<compile_context>
chip_gen: v7x
topology: tpu7x:2x2x1
jax: 0.10.0
libtpu: 0.0.40
codegen_flags: <defaults>
</compile_context>

<pallas_src>
import functools

import jax
import jax.numpy as jnp
from jax.experimental import pallas as pl
from jax.experimental.pallas import tpu as pltpu

SELU_ALPHA = 1.6732632423543772
SELU_SCALE = 1.0507009873554805
BN_EPS = 1e-5


def _round_up(x, m):
    return (x + m - 1) // m * m


# ----------------------------------------------------------------------------
# Pallas kernel: single-K-block matmul with fused bias (+ optional SELU).
# ----------------------------------------------------------------------------
def _make_matmul_kernel(act):
    def kernel(x_ref, w_ref, b_ref, o_ref):
        y = jnp.dot(x_ref[...], w_ref[...], preferred_element_type=jnp.float32)
        y = y + b_ref[...]
        if act == "selu":
            y = SELU_SCALE * jnp.where(y > 0, y, SELU_ALPHA * (jnp.exp(y) - 1.0))
        o_ref[...] = y.astype(o_ref.dtype)

    return kernel


def matmul_fused(x, w, bias, *, act=None, tm=512):
    """act((x @ w) + bias) computed by a Pallas TPU kernel.

    x: (M, K) f32, w: (K, N) f32, bias: (N,) f32.
    M is tiled over a "parallel" grid axis; K and N are zero-padded to lane
    multiples (128) so loads/stores are lane-dense and the whole K fits in a
    single MXU block (no accumulator scratch needed).
    """
    M, K = x.shape
    K2, N = w.shape
    assert K == K2, (K, K2)

    tm = min(tm, _round_up(M, 8))
    Mp = _round_up(M, tm)
    Kp = _round_up(K, 128)
    Np = _round_up(N, 128)

    xp = x if (Mp == M and Kp == K) else jnp.pad(x, ((0, Mp - M), (0, Kp - K)))
    wp = w if (Kp == K and Np == N) else jnp.pad(w, ((0, Kp - K), (0, Np - N)))
    bp = bias if Np == N else jnp.pad(bias, (0, Np - N))
    bp = bp.reshape(1, Np)

    out = pl.pallas_call(
        _make_matmul_kernel(act),
        out_shape=jax.ShapeDtypeStruct((Mp, Np), jnp.float32),
        grid_spec=pltpu.PrefetchScalarGridSpec(
            num_scalar_prefetch=0,
            grid=(Mp // tm,),
            in_specs=[
                pl.BlockSpec((tm, Kp), lambda i: (i, 0)),
                pl.BlockSpec((Kp, Np), lambda i: (0, 0)),
                pl.BlockSpec((1, Np), lambda i: (0, 0)),
            ],
            out_specs=pl.BlockSpec((tm, Np), lambda i: (i, 0)),
        ),
        compiler_params=pltpu.CompilerParams(
            dimension_semantics=("parallel",)),
    )(xp, wp, bp)

    if Mp != M or Np != N:
        out = out[:M, :N]
    return out


# ----------------------------------------------------------------------------
# Glue: NHWC im2col, BN folding, Linear-weight permutation (NCHW -> NHWC order)
# ----------------------------------------------------------------------------
def im2col_nhwc(x, kh, kw, stride, pad):
    """x: (N,H,W,C) -> patches (N*OH*OW, kh*kw*C), feature order (kh, kw, C)."""
    n, h, w, c = x.shape
    oh = (h + 2 * pad - kh) // stride + 1
    ow = (w + 2 * pad - kw) // stride + 1
    xp = jnp.pad(x, ((0, 0), (pad, pad), (pad, pad), (0, 0)))
    cols = []
    for i in range(kh):
        for j in range(kw):
            cols.append(
                xp[:, i: i + stride * (oh - 1) + 1: stride,
                      j: j + stride * (ow - 1) + 1: stride, :])
    patches = jnp.stack(cols, axis=3)                    # (N, OH, OW, kh*kw, C)
    return patches.reshape(n * oh * ow, kh * kw * c), oh, ow


def fold_bn_into_weight(w_oihw, conv_b, gamma, beta, mean, var):
    """Conv weight (Cout,Cin,kh,kw) + eval BN -> ((kh*kw*Cin, Cout), bias)."""
    cout = w_oihw.shape[0]
    scale = gamma / jnp.sqrt(var + BN_EPS)
    w_mat = jnp.transpose(w_oihw, (2, 3, 1, 0)).reshape(-1, cout) * scale[None, :]
    bias = beta + (conv_b - mean) * scale
    return w_mat, bias


def _permute_linear_for_nhwc(w_out_in, c, h, w):
    """PyTorch Linear weight (out, C*H*W in NCHW order) -> (H*W*C, out) NHWC order."""
    out_features = w_out_in.shape[0]
    wt = w_out_in.reshape(out_features, c, h, w)
    wt = jnp.transpose(wt, (0, 2, 3, 1)).reshape(out_features, h * w * c)
    return wt.T


def prepare_pallas_params(params, input_hw=84):
    """One-time weight prep (outside jit): BN folding, conv2/4 fusion, permutes."""
    def conv_out(s):
        return (s + 2 * 2 - 5) // 2 + 1

    h1 = conv_out(input_hw)          # 42
    h2 = conv_out(h1)                # 21
    h3 = conv_out(h2)                # 11

    prepped = {}
    for i in range(1, 6):
        w_mat, b = fold_bn_into_weight(
            params[f"conv{i}_w"], params[f"conv{i}_b"],
            params[f"bn{i}_gamma"], params[f"bn{i}_beta"],
            params[f"bn{i}_mean"], params[f"bn{i}_var"])
        prepped[f"conv{i}_wmat"] = w_mat
        prepped[f"conv{i}_bias"] = b

    # conv2 and conv4 share the same input: fuse into one 128-lane matmul.
    prepped["conv24_wmat"] = jnp.concatenate(
        [prepped["conv2_wmat"], prepped["conv4_wmat"]], axis=1)   # (800, 128)
    prepped["conv24_bias"] = jnp.concatenate(
        [prepped["conv2_bias"], prepped["conv4_bias"]])           # (128,)

    c3 = params["conv3_w"].shape[0]  # 32
    prepped["val_w"] = _permute_linear_for_nhwc(params["val_w"], c3, h3, h3)
    prepped["val_b"] = params["val_b"]
    prepped["adv_w"] = _permute_linear_for_nhwc(params["adv_w"], c3, h3, h3)
    prepped["adv_b"] = params["adv_b"]
    return prepped


# ----------------------------------------------------------------------------
# DuelingDQN forward (Pallas)
# ----------------------------------------------------------------------------
def dueling_dqn_forward(x_nchw, prepped):
    n = x_nchw.shape[0]
    c1 = prepped["conv1_wmat"].shape[1]      # 32
    c2 = prepped["conv2_wmat"].shape[1]      # 64
    c24 = prepped["conv24_wmat"].shape[1]    # 128

    x = jnp.transpose(x_nchw, (0, 2, 3, 1))  # NHWC once, at the boundary

    # conv1 + bn1 + selu
    p1, oh1, ow1 = im2col_nhwc(x, 5, 5, 2, 2)
    y1 = matmul_fused(p1, prepped["conv1_wmat"], prepped["conv1_bias"], act="selu")
    y1 = y1.reshape(n, oh1, ow1, c1)

    # conv2 + conv4 (shared input) as one fused 128-lane matmul, then split.
    p24, oh2, ow2 = im2col_nhwc(y1, 5, 5, 2, 2)
    y24 = matmul_fused(p24, prepped["conv24_wmat"], prepped["conv24_bias"], act="selu")
    y24 = y24.reshape(n, oh2, ow2, c24)
    v, a = y24[..., :c2], y24[..., c2:]

    # value branch: conv3 + bn3 + selu -> val Linear
    p3, oh3, ow3 = im2col_nhwc(v, 5, 5, 2, 2)
    v3 = matmul_fused(p3, prepped["conv3_wmat"], prepped["conv3_bias"], act="selu")
    v_flat = v3.reshape(n, -1)                               # NHWC flatten order
    val = matmul_fused(v_flat, prepped["val_w"], prepped["val_b"], act=None)   # (n, 1)

    # advantage branch: conv5 + bn5 + selu -> adv Linear
    p5, _, _ = im2col_nhwc(a, 5, 5, 2, 2)
    a5 = matmul_fused(p5, prepped["conv5_wmat"], prepped["conv5_bias"], act="selu")
    a_flat = a5.reshape(n, -1)
    adv = matmul_fused(a_flat, prepped["adv_w"], prepped["adv_b"], act=None)   # (n, A)

    return val + adv - jnp.mean(adv, axis=1, keepdims=True)


# ----------------------------------------------------------------------------
# Pure-JAX NCHW reference (independent lowering: lax.conv + jax.nn.selu)
# ----------------------------------------------------------------------------
def _conv_bn_selu_ref(x, w, b, gamma, beta, mean, var):
    y = jax.lax.conv_general_dilated(
        x, w, window_strides=(2, 2), padding=((2, 2), (2, 2)),
        dimension_numbers=("NCHW", "OIHW", "NCHW"))
    y = y + b[None, :, None, None]
    scale = gamma / jnp.sqrt(var + BN_EPS)
    y = (y - mean[None, :, None, None]) * scale[None, :, None, None] \
        + beta[None, :, None, None]
    return jax.nn.selu(y)


def dueling_dqn_ref(x, params):
    n = x.shape[0]
    out = _conv_bn_selu_ref(x, params["conv1_w"], params["conv1_b"],
                            params["bn1_gamma"], params["bn1_beta"],
                            params["bn1_mean"], params["bn1_var"])
    v = _conv_bn_selu_ref(out, params["conv2_w"], params["conv2_b"],
                          params["bn2_gamma"], params["bn2_beta"],
                          params["bn2_mean"], params["bn2_var"])
    v = _conv_bn_selu_ref(v, params["conv3_w"], params["conv3_b"],
                          params["bn3_gamma"], params["bn3_beta"],
                          params["bn3_mean"], params["bn3_var"])
    val = v.reshape(n, -1) @ params["val_w"].T + params["val_b"]
    a = _conv_bn_selu_ref(out, params["conv4_w"], params["conv4_b"],
                          params["bn4_gamma"], params["bn4_beta"],
                          params["bn4_mean"], params["bn4_var"])
    a = _conv_bn_selu_ref(a, params["conv5_w"], params["conv5_b"],
                          params["bn5_gamma"], params["bn5_beta"],
                          params["bn5_mean"], params["bn5_var"])
    adv = a.reshape(n, -1) @ params["adv_w"].T + params["adv_b"]
    return val + adv - jnp.mean(adv, axis=1, keepdims=True)


# ----------------------------------------------------------------------------
# Parameters
# ----------------------------------------------------------------------------
def init_params(key, action_space):
    ks = iter(jax.random.split(key, 40))
    f32 = jnp.float32

    def nrm(shape, s):
        return s * jax.random.normal(next(ks), shape, f32)

    p = {}
    conv_shapes = {1: (32, 3, 5, 5), 2: (64, 32, 5, 5), 3: (32, 64, 5, 5),
                   4: (64, 32, 5, 5), 5: (32, 64, 5, 5)}
    for i, shp in conv_shapes.items():
        cout = shp[0]
        p[f"conv{i}_w"] = nrm(shp, 0.04)
        p[f"conv{i}_b"] = nrm((cout,), 0.01)
        p[f"bn{i}_gamma"] = 1.0 + nrm((cout,), 0.1)
        p[f"bn{i}_beta"] = nrm((cout,), 0.1)
        p[f"bn{i}_mean"] = nrm((cout,), 0.05)
        p[f"bn{i}_var"] = jax.random.uniform(next(ks), (cout,), f32, 0.5, 1.5)
    p["val_w"] = nrm((1, 3872), 0.01)
    p["val_b"] = nrm((1,), 0.01)
    p["adv_w"] = nrm((action_space, 3872), 0.01)
    p["adv_b"] = nrm((action_space,), 0.01)
    return p


if __name__ == "__main__":
    ACTION_SPACE = 6
    key = jax.random.PRNGKey(0)
    k_param, k_x = jax.random.split(key)
    params = init_params(k_param, ACTION_SPACE)
    # Linear(3872, .) = 32*11*11 forces 84x84 spatial input with 3 channels.
    x = jax.random.normal(k_x, (2, 3, 84, 84), jnp.float32)

    prepped = prepare_pallas_params(params, input_hw=84)
    fwd = jax.jit(functools.partial(dueling_dqn_forward, prepped=prepped))
    q = jax.block_until_ready(fwd(x))

    q_ref = jax.block_until_ready(dueling_dqn_ref(x, params))

    assert q.shape == (2, ACTION_SPACE), q.shape
    assert bool(jnp.all(jnp.isfinite(q)))
    max_err = float(jnp.max(jnp.abs(q - q_ref)))
    assert bool(jnp.allclose(q, q_ref, atol=2e-2, rtol=2e-2)), max_err
    print("KERNEL_OK")
</pallas_src>

<mosaic_0001>
module attributes {stable_mosaic.version = 11 : i64} {
  func.func @kernel(%arg0: i32, %arg1: memref<512x128xf32, #tpu.memory_space<vmem>>, %arg2: memref<128x128xf32, #tpu.memory_space<vmem>>, %arg3: memref<1x128xf32, #tpu.memory_space<vmem>>, %arg4: memref<512x128xf32, #tpu.memory_space<vmem>>) attributes {dimension_semantics = [#tpu.dimension_semantics<parallel>], iteration_bounds = array<i64: 7>, scalar_prefetch = 0 : i64, scratch_operands = 0 : i64, tpu.core_type = #tpu.core_type<tc>, window_params = [{transform_indices = @transform_0, window_bounds = array<i64: 512, 128>}, {pipeline_mode = #tpu.pipeline_mode<synchronous>, transform_indices = @transform_1, window_bounds = array<i64: 128, 128>}, {pipeline_mode = #tpu.pipeline_mode<synchronous>, transform_indices = @transform_2, window_bounds = array<i64: 1, 128>}, {transform_indices = @transform_3, window_bounds = array<i64: 512, 128>}]} {
    %c0 = arith.constant 0 : index
    %c0_0 = arith.constant 0 : index
    %0 = vector.load %arg1[%c0, %c0_0] : memref<512x128xf32, #tpu.memory_space<vmem>>, vector<512x128xf32>
    %c0_1 = arith.constant 0 : index
    %c0_2 = arith.constant 0 : index
    %1 = vector.load %arg2[%c0_1, %c0_2] : memref<128x128xf32, #tpu.memory_space<vmem>>, vector<128x128xf32>
    %cst = arith.constant dense<0.000000e+00> : vector<512x128xf32>
    %2 = tpu.matmul %0, %1, %cst {dimension_numbers = #tpu.dot_dimension_numbers<[1], [0], [0], [1], [0, 0, 1, 1], [], []>} : vector<512x128xf32>, vector<128x128xf32>, vector<512x128xf32> -> vector<512x128xf32>
    %c0_3 = arith.constant 0 : index
    %c0_4 = arith.constant 0 : index
    %3 = vector.load %arg3[%c0_3, %c0_4] : memref<1x128xf32, #tpu.memory_space<vmem>>, vector<1x128xf32>
    %4 = vector.broadcast %3 : vector<1x128xf32> to vector<512x128xf32>
    %5 = arith.addf %2, %4 : vector<512x128xf32>
    %cst_5 = arith.constant 0.000000e+00 : f32
    %6 = vector.broadcast %cst_5 : f32 to vector<512x128xf32>
    %7 = arith.cmpf ogt, %5, %6 : vector<512x128xf32>
    %8 = math.exp %5 : vector<512x128xf32>
    %cst_6 = arith.constant 1.000000e+00 : f32
    %9 = vector.broadcast %cst_6 : f32 to vector<512x128xf32>
    %10 = arith.subf %8, %9 : vector<512x128xf32>
    %cst_7 = arith.constant 1.67326319 : f32
    %11 = vector.broadcast %cst_7 : f32 to vector<512x128xf32>
    %12 = arith.mulf %11, %10 : vector<512x128xf32>
    %13 = arith.select %7, %5, %12 : vector<512x128xi1>, vector<512x128xf32>
    %cst_8 = arith.constant 1.05070102 : f32
    %14 = vector.broadcast %cst_8 : f32 to vector<512x128xf32>
    %15 = arith.mulf %14, %13 : vector<512x128xf32>
    %c0_9 = arith.constant 0 : index
    %c0_10 = arith.constant 0 : index
    %16 = vector.load %arg4[%c0_9, %c0_10] : memref<512x128xf32, #tpu.memory_space<vmem>>, vector<512x128xf32>
    tpu.vector_store %arg4[%c0_9, %c0_10], %15 {strides = array<i32>} : memref<512x128xf32, #tpu.memory_space<vmem>>, vector<512x128xf32>,
    return
  }
  func.func @transform_0(%arg0: i32) -> (i32, i32) {
    %c0_i32 = arith.constant 0 : i32
    %c0_i32_0 = arith.constant 0 : i32
    return %arg0, %c0_i32 : i32, i32
  }
  func.func @transform_1(%arg0: i32) -> (i32, i32) {
    %c0_i32 = arith.constant 0 : i32
    %c0_i32_0 = arith.constant 0 : i32
    %c0_i32_1 = arith.constant 0 : i32
    return %c0_i32, %c0_i32_0 : i32, i32
  }
  func.func @transform_2(%arg0: i32) -> (i32, i32) {
    %c0_i32 = arith.constant 0 : i32
    %c0_i32_0 = arith.constant 0 : i32
    %c0_i32_1 = arith.constant 0 : i32
    return %c0_i32, %c0_i32_0 : i32, i32
  }
  func.func @transform_3(%arg0: i32) -> (i32, i32) {
    %c0_i32 = arith.constant 0 : i32
    %c0_i32_0 = arith.constant 0 : i32
    return %arg0, %c0_i32 : i32, i32
  }
}

module attributes {stable_mosaic.version = 11 : i64} {
  func.func @kernel(%arg0: i32, %arg1: memref<512x896xf32, #tpu.memory_space<vmem>>, %arg2: memref<896x128xf32, #tpu.memory_space<vmem>>, %arg3: memref<1x128xf32, #tpu.memory_space<vmem>>, %arg4: memref<512x128xf32, #tpu.memory_space<vmem>>) attributes {dimension_semantics = [#tpu.dimension_semantics<parallel>], iteration_bounds = array<i64: 2>, scalar_prefetch = 0 : i64, scratch_operands = 0 : i64, tpu.core_type = #tpu.core_type<tc>, window_params = [{transform_indices = @transform_0, window_bounds = array<i64: 512, 896>}, {pipeline_mode = #tpu.pipeline_mode<synchronous>, transform_indices = @transform_1, window_bounds = array<i64: 896, 128>}, {pipeline_mode = #tpu.pipeline_mode<synchronous>, transform_indices = @transform_2, window_bounds = array<i64: 1, 128>}, {transform_indices = @transform_3, window_bounds = array<i64: 512, 128>}]} {
    %c0 = arith.constant 0 : index
    %c0_0 = arith.constant 0 : index
    %0 = vector.load %arg1[%c0, %c0_0] : memref<512x896xf32, #tpu.memory_space<vmem>>, vector<512x896xf32>
    %c0_1 = arith.constant 0 : index
    %c0_2 = arith.constant 0 : index
    %1 = vector.load %arg2[%c0_1, %c0_2] : memref<896x128xf32, #tpu.memory_space<vmem>>, vector<896x128xf32>
    %cst = arith.constant dense<0.000000e+00> : vector<512x128xf32>
    %2 = tpu.matmul %0, %1, %cst {dimension_numbers = #tpu.dot_dimension_numbers<[1], [0], [0], [1], [0, 0, 1, 1], [], []>} : vector<512x896xf32>, vector<896x128xf32>, vector<512x128xf32> -> vector<512x128xf32>
    %c0_3 = arith.constant 0 : index
    %c0_4 = arith.constant 0 : index
    %3 = vector.load %arg3[%c0_3, %c0_4] : memref<1x128xf32, #tpu.memory_space<vmem>>, vector<1x128xf32>
    %4 = vector.broadcast %3 : vector<1x128xf32> to vector<512x128xf32>
    %5 = arith.addf %2, %4 : vector<512x128xf32>
    %cst_5 = arith.constant 0.000000e+00 : f32
    %6 = vector.broadcast %cst_5 : f32 to vector<512x128xf32>
    %7 = arith.cmpf ogt, %5, %6 : vector<512x128xf32>
    %8 = math.exp %5 : vector<512x128xf32>
    %cst_6 = arith.constant 1.000000e+00 : f32
    %9 = vector.broadcast %cst_6 : f32 to vector<512x128xf32>
    %10 = arith.subf %8, %9 : vector<512x128xf32>
    %cst_7 = arith.constant 1.67326319 : f32
    %11 = vector.broadcast %cst_7 : f32 to vector<512x128xf32>
    %12 = arith.mulf %11, %10 : vector<512x128xf32>
    %13 = arith.select %7, %5, %12 : vector<512x128xi1>, vector<512x128xf32>
    %cst_8 = arith.constant 1.05070102 : f32
    %14 = vector.broadcast %cst_8 : f32 to vector<512x128xf32>
    %15 = arith.mulf %14, %13 : vector<512x128xf32>
    %c0_9 = arith.constant 0 : index
    %c0_10 = arith.constant 0 : index
    %16 = vector.load %arg4[%c0_9, %c0_10] : memref<512x128xf32, #tpu.memory_space<vmem>>, vector<512x128xf32>
    tpu.vector_store %arg4[%c0_9, %c0_10], %15 {strides = array<i32>} : memref<512x128xf32, #tpu.memory_space<vmem>>, vector<512x128xf32>,
    return
  }
  func.func @transform_0(%arg0: i32) -> (i32, i32) {
    %c0_i32 = arith.constant 0 : i32
    %c0_i32_0 = arith.constant 0 : i32
    return %arg0, %c0_i32 : i32, i32
  }
  func.func @transform_1(%arg0: i32) -> (i32, i32) {
    %c0_i32 = arith.constant 0 : i32
    %c0_i32_0 = arith.constant 0 : i32
    %c0_i32_1 = arith.constant 0 : i32
    return %c0_i32, %c0_i32_0 : i32, i32
  }
  func.func @transform_2(%arg0: i32) -> (i32, i32) {
    %c0_i32 = arith.constant 0 : i32
    %c0_i32_0 = arith.constant 0 : i32
    %c0_i32_1 = arith.constant 0 : i32
    return %c0_i32, %c0_i32_0 : i32, i32
  }
  func.func @transform_3(%arg0: i32) -> (i32, i32) {
    %c0_i32 = arith.constant 0 : i32
    %c0_i32_0 = arith.constant 0 : i32
    return %arg0, %c0_i32 : i32, i32
  }
}

module attributes {stable_mosaic.version = 11 : i64} {
  func.func @kernel(%arg0: i32, %arg1: memref<248x1664xf32, #tpu.memory_space<vmem>>, %arg2: memref<1664x128xf32, #tpu.memory_space<vmem>>, %arg3: memref<1x128xf32, #tpu.memory_space<vmem>>, %arg4: memref<248x128xf32, #tpu.memory_space<vmem>>) attributes {dimension_semantics = [#tpu.dimension_semantics<parallel>], iteration_bounds = array<i64: 1>, scalar_prefetch = 0 : i64, scratch_operands = 0 : i64, tpu.core_type = #tpu.core_type<tc>, window_params = [{transform_indices = @transform_0, window_bounds = array<i64: 248, 1664>}, {pipeline_mode = #tpu.pipeline_mode<synchronous>, transform_indices = @transform_1, window_bounds = array<i64: 1664, 128>}, {pipeline_mode = #tpu.pipeline_mode<synchronous>, transform_indices = @transform_2, window_bounds = array<i64: 1, 128>}, {transform_indices = @transform_3, window_bounds = array<i64: 248, 128>}]} {
    %c0 = arith.constant 0 : index
    %c0_0 = arith.constant 0 : index
    %0 = vector.load %arg1[%c0, %c0_0] : memref<248x1664xf32, #tpu.memory_space<vmem>>, vector<248x1664xf32>
    %c0_1 = arith.constant 0 : index
    %c0_2 = arith.constant 0 : index
    %1 = vector.load %arg2[%c0_1, %c0_2] : memref<1664x128xf32, #tpu.memory_space<vmem>>, vector<1664x128xf32>
    %cst = arith.constant dense<0.000000e+00> : vector<248x128xf32>
    %2 = tpu.matmul %0, %1, %cst {dimension_numbers = #tpu.dot_dimension_numbers<[1], [0], [0], [1], [0, 0, 1, 1], [], []>} : vector<248x1664xf32>, vector<1664x128xf32>, vector<248x128xf32> -> vector<248x128xf32>
    %c0_3 = arith.constant 0 : index
    %c0_4 = arith.constant 0 : index
    %3 = vector.load %arg3[%c0_3, %c0_4] : memref<1x128xf32, #tpu.memory_space<vmem>>, vector<1x128xf32>
    %4 = vector.broadcast %3 : vector<1x128xf32> to vector<248x128xf32>
    %5 = arith.addf %2, %4 : vector<248x128xf32>
    %cst_5 = arith.constant 0.000000e+00 : f32
    %6 = vector.broadcast %cst_5 : f32 to vector<248x128xf32>
    %7 = arith.cmpf ogt, %5, %6 : vector<248x128xf32>
    %8 = math.exp %5 : vector<248x128xf32>
    %cst_6 = arith.constant 1.000000e+00 : f32
    %9 = vector.broadcast %cst_6 : f32 to vector<248x128xf32>
    %10 = arith.subf %8, %9 : vector<248x128xf32>
    %cst_7 = arith.constant 1.67326319 : f32
    %11 = vector.broadcast %cst_7 : f32 to vector<248x128xf32>
    %12 = arith.mulf %11, %10 : vector<248x128xf32>
    %13 = arith.select %7, %5, %12 : vector<248x128xi1>, vector<248x128xf32>
    %cst_8 = arith.constant 1.05070102 : f32
    %14 = vector.broadcast %cst_8 : f32 to vector<248x128xf32>
    %15 = arith.mulf %14, %13 : vector<248x128xf32>
    %c0_9 = arith.constant 0 : index
    %c0_10 = arith.constant 0 : index
    %16 = vector.load %arg4[%c0_9, %c0_10] : memref<248x128xf32, #tpu.memory_space<vmem>>, vector<248x128xf32>
    tpu.vector_store %arg4[%c0_9, %c0_10], %15 {strides = array<i32>} : memref<248x128xf32, #tpu.memory_space<vmem>>, vector<248x128xf32>,
    return
  }
  func.func @transform_0(%arg0: i32) -> (i32, i32) {
    %c0_i32 = arith.constant 0 : i32
    %c0_i32_0 = arith.constant 0 : i32
    return %arg0, %c0_i32 : i32, i32
  }
  func.func @transform_1(%arg0: i32) -> (i32, i32) {
    %c0_i32 = arith.constant 0 : i32
    %c0_i32_0 = arith.constant 0 : i32
    %c0_i32_1 = arith.constant 0 : i32
    return %c0_i32, %c0_i32_0 : i32, i32
  }
  func.func @transform_2(%arg0: i32) -> (i32, i32) {
    %c0_i32 = arith.constant 0 : i32
    %c0_i32_0 = arith.constant 0 : i32
    %c0_i32_1 = arith.constant 0 : i32
    return %c0_i32, %c0_i32_0 : i32, i32
  }
  func.func @transform_3(%arg0: i32) -> (i32, i32) {
    %c0_i32 = arith.constant 0 : i32
    %c0_i32_0 = arith.constant 0 : i32
    return %arg0, %c0_i32 : i32, i32
  }
}

module attributes {stable_mosaic.version = 11 : i64} {
  func.func @kernel(%arg0: i32, %arg1: memref<8x3968xf32, #tpu.memory_space<vmem>>, %arg2: memref<3968x128xf32, #tpu.memory_space<vmem>>, %arg3: memref<1x128xf32, #tpu.memory_space<vmem>>, %arg4: memref<8x128xf32, #tpu.memory_space<vmem>>) attributes {dimension_semantics = [#tpu.dimension_semantics<parallel>], iteration_bounds = array<i64: 1>, scalar_prefetch = 0 : i64, scratch_operands = 0 : i64, tpu.core_type = #tpu.core_type<tc>, window_params = [{transform_indices = @transform_0, window_bounds = array<i64: 8, 3968>}, {pipeline_mode = #tpu.pipeline_mode<synchronous>, transform_indices = @transform_1, window_bounds = array<i64: 3968, 128>}, {pipeline_mode = #tpu.pipeline_mode<synchronous>, transform_indices = @transform_2, window_bounds = array<i64: 1, 128>}, {transform_indices = @transform_3, window_bounds = array<i64: 8, 128>}]} {
    %c0 = arith.constant 0 : index
    %c0_0 = arith.constant 0 : index
    %0 = vector.load %arg1[%c0, %c0_0] : memref<8x3968xf32, #tpu.memory_space<vmem>>, vector<8x3968xf32>
    %c0_1 = arith.constant 0 : index
    %c0_2 = arith.constant 0 : index
    %1 = vector.load %arg2[%c0_1, %c0_2] : memref<3968x128xf32, #tpu.memory_space<vmem>>, vector<3968x128xf32>
    %cst = arith.constant dense<0.000000e+00> : vector<8x128xf32>
    %2 = tpu.matmul %0, %1, %cst {dimension_numbers = #tpu.dot_dimension_numbers<[1], [0], [0], [1], [0, 0, 1, 1], [], []>} : vector<8x3968xf32>, vector<3968x128xf32>, vector<8x128xf32> -> vector<8x128xf32>
    %c0_3 = arith.constant 0 : index
    %c0_4 = arith.constant 0 : index
    %3 = vector.load %arg3[%c0_3, %c0_4] : memref<1x128xf32, #tpu.memory_space<vmem>>, vector<1x128xf32>
    %4 = vector.broadcast %3 : vector<1x128xf32> to vector<8x128xf32>
    %5 = arith.addf %2, %4 : vector<8x128xf32>
    %c0_5 = arith.constant 0 : index
    %c0_6 = arith.constant 0 : index
    %6 = vector.load %arg4[%c0_5, %c0_6] : memref<8x128xf32, #tpu.memory_space<vmem>>, vector<8x128xf32>
    tpu.vector_store %arg4[%c0_5, %c0_6], %5 {strides = array<i32>} : memref<8x128xf32, #tpu.memory_space<vmem>>, vector<8x128xf32>,
    return
  }
  func.func @transform_0(%arg0: i32) -> (i32, i32) {
    %c0_i32 = arith.constant 0 : i32
    %c0_i32_0 = arith.constant 0 : i32
    return %arg0, %c0_i32 : i32, i32
  }
  func.func @transform_1(%arg0: i32) -> (i32, i32) {
    %c0_i32 = arith.constant 0 : i32
    %c0_i32_0 = arith.constant 0 : i32
    %c0_i32_1 = arith.constant 0 : i32
    return %c0_i32, %c0_i32_0 : i32, i32
  }
  func.func @transform_2(%arg0: i32) -> (i32, i32) {
    %c0_i32 = arith.constant 0 : i32
    %c0_i32_0 = arith.constant 0 : i32
    %c0_i32_1 = arith.constant 0 : i32
    return %c0_i32, %c0_i32_0 : i32, i32
  }
  func.func @transform_3(%arg0: i32) -> (i32, i32) {
    %c0_i32 = arith.constant 0 : i32
    %c0_i32_0 = arith.constant 0 : i32
    return %arg0, %c0_i32 : i32, i32
  }
}

</mosaic_0001>

<llo_original>
// kernel: dueling_dqn_forward.6
$region0: #{dueling_dqn_forward.6}
  #allocation0 [shape = 'u32[]', space=smem, size = 0x4, offset = 0x4, fixed_abs, tag = 'smem constant byte address 0x4 - core index']
  #allocation1 [shape = 'u32[144,128]{1,0:T(1,128)}', space=vmem, size = 0x12000, scoped, tag = 'internal scratch']
  %s0 = inlined_call_operand.vmem [shape: f32[3584,128], index: 0, kind: input, shape index: {}]
  %s1 = inlined_call_operand.vmem [shape: f32[128,128], index: 1, kind: input, shape index: {}]
  %s2 = inlined_call_operand.vmem [shape: f32[1,128], index: 2, kind: input, shape index: {}]
  %s3 = inlined_call_operand.vmem [shape: f32[3584,128], index: 3, kind: output, shape index: {}]
  %s4 = sld [smem:[#allocation0]]
  $region45: #{dueling_dqn_forward.6} parent=0
    _
  %s6 = ssub.s32 1, %s4
  %s7 = scalar_select 0, %s6, %s4
  loop: start=0, step=1, limit=9
  $region2: #{dueling_dqn_forward.6} parent=0 // loop_pre_header
    _
  $region3: #{dueling_dqn_forward.6} parent=0 // loop_header
    %s9 = sphi 0, %s13
    %p10 = scmp.ge.s32.totalorder %s9, 9
    %s19 = sphi 0, %s21
    %s22 = sphi 0, %s19
    %s23 = sphi 0, %s22
    %s39 = sphi 0, %s23
    %s43 = sphi 0, %s43
    %s45 = sphi 0, %s43
    %s46 = sphi 0, %s45
    %s60 = sphi 0, %s46
    %s64 = sphi 0, %s64
    %s66 = sphi 0, %s64
    %s67 = sphi 0, %s66
    %s81 = sphi 0, %s67
    %s87 = sphi 0, %s89
    %s90 = sphi 0, %s87
    %s91 = sphi 0, %s90
    %s107 = sphi 0, %s91
  $region4: #{dueling_dqn_forward.6} parent=0 // loop_header_branch
    %12 = sbr.rel (%p10) target = $region8
  $region5: #{dueling_dqn_forward.6} parent=0 // loop_body
    %s14 = ssub.s32 %s9, 1
    %s15 = ssub.s32 %s9, 2
    %s16 = sadd.s32 %s9, 1
    %s17 = ssub.s32 %s9, %s16
    %p18 = scmp.eq.s32.totalorder %s17, 0
    %s20 = sadd.s32 %s19, 1
    %s21 = scalar_select %p18, %s19, %s20
    %p24 = pneg %p18
    %p25 = scmp.eq.s32.totalorder %s9, 6
    %p26 = por %p24, %p25
    %p27 = scmp.ne.s32.totalorder %s19, %s22
    %p28 = scmp.eq.s32.totalorder %s9, 0
    %p29 = por %p27, %p28
    %p30 = scmp.ne.s32.totalorder %s19, %s22
    %p31 = scmp.eq.s32.totalorder %s14, 6
    %p32 = por %p30, %p31
    %p33 = scmp.ne.s32.totalorder %s22, %s23
    %p34 = scmp.eq.s32.totalorder %s14, 0
    %p35 = por %p33, %p34
    %p36 = scmp.ne.s32.totalorder %s22, %s23
    %p37 = scmp.eq.s32.totalorder %s15, 6
    %p38 = por %p36, %p37
    %p40 = scmp.ne.s32.totalorder %s23, %s39
    %p41 = scmp.eq.s32.totalorder %s15, 0
    %p42 = por %p40, %p41
    %s44 = sadd.s32 %s43, 1
    %p47 = scmp.eq.s32.totalorder %s9, 6
    %p48 = scmp.ne.s32.totalorder %s43, %s45
    %p49 = scmp.eq.s32.totalorder %s9, 0
    %p50 = por %p48, %p49
    %p51 = scmp.ne.s32.totalorder %s43, %s45
    %p52 = scmp.eq.s32.totalorder %s14, 6
    %p53 = por %p51, %p52
    %p54 = scmp.ne.s32.totalorder %s45, %s46
    %p55 = scmp.eq.s32.totalorder %s14, 0
    %p56 = por %p54, %p55
    %p57 = scmp.ne.s32.totalorder %s45, %s46
    %p58 = scmp.eq.s32.totalorder %s15, 6
    %p59 = por %p57, %p58
    %p61 = scmp.ne.s32.totalorder %s46, %s60
    %p62 = scmp.eq.s32.totalorder %s15, 0
    %p63 = por %p61, %p62
    %s65 = sadd.s32 %s64, 1
    %p68 = scmp.eq.s32.totalorder %s9, 6
    %p69 = scmp.ne.s32.totalorder %s64, %s66
    %p70 = scmp.eq.s32.totalorder %s9, 0
    %p71 = por %p69, %p70
    %p72 = scmp.ne.s32.totalorder %s64, %s66
    %p73 = scmp.eq.s32.totalorder %s14, 6
    %p74 = por %p72, %p73
    %p75 = scmp.ne.s32.totalorder %s66, %s67
    %p76 = scmp.eq.s32.totalorder %s14, 0
    %p77 = por %p75, %p76
    %p78 = scmp.ne.s32.totalorder %s66, %s67
    %p79 = scmp.eq.s32.totalorder %s15, 6
    %p80 = por %p78, %p79
    %p82 = scmp.ne.s32.totalorder %s67, %s81
    %p83 = scmp.eq.s32.totalorder %s15, 0
    %p84 = por %p82, %p83
    %s85 = ssub.s32 %s9, %s16
    %p86 = scmp.eq.s32.totalorder %s85, 0
    %s88 = sadd.s32 %s87, 1
    %s89 = scalar_select %p86, %s87, %s88
    %p92 = pneg %p86
    %p93 = scmp.eq.s32.totalorder %s9, 6
    %p94 = por %p92, %p93
    %p95 = scmp.ne.s32.totalorder %s87, %s90
    %p96 = scmp.eq.s32.totalorder %s9, 0
    %p97 = por %p95, %p96
    %p98 = scmp.ne.s32.totalorder %s87, %s90
    %p99 = scmp.eq.s32.totalorder %s14, 6
    %p100 = por %p98, %p99
    %p101 = scmp.ne.s32.totalorder %s90, %s91
    %p102 = scmp.eq.s32.totalorder %s14, 0
    %p103 = por %p101, %p102
    %p104 = scmp.ne.s32.totalorder %s90, %s91
    %p105 = scmp.eq.s32.totalorder %s15, 6
    %p106 = por %p104, %p105
    %p108 = scmp.ne.s32.totalorder %s91, %s107
    %p109 = scmp.eq.s32.totalorder %s15, 0
    %p110 = por %p108, %p109
    %p111 = scmp.le.s32.totalorder 1, %s9
    %p112 = scmp.lt.s32.totalorder %s9, 8
    %p113 = pnand %p111, %p112
    %p114 = pneg %p113
    // Predicated region
    $region9: #{dueling_dqn_forward.6} parent=5 // pred_check
      _
    $region10: #{dueling_dqn_forward.6} parent=5 // pred_check_branch
      %116 = sbr.rel (%p113) target = $region12
    $region11: #{dueling_dqn_forward.6} parent=5 // pred_region
      %s117 = ssub.s32 %s9, 1
      // Predicated region
      $region13: #{dueling_dqn_forward.6} parent=11 // pred_check
        %p118 = pneg %p56
      $region14: #{dueling_dqn_forward.6} parent=11 // pred_check_branch
        %120 = sbr.rel (%p118) target = $region16
      $region15: #{dueling_dqn_forward.6} parent=11 // pred_region
        _
      $region16: #{dueling_dqn_forward.6} parent=11 // pred_fallthru
        _
      // Predicated region
      $region17: #{dueling_dqn_forward.6} parent=11 // pred_check
        %p121 = pneg %p77
      $region18: #{dueling_dqn_forward.6} parent=11 // pred_check_branch
        %123 = sbr.rel (%p121) target = $region20
      $region19: #{dueling_dqn_forward.6} parent=11 // pred_region
        _
      $region20: #{dueling_dqn_forward.6} parent=11 // pred_fallthru
        _
    $region12: #{dueling_dqn_forward.6} parent=5 // pred_fallthru
      _
    %p124 = scmp.lt.s32.totalorder %s9, 7
    // Predicated region
    $region21: #{dueling_dqn_forward.6} parent=5 // pred_check
      %p125 = pneg %p124
    $region22: #{dueling_dqn_forward.6} parent=5 // pred_check_branch
      %127 = sbr.rel (%p125) target = $region24
    $region23: #{dueling_dqn_forward.6} parent=5 // pred_region
      // Predicated region
      $region25: #{dueling_dqn_forward.6} parent=23 // pred_check
        %p128 = pneg %p29
      $region26: #{dueling_dqn_forward.6} parent=23 // pred_check_branch
        %130 = sbr.rel (%p128) target = $region28
      $region27: #{dueling_dqn_forward.6} parent=23 // pred_region
        %s131 = smul.u32 64, %s9
        %p132 = scmp.lt.s32.totalorder %s131, 447
        %s133 = scalar_select %p132, %s131, 447
        %s134 = smul.addr %s133, 8
        %s135 = scalar_lea.vmem %s0, %s134
        %s136 = smul.u32 64, %s9
      $region28: #{dueling_dqn_forward.6} parent=23 // pred_fallthru
        _
    $region24: #{dueling_dqn_forward.6} parent=5 // pred_fallthru
      _
    %p137 = scmp.le.s32.totalorder 1, %s9
    %p138 = scmp.lt.s32.totalorder %s9, 8
    %p139 = pnand %p137, %p138
    %p140 = pneg %p139
    // Predicated region
    $region29: #{dueling_dqn_forward.6} parent=5 // pred_check
      _
    $region30: #{dueling_dqn_forward.6} parent=5 // pred_check_branch
      %142 = sbr.rel (%p139) target = $region32
    $region31: #{dueling_dqn_forward.6} parent=5 // pred_region
      %s143 = ssub.s32 %s9, 1
      %s144 = smul.u32 64, %s14
      %p145 = scmp.lt.s32.totalorder %s144, 447
      %s146 = scalar_select %p145, %s144, 447
      %s147 = smul.addr %s146, 8
      %s148 = scalar_lea.vmem %s0, %s147
      %p149 = pneg %p35
      %p150 = pneg %p32
      %p151 = pneg %p56
      %p152 = pneg %p53
      %p153 = pneg %p77
      %p154 = pneg %p74
      %p155 = pneg %p103
      %p156 = pneg %p100
      %s157 = smul.u32 64, %s14
      %p158 = scmp.lt.s32.totalorder %s157, 447
      %s159 = scalar_select %p158, %s157, 447
      %s160 = smul.addr %s159, 8
      %s161 = scalar_lea.vmem %s3, %s160
      %s162 = smul.u32 64, %s14
      %p163 = scmp.lt.s32.totalorder %s162, 447
      %s164 = scalar_select %p163, %s162, 447
      %s165 = smul.addr %s164, 8
      %s166 = scalar_lea.vmem %s0, %s165
      %s167 = smul.u32 64, %s14
      %s168 = smul.u32 64, %s14
      %p169 = scmp.lt.s32.totalorder %s168, 447
      %s170 = scalar_select %p169, %s168, 447
      %s171 = smul.addr %s170, 8
      %s172 = scalar_lea.vmem %s3, %s171
      %s173 = smul.u32 64, %s14
      %v174 = vld [vmem:[%s166] sm:$0xff]
      %v175 = vld [vmem:[%s166 + $0x8] sm:$0xff]
      %v176 = vld [vmem:[%s166 + $0x10] sm:$0xff]
      %v177 = vld [vmem:[%s166 + $0x18] sm:$0xff]
      %v178 = vld [vmem:[%s166 + $0x20] sm:$0xff]
      %v179 = vld [vmem:[%s166 + $0x28] sm:$0xff]
      %v180 = vld [vmem:[%s166 + $0x30] sm:$0xff]
      %v181 = vld [vmem:[%s166 + $0x38] sm:$0xff]
      %v182 = vld [vmem:[%s166 + $0x40] sm:$0xff]
      %v183 = vld [vmem:[%s166 + $0x48] sm:$0xff]
      %v184 = vld [vmem:[%s166 + $0x50] sm:$0xff]
      %v185 = vld [vmem:[%s166 + $0x58] sm:$0xff]
      %v186 = vld [vmem:[%s166 + $0x60] sm:$0xff]
      %v187 = vld [vmem:[%s166 + $0x68] sm:$0xff]
      %v188 = vld [vmem:[%s166 + $0x70] sm:$0xff]
      %v189 = vld [vmem:[%s166 + $0x78] sm:$0xff]
      %v190 = vld [vmem:[%s166 + $0x80] sm:$0xff]
      %v191 = vld [vmem:[%s166 + $0x88] sm:$0xff]
      %v192 = vld [vmem:[%s166 + $0x90] sm:$0xff]
      %v193 = vld [vmem:[%s166 + $0x98] sm:$0xff]
      %v194 = vld [vmem:[%s166 + $0xa0] sm:$0xff]
      %v195 = vld [vmem:[%s166 + $0xa8] sm:$0xff]
      %v196 = vld [vmem:[%s166 + $0xb0] sm:$0xff]
      %v197 = vld [vmem:[%s166 + $0xb8] sm:$0xff]
      %v198 = vld [vmem:[%s166 + $0xc0] sm:$0xff]
      %v199 = vld [vmem:[%s166 + $0xc8] sm:$0xff]
      %v200 = vld [vmem:[%s166 + $0xd0] sm:$0xff]
      %v201 = vld [vmem:[%s166 + $0xd8] sm:$0xff]
      %v202 = vld [vmem:[%s166 + $0xe0] sm:$0xff]
      %v203 = vld [vmem:[%s166 + $0xe8] sm:$0xff]
      %v204 = vld [vmem:[%s166 + $0xf0] sm:$0xff]
      %v205 = vld [vmem:[%s166 + $0xf8] sm:$0xff]
      %v206 = vld [vmem:[%s166 + $0x100] sm:$0xff]
      %v207 = vld [vmem:[%s166 + $0x108] sm:$0xff]
      %v208 = vld [vmem:[%s166 + $0x110] sm:$0xff]
      %v209 = vld [vmem:[%s166 + $0x118] sm:$0xff]
      %v210 = vld [vmem:[%s166 + $0x120] sm:$0xff]
      %v211 = vld [vmem:[%s166 + $0x128] sm:$0xff]
      %v212 = vld [vmem:[%s166 + $0x130] sm:$0xff]
      %v213 = vld [vmem:[%s166 + $0x138] sm:$0xff]
      %v214 = vld [vmem:[%s166 + $0x140] sm:$0xff]
      %v215 = vld [vmem:[%s166 + $0x148] sm:$0xff]
      %v216 = vld [vmem:[%s166 + $0x150] sm:$0xff]
      %v217 = vld [vmem:[%s166 + $0x158] sm:$0xff]
      %v218 = vld [vmem:[%s166 + $0x160] sm:$0xff]
      %v219 = vld [vmem:[%s166 + $0x168] sm:$0xff]
      %v220 = vld [vmem:[%s166 + $0x170] sm:$0xff]
      %v221 = vld [vmem:[%s166 + $0x178] sm:$0xff]
      %v222 = vld [vmem:[%s166 + $0x180] sm:$0xff]
      %v223 = vld [vmem:[%s166 + $0x188] sm:$0xff]
      %v224 = vld [vmem:[%s166 + $0x190] sm:$0xff]
      %v225 = vld [vmem:[%s166 + $0x198] sm:$0xff]
      %v226 = vld [vmem:[%s166 + $0x1a0] sm:$0xff]
      %v227 = vld [vmem:[%s166 + $0x1a8] sm:$0xff]
      %v228 = vld [vmem:[%s166 + $0x1b0] sm:$0xff]
      %v229 = vld [vmem:[%s166 + $0x1b8] sm:$0xff]
      %v230 = vld [vmem:[%s166 + $0x1c0] sm:$0xff]
      %v231 = vld [vmem:[%s166 + $0x1c8] sm:$0xff]
      %v232 = vld [vmem:[%s166 + $0x1d0] sm:$0xff]
      %v233 = vld [vmem:[%s166 + $0x1d8] sm:$0xff]
      %v234 = vld [vmem:[%s166 + $0x1e0] sm:$0xff]
      %v235 = vld [vmem:[%s166 + $0x1e8] sm:$0xff]
      %v236 = vld [vmem:[%s166 + $0x1f0] sm:$0xff]
      %v237 = vld [vmem:[%s166 + $0x1f8] sm:$0xff]
      %v238 = vld [vmem:[%s1] sm:$0xff]
      %v239 = vld [vmem:[%s1 + $0x8] sm:$0xff]
      %v240 = vld [vmem:[%s1 + $0x10] sm:$0xff]
      %v241 = vld [vmem:[%s1 + $0x18] sm:$0xff]
      %v242 = vld [vmem:[%s1 + $0x20] sm:$0xff]
      %v243 = vld [vmem:[%s1 + $0x28] sm:$0xff]
      %v244 = vld [vmem:[%s1 + $0x30] sm:$0xff]
      %v245 = vld [vmem:[%s1 + $0x38] sm:$0xff]
      %v246 = vld [vmem:[%s1 + $0x40] sm:$0xff]
      %v247 = vld [vmem:[%s1 + $0x48] sm:$0xff]
      %v248 = vld [vmem:[%s1 + $0x50] sm:$0xff]
      %v249 = vld [vmem:[%s1 + $0x58] sm:$0xff]
      %v250 = vld [vmem:[%s1 + $0x60] sm:$0xff]
      %v251 = vld [vmem:[%s1 + $0x68] sm:$0xff]
      %v252 = vld [vmem:[%s1 + $0x70] sm:$0xff]
      %v253 = vld [vmem:[%s1 + $0x78] sm:$0xff]
      %v254 = vld [vmem:[%s2] sm:$0x1]
      %v256 = vlaneseq
      %v257 = vshrl.u32 %v256, 7
      %v258 = vsub.s32 0, %v257
      %v259 = vrot.slane %v254, %v258
      %261 = vmatprep.subr.mxu0 0.0
      %262 = vmatpush1.msra.mxu0 %v238
      %263 = vmatprep.subr.mxu0 0.0
      %264 = vmatpush1.msra.mxu0 %v239
      %265 = vmatprep.subr.mxu0 0.0
      %266 = vmatpush1.msra.mxu0 %v240
      %267 = vmatprep.subr.mxu0 0.0
      %268 = vmatpush1.msra.mxu0 %v241
      %269 = vmatprep.subr.mxu0 0.0
      %270 = vmatpush1.msra.mxu0 %v242
      %271 = vmatprep.subr.mxu0 0.0
      %272 = vmatpush1.msra.mxu0 %v243
      %273 = vmatprep.subr.mxu0 0.0
      %274 = vmatpush1.msra.mxu0 %v244
      %275 = vmatprep.subr.mxu0 0.0
      %276 = vmatpush1.msra.mxu0 %v245
      %277 = vmatprep.subr.mxu0 0.0
      %278 = vmatpush1.msra.mxu0 %v246
      %279 = vmatprep.subr.mxu0 0.0
      %280 = vmatpush1.msra.mxu0 %v247
      %281 = vmatprep.subr.mxu0 0.0
      %282 = vmatpush1.msra.mxu0 %v248
      %283 = vmatprep.subr.mxu0 0.0
      %284 = vmatpush1.msra.mxu0 %v249
      %285 = vmatprep.subr.mxu0 0.0
      %286 = vmatpush1.msra.mxu0 %v250
      %287 = vmatprep.subr.mxu0 0.0
      %288 = vmatpush1.msra.mxu0 %v251
      %289 = vmatprep.subr.mxu0 0.0
      %290 = vmatpush1.msra.mxu0 %v252
      %291 = vmatprep.subr.mxu0 0.0
      %292 = vmatpush1.msra.mxu0 %v253
      %293 = vmatprep.subr.mxu0 0.0
      %294 = vmatpush1.msra.mxu0 0.0
      %295 = vmatprep.subr.mxu0 0.0
      %296 = vmatpush1.msra.mxu0 0.0
      %297 = vmatprep.subr.mxu0 0.0
      %298 = vmatpush1.msra.mxu0 0.0
      %299 = vmatprep.subr.mxu0 0.0
      %300 = vmatpush1.msra.mxu0 0.0
      %301 = vmatprep.subr.mxu0 0.0
      %302 = vmatpush1.msra.mxu0 0.0
      %303 = vmatprep.subr.mxu0 0.0
      %304 = vmatpush1.msra.mxu0 0.0
      %305 = vmatprep.subr.mxu0 0.0
      %306 = vmatpush1.msra.mxu0 0.0
      %307 = vmatprep.subr.mxu0 0.0
      %308 = vmatpush1.msra.mxu0 0.0
      %309 = vmatprep.subr.mxu0 0.0
      %310 = vmatpush1.msra.mxu0 0.0
      %311 = vmatprep.subr.mxu0 0.0
      %312 = vmatpush1.msra.mxu0 0.0
      %313 = vmatprep.subr.mxu0 0.0
      %314 = vmatpush1.msra.mxu0 0.0
      %315 = vmatprep.subr.mxu0 0.0
      %316 = vmatpush1.msra.mxu0 0.0
      %317 = vmatprep.subr.mxu0 0.0
      %318 = vmatpush1.msra.mxu0 0.0
      %319 = vmatprep.subr.mxu0 0.0
      %320 = vmatpush1.msra.mxu0 0.0
      %321 = vmatprep.subr.mxu0 0.0
      %322 = vmatpush1.msra.mxu0 0.0
      %323 = vmatprep.subr.mxu0 0.0
      %324 = vmatpush1.msra.mxu0 0.0
      %325 = vmatprep.mubr.f32.mxu0 0.0
      %326 = vmatmul.mubr.f32.gmra.mrb[0].mxu0 %v174
      %v327 = vpop.f32.mrb[0].mxu0
      %v328 = vadd.f32 %v259, %v327
      %v329 = vpop.f32.mrb[0].mxu0
      %330 = vmatprep.mubr.f32.mxu0 0.0
      %331 = vmatmul.mubr.f32.gmra.mrb[0].mxu0 %v175
      %v332 = vpop.f32.mrb[0].mxu0
      %v333 = vadd.f32 %v259, %v332
      %v334 = vpop.f32.mrb[0].mxu0
      %335 = vmatprep.mubr.f32.mxu0 0.0
      %336 = vmatmul.mubr.f32.gmra.mrb[0].mxu0 %v176
      %v337 = vpop.f32.mrb[0].mxu0
      %v338 = vadd.f32 %v259, %v337
      %v339 = vpop.f32.mrb[0].mxu0
      %340 = vmatprep.mubr.f32.mxu0 0.0
      %341 = vmatmul.mubr.f32.gmra.mrb[0].mxu0 %v177
      %v342 = vpop.f32.mrb[0].mxu0
      %v343 = vadd.f32 %v259, %v342
      %v344 = vpop.f32.mrb[0].mxu0
      %345 = vmatprep.mubr.f32.mxu0 0.0
      %346 = vmatmul.mubr.f32.gmra.mrb[0].mxu0 %v178
      %v347 = vpop.f32.mrb[0].mxu0
      %v348 = vadd.f32 %v259, %v347
      %v349 = vpop.f32.mrb[0].mxu0
      %350 = vmatprep.mubr.f32.mxu0 0.0
      %351 = vmatmul.mubr.f32.gmra.mrb[0].mxu0 %v179
      %v352 = vpop.f32.mrb[0].mxu0
      %v353 = vadd.f32 %v259, %v352
      %v354 = vpop.f32.mrb[0].mxu0
      %355 = vmatprep.mubr.f32.mxu0 0.0
      %356 = vmatmul.mubr.f32.gmra.mrb[0].mxu0 %v180
      %v357 = vpop.f32.mrb[0].mxu0
      %v358 = vadd.f32 %v259, %v357
      %v359 = vpop.f32.mrb[0].mxu0
      %360 = vmatprep.mubr.f32.mxu0 0.0
      %361 = vmatmul.mubr.f32.gmra.mrb[0].mxu0 %v181
      %v362 = vpop.f32.mrb[0].mxu0
      %v363 = vadd.f32 %v259, %v362
      %v364 = vpop.f32.mrb[0].mxu0
      %365 = vmatprep.mubr.f32.mxu0 0.0
      %366 = vmatmul.mubr.f32.gmra.mrb[0].mxu0 %v182
      %v367 = vpop.f32.mrb[0].mxu0
      %v368 = vadd.f32 %v259, %v367
      %v369 = vpop.f32.mrb[0].mxu0
      %370 = vmatprep.mubr.f32.mxu0 0.0
      %371 = vmatmul.mubr.f32.gmra.mrb[0].mxu0 %v183
      %v372 = vpop.f32.mrb[0].mxu0
      %v373 = vadd.f32 %v259, %v372
      %v374 = vpop.f32.mrb[0].mxu0
      %375 = vmatprep.mubr.f32.mxu0 0.0
      %376 = vmatmul.mubr.f32.gmra.mrb[0].mxu0 %v184
      %v377 = vpop.f32.mrb[0].mxu0
      %v378 = vadd.f32 %v259, %v377
      %v379 = vpop.f32.mrb[0].mxu0
      %380 = vmatprep.mubr.f32.mxu0 0.0
      %381 = vmatmul.mubr.f32.gmra.mrb[0].mxu0 %v185
      %v382 = vpop.f32.mrb[0].mxu0
      %v383 = vadd.f32 %v259, %v382
      %v384 = vpop.f32.mrb[0].mxu0
      %385 = vmatprep.mubr.f32.mxu0 0.0
      %386 = vmatmul.mubr.f32.gmra.mrb[0].mxu0 %v186
      %v387 = vpop.f32.mrb[0].mxu0
      %v388 = vadd.f32 %v259, %v387
      %v389 = vpop.f32.mrb[0].mxu0
      %390 = vmatprep.mubr.f32.mxu0 0.0
      %391 = vmatmul.mubr.f32.gmra.mrb[0].mxu0 %v187
      %v392 = vpop.f32.mrb[0].mxu0
      %v393 = vadd.f32 %v259, %v392
      %v394 = vpop.f32.mrb[0].mxu0
      %395 = vmatprep.mubr.f32.mxu0 0.0
      %396 = vmatmul.mubr.f32.gmra.mrb[0].mxu0 %v188
      %v397 = vpop.f32.mrb[0].mxu0
      %v398 = vadd.f32 %v259, %v397
      %v399 = vpop.f32.mrb[0].mxu0
      %400 = vmatprep.mubr.f32.mxu0 0.0
      %401 = vmatmul.mubr.f32.gmra.mrb[0].mxu0 %v189
      %v402 = vpop.f32.mrb[0].mxu0
      %v403 = vadd.f32 %v259, %v402
      %v404 = vpop.f32.mrb[0].mxu0
      %405 = vmatprep.mubr.f32.mxu0 0.0
      %406 = vmatmul.mubr.f32.gmra.mrb[0].mxu0 %v190
      %v407 = vpop.f32.mrb[0].mxu0
      %v408 = vadd.f32 %v259, %v407
      %v409 = vpop.f32.mrb[0].mxu0
      %410 = vmatprep.mubr.f32.mxu0 0.0
      %411 = vmatmul.mubr.f32.gmra.mrb[0].mxu0 %v191
      %v412 = vpop.f32.mrb[0].mxu0
      %v413 = vadd.f32 %v259, %v412
      %v414 = vpop.f32.mrb[0].mxu0
      %415 = vmatprep.mubr.f32.mxu0 0.0
      %416 = vmatmul.mubr.f32.gmra.mrb[0].mxu0 %v192
      %v417 = vpop.f32.mrb[0].mxu0
      %v418 = vadd.f32 %v259, %v417
      %v419 = vpop.f32.mrb[0].mxu0
      %420 = vmatprep.mubr.f32.mxu0 0.0
      %421 = vmatmul.mubr.f32.gmra.mrb[0].mxu0 %v193
      %v422 = vpop.f32.mrb[0].mxu0
      %v423 = vadd.f32 %v259, %v422
      %v424 = vpop.f32.mrb[0].mxu0
      %425 = vmatprep.mubr.f32.mxu0 0.0
      %426 = vmatmul.mubr.f32.gmra.mrb[0].mxu0 %v194
      %v427 = vpop.f32.mrb[0].mxu0
      %v428 = vadd.f32 %v259, %v427
      %v429 = vpop.f32.mrb[0].mxu0
      %430 = vmatprep.mubr.f32.mxu0 0.0
      %431 = vmatmul.mubr.f32.gmra.mrb[0].mxu0 %v195
      %v432 = vpop.f32.mrb[0].mxu0
      %v433 = vadd.f32 %v259, %v432
      %v434 = vpop.f32.mrb[0].mxu0
      %435 = vmatprep.mubr.f32.mxu0 0.0
      %436 = vmatmul.mubr.f32.gmra.mrb[0].mxu0 %v196
      %v437 = vpop.f32.mrb[0].mxu0
      %v438 = vadd.f32 %v259, %v437
      %v439 = vpop.f32.mrb[0].mxu0
      %440 = vmatprep.mubr.f32.mxu0 0.0
      %441 = vmatmul.mubr.f32.gmra.mrb[0].mxu0 %v197
      %v442 = vpop.f32.mrb[0].mxu0
      %v443 = vadd.f32 %v259, %v442
      %v444 = vpop.f32.mrb[0].mxu0
      %445 = vmatprep.mubr.f32.mxu0 0.0
      %446 = vmatmul.mubr.f32.gmra.mrb[0].mxu0 %v198
      %v447 = vpop.f32.mrb[0].mxu0
      %v448 = vadd.f32 %v259, %v447
      %v449 = vpop.f32.mrb[0].mxu0
      %450 = vmatprep.mubr.f32.mxu0 0.0
      %451 = vmatmul.mubr.f32.gmra.mrb[0].mxu0 %v199
      %v452 = vpop.f32.mrb[0].mxu0
      %v453 = vadd.f32 %v259, %v452
      %v454 = vpop.f32.mrb[0].mxu0
      %455 = vmatprep.mubr.f32.mxu0 0.0
      %456 = vmatmul.mubr.f32.gmra.mrb[0].mxu0 %v200
      %v457 = vpop.f32.mrb[0].mxu0
      %v458 = vadd.f32 %v259, %v457
      %v459 = vpop.f32.mrb[0].mxu0
      %460 = vmatprep.mubr.f32.mxu0 0.0
      %461 = vmatmul.mubr.f32.gmra.mrb[0].mxu0 %v201
      %v462 = vpop.f32.mrb[0].mxu0
      %v463 = vadd.f32 %v259, %v462
      %v464 = vpop.f32.mrb[0].mxu0
      %465 = vmatprep.mubr.f32.mxu0 0.0
      %466 = vmatmul.mubr.f32.gmra.mrb[0].mxu0 %v202
      %v467 = vpop.f32.mrb[0].mxu0
      %v468 = vadd.f32 %v259, %v467
      %v469 = vpop.f32.mrb[0].mxu0
      %470 = vmatprep.mubr.f32.mxu0 0.0
      %471 = vmatmul.mubr.f32.gmra.mrb[0].mxu0 %v203
      %v472 = vpop.f32.mrb[0].mxu0
      %v473 = vadd.f32 %v259, %v472
      %v474 = vpop.f32.mrb[0].mxu0
      %475 = vmatprep.mubr.f32.mxu0 0.0
      %476 = vmatmul.mubr.f32.gmra.mrb[0].mxu0 %v204
      %v477 = vpop.f32.mrb[0].mxu0
      %v478 = vadd.f32 %v259, %v477
      %v479 = vpop.f32.mrb[0].mxu0
      %480 = vmatprep.mubr.f32.mxu0 0.0
      %481 = vmatmul.mubr.f32.gmra.mrb[0].mxu0 %v205
      %v482 = vpop.f32.mrb[0].mxu0
      %v483 = vadd.f32 %v259, %v482
      %v484 = vpop.f32.mrb[0].mxu0
      %485 = vmatprep.mubr.f32.mxu0 0.0
      %486 = vmatmul.mubr.f32.gmra.mrb[0].mxu0 %v206
      %v487 = vpop.f32.mrb[0].mxu0
      %v488 = vadd.f32 %v259, %v487
      %v489 = vpop.f32.mrb[0].mxu0
      %490 = vmatprep.mubr.f32.mxu0 0.0
      %491 = vmatmul.mubr.f32.gmra.mrb[0].mxu0 %v207
      %v492 = vpop.f32.mrb[0].mxu0
      %v493 = vadd.f32 %v259, %v492
      %v494 = vpop.f32.mrb[0].mxu0
      %495 = vmatprep.mubr.f32.mxu0 0.0
      %496 = vmatmul.mubr.f32.gmra.mrb[0].mxu0 %v208
      %v497 = vpop.f32.mrb[0].mxu0
      %v498 = vadd.f32 %v259, %v497
      %v499 = vpop.f32.mrb[0].mxu0
      %500 = vmatprep.mubr.f32.mxu0 0.0
      %501 = vmatmul.mubr.f32.gmra.mrb[0].mxu0 %v209
      %v502 = vpop.f32.mrb[0].mxu0
      %v503 = vadd.f32 %v259, %v502
      %v504 = vpop.f32.mrb[0].mxu0
      %505 = vmatprep.mubr.f32.mxu0 0.0
      %506 = vmatmul.mubr.f32.gmra.mrb[0].mxu0 %v210
      %v507 = vpop.f32.mrb[0].mxu0
      %v508 = vadd.f32 %v259, %v507
      %v509 = vpop.f32.mrb[0].mxu0
      %510 = vmatprep.mubr.f32.mxu0 0.0
      %511 = vmatmul.mubr.f32.gmra.mrb[0].mxu0 %v211
      %v512 = vpop.f32.mrb[0].mxu0
      %v513 = vadd.f32 %v259, %v512
      %v514 = vpop.f32.mrb[0].mxu0
      %515 = vmatprep.mubr.f32.mxu0 0.0
      %516 = vmatmul.mubr.f32.gmra.mrb[0].mxu0 %v212
      %v517 = vpop.f32.mrb[0].mxu0
      %v518 = vadd.f32 %v259, %v517
      %v519 = vpop.f32.mrb[0].mxu0
      %520 = vmatprep.mubr.f32.mxu0 0.0
      %521 = vmatmul.mubr.f32.gmra.mrb[0].mxu0 %v213
      %v522 = vpop.f32.mrb[0].mxu0
      %v523 = vadd.f32 %v259, %v522
      %v524 = vpop.f32.mrb[0].mxu0
      %525 = vmatprep.mubr.f32.mxu0 0.0
      %526 = vmatmul.mubr.f32.gmra.mrb[0].mxu0 %v214
      %v527 = vpop.f32.mrb[0].mxu0
      %v528 = vadd.f32 %v259, %v527
      %v529 = vpop.f32.mrb[0].mxu0
      %530 = vmatprep.mubr.f32.mxu0 0.0
      %531 = vmatmul.mubr.f32.gmra.mrb[0].mxu0 %v215
      %v532 = vpop.f32.mrb[0].mxu0
      %v533 = vadd.f32 %v259, %v532
      %v534 = vpop.f32.mrb[0].mxu0
      %535 = vmatprep.mubr.f32.mxu0 0.0
      %536 = vmatmul.mubr.f32.gmra.mrb[0].mxu0 %v216
      %v537 = vpop.f32.mrb[0].mxu0
      %v538 = vadd.f32 %v259, %v537
      %v539 = vpop.f32.mrb[0].mxu0
      %540 = vmatprep.mubr.f32.mxu0 0.0
      %541 = vmatmul.mubr.f32.gmra.mrb[0].mxu0 %v217
      %v542 = vpop.f32.mrb[0].mxu0
      %v543 = vadd.f32 %v259, %v542
      %v544 = vpop.f32.mrb[0].mxu0
      %545 = vmatprep.mubr.f32.mxu0 0.0
      %546 = vmatmul.mubr.f32.gmra.mrb[0].mxu0 %v218
      %v547 = vpop.f32.mrb[0].mxu0
      %v548 = vadd.f32 %v259, %v547
      %v549 = vpop.f32.mrb[0].mxu0
      %550 = vmatprep.mubr.f32.mxu0 0.0
      %551 = vmatmul.mubr.f32.gmra.mrb[0].mxu0 %v219
      %v552 = vpop.f32.mrb[0].mxu0
      %v553 = vadd.f32 %v259, %v552
      %v554 = vpop.f32.mrb[0].mxu0
      %555 = vmatprep.mubr.f32.mxu0 0.0
      %556 = vmatmul.mubr.f32.gmra.mrb[0].mxu0 %v220
      %v557 = vpop.f32.mrb[0].mxu0
      %v558 = vadd.f32 %v259, %v557
      %v559 = vpop.f32.mrb[0].mxu0
      %560 = vmatprep.mubr.f32.mxu0 0.0
      %561 = vmatmul.mubr.f32.gmra.mrb[0].mxu0 %v221
      %v562 = vpop.f32.mrb[0].mxu0
      %v563 = vadd.f32 %v259, %v562
      %v564 = vpop.f32.mrb[0].mxu0
      %565 = vmatprep.mubr.f32.mxu0 0.0
      %566 = vmatmul.mubr.f32.gmra.mrb[0].mxu0 %v222
      %v567 = vpop.f32.mrb[0].mxu0
      %v568 = vadd.f32 %v259, %v567
      %v569 = vpop.f32.mrb[0].mxu0
      %570 = vmatprep.mubr.f32.mxu0 0.0
      %571 = vmatmul.mubr.f32.gmra.mrb[0].mxu0 %v223
      %v572 = vpop.f32.mrb[0].mxu0
      %v573 = vadd.f32 %v259, %v572
      %v574 = vpop.f32.mrb[0].mxu0
      %575 = vmatprep.mubr.f32.mxu0 0.0
      %576 = vmatmul.mubr.f32.gmra.mrb[0].mxu0 %v224
      %v577 = vpop.f32.mrb[0].mxu0
      %v578 = vadd.f32 %v259, %v577
      %v579 = vpop.f32.mrb[0].mxu0
      %580 = vmatprep.mubr.f32.mxu0 0.0
      %581 = vmatmul.mubr.f32.gmra.mrb[0].mxu0 %v225
      %v582 = vpop.f32.mrb[0].mxu0
      %v583 = vadd.f32 %v259, %v582
      %v584 = vpop.f32.mrb[0].mxu0
      %585 = vmatprep.mubr.f32.mxu0 0.0
      %586 = vmatmul.mubr.f32.gmra.mrb[0].mxu0 %v226
      %v587 = vpop.f32.mrb[0].mxu0
      %v588 = vadd.f32 %v259, %v587
      %v589 = vpop.f32.mrb[0].mxu0
      %590 = vmatprep.mubr.f32.mxu0 0.0
      %591 = vmatmul.mubr.f32.gmra.mrb[0].mxu0 %v227
      %v592 = vpop.f32.mrb[0].mxu0
      %v593 = vadd.f32 %v259, %v592
      %v594 = vpop.f32.mrb[0].mxu0
      %595 = vmatprep.mubr.f32.mxu0 0.0
      %596 = vmatmul.mubr.f32.gmra.mrb[0].mxu0 %v228
      %v597 = vpop.f32.mrb[0].mxu0
      %v598 = vadd.f32 %v259, %v597
      %v599 = vpop.f32.mrb[0].mxu0
      %600 = vmatprep.mubr.f32.mxu0 0.0
      %601 = vmatmul.mubr.f32.gmra.mrb[0].mxu0 %v229
      %v602 = vpop.f32.mrb[0].mxu0
      %v603 = vadd.f32 %v259, %v602
      %v604 = vpop.f32.mrb[0].mxu0
      %605 = vmatprep.mubr.f32.mxu0 0.0
      %606 = vmatmul.mubr.f32.gmra.mrb[0].mxu0 %v230
      %v607 = vpop.f32.mrb[0].mxu0
      %v608 = vadd.f32 %v259, %v607
      %v609 = vpop.f32.mrb[0].mxu0
      %610 = vmatprep.mubr.f32.mxu0 0.0
      %611 = vmatmul.mubr.f32.gmra.mrb[0].mxu0 %v231
      %v612 = vpop.f32.mrb[0].mxu0
      %v613 = vadd.f32 %v259, %v612
      %v614 = vpop.f32.mrb[0].mxu0
      %615 = vmatprep.mubr.f32.mxu0 0.0
      %616 = vmatmul.mubr.f32.gmra.mrb[0].mxu0 %v232
      %v617 = vpop.f32.mrb[0].mxu0
      %v618 = vadd.f32 %v259, %v617
      %v619 = vpop.f32.mrb[0].mxu0
      %620 = vmatprep.mubr.f32.mxu0 0.0
      %621 = vmatmul.mubr.f32.gmra.mrb[0].mxu0 %v233
      %v622 = vpop.f32.mrb[0].mxu0
      %v623 = vadd.f32 %v259, %v622
      %v624 = vpop.f32.mrb[0].mxu0
      %625 = vmatprep.mubr.f32.mxu0 0.0
      %626 = vmatmul.mubr.f32.gmra.mrb[0].mxu0 %v234
      %v627 = vpop.f32.mrb[0].mxu0
      %v628 = vadd.f32 %v259, %v627
      %v629 = vpop.f32.mrb[0].mxu0
      %630 = vmatprep.mubr.f32.mxu0 0.0
      %631 = vmatmul.mubr.f32.gmra.mrb[0].mxu0 %v235
      %v632 = vpop.f32.mrb[0].mxu0
      %v633 = vadd.f32 %v259, %v632
      %v634 = vpop.f32.mrb[0].mxu0
      %635 = vmatprep.mubr.f32.mxu0 0.0
      %636 = vmatmul.mubr.f32.gmra.mrb[0].mxu0 %v236
      %v637 = vpop.f32.mrb[0].mxu0
      %v638 = vadd.f32 %v259, %v637
      %v639 = vpop.f32.mrb[0].mxu0
      %640 = vmatprep.mubr.f32.mxu0 0.0
      %641 = vmatmul.mubr.f32.gmra.mrb[0].mxu0 %v237
      %v642 = vpop.f32.mrb[0].mxu0
      %v643 = vadd.f32 %v259, %v642
      %v644 = vpop.f32.mrb[0].mxu0
      %645 = vdwg.mxu0
      %vm646 = vcmp.gt.f32.partialorder %v328, 0.0
      %vm647 = vcmp.gt.f32.partialorder %v333, 0.0
      %vm648 = vcmp.gt.f32.partialorder %v338, 0.0
      %vm649 = vcmp.gt.f32.partialorder %v343, 0.0
      %vm650 = vcmp.gt.f32.partialorder %v348, 0.0
      %vm651 = vcmp.gt.f32.partialorder %v353, 0.0
      %vm652 = vcmp.gt.f32.partialorder %v358, 0.0
      %vm653 = vcmp.gt.f32.partialorder %v363, 0.0
      %vm654 = vcmp.gt.f32.partialorder %v368, 0.0
      %vm655 = vcmp.gt.f32.partialorder %v373, 0.0
      %vm656 = vcmp.gt.f32.partialorder %v378, 0.0
      %vm657 = vcmp.gt.f32.partialorder %v383, 0.0
      %vm658 = vcmp.gt.f32.partialorder %v388, 0.0
      %vm659 = vcmp.gt.f32.partialorder %v393, 0.0
      %vm660 = vcmp.gt.f32.partialorder %v398, 0.0
      %vm661 = vcmp.gt.f32.partialorder %v403, 0.0
      %vm662 = vcmp.gt.f32.partialorder %v408, 0.0
      %vm663 = vcmp.gt.f32.partialorder %v413, 0.0
      %vm664 = vcmp.gt.f32.partialorder %v418, 0.0
      %vm665 = vcmp.gt.f32.partialorder %v423, 0.0
      %vm666 = vcmp.gt.f32.partialorder %v428, 0.0
      %vm667 = vcmp.gt.f32.partialorder %v433, 0.0
      %vm668 = vcmp.gt.f32.partialorder %v438, 0.0
      %vm669 = vcmp.gt.f32.partialorder %v443, 0.0
      %vm670 = vcmp.gt.f32.partialorder %v448, 0.0
      %vm671 = vcmp.gt.f32.partialorder %v453, 0.0
      %vm672 = vcmp.gt.f32.partialorder %v458, 0.0
      %vm673 = vcmp.gt.f32.partialorder %v463, 0.0
      %vm674 = vcmp.gt.f32.partialorder %v468, 0.0
      %vm675 = vcmp.gt.f32.partialorder %v473, 0.0
      %vm676 = vcmp.gt.f32.partialorder %v478, 0.0
      %vm677 = vcmp.gt.f32.partialorder %v483, 0.0
      %vm678 = vcmp.gt.f32.partialorder %v488, 0.0
      %vm679 = vcmp.gt.f32.partialorder %v493, 0.0
      %vm680 = vcmp.gt.f32.partialorder %v498, 0.0
      %vm681 = vcmp.gt.f32.partialorder %v503, 0.0
      %vm682 = vcmp.gt.f32.partialorder %v508, 0.0
      %vm683 = vcmp.gt.f32.partialorder %v513, 0.0
      %vm684 = vcmp.gt.f32.partialorder %v518, 0.0
      %vm685 = vcmp.gt.f32.partialorder %v523, 0.0
      %vm686 = vcmp.gt.f32.partialorder %v528, 0.0
      %vm687 = vcmp.gt.f32.partialorder %v533, 0.0
      %vm688 = vcmp.gt.f32.partialorder %v538, 0.0
      %vm689 = vcmp.gt.f32.partialorder %v543, 0.0
      %vm690 = vcmp.gt.f32.partialorder %v548, 0.0
      %vm691 = vcmp.gt.f32.partialorder %v553, 0.0
      %vm692 = vcmp.gt.f32.partialorder %v558, 0.0
      %vm693 = vcmp.gt.f32.partialorder %v563, 0.0
      %vm694 = vcmp.gt.f32.partialorder %v568, 0.0
      %vm695 = vcmp.gt.f32.partialorder %v573, 0.0
      %vm696 = vcmp.gt.f32.partialorder %v578, 0.0
      %vm697 = vcmp.gt.f32.partialorder %v583, 0.0
      %vm698 = vcmp.gt.f32.partialorder %v588, 0.0
      %vm699 = vcmp.gt.f32.partialorder %v593, 0.0
      %vm700 = vcmp.gt.f32.partialorder %v598, 0.0
      %vm701 = vcmp.gt.f32.partialorder %v603, 0.0
      %vm702 = vcmp.gt.f32.partialorder %v608, 0.0
      %vm703 = vcmp.gt.f32.partialorder %v613, 0.0
      %vm704 = vcmp.gt.f32.partialorder %v618, 0.0
      %vm705 = vcmp.gt.f32.partialorder %v623, 0.0
      %vm706 = vcmp.gt.f32.partialorder %v628, 0.0
      %vm707 = vcmp.gt.f32.partialorder %v633, 0.0
      %vm708 = vcmp.gt.f32.partialorder %v638, 0.0
      %vm709 = vcmp.gt.f32.partialorder %v643, 0.0
      %v710 = vmul.f32 %v328, 1.442695
      %v711 = vpow.pop %v710
      %v712 = vmul.f32 %v333, 1.442695
      %v713 = vpow.pop %v712
      %v714 = vmul.f32 %v338, 1.442695
      %v715 = vpow.pop %v714
      %v716 = vmul.f32 %v343, 1.442695
      %v717 = vpow.pop %v716
      %v718 = vmul.f32 %v348, 1.442695
      %v719 = vpow.pop %v718
      %v720 = vmul.f32 %v353, 1.442695
      %v721 = vpow.pop %v720
      %v722 = vmul.f32 %v358, 1.442695
      %v723 = vpow.pop %v722
      %v724 = vmul.f32 %v363, 1.442695
      %v725 = vpow.pop %v724
      %v726 = vmul.f32 %v368, 1.442695
      %v727 = vpow.pop %v726
      %v728 = vmul.f32 %v373, 1.442695
      %v729 = vpow.pop %v728
      %v730 = vmul.f32 %v378, 1.442695
      %v731 = vpow.pop %v730
      %v732 = vmul.f32 %v383, 1.442695
      %v733 = vpow.pop %v732
      %v734 = vmul.f32 %v388, 1.442695
      %v735 = vpow.pop %v734
      %v736 = vmul.f32 %v393, 1.442695
      %v737 = vpow.pop %v736
      %v738 = vmul.f32 %v398, 1.442695
      %v739 = vpow.pop %v738
      %v740 = vmul.f32 %v403, 1.442695
      %v741 = vpow.pop %v740
      %v742 = vmul.f32 %v408, 1.442695
      %v743 = vpow.pop %v742
      %v744 = vmul.f32 %v413, 1.442695
      %v745 = vpow.pop %v744
      %v746 = vmul.f32 %v418, 1.442695
      %v747 = vpow.pop %v746
      %v748 = vmul.f32 %v423, 1.442695
      %v749 = vpow.pop %v748
      %v750 = vmul.f32 %v428, 1.442695
      %v751 = vpow.pop %v750
      %v752 = vmul.f32 %v433, 1.442695
      %v753 = vpow.pop %v752
      %v754 = vmul.f32 %v438, 1.442695
      %v755 = vpow.pop %v754
      %v756 = vmul.f32 %v443, 1.442695
      %v757 = vpow.pop %v756
      %v758 = vmul.f32 %v448, 1.442695
      %v759 = vpow.pop %v758
      %v760 = vmul.f32 %v453, 1.442695
      %v761 = vpow.pop %v760
      %v762 = vmul.f32 %v458, 1.442695
      %v763 = vpow.pop %v762
      %v764 = vmul.f32 %v463, 1.442695
      %v765 = vpow.pop %v764
      %v766 = vmul.f32 %v468, 1.442695
      %v767 = vpow.pop %v766
      %v768 = vmul.f32 %v473, 1.442695
      %v769 = vpow.pop %v768
      %v770 = vmul.f32 %v478, 1.442695
      %v771 = vpow.pop %v770
      %v772 = vmul.f32 %v483, 1.442695
      %v773 = vpow.pop %v772
      %v774 = vmul.f32 %v488, 1.442695
      %v775 = vpow.pop %v774
      %v776 = vmul.f32 %v493, 1.442695
      %v777 = vpow.pop %v776
      %v778 = vmul.f32 %v498, 1.442695
      %v779 = vpow.pop %v778
      %v780 = vmul.f32 %v503, 1.442695
      %v781 = vpow.pop %v780
      %v782 = vmul.f32 %v508, 1.442695
      %v783 = vpow.pop %v782
      %v784 = vmul.f32 %v513, 1.442695
      %v785 = vpow.pop %v784
      %v786 = vmul.f32 %v518, 1.442695
      %v787 = vpow.pop %v786
      %v788 = vmul.f32 %v523, 1.442695
      %v789 = vpow.pop %v788
      %v790 = vmul.f32 %v528, 1.442695
      %v791 = vpow.pop %v790
      %v792 = vmul.f32 %v533, 1.442695
      %v793 = vpow.pop %v792
      %v794 = vmul.f32 %v538, 1.442695
      %v795 = vpow.pop %v794
      %v796 = vmul.f32 %v543, 1.442695
      %v797 = vpow.pop %v796
      %v798 = vmul.f32 %v548, 1.442695
      %v799 = vpow.pop %v798
      %v800 = vmul.f32 %v553, 1.442695
      %v801 = vpow.pop %v800
      %v802 = vmul.f32 %v558, 1.442695
      %v803 = vpow.pop %v802
      %v804 = vmul.f32 %v563, 1.442695
      %v805 = vpow.pop %v804
      %v806 = vmul.f32 %v568, 1.442695
      %v807 = vpow.pop %v806
      %v808 = vmul.f32 %v573, 1.442695
      %v809 = vpow.pop %v808
      %v810 = vmul.f32 %v578, 1.442695
      %v811 = vpow.pop %v810
      %v812 = vmul.f32 %v583, 1.442695
      %v813 = vpow.pop %v812
      %v814 = vmul.f32 %v588, 1.442695
      %v815 = vpow.pop %v814
      %v816 = vmul.f32 %v593, 1.442695
      %v817 = vpow.pop %v816
      %v818 = vmul.f32 %v598, 1.442695
      %v819 = vpow.pop %v818
      %v820 = vmul.f32 %v603, 1.442695
      %v821 = vpow.pop %v820
      %v822 = vmul.f32 %v608, 1.442695
      %v823 = vpow.pop %v822
      %v824 = vmul.f32 %v613, 1.442695
      %v825 = vpow.pop %v824
      %v826 = vmul.f32 %v618, 1.442695
      %v827 = vpow.pop %v826
      %v828 = vmul.f32 %v623, 1.442695
      %v829 = vpow.pop %v828
      %v830 = vmul.f32 %v628, 1.442695
      %v831 = vpow.pop %v830
      %v832 = vmul.f32 %v633, 1.442695
      %v833 = vpow.pop %v832
      %v834 = vmul.f32 %v638, 1.442695
      %v835 = vpow.pop %v834
      %v836 = vmul.f32 %v643, 1.442695
      %v837 = vpow.pop %v836
      %v838 = vsub.f32 %v711, 1.0
      %v839 = vsub.f32 %v713, 1.0
      %v840 = vsub.f32 %v715, 1.0
      %v841 = vsub.f32 %v717, 1.0
      %v842 = vsub.f32 %v719, 1.0
      %v843 = vsub.f32 %v721, 1.0
      %v844 = vsub.f32 %v723, 1.0
      %v845 = vsub.f32 %v725, 1.0
      %v846 = vsub.f32 %v727, 1.0
      %v847 = vsub.f32 %v729, 1.0
      %v848 = vsub.f32 %v731, 1.0
      %v849 = vsub.f32 %v733, 1.0
      %v850 = vsub.f32 %v735, 1.0
      %v851 = vsub.f32 %v737, 1.0
      %v852 = vsub.f32 %v739, 1.0
      %v853 = vsub.f32 %v741, 1.0
      %v854 = vsub.f32 %v743, 1.0
      %v855 = vsub.f32 %v745, 1.0
      %v856 = vsub.f32 %v747, 1.0
      %v857 = vsub.f32 %v749, 1.0
      %v858 = vsub.f32 %v751, 1.0
      %v859 = vsub.f32 %v753, 1.0
      %v860 = vsub.f32 %v755, 1.0
      %v861 = vsub.f32 %v757, 1.0
      %v862 = vsub.f32 %v759, 1.0
      %v863 = vsub.f32 %v761, 1.0
      %v864 = vsub.f32 %v763, 1.0
      %v865 = vsub.f32 %v765, 1.0
      %v866 = vsub.f32 %v767, 1.0
      %v867 = vsub.f32 %v769, 1.0
      %v868 = vsub.f32 %v771, 1.0
      %v869 = vsub.f32 %v773, 1.0
      %v870 = vsub.f32 %v775, 1.0
      %v871 = vsub.f32 %v777, 1.0
      %v872 = vsub.f32 %v779, 1.0
      %v873 = vsub.f32 %v781, 1.0
      %v874 = vsub.f32 %v783, 1.0
      %v875 = vsub.f32 %v785, 1.0
      %v876 = vsub.f32 %v787, 1.0
      %v877 = vsub.f32 %v789, 1.0
      %v878 = vsub.f32 %v791, 1.0
      %v879 = vsub.f32 %v793, 1.0
      %v880 = vsub.f32 %v795, 1.0
      %v881 = vsub.f32 %v797, 1.0
      %v882 = vsub.f32 %v799, 1.0
      %v883 = vsub.f32 %v801, 1.0
      %v884 = vsub.f32 %v803, 1.0
      %v885 = vsub.f32 %v805, 1.0
      %v886 = vsub.f32 %v807, 1.0
      %v887 = vsub.f32 %v809, 1.0
      %v888 = vsub.f32 %v811, 1.0
      %v889 = vsub.f32 %v813, 1.0
      %v890 = vsub.f32 %v815, 1.0
      %v891 = vsub.f32 %v817, 1.0
      %v892 = vsub.f32 %v819, 1.0
      %v893 = vsub.f32 %v821, 1.0
      %v894 = vsub.f32 %v823, 1.0
      %v895 = vsub.f32 %v825, 1.0
      %v896 = vsub.f32 %v827, 1.0
      %v897 = vsub.f32 %v829, 1.0
      %v898 = vsub.f32 %v831, 1.0
      %v899 = vsub.f32 %v833, 1.0
      %v900 = vsub.f32 %v835, 1.0
      %v901 = vsub.f32 %v837, 1.0
      %v902 = vmul.f32 %v838, 1.6732632
      %v903 = vmul.f32 %v839, 1.6732632
      %v904 = vmul.f32 %v840, 1.6732632
      %v905 = vmul.f32 %v841, 1.6732632
      %v906 = vmul.f32 %v842, 1.6732632
      %v907 = vmul.f32 %v843, 1.6732632
      %v908 = vmul.f32 %v844, 1.6732632
      %v909 = vmul.f32 %v845, 1.6732632
      %v910 = vmul.f32 %v846, 1.6732632
      %v911 = vmul.f32 %v847, 1.6732632
      %v912 = vmul.f32 %v848, 1.6732632
      %v913 = vmul.f32 %v849, 1.6732632
      %v914 = vmul.f32 %v850, 1.6732632
      %v915 = vmul.f32 %v851, 1.6732632
      %v916 = vmul.f32 %v852, 1.6732632
      %v917 = vmul.f32 %v853, 1.6732632
      %v918 = vmul.f32 %v854, 1.6732632
      %v919 = vmul.f32 %v855, 1.6732632
      %v920 = vmul.f32 %v856, 1.6732632
      %v921 = vmul.f32 %v857, 1.6732632
      %v922 = vmul.f32 %v858, 1.6732632
      %v923 = vmul.f32 %v859, 1.6732632
      %v924 = vmul.f32 %v860, 1.6732632
      %v925 = vmul.f32 %v861, 1.6732632
      %v926 = vmul.f32 %v862, 1.6732632
      %v927 = vmul.f32 %v863, 1.6732632
      %v928 = vmul.f32 %v864, 1.6732632
      %v929 = vmul.f32 %v865, 1.6732632
      %v930 = vmul.f32 %v866, 1.6732632
      %v931 = vmul.f32 %v867, 1.6732632
      %v932 = vmul.f32 %v868, 1.6732632
      %v933 = vmul.f32 %v869, 1.6732632
      %v934 = vmul.f32 %v870, 1.6732632
      %v935 = vmul.f32 %v871, 1.6732632
      %v936 = vmul.f32 %v872, 1.6732632
      %v937 = vmul.f32 %v873, 1.6732632
      %v938 = vmul.f32 %v874, 1.6732632
      %v939 = vmul.f32 %v875, 1.6732632
      %v940 = vmul.f32 %v876, 1.6732632
      %v941 = vmul.f32 %v877, 1.6732632
      %v942 = vmul.f32 %v878, 1.6732632
      %v943 = vmul.f32 %v879, 1.6732632
      %v944 = vmul.f32 %v880, 1.6732632
      %v945 = vmul.f32 %v881, 1.6732632
      %v946 = vmul.f32 %v882, 1.6732632
      %v947 = vmul.f32 %v883, 1.6732632
      %v948 = vmul.f32 %v884, 1.6732632
      %v949 = vmul.f32 %v885, 1.6732632
      %v950 = vmul.f32 %v886, 1.6732632
      %v951 = vmul.f32 %v887, 1.6732632
      %v952 = vmul.f32 %v888, 1.6732632
      %v953 = vmul.f32 %v889, 1.6732632
      %v954 = vmul.f32 %v890, 1.6732632
      %v955 = vmul.f32 %v891, 1.6732632
      %v956 = vmul.f32 %v892, 1.6732632
      %v957 = vmul.f32 %v893, 1.6732632
      %v958 = vmul.f32 %v894, 1.6732632
      %v959 = vmul.f32 %v895, 1.6732632
      %v960 = vmul.f32 %v896, 1.6732632
      %v961 = vmul.f32 %v897, 1.6732632
      %v962 = vmul.f32 %v898, 1.6732632
      %v963 = vmul.f32 %v899, 1.6732632
      %v964 = vmul.f32 %v900, 1.6732632
      %v965 = vmul.f32 %v901, 1.6732632
      %v966 = vsel %vm646, %v328, %v902
      %v967 = vsel %vm647, %v333, %v903
      %v968 = vsel %vm648, %v338, %v904
      %v969 = vsel %vm649, %v343, %v905
      %v970 = vsel %vm650, %v348, %v906
      %v971 = vsel %vm651, %v353, %v907
      %v972 = vsel %vm652, %v358, %v908
      %v973 = vsel %vm653, %v363, %v909
      %v974 = vsel %vm654, %v368, %v910
      %v975 = vsel %vm655, %v373, %v911
      %v976 = vsel %vm656, %v378, %v912
      %v977 = vsel %vm657, %v383, %v913
      %v978 = vsel %vm658, %v388, %v914
      %v979 = vsel %vm659, %v393, %v915
      %v980 = vsel %vm660, %v398, %v916
      %v981 = vsel %vm661, %v403, %v917
      %v982 = vsel %vm662, %v408, %v918
      %v983 = vsel %vm663, %v413, %v919
      %v984 = vsel %vm664, %v418, %v920
      %v985 = vsel %vm665, %v423, %v921
      %v986 = vsel %vm666, %v428, %v922
      %v987 = vsel %vm667, %v433, %v923
      %v988 = vsel %vm668, %v438, %v924
      %v989 = vsel %vm669, %v443, %v925
      %v990 = vsel %vm670, %v448, %v926
      %v991 = vsel %vm671, %v453, %v927
      %v992 = vsel %vm672, %v458, %v928
      %v993 = vsel %vm673, %v463, %v929
      %v994 = vsel %vm674, %v468, %v930
      %v995 = vsel %vm675, %v473, %v931
      %v996 = vsel %vm676, %v478, %v932
      %v997 = vsel %vm677, %v483, %v933
      %v998 = vsel %vm678, %v488, %v934
      %v999 = vsel %vm679, %v493, %v935
      %v1000 = vsel %vm680, %v498, %v936
      %v1001 = vsel %vm681, %v503, %v937
      %v1002 = vsel %vm682, %v508, %v938
      %v1003 = vsel %vm683, %v513, %v939
      %v1004 = vsel %vm684, %v518, %v940
      %v1005 = vsel %vm685, %v523, %v941
      %v1006 = vsel %vm686, %v528, %v942
      %v1007 = vsel %vm687, %v533, %v943
      %v1008 = vsel %vm688, %v538, %v944
      %v1009 = vsel %vm689, %v543, %v945
      %v1010 = vsel %vm690, %v548, %v946
      %v1011 = vsel %vm691, %v553, %v947
      %v1012 = vsel %vm692, %v558, %v948
      %v1013 = vsel %vm693, %v563, %v949
      %v1014 = vsel %vm694, %v568, %v950
      %v1015 = vsel %vm695, %v573, %v951
      %v1016 = vsel %vm696, %v578, %v952
      %v1017 = vsel %vm697, %v583, %v953
      %v1018 = vsel %vm698, %v588, %v954
      %v1019 = vsel %vm699, %v593, %v955
      %v1020 = vsel %vm700, %v598, %v956
      %v1021 = vsel %vm701, %v603, %v957
      %v1022 = vsel %vm702, %v608, %v958
      %v1023 = vsel %vm703, %v613, %v959
      %v1024 = vsel %vm704, %v618, %v960
      %v1025 = vsel %vm705, %v623, %v961
      %v1026 = vsel %vm706, %v628, %v962
      %v1027 = vsel %vm707, %v633, %v963
      %v1028 = vsel %vm708, %v638, %v964
      %v1029 = vsel %vm709, %v643, %v965
      %v1030 = vmul.f32 %v966, 1.050701
      %v1031 = vmul.f32 %v967, 1.050701
      %v1032 = vmul.f32 %v968, 1.050701
      %v1033 = vmul.f32 %v969, 1.050701
      %v1034 = vmul.f32 %v970, 1.050701
      %v1035 = vmul.f32 %v971, 1.050701
      %v1036 = vmul.f32 %v972, 1.050701
      %v1037 = vmul.f32 %v973, 1.050701
      %v1038 = vmul.f32 %v974, 1.050701
      %v1039 = vmul.f32 %v975, 1.050701
      %v1040 = vmul.f32 %v976, 1.050701
      %v1041 = vmul.f32 %v977, 1.050701
      %v1042 = vmul.f32 %v978, 1.050701
      %v1043 = vmul.f32 %v979, 1.050701
      %v1044 = vmul.f32 %v980, 1.050701
      %v1045 = vmul.f32 %v981, 1.050701
      %v1046 = vmul.f32 %v982, 1.050701
      %v1047 = vmul.f32 %v983, 1.050701
      %v1048 = vmul.f32 %v984, 1.050701
      %v1049 = vmul.f32 %v985, 1.050701
      %v1050 = vmul.f32 %v986, 1.050701
      %v1051 = vmul.f32 %v987, 1.050701
      %v1052 = vmul.f32 %v988, 1.050701
      %v1053 = vmul.f32 %v989, 1.050701
      %v1054 = vmul.f32 %v990, 1.050701
      %v1055 = vmul.f32 %v991, 1.050701
      %v1056 = vmul.f32 %v992, 1.050701
      %v1057 = vmul.f32 %v993, 1.050701
      %v1058 = vmul.f32 %v994, 1.050701
      %v1059 = vmul.f32 %v995, 1.050701
      %v1060 = vmul.f32 %v996, 1.050701
      %v1061 = vmul.f32 %v997, 1.050701
      %v1062 = vmul.f32 %v998, 1.050701
      %v1063 = vmul.f32 %v999, 1.050701
      %v1064 = vmul.f32 %v1000, 1.050701
      %v1065 = vmul.f32 %v1001, 1.050701
      %v1066 = vmul.f32 %v1002, 1.050701
      %v1067 = vmul.f32 %v1003, 1.050701
      %v1068 = vmul.f32 %v1004, 1.050701
      %v1069 = vmul.f32 %v1005, 1.050701
      %v1070 = vmul.f32 %v1006, 1.050701
      %v1071 = vmul.f32 %v1007, 1.050701
      %v1072 = vmul.f32 %v1008, 1.050701
      %v1073 = vmul.f32 %v1009, 1.050701
      %v1074 = vmul.f32 %v1010, 1.050701
      %v1075 = vmul.f32 %v1011, 1.050701
      %v1076 = vmul.f32 %v1012, 1.050701
      %v1077 = vmul.f32 %v1013, 1.050701
      %v1078 = vmul.f32 %v1014, 1.050701
      %v1079 = vmul.f32 %v1015, 1.050701
      %v1080 = vmul.f32 %v1016, 1.050701
      %v1081 = vmul.f32 %v1017, 1.050701
      %v1082 = vmul.f32 %v1018, 1.050701
      %v1083 = vmul.f32 %v1019, 1.050701
      %v1084 = vmul.f32 %v1020, 1.050701
      %v1085 = vmul.f32 %v1021, 1.050701
      %v1086 = vmul.f32 %v1022, 1.050701
      %v1087 = vmul.f32 %v1023, 1.050701
      %v1088 = vmul.f32 %v1024, 1.050701
      %v1089 = vmul.f32 %v1025, 1.050701
      %v1090 = vmul.f32 %v1026, 1.050701
      %v1091 = vmul.f32 %v1027, 1.050701
      %v1092 = vmul.f32 %v1028, 1.050701
      %v1093 = vmul.f32 %v1029, 1.050701
      %1094 = vst [vmem:[%s172] sm:$0xff] %v1030
      %1095 = vst [vmem:[%s172 + $0x8] sm:$0xff] %v1031
      %1096 = vst [vmem:[%s172 + $0x10] sm:$0xff] %v1032
      %1097 = vst [vmem:[%s172 + $0x18] sm:$0xff] %v1033
      %1098 = vst [vmem:[%s172 + $0x20] sm:$0xff] %v1034
      %1099 = vst [vmem:[%s172 + $0x28] sm:$0xff] %v1035
      %1100 = vst [vmem:[%s172 + $0x30] sm:$0xff] %v1036
      %1101 = vst [vmem:[%s172 + $0x38] sm:$0xff] %v1037
      %1102 = vst [vmem:[%s172 + $0x40] sm:$0xff] %v1038
      %1103 = vst [vmem:[%s172 + $0x48] sm:$0xff] %v1039
      %1104 = vst [vmem:[%s172 + $0x50] sm:$0xff] %v1040
      %1105 = vst [vmem:[%s172 + $0x58] sm:$0xff] %v1041
      %1106 = vst [vmem:[%s172 + $0x60] sm:$0xff] %v1042
      %1107 = vst [vmem:[%s172 + $0x68] sm:$0xff] %v1043
      %1108 = vst [vmem:[%s172 + $0x70] sm:$0xff] %v1044
      %1109 = vst [vmem:[%s172 + $0x78] sm:$0xff] %v1045
      %1110 = vst [vmem:[%s172 + $0x80] sm:$0xff] %v1046
      %1111 = vst [vmem:[%s172 + $0x88] sm:$0xff] %v1047
      %1112 = vst [vmem:[%s172 + $0x90] sm:$0xff] %v1048
      %1113 = vst [vmem:[%s172 + $0x98] sm:$0xff] %v1049
      %1114 = vst [vmem:[%s172 + $0xa0] sm:$0xff] %v1050
      %1115 = vst [vmem:[%s172 + $0xa8] sm:$0xff] %v1051
      %1116 = vst [vmem:[%s172 + $0xb0] sm:$0xff] %v1052
      %1117 = vst [vmem:[%s172 + $0xb8] sm:$0xff] %v1053
      %1118 = vst [vmem:[%s172 + $0xc0] sm:$0xff] %v1054
      %1119 = vst [vmem:[%s172 + $0xc8] sm:$0xff] %v1055
      %1120 = vst [vmem:[%s172 + $0xd0] sm:$0xff] %v1056
      %1121 = vst [vmem:[%s172 + $0xd8] sm:$0xff] %v1057
      %1122 = vst [vmem:[%s172 + $0xe0] sm:$0xff] %v1058
      %1123 = vst [vmem:[%s172 + $0xe8] sm:$0xff] %v1059
      %1124 = vst [vmem:[%s172 + $0xf0] sm:$0xff] %v1060
      %1125 = vst [vmem:[%s172 + $0xf8] sm:$0xff] %v1061
      %1126 = vst [vmem:[%s172 + $0x100] sm:$0xff] %v1062
      %1127 = vst [vmem:[%s172 + $0x108] sm:$0xff] %v1063
      %1128 = vst [vmem:[%s172 + $0x110] sm:$0xff] %v1064
      %1129 = vst [vmem:[%s172 + $0x118] sm:$0xff] %v1065
      %1130 = vst [vmem:[%s172 + $0x120] sm:$0xff] %v1066
      %1131 = vst [vmem:[%s172 + $0x128] sm:$0xff] %v1067
      %1132 = vst [vmem:[%s172 + $0x130] sm:$0xff] %v1068
      %1133 = vst [vmem:[%s172 + $0x138] sm:$0xff] %v1069
      %1134 = vst [vmem:[%s172 + $0x140] sm:$0xff] %v1070
      %1135 = vst [vmem:[%s172 + $0x148] sm:$0xff] %v1071
      %1136 = vst [vmem:[%s172 + $0x150] sm:$0xff] %v1072
      %1137 = vst [vmem:[%s172 + $0x158] sm:$0xff] %v1073
      %1138 = vst [vmem:[%s172 + $0x160] sm:$0xff] %v1074
      %1139 = vst [vmem:[%s172 + $0x168] sm:$0xff] %v1075
      %1140 = vst [vmem:[%s172 + $0x170] sm:$0xff] %v1076
      %1141 = vst [vmem:[%s172 + $0x178] sm:$0xff] %v1077
      %1142 = vst [vmem:[%s172 + $0x180] sm:$0xff] %v1078
      %1143 = vst [vmem:[%s172 + $0x188] sm:$0xff] %v1079
      %1144 = vst [vmem:[%s172 + $0x190] sm:$0xff] %v1080
      %1145 = vst [vmem:[%s172 + $0x198] sm:$0xff] %v1081
      %1146 = vst [vmem:[%s172 + $0x1a0] sm:$0xff] %v1082
      %1147 = vst [vmem:[%s172 + $0x1a8] sm:$0xff] %v1083
      %1148 = vst [vmem:[%s172 + $0x1b0] sm:$0xff] %v1084
      %1149 = vst [vmem:[%s172 + $0x1b8] sm:$0xff] %v1085
      %1150 = vst [vmem:[%s172 + $0x1c0] sm:$0xff] %v1086
      %1151 = vst [vmem:[%s172 + $0x1c8] sm:$0xff] %v1087
      %1152 = vst [vmem:[%s172 + $0x1d0] sm:$0xff] %v1088
      %1153 = vst [vmem:[%s172 + $0x1d8] sm:$0xff] %v1089
      %1154 = vst [vmem:[%s172 + $0x1e0] sm:$0xff] %v1090
      %1155 = vst [vmem:[%s172 + $0x1e8] sm:$0xff] %v1091
      %1156 = vst [vmem:[%s172 + $0x1f0] sm:$0xff] %v1092
      %1157 = vst [vmem:[%s172 + $0x1f8] sm:$0xff] %v1093
      %s1158 = smul.u32 64, %s14
      %p1159 = scmp.lt.s32.totalorder %s1158, 447
      %s1160 = scalar_select %p1159, %s1158, 447
      %s1161 = smul.addr %s1160, 8
      %s1162 = scalar_lea.vmem %s3, %s1161
      // Predicated region
      $region33: #{dueling_dqn_forward.6} parent=31 // pred_check
        %p1163 = pneg %p100
      $region34: #{dueling_dqn_forward.6} parent=31 // pred_check_branch
        %1165 = sbr.rel (%p1163) target = $region36
      $region35: #{dueling_dqn_forward.6} parent=31 // pred_region
        %s1166 = smul.u32 64, %s14
      $region36: #{dueling_dqn_forward.6} parent=31 // pred_fallthru
        _
    $region32: #{dueling_dqn_forward.6} parent=5 // pred_fallthru
      _
    %p1167 = scmp.le.s32.totalorder 2, %s9
    // Predicated region
    $region37: #{dueling_dqn_forward.6} parent=5 // pred_check
      %p1168 = pneg %p1167
    $region38: #{dueling_dqn_forward.6} parent=5 // pred_check_branch
      %1170 = sbr.rel (%p1168) target = $region40
    $region39: #{dueling_dqn_forward.6} parent=5 // pred_region
      %s1171 = ssub.s32 %s9, 2
      // Predicated region
      $region41: #{dueling_dqn_forward.6} parent=39 // pred_check
        %p1172 = pneg %p106
      $region42: #{dueling_dqn_forward.6} parent=39 // pred_check_branch
        %1174 = sbr.rel (%p1172) target = $region44
      $region43: #{dueling_dqn_forward.6} parent=39 // pred_region
        %s1175 = smul.u32 64, %s15
        %p1176 = scmp.lt.s32.totalorder %s1175, 447
        %s1177 = scalar_select %p1176, %s1175, 447
        %s1178 = smul.addr %s1177, 8
        %s1179 = scalar_lea.vmem %s3, %s1178
      $region44: #{dueling_dqn_forward.6} parent=39 // pred_fallthru
        _
    $region40: #{dueling_dqn_forward.6} parent=5 // pred_fallthru
      _
  $region6: #{dueling_dqn_forward.6} parent=0 // loop_footer
    %s13 = sadd.s32 1, %s9
  $region7: #{dueling_dqn_forward.6} parent=0 // loop_footer_branch
    %8 = sbr.rel target = $region3
  $region8: #{dueling_dqn_forward.6} parent=0 // loop_exit
    _

// kernel: dueling_dqn_forward.7
$region0: #{dueling_dqn_forward.7}
  #allocation0 [shape = 'u32[]', space=smem, size = 0x4, offset = 0x4, fixed_abs, tag = 'smem constant byte address 0x4 - core index']
  #allocation1 [shape = 'u32[144,128]{1,0:T(1,128)}', space=vmem, size = 0x12000, scoped, tag = 'internal scratch']
  %s0 = inlined_call_operand.vmem [shape: f32[1024,896], index: 0, kind: input, shape index: {}]
  %s1 = inlined_call_operand.vmem [shape: f32[896,128], index: 1, kind: input, shape index: {}]
  %s2 = inlined_call_operand.vmem [shape: f32[1,128], index: 2, kind: input, shape index: {}]
  %s3 = inlined_call_operand.vmem [shape: f32[1024,128], index: 3, kind: output, shape index: {}]
  %s4 = sld [smem:[#allocation0]]
  $region45: #{dueling_dqn_forward.7} parent=0
    _
  %s6 = ssub.s32 1, %s4
  %s7 = scalar_select 0, %s6, %s4
  loop: start=0, step=1, limit=4
  $region2: #{dueling_dqn_forward.7} parent=0 // loop_pre_header
    _
  $region3: #{dueling_dqn_forward.7} parent=0 // loop_header
    %s9 = sphi 0, %s13
    %p10 = scmp.ge.s32.totalorder %s9, 4
    %s19 = sphi 0, %s21
    %s22 = sphi 0, %s19
    %s23 = sphi 0, %s22
    %s39 = sphi 0, %s23
    %s43 = sphi 0, %s43
    %s45 = sphi 0, %s43
    %s46 = sphi 0, %s45
    %s60 = sphi 0, %s46
    %s64 = sphi 0, %s64
    %s66 = sphi 0, %s64
    %s67 = sphi 0, %s66
    %s81 = sphi 0, %s67
    %s87 = sphi 0, %s89
    %s90 = sphi 0, %s87
    %s91 = sphi 0, %s90
    %s107 = sphi 0, %s91
  $region4: #{dueling_dqn_forward.7} parent=0 // loop_header_branch
    %12 = sbr.rel (%p10) target = $region8
  $region5: #{dueling_dqn_forward.7} parent=0 // loop_body
    %s14 = ssub.s32 %s9, 1
    %s15 = ssub.s32 %s9, 2
    %s16 = sadd.s32 %s9, 1
    %s17 = ssub.s32 %s9, %s16
    %p18 = scmp.eq.s32.totalorder %s17, 0
    %s20 = sadd.s32 %s19, 1
    %s21 = scalar_select %p18, %s19, %s20
    %p24 = pneg %p18
    %p25 = scmp.eq.s32.totalorder %s9, 1
    %p26 = por %p24, %p25
    %p27 = scmp.ne.s32.totalorder %s19, %s22
    %p28 = scmp.eq.s32.totalorder %s9, 0
    %p29 = por %p27, %p28
    %p30 = scmp.ne.s32.totalorder %s19, %s22
    %p31 = scmp.eq.s32.totalorder %s14, 1
    %p32 = por %p30, %p31
    %p33 = scmp.ne.s32.totalorder %s22, %s23
    %p34 = scmp.eq.s32.totalorder %s14, 0
    %p35 = por %p33, %p34
    %p36 = scmp.ne.s32.totalorder %s22, %s23
    %p37 = scmp.eq.s32.totalorder %s15, 1
    %p38 = por %p36, %p37
    %p40 = scmp.ne.s32.totalorder %s23, %s39
    %p41 = scmp.eq.s32.totalorder %s15, 0
    %p42 = por %p40, %p41
    %s44 = sadd.s32 %s43, 1
    %p47 = scmp.eq.s32.totalorder %s9, 1
    %p48 = scmp.ne.s32.totalorder %s43, %s45
    %p49 = scmp.eq.s32.totalorder %s9, 0
    %p50 = por %p48, %p49
    %p51 = scmp.ne.s32.totalorder %s43, %s45
    %p52 = scmp.eq.s32.totalorder %s14, 1
    %p53 = por %p51, %p52
    %p54 = scmp.ne.s32.totalorder %s45, %s46
    %p55 = scmp.eq.s32.totalorder %s14, 0
    %p56 = por %p54, %p55
    %p57 = scmp.ne.s32.totalorder %s45, %s46
    %p58 = scmp.eq.s32.totalorder %s15, 1
    %p59 = por %p57, %p58
    %p61 = scmp.ne.s32.totalorder %s46, %s60
    %p62 = scmp.eq.s32.totalorder %s15, 0
    %p63 = por %p61, %p62
    %s65 = sadd.s32 %s64, 1
    %p68 = scmp.eq.s32.totalorder %s9, 1
    %p69 = scmp.ne.s32.totalorder %s64, %s66
    %p70 = scmp.eq.s32.totalorder %s9, 0
    %p71 = por %p69, %p70
    %p72 = scmp.ne.s32.totalorder %s64, %s66
    %p73 = scmp.eq.s32.totalorder %s14, 1
    %p74 = por %p72, %p73
    %p75 = scmp.ne.s32.totalorder %s66, %s67
    %p76 = scmp.eq.s32.totalorder %s14, 0
    %p77 = por %p75, %p76
    %p78 = scmp.ne.s32.totalorder %s66, %s67
    %p79 = scmp.eq.s32.totalorder %s15, 1
    %p80 = por %p78, %p79
    %p82 = scmp.ne.s32.totalorder %s67, %s81
    %p83 = scmp.eq.s32.totalorder %s15, 0
    %p84 = por %p82, %p83
    %s85 = ssub.s32 %s9, %s16
    %p86 = scmp.eq.s32.totalorder %s85, 0
    %s88 = sadd.s32 %s87, 1
    %s89 = scalar_select %p86, %s87, %s88
    %p92 = pneg %p86
    %p93 = scmp.eq.s32.totalorder %s9, 1
    %p94 = por %p92, %p93
    %p95 = scmp.ne.s32.totalorder %s87, %s90
    %p96 = scmp.eq.s32.totalorder %s9, 0
    %p97 = por %p95, %p96
    %p98 = scmp.ne.s32.totalorder %s87, %s90
    %p99 = scmp.eq.s32.totalorder %s14, 1
    %p100 = por %p98, %p99
    %p101 = scmp.ne.s32.totalorder %s90, %s91
    %p102 = scmp.eq.s32.totalorder %s14, 0
    %p103 = por %p101, %p102
    %p104 = scmp.ne.s32.totalorder %s90, %s91
    %p105 = scmp.eq.s32.totalorder %s15, 1
    %p106 = por %p104, %p105
    %p108 = scmp.ne.s32.totalorder %s91, %s107
    %p109 = scmp.eq.s32.totalorder %s15, 0
    %p110 = por %p108, %p109
    %p111 = scmp.le.s32.totalorder 1, %s9
    %p112 = scmp.lt.s32.totalorder %s9, 3
    %p113 = pnand %p111, %p112
    %p114 = pneg %p113
    // Predicated region
    $region9: #{dueling_dqn_forward.7} parent=5 // pred_check
      _
    $region10: #{dueling_dqn_forward.7} parent=5 // pred_check_branch
      %116 = sbr.rel (%p113) target = $region12
    $region11: #{dueling_dqn_forward.7} parent=5 // pred_region
      %s117 = ssub.s32 %s9, 1
      // Predicated region
      $region13: #{dueling_dqn_forward.7} parent=11 // pred_check
        %p118 = pneg %p56
      $region14: #{dueling_dqn_forward.7} parent=11 // pred_check_branch
        %120 = sbr.rel (%p118) target = $region16
      $region15: #{dueling_dqn_forward.7} parent=11 // pred_region
        _
      $region16: #{dueling_dqn_forward.7} parent=11 // pred_fallthru
        _
      // Predicated region
      $region17: #{dueling_dqn_forward.7} parent=11 // pred_check
        %p121 = pneg %p77
      $region18: #{dueling_dqn_forward.7} parent=11 // pred_check_branch
        %123 = sbr.rel (%p121) target = $region20
      $region19: #{dueling_dqn_forward.7} parent=11 // pred_region
        _
      $region20: #{dueling_dqn_forward.7} parent=11 // pred_fallthru
        _
    $region12: #{dueling_dqn_forward.7} parent=5 // pred_fallthru
      _
    %p124 = scmp.lt.s32.totalorder %s9, 2
    // Predicated region
    $region21: #{dueling_dqn_forward.7} parent=5 // pred_check
      %p125 = pneg %p124
    $region22: #{dueling_dqn_forward.7} parent=5 // pred_check_branch
      %127 = sbr.rel (%p125) target = $region24
    $region23: #{dueling_dqn_forward.7} parent=5 // pred_region
      // Predicated region
      $region25: #{dueling_dqn_forward.7} parent=23 // pred_check
        %p128 = pneg %p29
      $region26: #{dueling_dqn_forward.7} parent=23 // pred_check_branch
        %130 = sbr.rel (%p128) target = $region28
      $region27: #{dueling_dqn_forward.7} parent=23 // pred_region
        %s131 = smul.u32 64, %s9
        %p132 = scmp.lt.s32.totalorder %s131, 127
        %s133 = scalar_select %p132, %s131, 127
        %s134 = smul.addr %s133, 7
        %s135 = smul.addr %s134, 8
        %s136 = scalar_lea.vmem %s0, %s135
        %s137 = smul.u32 64, %s9
      $region28: #{dueling_dqn_forward.7} parent=23 // pred_fallthru
        _
    $region24: #{dueling_dqn_forward.7} parent=5 // pred_fallthru
      _
    %p138 = scmp.le.s32.totalorder 1, %s9
    %p139 = scmp.lt.s32.totalorder %s9, 3
    %p140 = pnand %p138, %p139
    %p141 = pneg %p140
    // Predicated region
    $region29: #{dueling_dqn_forward.7} parent=5 // pred_check
      _
    $region30: #{dueling_dqn_forward.7} parent=5 // pred_check_branch
      %143 = sbr.rel (%p140) target = $region32
    $region31: #{dueling_dqn_forward.7} parent=5 // pred_region
      %s144 = ssub.s32 %s9, 1
      %s145 = smul.u32 64, %s14
      %p146 = scmp.lt.s32.totalorder %s145, 127
      %s147 = scalar_select %p146, %s145, 127
      %s148 = smul.addr %s147, 7
      %s149 = smul.addr %s148, 8
      %s150 = scalar_lea.vmem %s0, %s149
      %p151 = pneg %p35
      %p152 = pneg %p32
      %p153 = pneg %p56
      %p154 = pneg %p53
      %p155 = pneg %p77
      %p156 = pneg %p74
      %p157 = pneg %p103
      %p158 = pneg %p100
      %s159 = smul.u32 64, %s14
      %p160 = scmp.lt.s32.totalorder %s159, 127
      %s161 = scalar_select %p160, %s159, 127
      %s162 = smul.addr %s161, 8
      %s163 = scalar_lea.vmem %s3, %s162
      %s164 = smul.u32 64, %s14
      %p165 = scmp.lt.s32.totalorder %s164, 127
      %s166 = scalar_select %p165, %s164, 127
      %s167 = smul.addr %s166, 7
      %s168 = smul.addr %s167, 8
      %s169 = scalar_lea.vmem %s0, %s168
      %s170 = smul.u32 64, %s14
      %s171 = smul.u32 64, %s14
      %p172 = scmp.lt.s32.totalorder %s171, 127
      %s173 = scalar_select %p172, %s171, 127
      %s174 = smul.addr %s173, 8
      %s175 = scalar_lea.vmem %s3, %s174
      %s176 = smul.u32 64, %s14
      %v177 = vld [vmem:[%s169] sm:$0xff]
      %v178 = vld [vmem:[%s169 + $0x8] sm:$0xff]
      %v179 = vld [vmem:[%s169 + $0x10] sm:$0xff]
      %v180 = vld [vmem:[%s169 + $0x18] sm:$0xff]
      %v181 = vld [vmem:[%s169 + $0x20] sm:$0xff]
      %v182 = vld [vmem:[%s169 + $0x28] sm:$0xff]
      %v183 = vld [vmem:[%s169 + $0x30] sm:$0xff]
      %v184 = vld [vmem:[%s169 + $0x38] sm:$0xff]
      %v185 = vld [vmem:[%s169 + $0x40] sm:$0xff]
      %v186 = vld [vmem:[%s169 + $0x48] sm:$0xff]
      %v187 = vld [vmem:[%s169 + $0x50] sm:$0xff]
      %v188 = vld [vmem:[%s169 + $0x58] sm:$0xff]
      %v189 = vld [vmem:[%s169 + $0x60] sm:$0xff]
      %v190 = vld [vmem:[%s169 + $0x68] sm:$0xff]
      %v191 = vld [vmem:[%s169 + $0x70] sm:$0xff]
      %v192 = vld [vmem:[%s169 + $0x78] sm:$0xff]
      %v193 = vld [vmem:[%s169 + $0x80] sm:$0xff]
      %v194 = vld [vmem:[%s169 + $0x88] sm:$0xff]
      %v195 = vld [vmem:[%s169 + $0x90] sm:$0xff]
      %v196 = vld [vmem:[%s169 + $0x98] sm:$0xff]
      %v197 = vld [vmem:[%s169 + $0xa0] sm:$0xff]
      %v198 = vld [vmem:[%s169 + $0xa8] sm:$0xff]
      %v199 = vld [vmem:[%s169 + $0xb0] sm:$0xff]
      %v200 = vld [vmem:[%s169 + $0xb8] sm:$0xff]
      %v201 = vld [vmem:[%s169 + $0xc0] sm:$0xff]
      %v202 = vld [vmem:[%s169 + $0xc8] sm:$0xff]
      %v203 = vld [vmem:[%s169 + $0xd0] sm:$0xff]
      %v204 = vld [vmem:[%s169 + $0xd8] sm:$0xff]
      %v205 = vld [vmem:[%s169 + $0xe0] sm:$0xff]
      %v206 = vld [vmem:[%s169 + $0xe8] sm:$0xff]
      %v207 = vld [vmem:[%s169 + $0xf0] sm:$0xff]
      %v208 = vld [vmem:[%s169 + $0xf8] sm:$0xff]
      %v209 = vld [vmem:[%s169 + $0x100] sm:$0xff]
      %v210 = vld [vmem:[%s169 + $0x108] sm:$0xff]
      %v211 = vld [vmem:[%s169 + $0x110] sm:$0xff]
      %v212 = vld [vmem:[%s169 + $0x118] sm:$0xff]
      %v213 = vld [vmem:[%s169 + $0x120] sm:$0xff]
      %v214 = vld [vmem:[%s169 + $0x128] sm:$0xff]
      %v215 = vld [vmem:[%s169 + $0x130] sm:$0xff]
      %v216 = vld [vmem:[%s169 + $0x138] sm:$0xff]
      %v217 = vld [vmem:[%s169 + $0x140] sm:$0xff]
      %v218 = vld [vmem:[%s169 + $0x148] sm:$0xff]
      %v219 = vld [vmem:[%s169 + $0x150] sm:$0xff]
      %v220 = vld [vmem:[%s169 + $0x158] sm:$0xff]
      %v221 = vld [vmem:[%s169 + $0x160] sm:$0xff]
      %v222 = vld [vmem:[%s169 + $0x168] sm:$0xff]
      %v223 = vld [vmem:[%s169 + $0x170] sm:$0xff]
      %v224 = vld [vmem:[%s169 + $0x178] sm:$0xff]
      %v225 = vld [vmem:[%s169 + $0x180] sm:$0xff]
      %v226 = vld [vmem:[%s169 + $0x188] sm:$0xff]
      %v227 = vld [vmem:[%s169 + $0x190] sm:$0xff]
      %v228 = vld [vmem:[%s169 + $0x198] sm:$0xff]
      %v229 = vld [vmem:[%s169 + $0x1a0] sm:$0xff]
      %v230 = vld [vmem:[%s169 + $0x1a8] sm:$0xff]
      %v231 = vld [vmem:[%s169 + $0x1b0] sm:$0xff]
      %v232 = vld [vmem:[%s169 + $0x1b8] sm:$0xff]
      %v233 = vld [vmem:[%s169 + $0x1c0] sm:$0xff]
      %v234 = vld [vmem:[%s169 + $0x1c8] sm:$0xff]
      %v235 = vld [vmem:[%s169 + $0x1d0] sm:$0xff]
      %v236 = vld [vmem:[%s169 + $0x1d8] sm:$0xff]
      %v237 = vld [vmem:[%s169 + $0x1e0] sm:$0xff]
      %v238 = vld [vmem:[%s169 + $0x1e8] sm:$0xff]
      %v239 = vld [vmem:[%s169 + $0x1f0] sm:$0xff]
      %v240 = vld [vmem:[%s169 + $0x1f8] sm:$0xff]
      %v241 = vld [vmem:[%s169 + $0x200] sm:$0xff]
      %v242 = vld [vmem:[%s169 + $0x208] sm:$0xff]
      %v243 = vld [vmem:[%s169 + $0x210] sm:$0xff]
      %v244 = vld [vmem:[%s169 + $0x218] sm:$0xff]
      %v245 = vld [vmem:[%s169 + $0x220] sm:$0xff]
      %v246 = vld [vmem:[%s169 + $0x228] sm:$0xff]
      %v247 = vld [vmem:[%s169 + $0x230] sm:$0xff]
      %v248 = vld [vmem:[%s169 + $0x238] sm:$0xff]
      %v249 = vld [vmem:[%s169 + $0x240] sm:$0xff]
      %v250 = vld [vmem:[%s169 + $0x248] sm:$0xff]
      %v251 = vld [vmem:[%s169 + $0x250] sm:$0xff]
      %v252 = vld [vmem:[%s169 + $0x258] sm:$0xff]
      %v253 = vld [vmem:[%s169 + $0x260] sm:$0xff]
      %v254 = vld [vmem:[%s169 + $0x268] sm:$0xff]
      %v255 = vld [vmem:[%s169 + $0x270] sm:$0xff]
      %v256 = vld [vmem:[%s169 + $0x278] sm:$0xff]
      %v257 = vld [vmem:[%s169 + $0x280] sm:$0xff]
      %v258 = vld [vmem:[%s169 + $0x288] sm:$0xff]
      %v259 = vld [vmem:[%s169 + $0x290] sm:$0xff]
      %v260 = vld [vmem:[%s169 + $0x298] sm:$0xff]
      %v261 = vld [vmem:[%s169 + $0x2a0] sm:$0xff]
      %v262 = vld [vmem:[%s169 + $0x2a8] sm:$0xff]
      %v263 = vld [vmem:[%s169 + $0x2b0] sm:$0xff]
      %v264 = vld [vmem:[%s169 + $0x2b8] sm:$0xff]
      %v265 = vld [vmem:[%s169 + $0x2c0] sm:$0xff]
      %v266 = vld [vmem:[%s169 + $0x2c8] sm:$0xff]
      %v267 = vld [vmem:[%s169 + $0x2d0] sm:$0xff]
      %v268 = vld [vmem:[%s169 + $0x2d8] sm:$0xff]
      %v269 = vld [vmem:[%s169 + $0x2e0] sm:$0xff]
      %v270 = vld [vmem:[%s169 + $0x2e8] sm:$0xff]
      %v271 = vld [vmem:[%s169 + $0x2f0] sm:$0xff]
      %v272 = vld [vmem:[%s169 + $0x2f8] sm:$0xff]
      %v273 = vld [vmem:[%s169 + $0x300] sm:$0xff]
      %v274 = vld [vmem:[%s169 + $0x308] sm:$0xff]
      %v275 = vld [vmem:[%s169 + $0x310] sm:$0xff]
      %v276 = vld [vmem:[%s169 + $0x318] sm:$0xff]
      %v277 = vld [vmem:[%s169 + $0x320] sm:$0xff]
      %v278 = vld [vmem:[%s169 + $0x328] sm:$0xff]
      %v279 = vld [vmem:[%s169 + $0x330] sm:$0xff]
      %v280 = vld [vmem:[%s169 + $0x338] sm:$0xff]
      %v281 = vld [vmem:[%s169 + $0x340] sm:$0xff]
      %v282 = vld [vmem:[%s169 + $0x348] sm:$0xff]
      %v283 = vld [vmem:[%s169 + $0x350] sm:$0xff]
      %v284 = vld [vmem:[%s169 + $0x358] sm:$0xff]
      %v285 = vld [vmem:[%s169 + $0x360] sm:$0xff]
      %v286 = vld [vmem:[%s169 + $0x368] sm:$0xff]
      %v287 = vld [vmem:[%s169 + $0x370] sm:$0xff]
      %v288 = vld [vmem:[%s169 + $0x378] sm:$0xff]
      %v289 = vld [vmem:[%s169 + $0x380] sm:$0xff]
      %v290 = vld [vmem:[%s169 + $0x388] sm:$0xff]
      %v291 = vld [vmem:[%s169 + $0x390] sm:$0xff]
      %v292 = vld [vmem:[%s169 + $0x398] sm:$0xff]
      %v293 = vld [vmem:[%s169 + $0x3a0] sm:$0xff]
      %v294 = vld [vmem:[%s169 + $0x3a8] sm:$0xff]
      %v295 = vld [vmem:[%s169 + $0x3b0] sm:$0xff]
      %v296 = vld [vmem:[%s169 + $0x3b8] sm:$0xff]
      %v297 = vld [vmem:[%s169 + $0x3c0] sm:$0xff]
      %v298 = vld [vmem:[%s169 + $0x3c8] sm:$0xff]
      %v299 = vld [vmem:[%s169 + $0x3d0] sm:$0xff]
      %v300 = vld [vmem:[%s169 + $0x3d8] sm:$0xff]
      %v301 = vld [vmem:[%s169 + $0x3e0] sm:$0xff]
      %v302 = vld [vmem:[%s169 + $0x3e8] sm:$0xff]
      %v303 = vld [vmem:[%s169 + $0x3f0] sm:$0xff]
      %v304 = vld [vmem:[%s169 + $0x3f8] sm:$0xff]
      %v305 = vld [vmem:[%s169 + $0x400] sm:$0xff]
      %v306 = vld [vmem:[%s169 + $0x408] sm:$0xff]
      %v307 = vld [vmem:[%s169 + $0x410] sm:$0xff]
      %v308 = vld [vmem:[%s169 + $0x418] sm:$0xff]
      %v309 = vld [vmem:[%s169 + $0x420] sm:$0xff]
      %v310 = vld [vmem:[%s169 + $0x428] sm:$0xff]
      %v311 = vld [vmem:[%s169 + $0x430] sm:$0xff]
      %v312 = vld [vmem:[%s169 + $0x438] sm:$0xff]
      %v313 = vld [vmem:[%s169 + $0x440] sm:$0xff]
      %v314 = vld [vmem:[%s169 + $0x448] sm:$0xff]
      %v315 = vld [vmem:[%s169 + $0x450] sm:$0xff]
      %v316 = vld [vmem:[%s169 + $0x458] sm:$0xff]
      %v317 = vld [vmem:[%s169 + $0x460] sm:$0xff]
      %v318 = vld [vmem:[%s169 + $0x468] sm:$0xff]
      %v319 = vld [vmem:[%s169 + $0x470] sm:$0xff]
      %v320 = vld [vmem:[%s169 + $0x478] sm:$0xff]
      %v321 = vld [vmem:[%s169 + $0x480] sm:$0xff]
      %v322 = vld [vmem:[%s169 + $0x488] sm:$0xff]
      %v323 = vld [vmem:[%s169 + $0x490] sm:$0xff]
      %v324 = vld [vmem:[%s169 + $0x498] sm:$0xff]
      %v325 = vld [vmem:[%s169 + $0x4a0] sm:$0xff]
      %v326 = vld [vmem:[%s169 + $0x4a8] sm:$0xff]
      %v327 = vld [vmem:[%s169 + $0x4b0] sm:$0xff]
      %v328 = vld [vmem:[%s169 + $0x4b8] sm:$0xff]
      %v329 = vld [vmem:[%s169 + $0x4c0] sm:$0xff]
      %v330 = vld [vmem:[%s169 + $0x4c8] sm:$0xff]
      %v331 = vld [vmem:[%s169 + $0x4d0] sm:$0xff]
      %v332 = vld [vmem:[%s169 + $0x4d8] sm:$0xff]
      %v333 = vld [vmem:[%s169 + $0x4e0] sm:$0xff]
      %v334 = vld [vmem:[%s169 + $0x4e8] sm:$0xff]
      %v335 = vld [vmem:[%s169 + $0x4f0] sm:$0xff]
      %v336 = vld [vmem:[%s169 + $0x4f8] sm:$0xff]
      %v337 = vld [vmem:[%s169 + $0x500] sm:$0xff]
      %v338 = vld [vmem:[%s169 + $0x508] sm:$0xff]
      %v339 = vld [vmem:[%s169 + $0x510] sm:$0xff]
      %v340 = vld [vmem:[%s169 + $0x518] sm:$0xff]
      %v341 = vld [vmem:[%s169 + $0x520] sm:$0xff]
      %v342 = vld [vmem:[%s169 + $0x528] sm:$0xff]
      %v343 = vld [vmem:[%s169 + $0x530] sm:$0xff]
      %v344 = vld [vmem:[%s169 + $0x538] sm:$0xff]
      %v345 = vld [vmem:[%s169 + $0x540] sm:$0xff]
      %v346 = vld [vmem:[%s169 + $0x548] sm:$0xff]
      %v347 = vld [vmem:[%s169 + $0x550] sm:$0xff]
      %v348 = vld [vmem:[%s169 + $0x558] sm:$0xff]
      %v349 = vld [vmem:[%s169 + $0x560] sm:$0xff]
      %v350 = vld [vmem:[%s169 + $0x568] sm:$0xff]
      %v351 = vld [vmem:[%s169 + $0x570] sm:$0xff]
      %v352 = vld [vmem:[%s169 + $0x578] sm:$0xff]
      %v353 = vld [vmem:[%s169 + $0x580] sm:$0xff]
      %v354 = vld [vmem:[%s169 + $0x588] sm:$0xff]
      %v355 = vld [vmem:[%s169 + $0x590] sm:$0xff]
      %v356 = vld [vmem:[%s169 + $0x598] sm:$0xff]
      %v357 = vld [vmem:[%s169 + $0x5a0] sm:$0xff]
      %v358 = vld [vmem:[%s169 + $0x5a8] sm:$0xff]
      %v359 = vld [vmem:[%s169 + $0x5b0] sm:$0xff]
      %v360 = vld [vmem:[%s169 + $0x5b8] sm:$0xff]
      %v361 = vld [vmem:[%s169 + $0x5c0] sm:$0xff]
      %v362 = vld [vmem:[%s169 + $0x5c8] sm:$0xff]
      %v363 = vld [vmem:[%s169 + $0x5d0] sm:$0xff]
      %v364 = vld [vmem:[%s169 + $0x5d8] sm:$0xff]
      %v365 = vld [vmem:[%s169 + $0x5e0] sm:$0xff]
      %v366 = vld [vmem:[%s169 + $0x5e8] sm:$0xff]
      %v367 = vld [vmem:[%s169 + $0x5f0] sm:$0xff]
      %v368 = vld [vmem:[%s169 + $0x5f8] sm:$0xff]
      %v369 = vld [vmem:[%s169 + $0x600] sm:$0xff]
      %v370 = vld [vmem:[%s169 + $0x608] sm:$0xff]
      %v371 = vld [vmem:[%s169 + $0x610] sm:$0xff]
      %v372 = vld [vmem:[%s169 + $0x618] sm:$0xff]
      %v373 = vld [vmem:[%s169 + $0x620] sm:$0xff]
      %v374 = vld [vmem:[%s169 + $0x628] sm:$0xff]
      %v375 = vld [vmem:[%s169 + $0x630] sm:$0xff]
      %v376 = vld [vmem:[%s169 + $0x638] sm:$0xff]
      %v377 = vld [vmem:[%s169 + $0x640] sm:$0xff]
      %v378 = vld [vmem:[%s169 + $0x648] sm:$0xff]
      %v379 = vld [vmem:[%s169 + $0x650] sm:$0xff]
      %v380 = vld [vmem:[%s169 + $0x658] sm:$0xff]
      %v381 = vld [vmem:[%s169 + $0x660] sm:$0xff]
      %v382 = vld [vmem:[%s169 + $0x668] sm:$0xff]
      %v383 = vld [vmem:[%s169 + $0x670] sm:$0xff]
      %v384 = vld [vmem:[%s169 + $0x678] sm:$0xff]
      %v385 = vld [vmem:[%s169 + $0x680] sm:$0xff]
      %v386 = vld [vmem:[%s169 + $0x688] sm:$0xff]
      %v387 = vld [vmem:[%s169 + $0x690] sm:$0xff]
      %v388 = vld [vmem:[%s169 + $0x698] sm:$0xff]
      %v389 = vld [vmem:[%s169 + $0x6a0] sm:$0xff]
      %v390 = vld [vmem:[%s169 + $0x6a8] sm:$0xff]
      %v391 = vld [vmem:[%s169 + $0x6b0] sm:$0xff]
      %v392 = vld [vmem:[%s169 + $0x6b8] sm:$0xff]
      %v393 = vld [vmem:[%s169 + $0x6c0] sm:$0xff]
      %v394 = vld [vmem:[%s169 + $0x6c8] sm:$0xff]
      %v395 = vld [vmem:[%s169 + $0x6d0] sm:$0xff]
      %v396 = vld [vmem:[%s169 + $0x6d8] sm:$0xff]
      %v397 = vld [vmem:[%s169 + $0x6e0] sm:$0xff]
      %v398 = vld [vmem:[%s169 + $0x6e8] sm:$0xff]
      %v399 = vld [vmem:[%s169 + $0x6f0] sm:$0xff]
      %v400 = vld [vmem:[%s169 + $0x6f8] sm:$0xff]
      %v401 = vld [vmem:[%s169 + $0x700] sm:$0xff]
      %v402 = vld [vmem:[%s169 + $0x708] sm:$0xff]
      %v403 = vld [vmem:[%s169 + $0x710] sm:$0xff]
      %v404 = vld [vmem:[%s169 + $0x718] sm:$0xff]
      %v405 = vld [vmem:[%s169 + $0x720] sm:$0xff]
      %v406 = vld [vmem:[%s169 + $0x728] sm:$0xff]
      %v407 = vld [vmem:[%s169 + $0x730] sm:$0xff]
      %v408 = vld [vmem:[%s169 + $0x738] sm:$0xff]
      %v409 = vld [vmem:[%s169 + $0x740] sm:$0xff]
      %v410 = vld [vmem:[%s169 + $0x748] sm:$0xff]
      %v411 = vld [vmem:[%s169 + $0x750] sm:$0xff]
      %v412 = vld [vmem:[%s169 + $0x758] sm:$0xff]
      %v413 = vld [vmem:[%s169 + $0x760] sm:$0xff]
      %v414 = vld [vmem:[%s169 + $0x768] sm:$0xff]
      %v415 = vld [vmem:[%s169 + $0x770] sm:$0xff]
      %v416 = vld [vmem:[%s169 + $0x778] sm:$0xff]
      %v417 = vld [vmem:[%s169 + $0x780] sm:$0xff]
      %v418 = vld [vmem:[%s169 + $0x788] sm:$0xff]
      %v419 = vld [vmem:[%s169 + $0x790] sm:$0xff]
      %v420 = vld [vmem:[%s169 + $0x798] sm:$0xff]
      %v421 = vld [vmem:[%s169 + $0x7a0] sm:$0xff]
      %v422 = vld [vmem:[%s169 + $0x7a8] sm:$0xff]
      %v423 = vld [vmem:[%s169 + $0x7b0] sm:$0xff]
      %v424 = vld [vmem:[%s169 + $0x7b8] sm:$0xff]
      %v425 = vld [vmem:[%s169 + $0x7c0] sm:$0xff]
      %v426 = vld [vmem:[%s169 + $0x7c8] sm:$0xff]
      %v427 = vld [vmem:[%s169 + $0x7d0] sm:$0xff]
      %v428 = vld [vmem:[%s169 + $0x7d8] sm:$0xff]
      %v429 = vld [vmem:[%s169 + $0x7e0] sm:$0xff]
      %v430 = vld [vmem:[%s169 + $0x7e8] sm:$0xff]
      %v431 = vld [vmem:[%s169 + $0x7f0] sm:$0xff]
      %v432 = vld [vmem:[%s169 + $0x7f8] sm:$0xff]
      %v433 = vld [vmem:[%s169 + $0x800] sm:$0xff]
      %v434 = vld [vmem:[%s169 + $0x808] sm:$0xff]
      %v435 = vld [vmem:[%s169 + $0x810] sm:$0xff]
      %v436 = vld [vmem:[%s169 + $0x818] sm:$0xff]
      %v437 = vld [vmem:[%s169 + $0x820] sm:$0xff]
      %v438 = vld [vmem:[%s169 + $0x828] sm:$0xff]
      %v439 = vld [vmem:[%s169 + $0x830] sm:$0xff]
      %v440 = vld [vmem:[%s169 + $0x838] sm:$0xff]
      %v441 = vld [vmem:[%s169 + $0x840] sm:$0xff]
      %v442 = vld [vmem:[%s169 + $0x848] sm:$0xff]
      %v443 = vld [vmem:[%s169 + $0x850] sm:$0xff]
      %v444 = vld [vmem:[%s169 + $0x858] sm:$0xff]
      %v445 = vld [vmem:[%s169 + $0x860] sm:$0xff]
      %v446 = vld [vmem:[%s169 + $0x868] sm:$0xff]
      %v447 = vld [vmem:[%s169 + $0x870] sm:$0xff]
      %v448 = vld [vmem:[%s169 + $0x878] sm:$0xff]
      %v449 = vld [vmem:[%s169 + $0x880] sm:$0xff]
      %v450 = vld [vmem:[%s169 + $0x888] sm:$0xff]
      %v451 = vld [vmem:[%s169 + $0x890] sm:$0xff]
      %v452 = vld [vmem:[%s169 + $0x898] sm:$0xff]
      %v453 = vld [vmem:[%s169 + $0x8a0] sm:$0xff]
      %v454 = vld [vmem:[%s169 + $0x8a8] sm:$0xff]
      %v455 = vld [vmem:[%s169 + $0x8b0] sm:$0xff]
      %v456 = vld [vmem:[%s169 + $0x8b8] sm:$0xff]
      %v457 = vld [vmem:[%s169 + $0x8c0] sm:$0xff]
      %v458 = vld [vmem:[%s169 + $0x8c8] sm:$0xff]
      %v459 = vld [vmem:[%s169 + $0x8d0] sm:$0xff]
      %v460 = vld [vmem:[%s169 + $0x8d8] sm:$0xff]
      %v461 = vld [vmem:[%s169 + $0x8e0] sm:$0xff]
      %v462 = vld [vmem:[%s169 + $0x8e8] sm:$0xff]
      %v463 = vld [vmem:[%s169 + $0x8f0] sm:$0xff]
      %v464 = vld [vmem:[%s169 + $0x8f8] sm:$0xff]
      %v465 = vld [vmem:[%s169 + $0x900] sm:$0xff]
      %v466 = vld [vmem:[%s169 + $0x908] sm:$0xff]
      %v467 = vld [vmem:[%s169 + $0x910] sm:$0xff]
      %v468 = vld [vmem:[%s169 + $0x918] sm:$0xff]
      %v469 = vld [vmem:[%s169 + $0x920] sm:$0xff]
      %v470 = vld [vmem:[%s169 + $0x928] sm:$0xff]
      %v471 = vld [vmem:[%s169 + $0x930] sm:$0xff]
      %v472 = vld [vmem:[%s169 + $0x938] sm:$0xff]
      %v473 = vld [vmem:[%s169 + $0x940] sm:$0xff]
      %v474 = vld [vmem:[%s169 + $0x948] sm:$0xff]
      %v475 = vld [vmem:[%s169 + $0x950] sm:$0xff]
      %v476 = vld [vmem:[%s169 + $0x958] sm:$0xff]
      %v477 = vld [vmem:[%s169 + $0x960] sm:$0xff]
      %v478 = vld [vmem:[%s169 + $0x968] sm:$0xff]
      %v479 = vld [vmem:[%s169 + $0x970] sm:$0xff]
      %v480 = vld [vmem:[%s169 + $0x978] sm:$0xff]
      %v481 = vld [vmem:[%s169 + $0x980] sm:$0xff]
      %v482 = vld [vmem:[%s169 + $0x988] sm:$0xff]
      %v483 = vld [vmem:[%s169 + $0x990] sm:$0xff]
      %v484 = vld [vmem:[%s169 + $0x998] sm:$0xff]
      %v485 = vld [vmem:[%s169 + $0x9a0] sm:$0xff]
      %v486 = vld [vmem:[%s169 + $0x9a8] sm:$0xff]
      %v487 = vld [vmem:[%s169 + $0x9b0] sm:$0xff]
      %v488 = vld [vmem:[%s169 + $0x9b8] sm:$0xff]
      %v489 = vld [vmem:[%s169 + $0x9c0] sm:$0xff]
      %v490 = vld [vmem:[%s169 + $0x9c8] sm:$0xff]
      %v491 = vld [vmem:[%s169 + $0x9d0] sm:$0xff]
      %v492 = vld [vmem:[%s169 + $0x9d8] sm:$0xff]
      %v493 = vld [vmem:[%s169 + $0x9e0] sm:$0xff]
      %v494 = vld [vmem:[%s169 + $0x9e8] sm:$0xff]
      %v495 = vld [vmem:[%s169 + $0x9f0] sm:$0xff]
      %v496 = vld [vmem:[%s169 + $0x9f8] sm:$0xff]
      %v497 = vld [vmem:[%s169 + $0xa00] sm:$0xff]
      %v498 = vld [vmem:[%s169 + $0xa08] sm:$0xff]
      %v499 = vld [vmem:[%s169 + $0xa10] sm:$0xff]
      %v500 = vld [vmem:[%s169 + $0xa18] sm:$0xff]
      %v501 = vld [vmem:[%s169 + $0xa20] sm:$0xff]
      %v502 = vld [vmem:[%s169 + $0xa28] sm:$0xff]
      %v503 = vld [vmem:[%s169 + $0xa30] sm:$0xff]
      %v504 = vld [vmem:[%s169 + $0xa38] sm:$0xff]
      %v505 = vld [vmem:[%s169 + $0xa40] sm:$0xff]
      %v506 = vld [vmem:[%s169 + $0xa48] sm:$0xff]
      %v507 = vld [vmem:[%s169 + $0xa50] sm:$0xff]
      %v508 = vld [vmem:[%s169 + $0xa58] sm:$0xff]
      %v509 = vld [vmem:[%s169 + $0xa60] sm:$0xff]
      %v510 = vld [vmem:[%s169 + $0xa68] sm:$0xff]
      %v511 = vld [vmem:[%s169 + $0xa70] sm:$0xff]
      %v512 = vld [vmem:[%s169 + $0xa78] sm:$0xff]
      %v513 = vld [vmem:[%s169 + $0xa80] sm:$0xff]
      %v514 = vld [vmem:[%s169 + $0xa88] sm:$0xff]
      %v515 = vld [vmem:[%s169 + $0xa90] sm:$0xff]
      %v516 = vld [vmem:[%s169 + $0xa98] sm:$0xff]
      %v517 = vld [vmem:[%s169 + $0xaa0] sm:$0xff]
      %v518 = vld [vmem:[%s169 + $0xaa8] sm:$0xff]
      %v519 = vld [vmem:[%s169 + $0xab0] sm:$0xff]
      %v520 = vld [vmem:[%s169 + $0xab8] sm:$0xff]
      %v521 = vld [vmem:[%s169 + $0xac0] sm:$0xff]
      %v522 = vld [vmem:[%s169 + $0xac8] sm:$0xff]
      %v523 = vld [vmem:[%s169 + $0xad0] sm:$0xff]
      %v524 = vld [vmem:[%s169 + $0xad8] sm:$0xff]
      %v525 = vld [vmem:[%s169 + $0xae0] sm:$0xff]
      %v526 = vld [vmem:[%s169 + $0xae8] sm:$0xff]
      %v527 = vld [vmem:[%s169 + $0xaf0] sm:$0xff]
      %v528 = vld [vmem:[%s169 + $0xaf8] sm:$0xff]
      %v529 = vld [vmem:[%s169 + $0xb00] sm:$0xff]
      %v530 = vld [vmem:[%s169 + $0xb08] sm:$0xff]
      %v531 = vld [vmem:[%s169 + $0xb10] sm:$0xff]
      %v532 = vld [vmem:[%s169 + $0xb18] sm:$0xff]
      %v533 = vld [vmem:[%s169 + $0xb20] sm:$0xff]
      %v534 = vld [vmem:[%s169 + $0xb28] sm:$0xff]
      %v535 = vld [vmem:[%s169 + $0xb30] sm:$0xff]
      %v536 = vld [vmem:[%s169 + $0xb38] sm:$0xff]
      %v537 = vld [vmem:[%s169 + $0xb40] sm:$0xff]
      %v538 = vld [vmem:[%s169 + $0xb48] sm:$0xff]
      %v539 = vld [vmem:[%s169 + $0xb50] sm:$0xff]
      %v540 = vld [vmem:[%s169 + $0xb58] sm:$0xff]
      %v541 = vld [vmem:[%s169 + $0xb60] sm:$0xff]
      %v542 = vld [vmem:[%s169 + $0xb68] sm:$0xff]
      %v543 = vld [vmem:[%s169 + $0xb70] sm:$0xff]
      %v544 = vld [vmem:[%s169 + $0xb78] sm:$0xff]
      %v545 = vld [vmem:[%s169 + $0xb80] sm:$0xff]
      %v546 = vld [vmem:[%s169 + $0xb88] sm:$0xff]
      %v547 = vld [vmem:[%s169 + $0xb90] sm:$0xff]
      %v548 = vld [vmem:[%s169 + $0xb98] sm:$0xff]
      %v549 = vld [vmem:[%s169 + $0xba0] sm:$0xff]
      %v550 = vld [vmem:[%s169 + $0xba8] sm:$0xff]
      %v551 = vld [vmem:[%s169 + $0xbb0] sm:$0xff]
      %v552 = vld [vmem:[%s169 + $0xbb8] sm:$0xff]
      %v553 = vld [vmem:[%s169 + $0xbc0] sm:$0xff]
      %v554 = vld [vmem:[%s169 + $0xbc8] sm:$0xff]
      %v555 = vld [vmem:[%s169 + $0xbd0] sm:$0xff]
      %v556 = vld [vmem:[%s169 + $0xbd8] sm:$0xff]
      %v557 = vld [vmem:[%s169 + $0xbe0] sm:$0xff]
      %v558 = vld [vmem:[%s169 + $0xbe8] sm:$0xff]
      %v559 = vld [vmem:[%s169 + $0xbf0] sm:$0xff]
      %v560 = vld [vmem:[%s169 + $0xbf8] sm:$0xff]
      %v561 = vld [vmem:[%s169 + $0xc00] sm:$0xff]
      %v562 = vld [vmem:[%s169 + $0xc08] sm:$0xff]
      %v563 = vld [vmem:[%s169 + $0xc10] sm:$0xff]
      %v564 = vld [vmem:[%s169 + $0xc18] sm:$0xff]
      %v565 = vld [vmem:[%s169 + $0xc20] sm:$0xff]
      %v566 = vld [vmem:[%s169 + $0xc28] sm:$0xff]
      %v567 = vld [vmem:[%s169 + $0xc30] sm:$0xff]
      %v568 = vld [vmem:[%s169 + $0xc38] sm:$0xff]
      %v569 = vld [vmem:[%s169 + $0xc40] sm:$0xff]
      %v570 = vld [vmem:[%s169 + $0xc48] sm:$0xff]
      %v571 = vld [vmem:[%s169 + $0xc50] sm:$0xff]
      %v572 = vld [vmem:[%s169 + $0xc58] sm:$0xff]
      %v573 = vld [vmem:[%s169 + $0xc60] sm:$0xff]
      %v574 = vld [vmem:[%s169 + $0xc68] sm:$0xff]
      %v575 = vld [vmem:[%s169 + $0xc70] sm:$0xff]
      %v576 = vld [vmem:[%s169 + $0xc78] sm:$0xff]
      %v577 = vld [vmem:[%s169 + $0xc80] sm:$0xff]
      %v578 = vld [vmem:[%s169 + $0xc88] sm:$0xff]
      %v579 = vld [vmem:[%s169 + $0xc90] sm:$0xff]
      %v580 = vld [vmem:[%s169 + $0xc98] sm:$0xff]
      %v581 = vld [vmem:[%s169 + $0xca0] sm:$0xff]
      %v582 = vld [vmem:[%s169 + $0xca8] sm:$0xff]
      %v583 = vld [vmem:[%s169 + $0xcb0] sm:$0xff]
      %v584 = vld [vmem:[%s169 + $0xcb8] sm:$0xff]
      %v585 = vld [vmem:[%s169 + $0xcc0] sm:$0xff]
      %v586 = vld [vmem:[%s169 + $0xcc8] sm:$0xff]
      %v587 = vld [vmem:[%s169 + $0xcd0] sm:$0xff]
      %v588 = vld [vmem:[%s169 + $0xcd8] sm:$0xff]
      %v589 = vld [vmem:[%s169 + $0xce0] sm:$0xff]
      %v590 = vld [vmem:[%s169 + $0xce8] sm:$0xff]
      %v591 = vld [vmem:[%s169 + $0xcf0] sm:$0xff]
      %v592 = vld [vmem:[%s169 + $0xcf8] sm:$0xff]
      %v593 = vld [vmem:[%s169 + $0xd00] sm:$0xff]
      %v594 = vld [vmem:[%s169 + $0xd08] sm:$0xff]
      %v595 = vld [vmem:[%s169 + $0xd10] sm:$0xff]
      %v596 = vld [vmem:[%s169 + $0xd18] sm:$0xff]
      %v597 = vld [vmem:[%s169 + $0xd20] sm:$0xff]
      %v598 = vld [vmem:[%s169 + $0xd28] sm:$0xff]
      %v599 = vld [vmem:[%s169 + $0xd30] sm:$0xff]
      %v600 = vld [vmem:[%s169 + $0xd38] sm:$0xff]
      %v601 = vld [vmem:[%s169 + $0xd40] sm:$0xff]
      %v602 = vld [vmem:[%s169 + $0xd48] sm:$0xff]
      %v603 = vld [vmem:[%s169 + $0xd50] sm:$0xff]
      %v604 = vld [vmem:[%s169 + $0xd58] sm:$0xff]
      %v605 = vld [vmem:[%s169 + $0xd60] sm:$0xff]
      %v606 = vld [vmem:[%s169 + $0xd68] sm:$0xff]
      %v607 = vld [vmem:[%s169 + $0xd70] sm:$0xff]
      %v608 = vld [vmem:[%s169 + $0xd78] sm:$0xff]
      %v609 = vld [vmem:[%s169 + $0xd80] sm:$0xff]
      %v610 = vld [vmem:[%s169 + $0xd88] sm:$0xff]
      %v611 = vld [vmem:[%s169 + $0xd90] sm:$0xff]
      %v612 = vld [vmem:[%s169 + $0xd98] sm:$0xff]
      %v613 = vld [vmem:[%s169 + $0xda0] sm:$0xff]
      %v614 = vld [vmem:[%s169 + $0xda8] sm:$0xff]
      %v615 = vld [vmem:[%s169 + $0xdb0] sm:$0xff]
      %v616 = vld [vmem:[%s169 + $0xdb8] sm:$0xff]
      %v617 = vld [vmem:[%s169 + $0xdc0] sm:$0xff]
      %v618 = vld [vmem:[%s169 + $0xdc8] sm:$0xff]
      %v619 = vld [vmem:[%s169 + $0xdd0] sm:$0xff]
      %v620 = vld [vmem:[%s169 + $0xdd8] sm:$0xff]
      %v621 = vld [vmem:[%s169 + $0xde0] sm:$0xff]
      %v622 = vld [vmem:[%s169 + $0xde8] sm:$0xff]
      %v623 = vld [vmem:[%s169 + $0xdf0] sm:$0xff]
      %v624 = vld [vmem:[%s169 + $0xdf8] sm:$0xff]
      %v625 = vld [vmem:[%s1] sm:$0xff]
      %v626 = vld [vmem:[%s1 + $0x8] sm:$0xff]
      %v627 = vld [vmem:[%s1 + $0x10] sm:$0xff]
      %v628 = vld [vmem:[%s1 + $0x18] sm:$0xff]
      %v629 = vld [vmem:[%s1 + $0x20] sm:$0xff]
      %v630 = vld [vmem:[%s1 + $0x28] sm:$0xff]
      %v631 = vld [vmem:[%s1 + $0x30] sm:$0xff]
      %v632 = vld [vmem:[%s1 + $0x38] sm:$0xff]
      %v633 = vld [vmem:[%s1 + $0x40] sm:$0xff]
      %v634 = vld [vmem:[%s1 + $0x48] sm:$0xff]
      %v635 = vld [vmem:[%s1 + $0x50] sm:$0xff]
      %v636 = vld [vmem:[%s1 + $0x58] sm:$0xff]
      %v637 = vld [vmem:[%s1 + $0x60] sm:$0xff]
      %v638 = vld [vmem:[%s1 + $0x68] sm:$0xff]
      %v639 = vld [vmem:[%s1 + $0x70] sm:$0xff]
      %v640 = vld [vmem:[%s1 + $0x78] sm:$0xff]
      %v641 = vld [vmem:[%s1 + $0x80] sm:$0xff]
      %v642 = vld [vmem:[%s1 + $0x88] sm:$0xff]
      %v643 = vld [vmem:[%s1 + $0x90] sm:$0xff]
      %v644 = vld [vmem:[%s1 + $0x98] sm:$0xff]
      %v645 = vld [vmem:[%s1 + $0xa0] sm:$0xff]
      %v646 = vld [vmem:[%s1 + $0xa8] sm:$0xff]
      %v647 = vld [vmem:[%s1 + $0xb0] sm:$0xff]
      %v648 = vld [vmem:[%s1 + $0xb8] sm:$0xff]
      %v649 = vld [vmem:[%s1 + $0xc0] sm:$0xff]
      %v650 = vld [vmem:[%s1 + $0xc8] sm:$0xff]
      %v651 = vld [vmem:[%s1 + $0xd0] sm:$0xff]
      %v652 = vld [vmem:[%s1 + $0xd8] sm:$0xff]
      %v653 = vld [vmem:[%s1 + $0xe0] sm:$0xff]
      %v654 = vld [vmem:[%s1 + $0xe8] sm:$0xff]
      %v655 = vld [vmem:[%s1 + $0xf0] sm:$0xff]
      %v656 = vld [vmem:[%s1 + $0xf8] sm:$0xff]
      %v657 = vld [vmem:[%s1 + $0x100] sm:$0xff]
      %v658 = vld [vmem:[%s1 + $0x108] sm:$0xff]
      %v659 = vld [vmem:[%s1 + $0x110] sm:$0xff]
      %v660 = vld [vmem:[%s1 + $0x118] sm:$0xff]
      %v661 = vld [vmem:[%s1 + $0x120] sm:$0xff]
      %v662 = vld [vmem:[%s1 + $0x128] sm:$0xff]
      %v663 = vld [vmem:[%s1 + $0x130] sm:$0xff]
      %v664 = vld [vmem:[%s1 + $0x138] sm:$0xff]
      %v665 = vld [vmem:[%s1 + $0x140] sm:$0xff]
      %v666 = vld [vmem:[%s1 + $0x148] sm:$0xff]
      %v667 = vld [vmem:[%s1 + $0x150] sm:$0xff]
      %v668 = vld [vmem:[%s1 + $0x158] sm:$0xff]
      %v669 = vld [vmem:[%s1 + $0x160] sm:$0xff]
      %v670 = vld [vmem:[%s1 + $0x168] sm:$0xff]
      %v671 = vld [vmem:[%s1 + $0x170] sm:$0xff]
      %v672 = vld [vmem:[%s1 + $0x178] sm:$0xff]
      %v673 = vld [vmem:[%s1 + $0x180] sm:$0xff]
      %v674 = vld [vmem:[%s1 + $0x188] sm:$0xff]
      %v675 = vld [vmem:[%s1 + $0x190] sm:$0xff]
      %v676 = vld [vmem:[%s1 + $0x198] sm:$0xff]
      %v677 = vld [vmem:[%s1 + $0x1a0] sm:$0xff]
      %v678 = vld [vmem:[%s1 + $0x1a8] sm:$0xff]
      %v679 = vld [vmem:[%s1 + $0x1b0] sm:$0xff]
      %v680 = vld [vmem:[%s1 + $0x1b8] sm:$0xff]
      %v681 = vld [vmem:[%s1 + $0x1c0] sm:$0xff]
      %v682 = vld [vmem:[%s1 + $0x1c8] sm:$0xff]
      %v683 = vld [vmem:[%s1 + $0x1d0] sm:$0xff]
      %v684 = vld [vmem:[%s1 + $0x1d8] sm:$0xff]
      %v685 = vld [vmem:[%s1 + $0x1e0] sm:$0xff]
      %v686 = vld [vmem:[%s1 + $0x1e8] sm:$0xff]
      %v687 = vld [vmem:[%s1 + $0x1f0] sm:$0xff]
      %v688 = vld [vmem:[%s1 + $0x1f8] sm:$0xff]
      %v689 = vld [vmem:[%s1 + $0x200] sm:$0xff]
      %v690 = vld [vmem:[%s1 + $0x208] sm:$0xff]
      %v691 = vld [vmem:[%s1 + $0x210] sm:$0xff]
      %v692 = vld [vmem:[%s1 + $0x218] sm:$0xff]
      %v693 = vld [vmem:[%s1 + $0x220] sm:$0xff]
      %v694 = vld [vmem:[%s1 + $0x228] sm:$0xff]
      %v695 = vld [vmem:[%s1 + $0x230] sm:$0xff]
      %v696 = vld [vmem:[%s1 + $0x238] sm:$0xff]
      %v697 = vld [vmem:[%s1 + $0x240] sm:$0xff]
      %v698 = vld [vmem:[%s1 + $0x248] sm:$0xff]
      %v699 = vld [vmem:[%s1 + $0x250] sm:$0xff]
      %v700 = vld [vmem:[%s1 + $0x258] sm:$0xff]
      %v701 = vld [vmem:[%s1 + $0x260] sm:$0xff]
      %v702 = vld [vmem:[%s1 + $0x268] sm:$0xff]
      %v703 = vld [vmem:[%s1 + $0x270] sm:$0xff]
      %v704 = vld [vmem:[%s1 + $0x278] sm:$0xff]
      %v705 = vld [vmem:[%s1 + $0x280] sm:$0xff]
      %v706 = vld [vmem:[%s1 + $0x288] sm:$0xff]
      %v707 = vld [vmem:[%s1 + $0x290] sm:$0xff]
      %v708 = vld [vmem:[%s1 + $0x298] sm:$0xff]
      %v709 = vld [vmem:[%s1 + $0x2a0] sm:$0xff]
      %v710 = vld [vmem:[%s1 + $0x2a8] sm:$0xff]
      %v711 = vld [vmem:[%s1 + $0x2b0] sm:$0xff]
      %v712 = vld [vmem:[%s1 + $0x2b8] sm:$0xff]
      %v713 = vld [vmem:[%s1 + $0x2c0] sm:$0xff]
      %v714 = vld [vmem:[%s1 + $0x2c8] sm:$0xff]
      %v715 = vld [vmem:[%s1 + $0x2d0] sm:$0xff]
      %v716 = vld [vmem:[%s1 + $0x2d8] sm:$0xff]
      %v717 = vld [vmem:[%s1 + $0x2e0] sm:$0xff]
      %v718 = vld [vmem:[%s1 + $0x2e8] sm:$0xff]
      %v719 = vld [vmem:[%s1 + $0x2f0] sm:$0xff]
      %v720 = vld [vmem:[%s1 + $0x2f8] sm:$0xff]
      %v721 = vld [vmem:[%s1 + $0x300] sm:$0xff]
      %v722 = vld [vmem:[%s1 + $0x308] sm:$0xff]
      %v723 = vld [vmem:[%s1 + $0x310] sm:$0xff]
      %v724 = vld [vmem:[%s1 + $0x318] sm:$0xff]
      %v725 = vld [vmem:[%s1 + $0x320] sm:$0xff]
      %v726 = vld [vmem:[%s1 + $0x328] sm:$0xff]
      %v727 = vld [vmem:[%s1 + $0x330] sm:$0xff]
      %v728 = vld [vmem:[%s1 + $0x338] sm:$0xff]
      %v729 = vld [vmem:[%s1 + $0x340] sm:$0xff]
      %v730 = vld [vmem:[%s1 + $0x348] sm:$0xff]
      %v731 = vld [vmem:[%s1 + $0x350] sm:$0xff]
      %v732 = vld [vmem:[%s1 + $0x358] sm:$0xff]
      %v733 = vld [vmem:[%s1 + $0x360] sm:$0xff]
      %v734 = vld [vmem:[%s1 + $0x368] sm:$0xff]
      %v735 = vld [vmem:[%s1 + $0x370] sm:$0xff]
      %v736 = vld [vmem:[%s1 + $0x378] sm:$0xff]
      %v737 = vld [vmem:[%s2] sm:$0x1]
      %v739 = vlaneseq
      %v740 = vshrl.u32 %v739, 7
      %v741 = vsub.s32 0, %v740
      %v742 = vrot.slane %v737, %v741
      %744 = vmatprep.subr.mxu0 0.0
      %745 = vmatpush1.msra.mxu0 %v625
      %746 = vmatprep.subr.mxu0 0.0
      %747 = vmatpush1.msra.mxu0 %v626
      %748 = vmatprep.subr.mxu0 0.0
      %749 = vmatpush1.msra.mxu0 %v627
      %750 = vmatprep.subr.mxu0 0.0
      %751 = vmatpush1.msra.mxu0 %v628
      %752 = vmatprep.subr.mxu0 0.0
      %753 = vmatpush1.msra.mxu0 %v629
      %754 = vmatprep.subr.mxu0 0.0
      %755 = vmatpush1.msra.mxu0 %v630
      %756 = vmatprep.subr.mxu0 0.0
      %757 = vmatpush1.msra.mxu0 %v631
      %758 = vmatprep.subr.mxu0 0.0
      %759 = vmatpush1.msra.mxu0 %v632
      %760 = vmatprep.subr.mxu0 0.0
      %761 = vmatpush1.msra.mxu0 %v633
      %762 = vmatprep.subr.mxu0 0.0
      %763 = vmatpush1.msra.mxu0 %v634
      %764 = vmatprep.subr.mxu0 0.0
      %765 = vmatpush1.msra.mxu0 %v635
      %766 = vmatprep.subr.mxu0 0.0
      %767 = vmatpush1.msra.mxu0 %v636
      %768 = vmatprep.subr.mxu0 0.0
      %769 = vmatpush1.msra.mxu0 %v637
      %770 = vmatprep.subr.mxu0 0.0
      %771 = vmatpush1.msra.mxu0 %v638
      %772 = vmatprep.subr.mxu0 0.0
      %773 = vmatpush1.msra.mxu0 %v639
      %774 = vmatprep.subr.mxu0 0.0
      %775 = vmatpush1.msra.mxu0 %v640
      %776 = vmatprep.subr.mxu0 0.0
      %777 = vmatpush1.msra.mxu0 %v641
      %778 = vmatprep.subr.mxu0 0.0
      %779 = vmatpush1.msra.mxu0 %v642
      %780 = vmatprep.subr.mxu0 0.0
      %781 = vmatpush1.msra.mxu0 %v643
      %782 = vmatprep.subr.mxu0 0.0
      %783 = vmatpush1.msra.mxu0 %v644
      %784 = vmatprep.subr.mxu0 0.0
      %785 = vmatpush1.msra.mxu0 %v645
      %786 = vmatprep.subr.mxu0 0.0
      %787 = vmatpush1.msra.mxu0 %v646
      %788 = vmatprep.subr.mxu0 0.0
      %789 = vmatpush1.msra.mxu0 %v647
      %790 = vmatprep.subr.mxu0 0.0
      %791 = vmatpush1.msra.mxu0 %v648
      %792 = vmatprep.subr.mxu0 0.0
      %793 = vmatpush1.msra.mxu0 %v649
      %794 = vmatprep.subr.mxu0 0.0
      %795 = vmatpush1.msra.mxu0 %v650
      %796 = vmatprep.subr.mxu0 0.0
      %797 = vmatpush1.msra.mxu0 %v651
      %798 = vmatprep.subr.mxu0 0.0
      %799 = vmatpush1.msra.mxu0 %v652
      %800 = vmatprep.subr.mxu0 0.0
      %801 = vmatpush1.msra.mxu0 %v653
      %802 = vmatprep.subr.mxu0 0.0
      %803 = vmatpush1.msra.mxu0 %v654
      %804 = vmatprep.subr.mxu0 0.0
      %805 = vmatpush1.msra.mxu0 %v655
      %806 = vmatprep.subr.mxu0 0.0
      %807 = vmatpush1.msra.mxu0 %v656
      %808 = vmatprep.mubr.f32.mxu0 %v178
      %809 = vmatmul.mubr.f32.gmra.mrb[0].mxu0 %v177
      %v810 = vpop.f32.mrb[0].mxu0
      %v811 = vadd.f32 %v742, %v810
      %v812 = vpop.f32.mrb[0].mxu0
      %813 = vmatprep.mubr.f32.mxu0 %v185
      %814 = vmatmul.mubr.f32.gmra.mrb[0].mxu0 %v184
      %v815 = vpop.f32.mrb[0].mxu0
      %v816 = vadd.f32 %v742, %v815
      %v817 = vpop.f32.mrb[0].mxu0
      %818 = vmatprep.mubr.f32.mxu0 %v192
      %819 = vmatmul.mubr.f32.gmra.mrb[0].mxu0 %v191
      %v820 = vpop.f32.mrb[0].mxu0
      %v821 = vadd.f32 %v742, %v820
      %v822 = vpop.f32.mrb[0].mxu0
      %823 = vmatprep.mubr.f32.mxu0 %v199
      %824 = vmatmul.mubr.f32.gmra.mrb[0].mxu0 %v198
      %v825 = vpop.f32.mrb[0].mxu0
      %v826 = vadd.f32 %v742, %v825
      %v827 = vpop.f32.mrb[0].mxu0
      %828 = vmatprep.mubr.f32.mxu0 %v206
      %829 = vmatmul.mubr.f32.gmra.mrb[0].mxu0 %v205
      %v830 = vpop.f32.mrb[0].mxu0
      %v831 = vadd.f32 %v742, %v830
      %v832 = vpop.f32.mrb[0].mxu0
      %833 = vmatprep.mubr.f32.mxu0 %v213
      %834 = vmatmul.mubr.f32.gmra.mrb[0].mxu0 %v212
      %v835 = vpop.f32.mrb[0].mxu0
      %v836 = vadd.f32 %v742, %v835
      %v837 = vpop.f32.mrb[0].mxu0
      %838 = vmatprep.mubr.f32.mxu0 %v220
      %839 = vmatmul.mubr.f32.gmra.mrb[0].mxu0 %v219
      %v840 = vpop.f32.mrb[0].mxu0
      %v841 = vadd.f32 %v742, %v840
      %v842 = vpop.f32.mrb[0].mxu0
      %843 = vmatprep.mubr.f32.mxu0 %v227
      %844 = vmatmul.mubr.f32.gmra.mrb[0].mxu0 %v226
      %v845 = vpop.f32.mrb[0].mxu0
      %v846 = vadd.f32 %v742, %v845
      %v847 = vpop.f32.mrb[0].mxu0
      %848 = vmatprep.mubr.f32.mxu0 %v234
      %849 = vmatmul.mubr.f32.gmra.mrb[0].mxu0 %v233
      %v850 = vpop.f32.mrb[0].mxu0
      %v851 = vadd.f32 %v742, %v850
      %v852 = vpop.f32.mrb[0].mxu0
      %853 = vmatprep.mubr.f32.mxu0 %v241
      %854 = vmatmul.mubr.f32.gmra.mrb[0].mxu0 %v240
      %v855 = vpop.f32.mrb[0].mxu0
      %v856 = vadd.f32 %v742, %v855
      %v857 = vpop.f32.mrb[0].mxu0
      %858 = vmatprep.mubr.f32.mxu0 %v248
      %859 = vmatmul.mubr.f32.gmra.mrb[0].mxu0 %v247
      %v860 = vpop.f32.mrb[0].mxu0
      %v861 = vadd.f32 %v742, %v860
      %v862 = vpop.f32.mrb[0].mxu0
      %863 = vmatprep.mubr.f32.mxu0 %v255
      %864 = vmatmul.mubr.f32.gmra.mrb[0].mxu0 %v254
      %v865 = vpop.f32.mrb[0].mxu0
      %v866 = vadd.f32 %v742, %v865
      %v867 = vpop.f32.mrb[0].mxu0
      %868 = vmatprep.mubr.f32.mxu0 %v262
      %869 = vmatmul.mubr.f32.gmra.mrb[0].mxu0 %v261
      %v870 = vpop.f32.mrb[0].mxu0
      %v871 = vadd.f32 %v742, %v870
      %v872 = vpop.f32.mrb[0].mxu0
      %873 = vmatprep.mubr.f32.mxu0 %v269
      %874 = vmatmul.mubr.f32.gmra.mrb[0].mxu0 %v268
      %v875 = vpop.f32.mrb[0].mxu0
      %v876 = vadd.f32 %v742, %v875
      %v877 = vpop.f32.mrb[0].mxu0
      %878 = vmatprep.mubr.f32.mxu0 %v276
      %879 = vmatmul.mubr.f32.gmra.mrb[0].mxu0 %v275
      %v880 = vpop.f32.mrb[0].mxu0
      %v881 = vadd.f32 %v742, %v880
      %v882 = vpop.f32.mrb[0].mxu0
      %883 = vmatprep.mubr.f32.mxu0 %v283
      %884 = vmatmul.mubr.f32.gmra.mrb[0].mxu0 %v282
      %v885 = vpop.f32.mrb[0].mxu0
      %v886 = vadd.f32 %v742, %v885
      %v887 = vpop.f32.mrb[0].mxu0
      %888 = vmatprep.mubr.f32.mxu0 %v290
      %889 = vmatmul.mubr.f32.gmra.mrb[0].mxu0 %v289
      %v890 = vpop.f32.mrb[0].mxu0
      %v891 = vadd.f32 %v742, %v890
      %v892 = vpop.f32.mrb[0].mxu0
      %893 = vmatprep.mubr.f32.mxu0 %v297
      %894 = vmatmul.mubr.f32.gmra.mrb[0].mxu0 %v296
      %v895 = vpop.f32.mrb[0].mxu0
      %v896 = vadd.f32 %v742, %v895
      %v897 = vpop.f32.mrb[0].mxu0
      %898 = vmatprep.mubr.f32.mxu0 %v304
      %899 = vmatmul.mubr.f32.gmra.mrb[0].mxu0 %v303
      %v900 = vpop.f32.mrb[0].mxu0
      %v901 = vadd.f32 %v742, %v900
      %v902 = vpop.f32.mrb[0].mxu0
      %903 = vmatprep.mubr.f32.mxu0 %v311
      %904 = vmatmul.mubr.f32.gmra.mrb[0].mxu0 %v310
      %v905 = vpop.f32.mrb[0].mxu0
      %v906 = vadd.f32 %v742, %v905
      %v907 = vpop.f32.mrb[0].mxu0
      %908 = vmatprep.mubr.f32.mxu0 %v318
      %909 = vmatmul.mubr.f32.gmra.mrb[0].mxu0 %v317
      %v910 = vpop.f32.mrb[0].mxu0
      %v911 = vadd.f32 %v742, %v910
      %v912 = vpop.f32.mrb[0].mxu0
      %913 = vmatprep.mubr.f32.mxu0 %v325
      %914 = vmatmul.mubr.f32.gmra.mrb[0].mxu0 %v324
      %v915 = vpop.f32.mrb[0].mxu0
      %v916 = vadd.f32 %v742, %v915
      %v917 = vpop.f32.mrb[0].mxu0
      %918 = vmatprep.mubr.f32.mxu0 %v332
      %919 = vmatmul.mubr.f32.gmra.mrb[0].mxu0 %v331
      %v920 = vpop.f32.mrb[0].mxu0
      %v921 = vadd.f32 %v742, %v920
      %v922 = vpop.f32.mrb[0].mxu0
      %923 = vmatprep.mubr.f32.mxu0 %v339
      %924 = vmatmul.mubr.f32.gmra.mrb[0].mxu0 %v338
      %v925 = vpop.f32.mrb[0].mxu0
      %v926 = vadd.f32 %v742, %v925
      %v927 = vpop.f32.mrb[0].mxu0
      %928 = vmatprep.mubr.f32.mxu0 %v346
      %929 = vmatmul.mubr.f32.gmra.mrb[0].mxu0 %v345
      %v930 = vpop.f32.mrb[0].mxu0
      %v931 = vadd.f32 %v742, %v930
      %v932 = vpop.f32.mrb[0].mxu0
      %933 = vmatprep.mubr.f32.mxu0 %v353
      %934 = vmatmul.mubr.f32.gmra.mrb[0].mxu0 %v352
      %v935 = vpop.f32.mrb[0].mxu0
      %v936 = vadd.f32 %v742, %v935
      %v937 = vpop.f32.mrb[0].mxu0
      %938 = vmatprep.mubr.f32.mxu0 %v360
      %939 = vmatmul.mubr.f32.gmra.mrb[0].mxu0 %v359
      %v940 = vpop.f32.mrb[0].mxu0
      %v941 = vadd.f32 %v742, %v940
      %v942 = vpop.f32.mrb[0].mxu0
      %943 = vmatprep.mubr.f32.mxu0 %v367
      %944 = vmatmul.mubr.f32.gmra.mrb[0].mxu0 %v366
      %v945 = vpop.f32.mrb[0].mxu0
      %v946 = vadd.f32 %v742, %v945
      %v947 = vpop.f32.mrb[0].mxu0
      %948 = vmatprep.mubr.f32.mxu0 %v374
      %949 = vmatmul.mubr.f32.gmra.mrb[0].mxu0 %v373
      %v950 = vpop.f32.mrb[0].mxu0
      %v951 = vadd.f32 %v742, %v950
      %v952 = vpop.f32.mrb[0].mxu0
      %953 = vmatprep.mubr.f32.mxu0 %v381
      %954 = vmatmul.mubr.f32.gmra.mrb[0].mxu0 %v380
      %v955 = vpop.f32.mrb[0].mxu0
      %v956 = vadd.f32 %v742, %v955
      %v957 = vpop.f32.mrb[0].mxu0
      %958 = vmatprep.mubr.f32.mxu0 %v388
      %959 = vmatmul.mubr.f32.gmra.mrb[0].mxu0 %v387
      %v960 = vpop.f32.mrb[0].mxu0
      %v961 = vadd.f32 %v742, %v960
      %v962 = vpop.f32.mrb[0].mxu0
      %963 = vmatprep.mubr.f32.mxu0 %v395
      %964 = vmatmul.mubr.f32.gmra.mrb[0].mxu0 %v394
      %v965 = vpop.f32.mrb[0].mxu0
      %v966 = vadd.f32 %v742, %v965
      %v967 = vpop.f32.mrb[0].mxu0
      %968 = vmatprep.mubr.f32.mxu0 %v402
      %969 = vmatmul.mubr.f32.gmra.mrb[0].mxu0 %v401
      %v970 = vpop.f32.mrb[0].mxu0
      %v971 = vadd.f32 %v742, %v970
      %v972 = vpop.f32.mrb[0].mxu0
      %973 = vmatprep.mubr.f32.mxu0 %v409
      %974 = vmatmul.mubr.f32.gmra.mrb[0].mxu0 %v408
      %v975 = vpop.f32.mrb[0].mxu0
      %v976 = vadd.f32 %v742, %v975
      %v977 = vpop.f32.mrb[0].mxu0
      %978 = vmatprep.mubr.f32.mxu0 %v416
      %979 = vmatmul.mubr.f32.gmra.mrb[0].mxu0 %v415
      %v980 = vpop.f32.mrb[0].mxu0
      %v981 = vadd.f32 %v742, %v980
      %v982 = vpop.f32.mrb[0].mxu0
      %983 = vmatprep.mubr.f32.mxu0 %v423
      %984 = vmatmul.mubr.f32.gmra.mrb[0].mxu0 %v422
      %v985 = vpop.f32.mrb[0].mxu0
      %v986 = vadd.f32 %v742, %v985
      %v987 = vpop.f32.mrb[0].mxu0
      %988 = vmatprep.mubr.f32.mxu0 %v430
      %989 = vmatmul.mubr.f32.gmra.mrb[0].mxu0 %v429
      %v990 = vpop.f32.mrb[0].mxu0
      %v991 = vadd.f32 %v742, %v990
      %v992 = vpop.f32.mrb[0].mxu0
      %993 = vmatprep.mubr.f32.mxu0 %v437
      %994 = vmatmul.mubr.f32.gmra.mrb[0].mxu0 %v436
      %v995 = vpop.f32.mrb[0].mxu0
      %v996 = vadd.f32 %v742, %v995
      %v997 = vpop.f32.mrb[0].mxu0
      %998 = vmatprep.mubr.f32.mxu0 %v444
      %999 = vmatmul.mubr.f32.gmra.mrb[0].mxu0 %v443
      %v1000 = vpop.f32.mrb[0].mxu0
      %v1001 = vadd.f32 %v742, %v1000
      %v1002 = vpop.f32.mrb[0].mxu0
      %1003 = vmatprep.mubr.f32.mxu0 %v451
      %1004 = vmatmul.mubr.f32.gmra.mrb[0].mxu0 %v450
      %v1005 = vpop.f32.mrb[0].mxu0
      %v1006 = vadd.f32 %v742, %v1005
      %v1007 = vpop.f32.mrb[0].mxu0
      %1008 = vmatprep.mubr.f32.mxu0 %v458
      %1009 = vmatmul.mubr.f32.gmra.mrb[0].mxu0 %v457
      %v1010 = vpop.f32.mrb[0].mxu0
      %v1011 = vadd.f32 %v742, %v1010
      %v1012 = vpop.f32.mrb[0].mxu0
      %1013 = vmatprep.mubr.f32.mxu0 %v465
      %1014 = vmatmul.mubr.f32.gmra.mrb[0].mxu0 %v464
      %v1015 = vpop.f32.mrb[0].mxu0
      %v1016 = vadd.f32 %v742, %v1015
      %v1017 = vpop.f32.mrb[0].mxu0
      %1018 = vmatprep.mubr.f32.mxu0 %v472
      %1019 = vmatmul.mubr.f32.gmra.mrb[0].mxu0 %v471
      %v1020 = vpop.f32.mrb[0].mxu0
      %v1021 = vadd.f32 %v742, %v1020
      %v1022 = vpop.f32.mrb[0].mxu0
      %1023 = vmatprep.mubr.f32.mxu0 %v479
      %1024 = vmatmul.mubr.f32.gmra.mrb[0].mxu0 %v478
      %v1025 = vpop.f32.mrb[0].mxu0
      %v1026 = vadd.f32 %v742, %v1025
      %v1027 = vpop.f32.mrb[0].mxu0
      %1028 = vmatprep.mubr.f32.mxu0 %v486
      %1029 = vmatmul.mubr.f32.gmra.mrb[0].mxu0 %v485
      %v1030 = vpop.f32.mrb[0].mxu0
      %v1031 = vadd.f32 %v742, %v1030
      %v1032 = vpop.f32.mrb[0].mxu0
      %1033 = vmatprep.mubr.f32.mxu0 %v493
      %1034 = vmatmul.mubr.f32.gmra.mrb[0].mxu0 %v492
      %v1035 = vpop.f32.mrb[0].mxu0
      %v1036 = vadd.f32 %v742, %v1035
      %v1037 = vpop.f32.mrb[0].mxu0
      %1038 = vmatprep.mubr.f32.mxu0 %v500
      %1039 = vmatmul.mubr.f32.gmra.mrb[0].mxu0 %v499
      %v1040 = vpop.f32.mrb[0].mxu0
      %v1041 = vadd.f32 %v742, %v1040
      %v1042 = vpop.f32.mrb[0].mxu0
      %1043 = vmatprep.mubr.f32.mxu0 %v507
      %1044 = vmatmul.mubr.f32.gmra.mrb[0].mxu0 %v506
      %v1045 = vpop.f32.mrb[0].mxu0
      %v1046 = vadd.f32 %v742, %v1045
      %v1047 = vpop.f32.mrb[0].mxu0
      %1048 = vmatprep.mubr.f32.mxu0 %v514
      %1049 = vmatmul.mubr.f32.gmra.mrb[0].mxu0 %v513
      %v1050 = vpop.f32.mrb[0].mxu0
      %v1051 = vadd.f32 %v742, %v1050
      %v1052 = vpop.f32.mrb[0].mxu0
      %1053 = vmatprep.mubr.f32.mxu0 %v521
      %1054 = vmatmul.mubr.f32.gmra.mrb[0].mxu0 %v520
      %v1055 = vpop.f32.mrb[0].mxu0
      %v1056 = vadd.f32 %v742, %v1055
      %v1057 = vpop.f32.mrb[0].mxu0
      %1058 = vmatprep.mubr.f32.mxu0 %v528
      %1059 = vmatmul.mubr.f32.gmra.mrb[0].mxu0 %v527
      %v1060 = vpop.f32.mrb[0].mxu0
      %v1061 = vadd.f32 %v742, %v1060
      %v1062 = vpop.f32.mrb[0].mxu0
      %1063 = vmatprep.mubr.f32.mxu0 %v535
      %1064 = vmatmul.mubr.f32.gmra.mrb[0].mxu0 %v534
      %v1065 = vpop.f32.mrb[0].mxu0
      %v1066 = vadd.f32 %v742, %v1065
      %v1067 = vpop.f32.mrb[0].mxu0
      %1068 = vmatprep.mubr.f32.mxu0 %v542
      %1069 = vmatmul.mubr.f32.gmra.mrb[0].mxu0 %v541
      %v1070 = vpop.f32.mrb[0].mxu0
      %v1071 = vadd.f32 %v742, %v1070
      %v1072 = vpop.f32.mrb[0].mxu0
      %1073 = vmatprep.mubr.f32.mxu0 %v549
      %1074 = vmatmul.mubr.f32.gmra.mrb[0].mxu0 %v548
      %v1075 = vpop.f32.mrb[0].mxu0
      %v1076 = vadd.f32 %v742, %v1075
      %v1077 = vpop.f32.mrb[0].mxu0
      %1078 = vmatprep.mubr.f32.mxu0 %v556
      %1079 = vmatmul.mubr.f32.gmra.mrb[0].mxu0 %v555
      %v1080 = vpop.f32.mrb[0].mxu0
      %v1081 = vadd.f32 %v742, %v1080
      %v1082 = vpop.f32.mrb[0].mxu0
      %1083 = vmatprep.mubr.f32.mxu0 %v563
      %1084 = vmatmul.mubr.f32.gmra.mrb[0].mxu0 %v562
      %v1085 = vpop.f32.mrb[0].mxu0
      %v1086 = vadd.f32 %v742, %v1085
      %v1087 = vpop.f32.mrb[0].mxu0
      %1088 = vmatprep.mubr.f32.mxu0 %v570
      %1089 = vmatmul.mubr.f32.gmra.mrb[0].mxu0 %v569
      %v1090 = vpop.f32.mrb[0].mxu0
      %v1091 = vadd.f32 %v742, %v1090
      %v1092 = vpop.f32.mrb[0].mxu0
      %1093 = vmatprep.mubr.f32.mxu0 %v577
      %1094 = vmatmul.mubr.f32.gmra.mrb[0].mxu0 %v576
      %v1095 = vpop.f32.mrb[0].mxu0
      %v1096 = vadd.f32 %v742, %v1095
      %v1097 = vpop.f32.mrb[0].mxu0
      %1098 = vmatprep.mubr.f32.mxu0 %v584
      %1099 = vmatmul.mubr.f32.gmra.mrb[0].mxu0 %v583
      %v1100 = vpop.f32.mrb[0].mxu0
      %v1101 = vadd.f32 %v742, %v1100
      %v1102 = vpop.f32.mrb[0].mxu0
      %1103 = vmatprep.mubr.f32.mxu0 %v591
      %1104 = vmatmul.mubr.f32.gmra.mrb[0].mxu0 %v590
      %v1105 = vpop.f32.mrb[0].mxu0
      %v1106 = vadd.f32 %v742, %v1105
      %v1107 = vpop.f32.mrb[0].mxu0
      %1108 = vmatprep.mubr.f32.mxu0 %v598
      %1109 = vmatmul.mubr.f32.gmra.mrb[0].mxu0 %v597
      %v1110 = vpop.f32.mrb[0].mxu0
      %v1111 = vadd.f32 %v742, %v1110
      %v1112 = vpop.f32.mrb[0].mxu0
      %1113 = vmatprep.mubr.f32.mxu0 %v605
      %1114 = vmatmul.mubr.f32.gmra.mrb[0].mxu0 %v604
      %v1115 = vpop.f32.mrb[0].mxu0
      %v1116 = vadd.f32 %v742, %v1115
      %v1117 = vpop.f32.mrb[0].mxu0
      %1118 = vmatprep.mubr.f32.mxu0 %v612
      %1119 = vmatmul.mubr.f32.gmra.mrb[0].mxu0 %v611
      %v1120 = vpop.f32.mrb[0].mxu0
      %v1121 = vadd.f32 %v742, %v1120
      %v1122 = vpop.f32.mrb[0].mxu0
      %1123 = vmatprep.mubr.f32.mxu0 %v619
      %1124 = vmatmul.mubr.f32.gmra.mrb[0].mxu0 %v618
      %v1125 = vpop.f32.mrb[0].mxu0
      %v1126 = vadd.f32 %v742, %v1125
      %v1127 = vpop.f32.mrb[0].mxu0
      %1128 = vdwg.mxu0
      %1129 = vmatprep.subr.mxu0 0.0
      %1130 = vmatpush1.msra.mxu0 %v657
      %1131 = vmatprep.subr.mxu0 0.0
      %1132 = vmatpush1.msra.mxu0 %v658
      %1133 = vmatprep.subr.mxu0 0.0
      %1134 = vmatpush1.msra.mxu0 %v659
      %1135 = vmatprep.subr.mxu0 0.0
      %1136 = vmatpush1.msra.mxu0 %v660
      %1137 = vmatprep.subr.mxu0 0.0
      %1138 = vmatpush1.msra.mxu0 %v661
      %1139 = vmatprep.subr.mxu0 0.0
      %1140 = vmatpush1.msra.mxu0 %v662
      %1141 = vmatprep.subr.mxu0 0.0
      %1142 = vmatpush1.msra.mxu0 %v663
      %1143 = vmatprep.subr.mxu0 0.0
      %1144 = vmatpush1.msra.mxu0 %v664
      %1145 = vmatprep.subr.mxu0 0.0
      %1146 = vmatpush1.msra.mxu0 %v665
      %1147 = vmatprep.subr.mxu0 0.0
      %1148 = vmatpush1.msra.mxu0 %v666
      %1149 = vmatprep.subr.mxu0 0.0
      %1150 = vmatpush1.msra.mxu0 %v667
      %1151 = vmatprep.subr.mxu0 0.0
      %1152 = vmatpush1.msra.mxu0 %v668
      %1153 = vmatprep.subr.mxu0 0.0
      %1154 = vmatpush1.msra.mxu0 %v669
      %1155 = vmatprep.subr.mxu0 0.0
      %1156 = vmatpush1.msra.mxu0 %v670
      %1157 = vmatprep.subr.mxu0 0.0
      %1158 = vmatpush1.msra.mxu0 %v671
      %1159 = vmatprep.subr.mxu0 0.0
      %1160 = vmatpush1.msra.mxu0 %v672
      %1161 = vmatprep.subr.mxu0 0.0
      %1162 = vmatpush1.msra.mxu0 %v673
      %1163 = vmatprep.subr.mxu0 0.0
      %1164 = vmatpush1.msra.mxu0 %v674
      %1165 = vmatprep.subr.mxu0 0.0
      %1166 = vmatpush1.msra.mxu0 %v675
      %1167 = vmatprep.subr.mxu0 0.0
      %1168 = vmatpush1.msra.mxu0 %v676
      %1169 = vmatprep.subr.mxu0 0.0
      %1170 = vmatpush1.msra.mxu0 %v677
      %1171 = vmatprep.subr.mxu0 0.0
      %1172 = vmatpush1.msra.mxu0 %v678
      %1173 = vmatprep.subr.mxu0 0.0
      %1174 = vmatpush1.msra.mxu0 %v679
      %1175 = vmatprep.subr.mxu0 0.0
      %1176 = vmatpush1.msra.mxu0 %v680
      %1177 = vmatprep.subr.mxu0 0.0
      %1178 = vmatpush1.msra.mxu0 %v681
      %1179 = vmatprep.subr.mxu0 0.0
      %1180 = vmatpush1.msra.mxu0 %v682
      %1181 = vmatprep.subr.mxu0 0.0
      %1182 = vmatpush1.msra.mxu0 %v683
      %1183 = vmatprep.subr.mxu0 0.0
      %1184 = vmatpush1.msra.mxu0 %v684
      %1185 = vmatprep.subr.mxu0 0.0
      %1186 = vmatpush1.msra.mxu0 %v685
      %1187 = vmatprep.subr.mxu0 0.0
      %1188 = vmatpush1.msra.mxu0 %v686
      %1189 = vmatprep.subr.mxu0 0.0
      %1190 = vmatpush1.msra.mxu0 %v687
      %1191 = vmatprep.subr.mxu0 0.0
      %1192 = vmatpush1.msra.mxu0 %v688
      %1193 = vmatprep.mubr.f32.mxu0 %v180
      %1194 = vmatmul.mubr.f32.gmra.mrb[0].mxu0 %v179
      %v1195 = vpop.f32.mrb[0].mxu0
      %v1196 = vadd.f32 %v811, %v1195
      %v1197 = vpop.f32.mrb[0].mxu0
      %1198 = vmatprep.mubr.f32.mxu0 %v187
      %1199 = vmatmul.mubr.f32.gmra.mrb[0].mxu0 %v186
      %v1200 = vpop.f32.mrb[0].mxu0
      %v1201 = vadd.f32 %v816, %v1200
      %v1202 = vpop.f32.mrb[0].mxu0
      %1203 = vmatprep.mubr.f32.mxu0 %v194
      %1204 = vmatmul.mubr.f32.gmra.mrb[0].mxu0 %v193
      %v1205 = vpop.f32.mrb[0].mxu0
      %v1206 = vadd.f32 %v821, %v1205
      %v1207 = vpop.f32.mrb[0].mxu0
      %1208 = vmatprep.mubr.f32.mxu0 %v201
      %1209 = vmatmul.mubr.f32.gmra.mrb[0].mxu0 %v200
      %v1210 = vpop.f32.mrb[0].mxu0
      %v1211 = vadd.f32 %v826, %v1210
      %v1212 = vpop.f32.mrb[0].mxu0
      %1213 = vmatprep.mubr.f32.mxu0 %v208
      %1214 = vmatmul.mubr.f32.gmra.mrb[0].mxu0 %v207
      %v1215 = vpop.f32.mrb[0].mxu0
      %v1216 = vadd.f32 %v831, %v1215
      %v1217 = vpop.f32.mrb[0].mxu0
      %1218 = vmatprep.mubr.f32.mxu0 %v215
      %1219 = vmatmul.mubr.f32.gmra.mrb[0].mxu0 %v214
      %v1220 = vpop.f32.mrb[0].mxu0
      %v1221 = vadd.f32 %v836, %v1220
      %v1222 = vpop.f32.mrb[0].mxu0
      %1223 = vmatprep.mubr.f32.mxu0 %v222
      %1224 = vmatmul.mubr.f32.gmra.mrb[0].mxu0 %v221
      %v1225 = vpop.f32.mrb[0].mxu0
      %v1226 = vadd.f32 %v841, %v1225
      %v1227 = vpop.f32.mrb[0].mxu0
      %1228 = vmatprep.mubr.f32.mxu0 %v229
      %1229 = vmatmul.mubr.f32.gmra.mrb[0].mxu0 %v228
      %v1230 = vpop.f32.mrb[0].mxu0
      %v1231 = vadd.f32 %v846, %v1230
      %v1232 = vpop.f32.mrb[0].mxu0
      %1233 = vmatprep.mubr.f32.mxu0 %v236
      %1234 = vmatmul.mubr.f32.gmra.mrb[0].mxu0 %v235
      %v1235 = vpop.f32.mrb[0].mxu0
      %v1236 = vadd.f32 %v851, %v1235
      %v1237 = vpop.f32.mrb[0].mxu0
      %1238 = vmatprep.mubr.f32.mxu0 %v243
      %1239 = vmatmul.mubr.f32.gmra.mrb[0].mxu0 %v242
      %v1240 = vpop.f32.mrb[0].mxu0
      %v1241 = vadd.f32 %v856, %v1240
      %v1242 = vpop.f32.mrb[0].mxu0
      %1243 = vmatprep.mubr.f32.mxu0 %v250
      %1244 = vmatmul.mubr.f32.gmra.mrb[0].mxu0 %v249
      %v1245 = vpop.f32.mrb[0].mxu0
      %v1246 = vadd.f32 %v861, %v1245
      %v1247 = vpop.f32.mrb[0].mxu0
      %1248 = vmatprep.mubr.f32.mxu0 %v257
      %1249 = vmatmul.mubr.f32.gmra.mrb[0].mxu0 %v256
      %v1250 = vpop.f32.mrb[0].mxu0
      %v1251 = vadd.f32 %v866, %v1250
      %v1252 = vpop.f32.mrb[0].mxu0
      %1253 = vmatprep.mubr.f32.mxu0 %v264
      %1254 = vmatmul.mubr.f32.gmra.mrb[0].mxu0 %v263
      %v1255 = vpop.f32.mrb[0].mxu0
      %v1256 = vadd.f32 %v871, %v1255
      %v1257 = vpop.f32.mrb[0].mxu0
      %1258 = vmatprep.mubr.f32.mxu0 %v271
      %1259 = vmatmul.mubr.f32.gmra.mrb[0].mxu0 %v270
      %v1260 = vpop.f32.mrb[0].mxu0
      %v1261 = vadd.f32 %v876, %v1260
      %v1262 = vpop.f32.mrb[0].mxu0
      %1263 = vmatprep.mubr.f32.mxu0 %v278
      %1264 = vmatmul.mubr.f32.gmra.mrb[0].mxu0 %v277
      %v1265 = vpop.f32.mrb[0].mxu0
      %v1266 = vadd.f32 %v881, %v1265
      %v1267 = vpop.f32.mrb[0].mxu0
      %1268 = vmatprep.mubr.f32.mxu0 %v285
      %1269 = vmatmul.mubr.f32.gmra.mrb[0].mxu0 %v284
      %v1270 = vpop.f32.mrb[0].mxu0
      %v1271 = vadd.f32 %v886, %v1270
      %v1272 = vpop.f32.mrb[0].mxu0
      %1273 = vmatprep.mubr.f32.mxu0 %v292
      %1274 = vmatmul.mubr.f32.gmra.mrb[0].mxu0 %v291
      %v1275 = vpop.f32.mrb[0].mxu0
      %v1276 = vadd.f32 %v891, %v1275
      %v1277 = vpop.f32.mrb[0].mxu0
      %1278 = vmatprep.mubr.f32.mxu0 %v299
      %1279 = vmatmul.mubr.f32.gmra.mrb[0].mxu0 %v298
      %v1280 = vpop.f32.mrb[0].mxu0
      %v1281 = vadd.f32 %v896, %v1280
      %v1282 = vpop.f32.mrb[0].mxu0
      %1283 = vmatprep.mubr.f32.mxu0 %v306
      %1284 = vmatmul.mubr.f32.gmra.mrb[0].mxu0 %v305
      %v1285 = vpop.f32.mrb[0].mxu0
      %v1286 = vadd.f32 %v901, %v1285
      %v1287 = vpop.f32.mrb[0].mxu0
      %1288 = vmatprep.mubr.f32.mxu0 %v313
      %1289 = vmatmul.mubr.f32.gmra.mrb[0].mxu0 %v312
      %v1290 = vpop.f32.mrb[0].mxu0
      %v1291 = vadd.f32 %v906, %v1290
      %v1292 = vpop.f32.mrb[0].mxu0
      %1293 = vmatprep.mubr.f32.mxu0 %v320
      %1294 = vmatmul.mubr.f32.gmra.mrb[0].mxu0 %v319
      %v1295 = vpop.f32.mrb[0].mxu0
      %v1296 = vadd.f32 %v911, %v1295
      %v1297 = vpop.f32.mrb[0].mxu0
      %1298 = vmatprep.mubr.f32.mxu0 %v327
      %1299 = vmatmul.mubr.f32.gmra.mrb[0].mxu0 %v326
      %v1300 = vpop.f32.mrb[0].mxu0
      %v1301 = vadd.f32 %v916, %v1300
      %v1302 = vpop.f32.mrb[0].mxu0
      %1303 = vmatprep.mubr.f32.mxu0 %v334
      %1304 = vmatmul.mubr.f32.gmra.mrb[0].mxu0 %v333
      %v1305 = vpop.f32.mrb[0].mxu0
      %v1306 = vadd.f32 %v921, %v1305
      %v1307 = vpop.f32.mrb[0].mxu0
      %1308 = vmatprep.mubr.f32.mxu0 %v341
      %1309 = vmatmul.mubr.f32.gmra.mrb[0].mxu0 %v340
      %v1310 = vpop.f32.mrb[0].mxu0
      %v1311 = vadd.f32 %v926, %v1310
      %v1312 = vpop.f32.mrb[0].mxu0
      %1313 = vmatprep.mubr.f32.mxu0 %v348
      %1314 = vmatmul.mubr.f32.gmra.mrb[0].mxu0 %v347
      %v1315 = vpop.f32.mrb[0].mxu0
      %v1316 = vadd.f32 %v931, %v1315
      %v1317 = vpop.f32.mrb[0].mxu0
      %1318 = vmatprep.mubr.f32.mxu0 %v355
      %1319 = vmatmul.mubr.f32.gmra.mrb[0].mxu0 %v354
      %v1320 = vpop.f32.mrb[0].mxu0
      %v1321 = vadd.f32 %v936, %v1320
      %v1322 = vpop.f32.mrb[0].mxu0
      %1323 = vmatprep.mubr.f32.mxu0 %v362
      %1324 = vmatmul.mubr.f32.gmra.mrb[0].mxu0 %v361
      %v1325 = vpop.f32.mrb[0].mxu0
      %v1326 = vadd.f32 %v941, %v1325
      %v1327 = vpop.f32.mrb[0].mxu0
      %1328 = vmatprep.mubr.f32.mxu0 %v369
      %1329 = vmatmul.mubr.f32.gmra.mrb[0].mxu0 %v368
      %v1330 = vpop.f32.mrb[0].mxu0
      %v1331 = vadd.f32 %v946, %v1330
      %v1332 = vpop.f32.mrb[0].mxu0
      %1333 = vmatprep.mubr.f32.mxu0 %v376
      %1334 = vmatmul.mubr.f32.gmra.mrb[0].mxu0 %v375
      %v1335 = vpop.f32.mrb[0].mxu0
      %v1336 = vadd.f32 %v951, %v1335
      %v1337 = vpop.f32.mrb[0].mxu0
      %1338 = vmatprep.mubr.f32.mxu0 %v383
      %1339 = vmatmul.mubr.f32.gmra.mrb[0].mxu0 %v382
      %v1340 = vpop.f32.mrb[0].mxu0
      %v1341 = vadd.f32 %v956, %v1340
      %v1342 = vpop.f32.mrb[0].mxu0
      %1343 = vmatprep.mubr.f32.mxu0 %v390
      %1344 = vmatmul.mubr.f32.gmra.mrb[0].mxu0 %v389
      %v1345 = vpop.f32.mrb[0].mxu0
      %v1346 = vadd.f32 %v961, %v1345
      %v1347 = vpop.f32.mrb[0].mxu0
      %1348 = vmatprep.mubr.f32.mxu0 %v397
      %1349 = vmatmul.mubr.f32.gmra.mrb[0].mxu0 %v396
      %v1350 = vpop.f32.mrb[0].mxu0
      %v1351 = vadd.f32 %v966, %v1350
      %v1352 = vpop.f32.mrb[0].mxu0
      %1353 = vmatprep.mubr.f32.mxu0 %v404
      %1354 = vmatmul.mubr.f32.gmra.mrb[0].mxu0 %v403
      %v1355 = vpop.f32.mrb[0].mxu0
      %v1356 = vadd.f32 %v971, %v1355
      %v1357 = vpop.f32.mrb[0].mxu0
      %1358 = vmatprep.mubr.f32.mxu0 %v411
      %1359 = vmatmul.mubr.f32.gmra.mrb[0].mxu0 %v410
      %v1360 = vpop.f32.mrb[0].mxu0
      %v1361 = vadd.f32 %v976, %v1360
      %v1362 = vpop.f32.mrb[0].mxu0
      %1363 = vmatprep.mubr.f32.mxu0 %v418
      %1364 = vmatmul.mubr.f32.gmra.mrb[0].mxu0 %v417
      %v1365 = vpop.f32.mrb[0].mxu0
      %v1366 = vadd.f32 %v981, %v1365
      %v1367 = vpop.f32.mrb[0].mxu0
      %1368 = vmatprep.mubr.f32.mxu0 %v425
      %1369 = vmatmul.mubr.f32.gmra.mrb[0].mxu0 %v424
      %v1370 = vpop.f32.mrb[0].mxu0
      %v1371 = vadd.f32 %v986, %v1370
      %v1372 = vpop.f32.mrb[0].mxu0
      %1373 = vmatprep.mubr.f32.mxu0 %v432
      %1374 = vmatmul.mubr.f32.gmra.mrb[0].mxu0 %v431
      %v1375 = vpop.f32.mrb[0].mxu0
      %v1376 = vadd.f32 %v991, %v1375
      %v1377 = vpop.f32.mrb[0].mxu0
      %1378 = vmatprep.mubr.f32.mxu0 %v439
      %1379 = vmatmul.mubr.f32.gmra.mrb[0].mxu0 %v438
      %v1380 = vpop.f32.mrb[0].mxu0
      %v1381 = vadd.f32 %v996, %v1380
      %v1382 = vpop.f32.mrb[0].mxu0
      %1383 = vmatprep.mubr.f32.mxu0 %v446
      %1384 = vmatmul.mubr.f32.gmra.mrb[0].mxu0 %v445
      %v1385 = vpop.f32.mrb[0].mxu0
      %v1386 = vadd.f32 %v1001, %v1385
      %v1387 = vpop.f32.mrb[0].mxu0
      %1388 = vmatprep.mubr.f32.mxu0 %v453
      %1389 = vmatmul.mubr.f32.gmra.mrb[0].mxu0 %v452
      %v1390 = vpop.f32.mrb[0].mxu0
      %v1391 = vadd.f32 %v1006, %v1390
      %v1392 = vpop.f32.mrb[0].mxu0
      %1393 = vmatprep.mubr.f32.mxu0 %v460
      %1394 = vmatmul.mubr.f32.gmra.mrb[0].mxu0 %v459
      %v1395 = vpop.f32.mrb[0].mxu0
      %v1396 = vadd.f32 %v1011, %v1395
      %v1397 = vpop.f32.mrb[0].mxu0
      %1398 = vmatprep.mubr.f32.mxu0 %v467
      %1399 = vmatmul.mubr.f32.gmra.mrb[0].mxu0 %v466
      %v1400 = vpop.f32.mrb[0].mxu0
      %v1401 = vadd.f32 %v1016, %v1400
      %v1402 = vpop.f32.mrb[0].mxu0
      %1403 = vmatprep.mubr.f32.mxu0 %v474
      %1404 = vmatmul.mubr.f32.gmra.mrb[0].mxu0 %v473
      %v1405 = vpop.f32.mrb[0].mxu0
      %v1406 = vadd.f32 %v1021, %v1405
      %v1407 = vpop.f32.mrb[0].mxu0
      %1408 = vmatprep.mubr.f32.mxu0 %v481
      %1409 = vmatmul.mubr.f32.gmra.mrb[0].mxu0 %v480
      %v1410 = vpop.f32.mrb[0].mxu0
      %v1411 = vadd.f32 %v1026, %v1410
      %v1412 = vpop.f32.mrb[0].mxu0
      %1413 = vmatprep.mubr.f32.mxu0 %v488
      %1414 = vmatmul.mubr.f32.gmra.mrb[0].mxu0 %v487
      %v1415 = vpop.f32.mrb[0].mxu0
      %v1416 = vadd.f32 %v1031, %v1415
      %v1417 = vpop.f32.mrb[0].mxu0
      %1418 = vmatprep.mubr.f32.mxu0 %v495
      %1419 = vmatmul.mubr.f32.gmra.mrb[0].mxu0 %v494
      %v1420 = vpop.f32.mrb[0].mxu0
      %v1421 = vadd.f32 %v1036, %v1420
      %v1422 = vpop.f32.mrb[0].mxu0
      %1423 = vmatprep.mubr.f32.mxu0 %v502
      %1424 = vmatmul.mubr.f32.gmra.mrb[0].mxu0 %v501
      %v1425 = vpop.f32.mrb[0].mxu0
      %v1426 = vadd.f32 %v1041, %v1425
      %v1427 = vpop.f32.mrb[0].mxu0
      %1428 = vmatprep.mubr.f32.mxu0 %v509
      %1429 = vmatmul.mubr.f32.gmra.mrb[0].mxu0 %v508
      %v1430 = vpop.f32.mrb[0].mxu0
      %v1431 = vadd.f32 %v1046, %v1430
      %v1432 = vpop.f32.mrb[0].mxu0
      %1433 = vmatprep.mubr.f32.mxu0 %v516
      %1434 = vmatmul.mubr.f32.gmra.mrb[0].mxu0 %v515
      %v1435 = vpop.f32.mrb[0].mxu0
      %v1436 = vadd.f32 %v1051, %v1435
      %v1437 = vpop.f32.mrb[0].mxu0
      %1438 = vmatprep.mubr.f32.mxu0 %v523
      %1439 = vmatmul.mubr.f32.gmra.mrb[0].mxu0 %v522
      %v1440 = vpop.f32.mrb[0].mxu0
      %v1441 = vadd.f32 %v1056, %v1440
      %v1442 = vpop.f32.mrb[0].mxu0
      %1443 = vmatprep.mubr.f32.mxu0 %v530
      %1444 = vmatmul.mubr.f32.gmra.mrb[0].mxu0 %v529
      %v1445 = vpop.f32.mrb[0].mxu0
      %v1446 = vadd.f32 %v1061, %v1445
      %v1447 = vpop.f32.mrb[0].mxu0
      %1448 = vmatprep.mubr.f32.mxu0 %v537
      %1449 = vmatmul.mubr.f32.gmra.mrb[0].mxu0 %v536
      %v1450 = vpop.f32.mrb[0].mxu0
      %v1451 = vadd.f32 %v1066, %v1450
      %v1452 = vpop.f32.mrb[0].mxu0
      %1453 = vmatprep.mubr.f32.mxu0 %v544
      %1454 = vmatmul.mubr.f32.gmra.mrb[0].mxu0 %v543
      %v1455 = vpop.f32.mrb[0].mxu0
      %v1456 = vadd.f32 %v1071, %v1455
      %v1457 = vpop.f32.mrb[0].mxu0
      %1458 = vmatprep.mubr.f32.mxu0 %v551
      %1459 = vmatmul.mubr.f32.gmra.mrb[0].mxu0 %v550
      %v1460 = vpop.f32.mrb[0].mxu0
      %v1461 = vadd.f32 %v1076, %v1460
      %v1462 = vpop.f32.mrb[0].mxu0
      %1463 = vmatprep.mubr.f32.mxu0 %v558
      %1464 = vmatmul.mubr.f32.gmra.mrb[0].mxu0 %v557
      %v1465 = vpop.f32.mrb[0].mxu0
      %v1466 = vadd.f32 %v1081, %v1465
      %v1467 = vpop.f32.mrb[0].mxu0
      %1468 = vmatprep.mubr.f32.mxu0 %v565
      %1469 = vmatmul.mubr.f32.gmra.mrb[0].mxu0 %v564
      %v1470 = vpop.f32.mrb[0].mxu0
      %v1471 = vadd.f32 %v1086, %v1470
      %v1472 = vpop.f32.mrb[0].mxu0
      %1473 = vmatprep.mubr.f32.mxu0 %v572
      %1474 = vmatmul.mubr.f32.gmra.mrb[0].mxu0 %v571
      %v1475 = vpop.f32.mrb[0].mxu0
      %v1476 = vadd.f32 %v1091, %v1475
      %v1477 = vpop.f32.mrb[0].mxu0
      %1478 = vmatprep.mubr.f32.mxu0 %v579
      %1479 = vmatmul.mubr.f32.gmra.mrb[0].mxu0 %v578
      %v1480 = vpop.f32.mrb[0].mxu0
      %v1481 = vadd.f32 %v1096, %v1480
      %v1482 = vpop.f32.mrb[0].mxu0
      %1483 = vmatprep.mubr.f32.mxu0 %v586
      %1484 = vmatmul.mubr.f32.gmra.mrb[0].mxu0 %v585
      %v1485 = vpop.f32.mrb[0].mxu0
      %v1486 = vadd.f32 %v1101, %v1485
      %v1487 = vpop.f32.mrb[0].mxu0
      %1488 = vmatprep.mubr.f32.mxu0 %v593
      %1489 = vmatmul.mubr.f32.gmra.mrb[0].mxu0 %v592
      %v1490 = vpop.f32.mrb[0].mxu0
      %v1491 = vadd.f32 %v1106, %v1490
      %v1492 = vpop.f32.mrb[0].mxu0
      %1493 = vmatprep.mubr.f32.mxu0 %v600
      %1494 = vmatmul.mubr.f32.gmra.mrb[0].mxu0 %v599
      %v1495 = vpop.f32.mrb[0].mxu0
      %v1496 = vadd.f32 %v1111, %v1495
      %v1497 = vpop.f32.mrb[0].mxu0
      %1498 = vmatprep.mubr.f32.mxu0 %v607
      %1499 = vmatmul.mubr.f32.gmra.mrb[0].mxu0 %v606
      %v1500 = vpop.f32.mrb[0].mxu0
      %v1501 = vadd.f32 %v1116, %v1500
      %v1502 = vpop.f32.mrb[0].mxu0
      %1503 = vmatprep.mubr.f32.mxu0 %v614
      %1504 = vmatmul.mubr.f32.gmra.mrb[0].mxu0 %v613
      %v1505 = vpop.f32.mrb[0].mxu0
      %v1506 = vadd.f32 %v1121, %v1505
      %v1507 = vpop.f32.mrb[0].mxu0
      %1508 = vmatprep.mubr.f32.mxu0 %v621
      %1509 = vmatmul.mubr.f32.gmra.mrb[0].mxu0 %v620
      %v1510 = vpop.f32.mrb[0].mxu0
      %v1511 = vadd.f32 %v1126, %v1510
      %v1512 = vpop.f32.mrb[0].mxu0
      %1513 = vdwg.mxu0
      %1514 = vmatprep.subr.mxu0 0.0
      %1515 = vmatpush1.msra.mxu0 %v689
      %1516 = vmatprep.subr.mxu0 0.0
      %1517 = vmatpush1.msra.mxu0 %v690
      %1518 = vmatprep.subr.mxu0 0.0
      %1519 = vmatpush1.msra.mxu0 %v691
      %1520 = vmatprep.subr.mxu0 0.0
      %1521 = vmatpush1.msra.mxu0 %v692
      %1522 = vmatprep.subr.mxu0 0.0
      %1523 = vmatpush1.msra.mxu0 %v693
      %1524 = vmatprep.subr.mxu0 0.0
      %1525 = vmatpush1.msra.mxu0 %v694
      %1526 = vmatprep.subr.mxu0 0.0
      %1527 = vmatpush1.msra.mxu0 %v695
      %1528 = vmatprep.subr.mxu0 0.0
      %1529 = vmatpush1.msra.mxu0 %v696
      %1530 = vmatprep.subr.mxu0 0.0
      %1531 = vmatpush1.msra.mxu0 %v697
      %1532 = vmatprep.subr.mxu0 0.0
      %1533 = vmatpush1.msra.mxu0 %v698
      %1534 = vmatprep.subr.mxu0 0.0
      %1535 = vmatpush1.msra.mxu0 %v699
      %1536 = vmatprep.subr.mxu0 0.0
      %1537 = vmatpush1.msra.mxu0 %v700
      %1538 = vmatprep.subr.mxu0 0.0
      %1539 = vmatpush1.msra.mxu0 %v701
      %1540 = vmatprep.subr.mxu0 0.0
      %1541 = vmatpush1.msra.mxu0 %v702
      %1542 = vmatprep.subr.mxu0 0.0
      %1543 = vmatpush1.msra.mxu0 %v703
      %1544 = vmatprep.subr.mxu0 0.0
      %1545 = vmatpush1.msra.mxu0 %v704
      %1546 = vmatprep.subr.mxu0 0.0
      %1547 = vmatpush1.msra.mxu0 %v705
      %1548 = vmatprep.subr.mxu0 0.0
      %1549 = vmatpush1.msra.mxu0 %v706
      %1550 = vmatprep.subr.mxu0 0.0
      %1551 = vmatpush1.msra.mxu0 %v707
      %1552 = vmatprep.subr.mxu0 0.0
      %1553 = vmatpush1.msra.mxu0 %v708
      %1554 = vmatprep.subr.mxu0 0.0
      %1555 = vmatpush1.msra.mxu0 %v709
      %1556 = vmatprep.subr.mxu0 0.0
      %1557 = vmatpush1.msra.mxu0 %v710
      %1558 = vmatprep.subr.mxu0 0.0
      %1559 = vmatpush1.msra.mxu0 %v711
      %1560 = vmatprep.subr.mxu0 0.0
      %1561 = vmatpush1.msra.mxu0 %v712
      %1562 = vmatprep.subr.mxu0 0.0
      %1563 = vmatpush1.msra.mxu0 %v713
      %1564 = vmatprep.subr.mxu0 0.0
      %1565 = vmatpush1.msra.mxu0 %v714
      %1566 = vmatprep.subr.mxu0 0.0
      %1567 = vmatpush1.msra.mxu0 %v715
      %1568 = vmatprep.subr.mxu0 0.0
      %1569 = vmatpush1.msra.mxu0 %v716
      %1570 = vmatprep.subr.mxu0 0.0
      %1571 = vmatpush1.msra.mxu0 %v717
      %1572 = vmatprep.subr.mxu0 0.0
      %1573 = vmatpush1.msra.mxu0 %v718
      %1574 = vmatprep.subr.mxu0 0.0
      %1575 = vmatpush1.msra.mxu0 %v719
      %1576 = vmatprep.subr.mxu0 0.0
      %1577 = vmatpush1.msra.mxu0 %v720
      %1578 = vmatprep.mubr.f32.mxu0 %v182
      %1579 = vmatmul.mubr.f32.gmra.mrb[0].mxu0 %v181
      %v1580 = vpop.f32.mrb[0].mxu0
      %v1581 = vadd.f32 %v1196, %v1580
      %v1582 = vpop.f32.mrb[0].mxu0
      %1583 = vmatprep.mubr.f32.mxu0 %v189
      %1584 = vmatmul.mubr.f32.gmra.mrb[0].mxu0 %v188
      %v1585 = vpop.f32.mrb[0].mxu0
      %v1586 = vadd.f32 %v1201, %v1585
      %v1587 = vpop.f32.mrb[0].mxu0
      %1588 = vmatprep.mubr.f32.mxu0 %v196
      %1589 = vmatmul.mubr.f32.gmra.mrb[0].mxu0 %v195
      %v1590 = vpop.f32.mrb[0].mxu0
      %v1591 = vadd.f32 %v1206, %v1590
      %v1592 = vpop.f32.mrb[0].mxu0
      %1593 = vmatprep.mubr.f32.mxu0 %v203
      %1594 = vmatmul.mubr.f32.gmra.mrb[0].mxu0 %v202
      %v1595 = vpop.f32.mrb[0].mxu0
      %v1596 = vadd.f32 %v1211, %v1595
      %v1597 = vpop.f32.mrb[0].mxu0
      %1598 = vmatprep.mubr.f32.mxu0 %v210
      %1599 = vmatmul.mubr.f32.gmra.mrb[0].mxu0 %v209
      %v1600 = vpop.f32.mrb[0].mxu0
      %v1601 = vadd.f32 %v1216, %v1600
      %v1602 = vpop.f32.mrb[0].mxu0
      %1603 = vmatprep.mubr.f32.mxu0 %v217
      %1604 = vmatmul.mubr.f32.gmra.mrb[0].mxu0 %v216
      %v1605 = vpop.f32.mrb[0].mxu0
      %v1606 = vadd.f32 %v1221, %v1605
      %v1607 = vpop.f32.mrb[0].mxu0
      %1608 = vmatprep.mubr.f32.mxu0 %v224
      %1609 = vmatmul.mubr.f32.gmra.mrb[0].mxu0 %v223
      %v1610 = vpop.f32.mrb[0].mxu0
      %v1611 = vadd.f32 %v1226, %v1610
      %v1612 = vpop.f32.mrb[0].mxu0
      %1613 = vmatprep.mubr.f32.mxu0 %v231
      %1614 = vmatmul.mubr.f32.gmra.mrb[0].mxu0 %v230
      %v1615 = vpop.f32.mrb[0].mxu0
      %v1616 = vadd.f32 %v1231, %v1615
      %v1617 = vpop.f32.mrb[0].mxu0
      %1618 = vmatprep.mubr.f32.mxu0 %v238
      %1619 = vmatmul.mubr.f32.gmra.mrb[0].mxu0 %v237
      %v1620 = vpop.f32.mrb[0].mxu0
      %v1621 = vadd.f32 %v1236, %v1620
      %v1622 = vpop.f32.mrb[0].mxu0
      %1623 = vmatprep.mubr.f32.mxu0 %v245
      %1624 = vmatmul.mubr.f32.gmra.mrb[0].mxu0 %v244
      %v1625 = vpop.f32.mrb[0].mxu0
      %v1626 = vadd.f32 %v1241, %v1625
      %v1627 = vpop.f32.mrb[0].mxu0
      %1628 = vmatprep.mubr.f32.mxu0 %v252
      %1629 = vmatmul.mubr.f32.gmra.mrb[0].mxu0 %v251
      %v1630 = vpop.f32.mrb[0].mxu0
      %v1631 = vadd.f32 %v1246, %v1630
      %v1632 = vpop.f32.mrb[0].mxu0
      %1633 = vmatprep.mubr.f32.mxu0 %v259
      %1634 = vmatmul.mubr.f32.gmra.mrb[0].mxu0 %v258
      %v1635 = vpop.f32.mrb[0].mxu0
      %v1636 = vadd.f32 %v1251, %v1635
      %v1637 = vpop.f32.mrb[0].mxu0
      %1638 = vmatprep.mubr.f32.mxu0 %v266
      %1639 = vmatmul.mubr.f32.gmra.mrb[0].mxu0 %v265
      %v1640 = vpop.f32.mrb[0].mxu0
      %v1641 = vadd.f32 %v1256, %v1640
      %v1642 = vpop.f32.mrb[0].mxu0
      %1643 = vmatprep.mubr.f32.mxu0 %v273
      %1644 = vmatmul.mubr.f32.gmra.mrb[0].mxu0 %v272
      %v1645 = vpop.f32.mrb[0].mxu0
      %v1646 = vadd.f32 %v1261, %v1645
      %v1647 = vpop.f32.mrb[0].mxu0
      %1648 = vmatprep.mubr.f32.mxu0 %v280
      %1649 = vmatmul.mubr.f32.gmra.mrb[0].mxu0 %v279
      %v1650 = vpop.f32.mrb[0].mxu0
      %v1651 = vadd.f32 %v1266, %v1650
      %v1652 = vpop.f32.mrb[0].mxu0
      %1653 = vmatprep.mubr.f32.mxu0 %v287
      %1654 = vmatmul.mubr.f32.gmra.mrb[0].mxu0 %v286
      %v1655 = vpop.f32.mrb[0].mxu0
      %v1656 = vadd.f32 %v1271, %v1655
      %v1657 = vpop.f32.mrb[0].mxu0
      %1658 = vmatprep.mubr.f32.mxu0 %v294
      %1659 = vmatmul.mubr.f32.gmra.mrb[0].mxu0 %v293
      %v1660 = vpop.f32.mrb[0].mxu0
      %v1661 = vadd.f32 %v1276, %v1660
      %v1662 = vpop.f32.mrb[0].mxu0
      %1663 = vmatprep.mubr.f32.mxu0 %v301
      %1664 = vmatmul.mubr.f32.gmra.mrb[0].mxu0 %v300
      %v1665 = vpop.f32.mrb[0].mxu0
      %v1666 = vadd.f32 %v1281, %v1665
      %v1667 = vpop.f32.mrb[0].mxu0
      %1668 = vmatprep.mubr.f32.mxu0 %v308
      %1669 = vmatmul.mubr.f32.gmra.mrb[0].mxu0 %v307
      %v1670 = vpop.f32.mrb[0].mxu0
      %v1671 = vadd.f32 %v1286, %v1670
      %v1672 = vpop.f32.mrb[0].mxu0
      %1673 = vmatprep.mubr.f32.mxu0 %v315
      %1674 = vmatmul.mubr.f32.gmra.mrb[0].mxu0 %v314
      %v1675 = vpop.f32.mrb[0].mxu0
      %v1676 = vadd.f32 %v1291, %v1675
      %v1677 = vpop.f32.mrb[0].mxu0
      %1678 = vmatprep.mubr.f32.mxu0 %v322
      %1679 = vmatmul.mubr.f32.gmra.mrb[0].mxu0 %v321
      %v1680 = vpop.f32.mrb[0].mxu0
      %v1681 = vadd.f32 %v1296, %v1680
      %v1682 = vpop.f32.mrb[0].mxu0
      %1683 = vmatprep.mubr.f32.mxu0 %v329
      %1684 = vmatmul.mubr.f32.gmra.mrb[0].mxu0 %v328
      %v1685 = vpop.f32.mrb[0].mxu0
      %v1686 = vadd.f32 %v1301, %v1685
      %v1687 = vpop.f32.mrb[0].mxu0
      %1688 = vmatprep.mubr.f32.mxu0 %v336
      %1689 = vmatmul.mubr.f32.gmra.mrb[0].mxu0 %v335
      %v1690 = vpop.f32.mrb[0].mxu0
      %v1691 = vadd.f32 %v1306, %v1690
      %v1692 = vpop.f32.mrb[0].mxu0
      %1693 = vmatprep.mubr.f32.mxu0 %v343
      %1694 = vmatmul.mubr.f32.gmra.mrb[0].mxu0 %v342
      %v1695 = vpop.f32.mrb[0].mxu0
      %v1696 = vadd.f32 %v1311, %v1695
      %v1697 = vpop.f32.mrb[0].mxu0
      %1698 = vmatprep.mubr.f32.mxu0 %v350
      %1699 = vmatmul.mubr.f32.gmra.mrb[0].mxu0 %v349
      %v1700 = vpop.f32.mrb[0].mxu0
      %v1701 = vadd.f32 %v1316, %v1700
      %v1702 = vpop.f32.mrb[0].mxu0
      %1703 = vmatprep.mubr.f32.mxu0 %v357
      %1704 = vmatmul.mubr.f32.gmra.mrb[0].mxu0 %v356
      %v1705 = vpop.f32.mrb[0].mxu0
      %v1706 = vadd.f32 %v1321, %v1705
      %v1707 = vpop.f32.mrb[0].mxu0
      %1708 = vmatprep.mubr.f32.mxu0 %v364
      %1709 = vmatmul.mubr.f32.gmra.mrb[0].mxu0 %v363
      %v1710 = vpop.f32.mrb[0].mxu0
      %v1711 = vadd.f32 %v1326, %v1710
      %v1712 = vpop.f32.mrb[0].mxu0
      %1713 = vmatprep.mubr.f32.mxu0 %v371
      %1714 = vmatmul.mubr.f32.gmra.mrb[0].mxu0 %v370
      %v1715 = vpop.f32.mrb[0].mxu0
      %v1716 = vadd.f32 %v1331, %v1715
      %v1717 = vpop.f32.mrb[0].mxu0
      %1718 = vmatprep.mubr.f32.mxu0 %v378
      %1719 = vmatmul.mubr.f32.gmra.mrb[0].mxu0 %v377
      %v1720 = vpop.f32.mrb[0].mxu0
      %v1721 = vadd.f32 %v1336, %v1720
      %v1722 = vpop.f32.mrb[0].mxu0
      %1723 = vmatprep.mubr.f32.mxu0 %v385
      %1724 = vmatmul.mubr.f32.gmra.mrb[0].mxu0 %v384
      %v1725 = vpop.f32.mrb[0].mxu0
      %v1726 = vadd.f32 %v1341, %v1725
      %v1727 = vpop.f32.mrb[0].mxu0
      %1728 = vmatprep.mubr.f32.mxu0 %v392
      %1729 = vmatmul.mubr.f32.gmra.mrb[0].mxu0 %v391
      %v1730 = vpop.f32.mrb[0].mxu0
      %v1731 = vadd.f32 %v1346, %v1730
      %v1732 = vpop.f32.mrb[0].mxu0
      %1733 = vmatprep.mubr.f32.mxu0 %v399
      %1734 = vmatmul.mubr.f32.gmra.mrb[0].mxu0 %v398
      %v1735 = vpop.f32.mrb[0].mxu0
      %v1736 = vadd.f32 %v1351, %v1735
      %v1737 = vpop.f32.mrb[0].mxu0
      %1738 = vmatprep.mubr.f32.mxu0 %v406
      %1739 = vmatmul.mubr.f32.gmra.mrb[0].mxu0 %v405
      %v1740 = vpop.f32.mrb[0].mxu0
      %v1741 = vadd.f32 %v1356, %v1740
      %v1742 = vpop.f32.mrb[0].mxu0
      %1743 = vmatprep.mubr.f32.mxu0 %v413
      %1744 = vmatmul.mubr.f32.gmra.mrb[0].mxu0 %v412
      %v1745 = vpop.f32.mrb[0].mxu0
      %v1746 = vadd.f32 %v1361, %v1745
      %v1747 = vpop.f32.mrb[0].mxu0
      %1748 = vmatprep.mubr.f32.mxu0 %v420
      %1749 = vmatmul.mubr.f32.gmra.mrb[0].mxu0 %v419
      %v1750 = vpop.f32.mrb[0].mxu0
      %v1751 = vadd.f32 %v1366, %v1750
      %v1752 = vpop.f32.mrb[0].mxu0
      %1753 = vmatprep.mubr.f32.mxu0 %v427
      %1754 = vmatmul.mubr.f32.gmra.mrb[0].mxu0 %v426
      %v1755 = vpop.f32.mrb[0].mxu0
      %v1756 = vadd.f32 %v1371, %v1755
      %v1757 = vpop.f32.mrb[0].mxu0
      %1758 = vmatprep.mubr.f32.mxu0 %v434
      %1759 = vmatmul.mubr.f32.gmra.mrb[0].mxu0 %v433
      %v1760 = vpop.f32.mrb[0].mxu0
      %v1761 = vadd.f32 %v1376, %v1760
      %v1762 = vpop.f32.mrb[0].mxu0
      %1763 = vmatprep.mubr.f32.mxu0 %v441
      %1764 = vmatmul.mubr.f32.gmra.mrb[0].mxu0 %v440
      %v1765 = vpop.f32.mrb[0].mxu0
      %v1766 = vadd.f32 %v1381, %v1765
      %v1767 = vpop.f32.mrb[0].mxu0
      %1768 = vmatprep.mubr.f32.mxu0 %v448
      %1769 = vmatmul.mubr.f32.gmra.mrb[0].mxu0 %v447
      %v1770 = vpop.f32.mrb[0].mxu0
      %v1771 = vadd.f32 %v1386, %v1770
      %v1772 = vpop.f32.mrb[0].mxu0
      %1773 = vmatprep.mubr.f32.mxu0 %v455
      %1774 = vmatmul.mubr.f32.gmra.mrb[0].mxu0 %v454
      %v1775 = vpop.f32.mrb[0].mxu0
      %v1776 = vadd.f32 %v1391, %v1775
      %v1777 = vpop.f32.mrb[0].mxu0
      %1778 = vmatprep.mubr.f32.mxu0 %v462
      %1779 = vmatmul.mubr.f32.gmra.mrb[0].mxu0 %v461
      %v1780 = vpop.f32.mrb[0].mxu0
      %v1781 = vadd.f32 %v1396, %v1780
      %v1782 = vpop.f32.mrb[0].mxu0
      %1783 = vmatprep.mubr.f32.mxu0 %v469
      %1784 = vmatmul.mubr.f32.gmra.mrb[0].mxu0 %v468
      %v1785 = vpop.f32.mrb[0].mxu0
      %v1786 = vadd.f32 %v1401, %v1785
      %v1787 = vpop.f32.mrb[0].mxu0
      %1788 = vmatprep.mubr.f32.mxu0 %v476
      %1789 = vmatmul.mubr.f32.gmra.mrb[0].mxu0 %v475
      %v1790 = vpop.f32.mrb[0].mxu0
      %v1791 = vadd.f32 %v1406, %v1790
      %v1792 = vpop.f32.mrb[0].mxu0
      %1793 = vmatprep.mubr.f32.mxu0 %v483
      %1794 = vmatmul.mubr.f32.gmra.mrb[0].mxu0 %v482
      %v1795 = vpop.f32.mrb[0].mxu0
      %v1796 = vadd.f32 %v1411, %v1795
      %v1797 = vpop.f32.mrb[0].mxu0
      %1798 = vmatprep.mubr.f32.mxu0 %v490
      %1799 = vmatmul.mubr.f32.gmra.mrb[0].mxu0 %v489
      %v1800 = vpop.f32.mrb[0].mxu0
      %v1801 = vadd.f32 %v1416, %v1800
      %v1802 = vpop.f32.mrb[0].mxu0
      %1803 = vmatprep.mubr.f32.mxu0 %v497
      %1804 = vmatmul.mubr.f32.gmra.mrb[0].mxu0 %v496
      %v1805 = vpop.f32.mrb[0].mxu0
      %v1806 = vadd.f32 %v1421, %v1805
      %v1807 = vpop.f32.mrb[0].mxu0
      %1808 = vmatprep.mubr.f32.mxu0 %v504
      %1809 = vmatmul.mubr.f32.gmra.mrb[0].mxu0 %v503
      %v1810 = vpop.f32.mrb[0].mxu0
      %v1811 = vadd.f32 %v1426, %v1810
      %v1812 = vpop.f32.mrb[0].mxu0
      %1813 = vmatprep.mubr.f32.mxu0 %v511
      %1814 = vmatmul.mubr.f32.gmra.mrb[0].mxu0 %v510
      %v1815 = vpop.f32.mrb[0].mxu0
      %v1816 = vadd.f32 %v1431, %v1815
      %v1817 = vpop.f32.mrb[0].mxu0
      %1818 = vmatprep.mubr.f32.mxu0 %v518
      %1819 = vmatmul.mubr.f32.gmra.mrb[0].mxu0 %v517
      %v1820 = vpop.f32.mrb[0].mxu0
      %v1821 = vadd.f32 %v1436, %v1820
      %v1822 = vpop.f32.mrb[0].mxu0
      %1823 = vmatprep.mubr.f32.mxu0 %v525
      %1824 = vmatmul.mubr.f32.gmra.mrb[0].mxu0 %v524
      %v1825 = vpop.f32.mrb[0].mxu0
      %v1826 = vadd.f32 %v1441, %v1825
      %v1827 = vpop.f32.mrb[0].mxu0
      %1828 = vmatprep.mubr.f32.mxu0 %v532
      %1829 = vmatmul.mubr.f32.gmra.mrb[0].mxu0 %v531
      %v1830 = vpop.f32.mrb[0].mxu0
      %v1831 = vadd.f32 %v1446, %v1830
      %v1832 = vpop.f32.mrb[0].mxu0
      %1833 = vmatprep.mubr.f32.mxu0 %v539
      %1834 = vmatmul.mubr.f32.gmra.mrb[0].mxu0 %v538
      %v1835 = vpop.f32.mrb[0].mxu0
      %v1836 = vadd.f32 %v1451, %v1835
      %v1837 = vpop.f32.mrb[0].mxu0
      %1838 = vmatprep.mubr.f32.mxu0 %v546
      %1839 = vmatmul.mubr.f32.gmra.mrb[0].mxu0 %v545
      %v1840 = vpop.f32.mrb[0].mxu0
      %v1841 = vadd.f32 %v1456, %v1840
      %v1842 = vpop.f32.mrb[0].mxu0
      %1843 = vmatprep.mubr.f32.mxu0 %v553
      %1844 = vmatmul.mubr.f32.gmra.mrb[0].mxu0 %v552
      %v1845 = vpop.f32.mrb[0].mxu0
      %v1846 = vadd.f32 %v1461, %v1845
      %v1847 = vpop.f32.mrb[0].mxu0
      %1848 = vmatprep.mubr.f32.mxu0 %v560
      %1849 = vmatmul.mubr.f32.gmra.mrb[0].mxu0 %v559
      %v1850 = vpop.f32.mrb[0].mxu0
      %v1851 = vadd.f32 %v1466, %v1850
      %v1852 = vpop.f32.mrb[0].mxu0
      %1853 = vmatprep.mubr.f32.mxu0 %v567
      %1854 = vmatmul.mubr.f32.gmra.mrb[0].mxu0 %v566
      %v1855 = vpop.f32.mrb[0].mxu0
      %v1856 = vadd.f32 %v1471, %v1855
      %v1857 = vpop.f32.mrb[0].mxu0
      %1858 = vmatprep.mubr.f32.mxu0 %v574
      %1859 = vmatmul.mubr.f32.gmra.mrb[0].mxu0 %v573
      %v1860 = vpop.f32.mrb[0].mxu0
      %v1861 = vadd.f32 %v1476, %v1860
      %v1862 = vpop.f32.mrb[0].mxu0
      %1863 = vmatprep.mubr.f32.mxu0 %v581
      %1864 = vmatmul.mubr.f32.gmra.mrb[0].mxu0 %v580
      %v1865 = vpop.f32.mrb[0].mxu0
      %v1866 = vadd.f32 %v1481, %v1865
      %v1867 = vpop.f32.mrb[0].mxu0
      %1868 = vmatprep.mubr.f32.mxu0 %v588
      %1869 = vmatmul.mubr.f32.gmra.mrb[0].mxu0 %v587
      %v1870 = vpop.f32.mrb[0].mxu0
      %v1871 = vadd.f32 %v1486, %v1870
      %v1872 = vpop.f32.mrb[0].mxu0
      %1873 = vmatprep.mubr.f32.mxu0 %v595
      %1874 = vmatmul.mubr.f32.gmra.mrb[0].mxu0 %v594
      %v1875 = vpop.f32.mrb[0].mxu0
      %v1876 = vadd.f32 %v1491, %v1875
      %v1877 = vpop.f32.mrb[0].mxu0
      %1878 = vmatprep.mubr.f32.mxu0 %v602
      %1879 = vmatmul.mubr.f32.gmra.mrb[0].mxu0 %v601
      %v1880 = vpop.f32.mrb[0].mxu0
      %v1881 = vadd.f32 %v1496, %v1880
      %v1882 = vpop.f32.mrb[0].mxu0
      %1883 = vmatprep.mubr.f32.mxu0 %v609
      %1884 = vmatmul.mubr.f32.gmra.mrb[0].mxu0 %v608
      %v1885 = vpop.f32.mrb[0].mxu0
      %v1886 = vadd.f32 %v1501, %v1885
      %v1887 = vpop.f32.mrb[0].mxu0
      %1888 = vmatprep.mubr.f32.mxu0 %v616
      %1889 = vmatmul.mubr.f32.gmra.mrb[0].mxu0 %v615
      %v1890 = vpop.f32.mrb[0].mxu0
      %v1891 = vadd.f32 %v1506, %v1890
      %v1892 = vpop.f32.mrb[0].mxu0
      %1893 = vmatprep.mubr.f32.mxu0 %v623
      %1894 = vmatmul.mubr.f32.gmra.mrb[0].mxu0 %v622
      %v1895 = vpop.f32.mrb[0].mxu0
      %v1896 = vadd.f32 %v1511, %v1895
      %v1897 = vpop.f32.mrb[0].mxu0
      %1898 = vdwg.mxu0
      %1899 = vmatprep.subr.mxu0 0.0
      %1900 = vmatpush1.msra.mxu0 %v721
      %1901 = vmatprep.subr.mxu0 0.0
      %1902 = vmatpush1.msra.mxu0 %v722
      %1903 = vmatprep.subr.mxu0 0.0
      %1904 = vmatpush1.msra.mxu0 %v723
      %1905 = vmatprep.subr.mxu0 0.0
      %1906 = vmatpush1.msra.mxu0 %v724
      %1907 = vmatprep.subr.mxu0 0.0
      %1908 = vmatpush1.msra.mxu0 %v725
      %1909 = vmatprep.subr.mxu0 0.0
      %1910 = vmatpush1.msra.mxu0 %v726
      %1911 = vmatprep.subr.mxu0 0.0
      %1912 = vmatpush1.msra.mxu0 %v727
      %1913 = vmatprep.subr.mxu0 0.0
      %1914 = vmatpush1.msra.mxu0 %v728
      %1915 = vmatprep.subr.mxu0 0.0
      %1916 = vmatpush1.msra.mxu0 %v729
      %1917 = vmatprep.subr.mxu0 0.0
      %1918 = vmatpush1.msra.mxu0 %v730
      %1919 = vmatprep.subr.mxu0 0.0
      %1920 = vmatpush1.msra.mxu0 %v731
      %1921 = vmatprep.subr.mxu0 0.0
      %1922 = vmatpush1.msra.mxu0 %v732
      %1923 = vmatprep.subr.mxu0 0.0
      %1924 = vmatpush1.msra.mxu0 %v733
      %1925 = vmatprep.subr.mxu0 0.0
      %1926 = vmatpush1.msra.mxu0 %v734
      %1927 = vmatprep.subr.mxu0 0.0
      %1928 = vmatpush1.msra.mxu0 %v735
      %1929 = vmatprep.subr.mxu0 0.0
      %1930 = vmatpush1.msra.mxu0 %v736
      %1931 = vmatprep.subr.mxu0 0.0
      %1932 = vmatpush1.msra.mxu0 0.0
      %1933 = vmatprep.subr.mxu0 0.0
      %1934 = vmatpush1.msra.mxu0 0.0
      %1935 = vmatprep.subr.mxu0 0.0
      %1936 = vmatpush1.msra.mxu0 0.0
      %1937 = vmatprep.subr.mxu0 0.0
      %1938 = vmatpush1.msra.mxu0 0.0
      %1939 = vmatprep.subr.mxu0 0.0
      %1940 = vmatpush1.msra.mxu0 0.0
      %1941 = vmatprep.subr.mxu0 0.0
      %1942 = vmatpush1.msra.mxu0 0.0
      %1943 = vmatprep.subr.mxu0 0.0
      %1944 = vmatpush1.msra.mxu0 0.0
      %1945 = vmatprep.subr.mxu0 0.0
      %1946 = vmatpush1.msra.mxu0 0.0
      %1947 = vmatprep.subr.mxu0 0.0
      %1948 = vmatpush1.msra.mxu0 0.0
      %1949 = vmatprep.subr.mxu0 0.0
      %1950 = vmatpush1.msra.mxu0 0.0
      %1951 = vmatprep.subr.mxu0 0.0
      %1952 = vmatpush1.msra.mxu0 0.0
      %1953 = vmatprep.subr.mxu0 0.0
      %1954 = vmatpush1.msra.mxu0 0.0
      %1955 = vmatprep.subr.mxu0 0.0
      %1956 = vmatpush1.msra.mxu0 0.0
      %1957 = vmatprep.subr.mxu0 0.0
      %1958 = vmatpush1.msra.mxu0 0.0
      %1959 = vmatprep.subr.mxu0 0.0
      %1960 = vmatpush1.msra.mxu0 0.0
      %1961 = vmatprep.subr.mxu0 0.0
      %1962 = vmatpush1.msra.mxu0 0.0
      %1963 = vmatprep.mubr.f32.mxu0 0.0
      %1964 = vmatmul.mubr.f32.gmra.mrb[0].mxu0 %v183
      %v1965 = vpop.f32.mrb[0].mxu0
      %v1966 = vadd.f32 %v1581, %v1965
      %v1967 = vpop.f32.mrb[0].mxu0
      %1968 = vmatprep.mubr.f32.mxu0 0.0
      %1969 = vmatmul.mubr.f32.gmra.mrb[0].mxu0 %v190
      %v1970 = vpop.f32.mrb[0].mxu0
      %v1971 = vadd.f32 %v1586, %v1970
      %v1972 = vpop.f32.mrb[0].mxu0
      %1973 = vmatprep.mubr.f32.mxu0 0.0
      %1974 = vmatmul.mubr.f32.gmra.mrb[0].mxu0 %v197
      %v1975 = vpop.f32.mrb[0].mxu0
      %v1976 = vadd.f32 %v1591, %v1975
      %v1977 = vpop.f32.mrb[0].mxu0
      %1978 = vmatprep.mubr.f32.mxu0 0.0
      %1979 = vmatmul.mubr.f32.gmra.mrb[0].mxu0 %v204
      %v1980 = vpop.f32.mrb[0].mxu0
      %v1981 = vadd.f32 %v1596, %v1980
      %v1982 = vpop.f32.mrb[0].mxu0
      %1983 = vmatprep.mubr.f32.mxu0 0.0
      %1984 = vmatmul.mubr.f32.gmra.mrb[0].mxu0 %v211
      %v1985 = vpop.f32.mrb[0].mxu0
      %v1986 = vadd.f32 %v1601, %v1985
      %v1987 = vpop.f32.mrb[0].mxu0
      %1988 = vmatprep.mubr.f32.mxu0 0.0
      %1989 = vmatmul.mubr.f32.gmra.mrb[0].mxu0 %v218
      %v1990 = vpop.f32.mrb[0].mxu0
      %v1991 = vadd.f32 %v1606, %v1990
      %v1992 = vpop.f32.mrb[0].mxu0
      %1993 = vmatprep.mubr.f32.mxu0 0.0
      %1994 = vmatmul.mubr.f32.gmra.mrb[0].mxu0 %v225
      %v1995 = vpop.f32.mrb[0].mxu0
      %v1996 = vadd.f32 %v1611, %v1995
      %v1997 = vpop.f32.mrb[0].mxu0
      %1998 = vmatprep.mubr.f32.mxu0 0.0
      %1999 = vmatmul.mubr.f32.gmra.mrb[0].mxu0 %v232
      %v2000 = vpop.f32.mrb[0].mxu0
      %v2001 = vadd.f32 %v1616, %v2000
      %v2002 = vpop.f32.mrb[0].mxu0
      %2003 = vmatprep.mubr.f32.mxu0 0.0
      %2004 = vmatmul.mubr.f32.gmra.mrb[0].mxu0 %v239
      %v2005 = vpop.f32.mrb[0].mxu0
      %v2006 = vadd.f32 %v1621, %v2005
      %v2007 = vpop.f32.mrb[0].mxu0
      %2008 = vmatprep.mubr.f32.mxu0 0.0
      %2009 = vmatmul.mubr.f32.gmra.mrb[0].mxu0 %v246
      %v2010 = vpop.f32.mrb[0].mxu0
      %v2011 = vadd.f32 %v1626, %v2010
      %v2012 = vpop.f32.mrb[0].mxu0
      %2013 = vmatprep.mubr.f32.mxu0 0.0
      %2014 = vmatmul.mubr.f32.gmra.mrb[0].mxu0 %v253
      %v2015 = vpop.f32.mrb[0].mxu0
      %v2016 = vadd.f32 %v1631, %v2015
      %v2017 = vpop.f32.mrb[0].mxu0
      %2018 = vmatprep.mubr.f32.mxu0 0.0
      %2019 = vmatmul.mubr.f32.gmra.mrb[0].mxu0 %v260
      %v2020 = vpop.f32.mrb[0].mxu0
      %v2021 = vadd.f32 %v1636, %v2020
      %v2022 = vpop.f32.mrb[0].mxu0
      %2023 = vmatprep.mubr.f32.mxu0 0.0
      %2024 = vmatmul.mubr.f32.gmra.mrb[0].mxu0 %v267
      %v2025 = vpop.f32.mrb[0].mxu0
      %v2026 = vadd.f32 %v1641, %v2025
      %v2027 = vpop.f32.mrb[0].mxu0
      %2028 = vmatprep.mubr.f32.mxu0 0.0
      %2029 = vmatmul.mubr.f32.gmra.mrb[0].mxu0 %v274
      %v2030 = vpop.f32.mrb[0].mxu0
      %v2031 = vadd.f32 %v1646, %v2030
      %v2032 = vpop.f32.mrb[0].mxu0
      %2033 = vmatprep.mubr.f32.mxu0 0.0
      %2034 = vmatmul.mubr.f32.gmra.mrb[0].mxu0 %v281
      %v2035 = vpop.f32.mrb[0].mxu0
      %v2036 = vadd.f32 %v1651, %v2035
      %v2037 = vpop.f32.mrb[0].mxu0
      %2038 = vmatprep.mubr.f32.mxu0 0.0
      %2039 = vmatmul.mubr.f32.gmra.mrb[0].mxu0 %v288
      %v2040 = vpop.f32.mrb[0].mxu0
      %v2041 = vadd.f32 %v1656, %v2040
      %v2042 = vpop.f32.mrb[0].mxu0
      %2043 = vmatprep.mubr.f32.mxu0 0.0
      %2044 = vmatmul.mubr.f32.gmra.mrb[0].mxu0 %v295
      %v2045 = vpop.f32.mrb[0].mxu0
      %v2046 = vadd.f32 %v1661, %v2045
      %v2047 = vpop.f32.mrb[0].mxu0
      %2048 = vmatprep.mubr.f32.mxu0 0.0
      %2049 = vmatmul.mubr.f32.gmra.mrb[0].mxu0 %v302
      %v2050 = vpop.f32.mrb[0].mxu0
      %v2051 = vadd.f32 %v1666, %v2050
      %v2052 = vpop.f32.mrb[0].mxu0
      %2053 = vmatprep.mubr.f32.mxu0 0.0
      %2054 = vmatmul.mubr.f32.gmra.mrb[0].mxu0 %v309
      %v2055 = vpop.f32.mrb[0].mxu0
      %v2056 = vadd.f32 %v1671, %v2055
      %v2057 = vpop.f32.mrb[0].mxu0
      %2058 = vmatprep.mubr.f32.mxu0 0.0
      %2059 = vmatmul.mubr.f32.gmra.mrb[0].mxu0 %v316
      %v2060 = vpop.f32.mrb[0].mxu0
      %v2061 = vadd.f32 %v1676, %v2060
      %v2062 = vpop.f32.mrb[0].mxu0
      %2063 = vmatprep.mubr.f32.mxu0 0.0
      %2064 = vmatmul.mubr.f32.gmra.mrb[0].mxu0 %v323
      %v2065 = vpop.f32.mrb[0].mxu0
      %v2066 = vadd.f32 %v1681, %v2065
      %v2067 = vpop.f32.mrb[0].mxu0
      %2068 = vmatprep.mubr.f32.mxu0 0.0
      %2069 = vmatmul.mubr.f32.gmra.mrb[0].mxu0 %v330
      %v2070 = vpop.f32.mrb[0].mxu0
      %v2071 = vadd.f32 %v1686, %v2070
      %v2072 = vpop.f32.mrb[0].mxu0
      %2073 = vmatprep.mubr.f32.mxu0 0.0
      %2074 = vmatmul.mubr.f32.gmra.mrb[0].mxu0 %v337
      %v2075 = vpop.f32.mrb[0].mxu0
      %v2076 = vadd.f32 %v1691, %v2075
      %v2077 = vpop.f32.mrb[0].mxu0
      %2078 = vmatprep.mubr.f32.mxu0 0.0
      %2079 = vmatmul.mubr.f32.gmra.mrb[0].mxu0 %v344
      %v2080 = vpop.f32.mrb[0].mxu0
      %v2081 = vadd.f32 %v1696, %v2080
      %v2082 = vpop.f32.mrb[0].mxu0
      %2083 = vmatprep.mubr.f32.mxu0 0.0
      %2084 = vmatmul.mubr.f32.gmra.mrb[0].mxu0 %v351
      %v2085 = vpop.f32.mrb[0].mxu0
      %v2086 = vadd.f32 %v1701, %v2085
      %v2087 = vpop.f32.mrb[0].mxu0
      %2088 = vmatprep.mubr.f32.mxu0 0.0
      %2089 = vmatmul.mubr.f32.gmra.mrb[0].mxu0 %v358
      %v2090 = vpop.f32.mrb[0].mxu0
      %v2091 = vadd.f32 %v1706, %v2090
      %v2092 = vpop.f32.mrb[0].mxu0
      %2093 = vmatprep.mubr.f32.mxu0 0.0
      %2094 = vmatmul.mubr.f32.gmra.mrb[0].mxu0 %v365
      %v2095 = vpop.f32.mrb[0].mxu0
      %v2096 = vadd.f32 %v1711, %v2095
      %v2097 = vpop.f32.mrb[0].mxu0
      %2098 = vmatprep.mubr.f32.mxu0 0.0
      %2099 = vmatmul.mubr.f32.gmra.mrb[0].mxu0 %v372
      %v2100 = vpop.f32.mrb[0].mxu0
      %v2101 = vadd.f32 %v1716, %v2100
      %v2102 = vpop.f32.mrb[0].mxu0
      %2103 = vmatprep.mubr.f32.mxu0 0.0
      %2104 = vmatmul.mubr.f32.gmra.mrb[0].mxu0 %v379
      %v2105 = vpop.f32.mrb[0].mxu0
      %v2106 = vadd.f32 %v1721, %v2105
      %v2107 = vpop.f32.mrb[0].mxu0
      %2108 = vmatprep.mubr.f32.mxu0 0.0
      %2109 = vmatmul.mubr.f32.gmra.mrb[0].mxu0 %v386
      %v2110 = vpop.f32.mrb[0].mxu0
      %v2111 = vadd.f32 %v1726, %v2110
      %v2112 = vpop.f32.mrb[0].mxu0
      %2113 = vmatprep.mubr.f32.mxu0 0.0
      %2114 = vmatmul.mubr.f32.gmra.mrb[0].mxu0 %v393
      %v2115 = vpop.f32.mrb[0].mxu0
      %v2116 = vadd.f32 %v1731, %v2115
      %v2117 = vpop.f32.mrb[0].mxu0
      %2118 = vmatprep.mubr.f32.mxu0 0.0
      %2119 = vmatmul.mubr.f32.gmra.mrb[0].mxu0 %v400
      %v2120 = vpop.f32.mrb[0].mxu0
      %v2121 = vadd.f32 %v1736, %v2120
      %v2122 = vpop.f32.mrb[0].mxu0
      %2123 = vmatprep.mubr.f32.mxu0 0.0
      %2124 = vmatmul.mubr.f32.gmra.mrb[0].mxu0 %v407
      %v2125 = vpop.f32.mrb[0].mxu0
      %v2126 = vadd.f32 %v1741, %v2125
      %v2127 = vpop.f32.mrb[0].mxu0
      %2128 = vmatprep.mubr.f32.mxu0 0.0
      %2129 = vmatmul.mubr.f32.gmra.mrb[0].mxu0 %v414
      %v2130 = vpop.f32.mrb[0].mxu0
      %v2131 = vadd.f32 %v1746, %v2130
      %v2132 = vpop.f32.mrb[0].mxu0
      %2133 = vmatprep.mubr.f32.mxu0 0.0
      %2134 = vmatmul.mubr.f32.gmra.mrb[0].mxu0 %v421
      %v2135 = vpop.f32.mrb[0].mxu0
      %v2136 = vadd.f32 %v1751, %v2135
      %v2137 = vpop.f32.mrb[0].mxu0
      %2138 = vmatprep.mubr.f32.mxu0 0.0
      %2139 = vmatmul.mubr.f32.gmra.mrb[0].mxu0 %v428
      %v2140 = vpop.f32.mrb[0].mxu0
      %v2141 = vadd.f32 %v1756, %v2140
      %v2142 = vpop.f32.mrb[0].mxu0
      %2143 = vmatprep.mubr.f32.mxu0 0.0
      %2144 = vmatmul.mubr.f32.gmra.mrb[0].mxu0 %v435
      %v2145 = vpop.f32.mrb[0].mxu0
      %v2146 = vadd.f32 %v1761, %v2145
      %v2147 = vpop.f32.mrb[0].mxu0
      %2148 = vmatprep.mubr.f32.mxu0 0.0
      %2149 = vmatmul.mubr.f32.gmra.mrb[0].mxu0 %v442
      %v2150 = vpop.f32.mrb[0].mxu0
      %v2151 = vadd.f32 %v1766, %v2150
      %v2152 = vpop.f32.mrb[0].mxu0
      %2153 = vmatprep.mubr.f32.mxu0 0.0
      %2154 = vmatmul.mubr.f32.gmra.mrb[0].mxu0 %v449
      %v2155 = vpop.f32.mrb[0].mxu0
      %v2156 = vadd.f32 %v1771, %v2155
      %v2157 = vpop.f32.mrb[0].mxu0
      %2158 = vmatprep.mubr.f32.mxu0 0.0
      %2159 = vmatmul.mubr.f32.gmra.mrb[0].mxu0 %v456
      %v2160 = vpop.f32.mrb[0].mxu0
      %v2161 = vadd.f32 %v1776, %v2160
      %v2162 = vpop.f32.mrb[0].mxu0
      %2163 = vmatprep.mubr.f32.mxu0 0.0
      %2164 = vmatmul.mubr.f32.gmra.mrb[0].mxu0 %v463
      %v2165 = vpop.f32.mrb[0].mxu0
      %v2166 = vadd.f32 %v1781, %v2165
      %v2167 = vpop.f32.mrb[0].mxu0
      %2168 = vmatprep.mubr.f32.mxu0 0.0
      %2169 = vmatmul.mubr.f32.gmra.mrb[0].mxu0 %v470
      %v2170 = vpop.f32.mrb[0].mxu0
      %v2171 = vadd.f32 %v1786, %v2170
      %v2172 = vpop.f32.mrb[0].mxu0
      %2173 = vmatprep.mubr.f32.mxu0 0.0
      %2174 = vmatmul.mubr.f32.gmra.mrb[0].mxu0 %v477
      %v2175 = vpop.f32.mrb[0].mxu0
      %v2176 = vadd.f32 %v1791, %v2175
      %v2177 = vpop.f32.mrb[0].mxu0
      %2178 = vmatprep.mubr.f32.mxu0 0.0
      %2179 = vmatmul.mubr.f32.gmra.mrb[0].mxu0 %v484
      %v2180 = vpop.f32.mrb[0].mxu0
      %v2181 = vadd.f32 %v1796, %v2180
      %v2182 = vpop.f32.mrb[0].mxu0
      %2183 = vmatprep.mubr.f32.mxu0 0.0
      %2184 = vmatmul.mubr.f32.gmra.mrb[0].mxu0 %v491
      %v2185 = vpop.f32.mrb[0].mxu0
      %v2186 = vadd.f32 %v1801, %v2185
      %v2187 = vpop.f32.mrb[0].mxu0
      %2188 = vmatprep.mubr.f32.mxu0 0.0
      %2189 = vmatmul.mubr.f32.gmra.mrb[0].mxu0 %v498
      %v2190 = vpop.f32.mrb[0].mxu0
      %v2191 = vadd.f32 %v1806, %v2190
      %v2192 = vpop.f32.mrb[0].mxu0
      %2193 = vmatprep.mubr.f32.mxu0 0.0
      %2194 = vmatmul.mubr.f32.gmra.mrb[0].mxu0 %v505
      %v2195 = vpop.f32.mrb[0].mxu0
      %v2196 = vadd.f32 %v1811, %v2195
      %v2197 = vpop.f32.mrb[0].mxu0
      %2198 = vmatprep.mubr.f32.mxu0 0.0
      %2199 = vmatmul.mubr.f32.gmra.mrb[0].mxu0 %v512
      %v2200 = vpop.f32.mrb[0].mxu0
      %v2201 = vadd.f32 %v1816, %v2200
      %v2202 = vpop.f32.mrb[0].mxu0
      %2203 = vmatprep.mubr.f32.mxu0 0.0
      %2204 = vmatmul.mubr.f32.gmra.mrb[0].mxu0 %v519
      %v2205 = vpop.f32.mrb[0].mxu0
      %v2206 = vadd.f32 %v1821, %v2205
      %v2207 = vpop.f32.mrb[0].mxu0
      %2208 = vmatprep.mubr.f32.mxu0 0.0
      %2209 = vmatmul.mubr.f32.gmra.mrb[0].mxu0 %v526
      %v2210 = vpop.f32.mrb[0].mxu0
      %v2211 = vadd.f32 %v1826, %v2210
      %v2212 = vpop.f32.mrb[0].mxu0
      %2213 = vmatprep.mubr.f32.mxu0 0.0
      %2214 = vmatmul.mubr.f32.gmra.mrb[0].mxu0 %v533
      %v2215 = vpop.f32.mrb[0].mxu0
      %v2216 = vadd.f32 %v1831, %v2215
      %v2217 = vpop.f32.mrb[0].mxu0
      %2218 = vmatprep.mubr.f32.mxu0 0.0
      %2219 = vmatmul.mubr.f32.gmra.mrb[0].mxu0 %v540
      %v2220 = vpop.f32.mrb[0].mxu0
      %v2221 = vadd.f32 %v1836, %v2220
      %v2222 = vpop.f32.mrb[0].mxu0
      %2223 = vmatprep.mubr.f32.mxu0 0.0
      %2224 = vmatmul.mubr.f32.gmra.mrb[0].mxu0 %v547
      %v2225 = vpop.f32.mrb[0].mxu0
      %v2226 = vadd.f32 %v1841, %v2225
      %v2227 = vpop.f32.mrb[0].mxu0
      %2228 = vmatprep.mubr.f32.mxu0 0.0
      %2229 = vmatmul.mubr.f32.gmra.mrb[0].mxu0 %v554
      %v2230 = vpop.f32.mrb[0].mxu0
      %v2231 = vadd.f32 %v1846, %v2230
      %v2232 = vpop.f32.mrb[0].mxu0
      %2233 = vmatprep.mubr.f32.mxu0 0.0
      %2234 = vmatmul.mubr.f32.gmra.mrb[0].mxu0 %v561
      %v2235 = vpop.f32.mrb[0].mxu0
      %v2236 = vadd.f32 %v1851, %v2235
      %v2237 = vpop.f32.mrb[0].mxu0
      %2238 = vmatprep.mubr.f32.mxu0 0.0
      %2239 = vmatmul.mubr.f32.gmra.mrb[0].mxu0 %v568
      %v2240 = vpop.f32.mrb[0].mxu0
      %v2241 = vadd.f32 %v1856, %v2240
      %v2242 = vpop.f32.mrb[0].mxu0
      %2243 = vmatprep.mubr.f32.mxu0 0.0
      %2244 = vmatmul.mubr.f32.gmra.mrb[0].mxu0 %v575
      %v2245 = vpop.f32.mrb[0].mxu0
      %v2246 = vadd.f32 %v1861, %v2245
      %v2247 = vpop.f32.mrb[0].mxu0
      %2248 = vmatprep.mubr.f32.mxu0 0.0
      %2249 = vmatmul.mubr.f32.gmra.mrb[0].mxu0 %v582
      %v2250 = vpop.f32.mrb[0].mxu0
      %v2251 = vadd.f32 %v1866, %v2250
      %v2252 = vpop.f32.mrb[0].mxu0
      %2253 = vmatprep.mubr.f32.mxu0 0.0
      %2254 = vmatmul.mubr.f32.gmra.mrb[0].mxu0 %v589
      %v2255 = vpop.f32.mrb[0].mxu0
      %v2256 = vadd.f32 %v1871, %v2255
      %v2257 = vpop.f32.mrb[0].mxu0
      %2258 = vmatprep.mubr.f32.mxu0 0.0
      %2259 = vmatmul.mubr.f32.gmra.mrb[0].mxu0 %v596
      %v2260 = vpop.f32.mrb[0].mxu0
      %v2261 = vadd.f32 %v1876, %v2260
      %v2262 = vpop.f32.mrb[0].mxu0
      %2263 = vmatprep.mubr.f32.mxu0 0.0
      %2264 = vmatmul.mubr.f32.gmra.mrb[0].mxu0 %v603
      %v2265 = vpop.f32.mrb[0].mxu0
      %v2266 = vadd.f32 %v1881, %v2265
      %v2267 = vpop.f32.mrb[0].mxu0
      %2268 = vmatprep.mubr.f32.mxu0 0.0
      %2269 = vmatmul.mubr.f32.gmra.mrb[0].mxu0 %v610
      %v2270 = vpop.f32.mrb[0].mxu0
      %v2271 = vadd.f32 %v1886, %v2270
      %v2272 = vpop.f32.mrb[0].mxu0
      %2273 = vmatprep.mubr.f32.mxu0 0.0
      %2274 = vmatmul.mubr.f32.gmra.mrb[0].mxu0 %v617
      %v2275 = vpop.f32.mrb[0].mxu0
      %v2276 = vadd.f32 %v1891, %v2275
      %v2277 = vpop.f32.mrb[0].mxu0
      %2278 = vmatprep.mubr.f32.mxu0 0.0
      %2279 = vmatmul.mubr.f32.gmra.mrb[0].mxu0 %v624
      %v2280 = vpop.f32.mrb[0].mxu0
      %v2281 = vadd.f32 %v1896, %v2280
      %v2282 = vpop.f32.mrb[0].mxu0
      %2283 = vdwg.mxu0
      %vm2284 = vcmp.gt.f32.partialorder %v1966, 0.0
      %vm2285 = vcmp.gt.f32.partialorder %v1971, 0.0
      %vm2286 = vcmp.gt.f32.partialorder %v1976, 0.0
      %vm2287 = vcmp.gt.f32.partialorder %v1981, 0.0
      %vm2288 = vcmp.gt.f32.partialorder %v1986, 0.0
      %vm2289 = vcmp.gt.f32.partialorder %v1991, 0.0
      %vm2290 = vcmp.gt.f32.partialorder %v1996, 0.0
      %vm2291 = vcmp.gt.f32.partialorder %v2001, 0.0
      %vm2292 = vcmp.gt.f32.partialorder %v2006, 0.0
      %vm2293 = vcmp.gt.f32.partialorder %v2011, 0.0
      %vm2294 = vcmp.gt.f32.partialorder %v2016, 0.0
      %vm2295 = vcmp.gt.f32.partialorder %v2021, 0.0
      %vm2296 = vcmp.gt.f32.partialorder %v2026, 0.0
      %vm2297 = vcmp.gt.f32.partialorder %v2031, 0.0
      %vm2298 = vcmp.gt.f32.partialorder %v2036, 0.0
      %vm2299 = vcmp.gt.f32.partialorder %v2041, 0.0
      %vm2300 = vcmp.gt.f32.partialorder %v2046, 0.0
      %vm2301 = vcmp.gt.f32.partialorder %v2051, 0.0
      %vm2302 = vcmp.gt.f32.partialorder %v2056, 0.0
      %vm2303 = vcmp.gt.f32.partialorder %v2061, 0.0
      %vm2304 = vcmp.gt.f32.partialorder %v2066, 0.0
      %vm2305 = vcmp.gt.f32.partialorder %v2071, 0.0
      %vm2306 = vcmp.gt.f32.partialorder %v2076, 0.0
      %vm2307 = vcmp.gt.f32.partialorder %v2081, 0.0
      %vm2308 = vcmp.gt.f32.partialorder %v2086, 0.0
      %vm2309 = vcmp.gt.f32.partialorder %v2091, 0.0
      %vm2310 = vcmp.gt.f32.partialorder %v2096, 0.0
      %vm2311 = vcmp.gt.f32.partialorder %v2101, 0.0
      %vm2312 = vcmp.gt.f32.partialorder %v2106, 0.0
      %vm2313 = vcmp.gt.f32.partialorder %v2111, 0.0
      %vm2314 = vcmp.gt.f32.partialorder %v2116, 0.0
      %vm2315 = vcmp.gt.f32.partialorder %v2121, 0.0
      %vm2316 = vcmp.gt.f32.partialorder %v2126, 0.0
      %vm2317 = vcmp.gt.f32.partialorder %v2131, 0.0
      %vm2318 = vcmp.gt.f32.partialorder %v2136, 0.0
      %vm2319 = vcmp.gt.f32.partialorder %v2141, 0.0
      %vm2320 = vcmp.gt.f32.partialorder %v2146, 0.0
      %vm2321 = vcmp.gt.f32.partialorder %v2151, 0.0
      %vm2322 = vcmp.gt.f32.partialorder %v2156, 0.0
      %vm2323 = vcmp.gt.f32.partialorder %v2161, 0.0
      %vm2324 = vcmp.gt.f32.partialorder %v2166, 0.0
      %vm2325 = vcmp.gt.f32.partialorder %v2171, 0.0
      %vm2326 = vcmp.gt.f32.partialorder %v2176, 0.0
      %vm2327 = vcmp.gt.f32.partialorder %v2181, 0.0
      %vm2328 = vcmp.gt.f32.partialorder %v2186, 0.0
      %vm2329 = vcmp.gt.f32.partialorder %v2191, 0.0
      %vm2330 = vcmp.gt.f32.partialorder %v2196, 0.0
      %vm2331 = vcmp.gt.f32.partialorder %v2201, 0.0
      %vm2332 = vcmp.gt.f32.partialorder %v2206, 0.0
      %vm2333 = vcmp.gt.f32.partialorder %v2211, 0.0
      %vm2334 = vcmp.gt.f32.partialorder %v2216, 0.0
      %vm2335 = vcmp.gt.f32.partialorder %v2221, 0.0
      %vm2336 = vcmp.gt.f32.partialorder %v2226, 0.0
      %vm2337 = vcmp.gt.f32.partialorder %v2231, 0.0
      %vm2338 = vcmp.gt.f32.partialorder %v2236, 0.0
      %vm2339 = vcmp.gt.f32.partialorder %v2241, 0.0
      %vm2340 = vcmp.gt.f32.partialorder %v2246, 0.0
      %vm2341 = vcmp.gt.f32.partialorder %v2251, 0.0
      %vm2342 = vcmp.gt.f32.partialorder %v2256, 0.0
      %vm2343 = vcmp.gt.f32.partialorder %v2261, 0.0
      %vm2344 = vcmp.gt.f32.partialorder %v2266, 0.0
      %vm2345 = vcmp.gt.f32.partialorder %v2271, 0.0
      %vm2346 = vcmp.gt.f32.partialorder %v2276, 0.0
      %vm2347 = vcmp.gt.f32.partialorder %v2281, 0.0
      %v2348 = vmul.f32 %v1966, 1.442695
      %v2349 = vpow.pop %v2348
      %v2350 = vmul.f32 %v1971, 1.442695
      %v2351 = vpow.pop %v2350
      %v2352 = vmul.f32 %v1976, 1.442695
      %v2353 = vpow.pop %v2352
      %v2354 = vmul.f32 %v1981, 1.442695
      %v2355 = vpow.pop %v2354
      %v2356 = vmul.f32 %v1986, 1.442695
      %v2357 = vpow.pop %v2356
      %v2358 = vmul.f32 %v1991, 1.442695
      %v2359 = vpow.pop %v2358
      %v2360 = vmul.f32 %v1996, 1.442695
      %v2361 = vpow.pop %v2360
      %v2362 = vmul.f32 %v2001, 1.442695
      %v2363 = vpow.pop %v2362
      %v2364 = vmul.f32 %v2006, 1.442695
      %v2365 = vpow.pop %v2364
      %v2366 = vmul.f32 %v2011, 1.442695
      %v2367 = vpow.pop %v2366
      %v2368 = vmul.f32 %v2016, 1.442695
      %v2369 = vpow.pop %v2368
      %v2370 = vmul.f32 %v2021, 1.442695
      %v2371 = vpow.pop %v2370
      %v2372 = vmul.f32 %v2026, 1.442695
      %v2373 = vpow.pop %v2372
      %v2374 = vmul.f32 %v2031, 1.442695
      %v2375 = vpow.pop %v2374
      %v2376 = vmul.f32 %v2036, 1.442695
      %v2377 = vpow.pop %v2376
      %v2378 = vmul.f32 %v2041, 1.442695
      %v2379 = vpow.pop %v2378
      %v2380 = vmul.f32 %v2046, 1.442695
      %v2381 = vpow.pop %v2380
      %v2382 = vmul.f32 %v2051, 1.442695
      %v2383 = vpow.pop %v2382
      %v2384 = vmul.f32 %v2056, 1.442695
      %v2385 = vpow.pop %v2384
      %v2386 = vmul.f32 %v2061, 1.442695
      %v2387 = vpow.pop %v2386
      %v2388 = vmul.f32 %v2066, 1.442695
      %v2389 = vpow.pop %v2388
      %v2390 = vmul.f32 %v2071, 1.442695
      %v2391 = vpow.pop %v2390
      %v2392 = vmul.f32 %v2076, 1.442695
      %v2393 = vpow.pop %v2392
      %v2394 = vmul.f32 %v2081, 1.442695
      %v2395 = vpow.pop %v2394
      %v2396 = vmul.f32 %v2086, 1.442695
      %v2397 = vpow.pop %v2396
      %v2398 = vmul.f32 %v2091, 1.442695
      %v2399 = vpow.pop %v2398
      %v2400 = vmul.f32 %v2096, 1.442695
      %v2401 = vpow.pop %v2400
      %v2402 = vmul.f32 %v2101, 1.442695
      %v2403 = vpow.pop %v2402
      %v2404 = vmul.f32 %v2106, 1.442695
      %v2405 = vpow.pop %v2404
      %v2406 = vmul.f32 %v2111, 1.442695
      %v2407 = vpow.pop %v2406
      %v2408 = vmul.f32 %v2116, 1.442695
      %v2409 = vpow.pop %v2408
      %v2410 = vmul.f32 %v2121, 1.442695
      %v2411 = vpow.pop %v2410
      %v2412 = vmul.f32 %v2126, 1.442695
      %v2413 = vpow.pop %v2412
      %v2414 = vmul.f32 %v2131, 1.442695
      %v2415 = vpow.pop %v2414
      %v2416 = vmul.f32 %v2136, 1.442695
      %v2417 = vpow.pop %v2416
      %v2418 = vmul.f32 %v2141, 1.442695
      %v2419 = vpow.pop %v2418
      %v2420 = vmul.f32 %v2146, 1.442695
      %v2421 = vpow.pop %v2420
      %v2422 = vmul.f32 %v2151, 1.442695
      %v2423 = vpow.pop %v2422
      %v2424 = vmul.f32 %v2156, 1.442695
      %v2425 = vpow.pop %v2424
      %v2426 = vmul.f32 %v2161, 1.442695
      %v2427 = vpow.pop %v2426
      %v2428 = vmul.f32 %v2166, 1.442695
      %v2429 = vpow.pop %v2428
      %v2430 = vmul.f32 %v2171, 1.442695
      %v2431 = vpow.pop %v2430
      %v2432 = vmul.f32 %v2176, 1.442695
      %v2433 = vpow.pop %v2432
      %v2434 = vmul.f32 %v2181, 1.442695
      %v2435 = vpow.pop %v2434
      %v2436 = vmul.f32 %v2186, 1.442695
      %v2437 = vpow.pop %v2436
      %v2438 = vmul.f32 %v2191, 1.442695
      %v2439 = vpow.pop %v2438
      %v2440 = vmul.f32 %v2196, 1.442695
      %v2441 = vpow.pop %v2440
      %v2442 = vmul.f32 %v2201, 1.442695
      %v2443 = vpow.pop %v2442
      %v2444 = vmul.f32 %v2206, 1.442695
      %v2445 = vpow.pop %v2444
      %v2446 = vmul.f32 %v2211, 1.442695
      %v2447 = vpow.pop %v2446
      %v2448 = vmul.f32 %v2216, 1.442695
      %v2449 = vpow.pop %v2448
      %v2450 = vmul.f32 %v2221, 1.442695
      %v2451 = vpow.pop %v2450
      %v2452 = vmul.f32 %v2226, 1.442695
      %v2453 = vpow.pop %v2452
      %v2454 = vmul.f32 %v2231, 1.442695
      %v2455 = vpow.pop %v2454
      %v2456 = vmul.f32 %v2236, 1.442695
      %v2457 = vpow.pop %v2456
      %v2458 = vmul.f32 %v2241, 1.442695
      %v2459 = vpow.pop %v2458
      %v2460 = vmul.f32 %v2246, 1.442695
      %v2461 = vpow.pop %v2460
      %v2462 = vmul.f32 %v2251, 1.442695
      %v2463 = vpow.pop %v2462
      %v2464 = vmul.f32 %v2256, 1.442695
      %v2465 = vpow.pop %v2464
      %v2466 = vmul.f32 %v2261, 1.442695
      %v2467 = vpow.pop %v2466
      %v2468 = vmul.f32 %v2266, 1.442695
      %v2469 = vpow.pop %v2468
      %v2470 = vmul.f32 %v2271, 1.442695
      %v2471 = vpow.pop %v2470
      %v2472 = vmul.f32 %v2276, 1.442695
      %v2473 = vpow.pop %v2472
      %v2474 = vmul.f32 %v2281, 1.442695
      %v2475 = vpow.pop %v2474
      %v2476 = vsub.f32 %v2349, 1.0
      %v2477 = vsub.f32 %v2351, 1.0
      %v2478 = vsub.f32 %v2353, 1.0
      %v2479 = vsub.f32 %v2355, 1.0
      %v2480 = vsub.f32 %v2357, 1.0
      %v2481 = vsub.f32 %v2359, 1.0
      %v2482 = vsub.f32 %v2361, 1.0
      %v2483 = vsub.f32 %v2363, 1.0
      %v2484 = vsub.f32 %v2365, 1.0
      %v2485 = vsub.f32 %v2367, 1.0
      %v2486 = vsub.f32 %v2369, 1.0
      %v2487 = vsub.f32 %v2371, 1.0
      %v2488 = vsub.f32 %v2373, 1.0
      %v2489 = vsub.f32 %v2375, 1.0
      %v2490 = vsub.f32 %v2377, 1.0
      %v2491 = vsub.f32 %v2379, 1.0
      %v2492 = vsub.f32 %v2381, 1.0
      %v2493 = vsub.f32 %v2383, 1.0
      %v2494 = vsub.f32 %v2385, 1.0
      %v2495 = vsub.f32 %v2387, 1.0
      %v2496 = vsub.f32 %v2389, 1.0
      %v2497 = vsub.f32 %v2391, 1.0
      %v2498 = vsub.f32 %v2393, 1.0
      %v2499 = vsub.f32 %v2395, 1.0
      %v2500 = vsub.f32 %v2397, 1.0
      %v2501 = vsub.f32 %v2399, 1.0
      %v2502 = vsub.f32 %v2401, 1.0
      %v2503 = vsub.f32 %v2403, 1.0
      %v2504 = vsub.f32 %v2405, 1.0
      %v2505 = vsub.f32 %v2407, 1.0
      %v2506 = vsub.f32 %v2409, 1.0
      %v2507 = vsub.f32 %v2411, 1.0
      %v2508 = vsub.f32 %v2413, 1.0
      %v2509 = vsub.f32 %v2415, 1.0
      %v2510 = vsub.f32 %v2417, 1.0
      %v2511 = vsub.f32 %v2419, 1.0
      %v2512 = vsub.f32 %v2421, 1.0
      %v2513 = vsub.f32 %v2423, 1.0
      %v2514 = vsub.f32 %v2425, 1.0
      %v2515 = vsub.f32 %v2427, 1.0
      %v2516 = vsub.f32 %v2429, 1.0
      %v2517 = vsub.f32 %v2431, 1.0
      %v2518 = vsub.f32 %v2433, 1.0
      %v2519 = vsub.f32 %v2435, 1.0
      %v2520 = vsub.f32 %v2437, 1.0
      %v2521 = vsub.f32 %v2439, 1.0
      %v2522 = vsub.f32 %v2441, 1.0
      %v2523 = vsub.f32 %v2443, 1.0
      %v2524 = vsub.f32 %v2445, 1.0
      %v2525 = vsub.f32 %v2447, 1.0
      %v2526 = vsub.f32 %v2449, 1.0
      %v2527 = vsub.f32 %v2451, 1.0
      %v2528 = vsub.f32 %v2453, 1.0
      %v2529 = vsub.f32 %v2455, 1.0
      %v2530 = vsub.f32 %v2457, 1.0
      %v2531 = vsub.f32 %v2459, 1.0
      %v2532 = vsub.f32 %v2461, 1.0
      %v2533 = vsub.f32 %v2463, 1.0
      %v2534 = vsub.f32 %v2465, 1.0
      %v2535 = vsub.f32 %v2467, 1.0
      %v2536 = vsub.f32 %v2469, 1.0
      %v2537 = vsub.f32 %v2471, 1.0
      %v2538 = vsub.f32 %v2473, 1.0
      %v2539 = vsub.f32 %v2475, 1.0
      %v2540 = vmul.f32 %v2476, 1.6732632
      %v2541 = vmul.f32 %v2477, 1.6732632
      %v2542 = vmul.f32 %v2478, 1.6732632
      %v2543 = vmul.f32 %v2479, 1.6732632
      %v2544 = vmul.f32 %v2480, 1.6732632
      %v2545 = vmul.f32 %v2481, 1.6732632
      %v2546 = vmul.f32 %v2482, 1.6732632
      %v2547 = vmul.f32 %v2483, 1.6732632
      %v2548 = vmul.f32 %v2484, 1.6732632
      %v2549 = vmul.f32 %v2485, 1.6732632
      %v2550 = vmul.f32 %v2486, 1.6732632
      %v2551 = vmul.f32 %v2487, 1.6732632
      %v2552 = vmul.f32 %v2488, 1.6732632
      %v2553 = vmul.f32 %v2489, 1.6732632
      %v2554 = vmul.f32 %v2490, 1.6732632
      %v2555 = vmul.f32 %v2491, 1.6732632
      %v2556 = vmul.f32 %v2492, 1.6732632
      %v2557 = vmul.f32 %v2493, 1.6732632
      %v2558 = vmul.f32 %v2494, 1.6732632
      %v2559 = vmul.f32 %v2495, 1.6732632
      %v2560 = vmul.f32 %v2496, 1.6732632
      %v2561 = vmul.f32 %v2497, 1.6732632
      %v2562 = vmul.f32 %v2498, 1.6732632
      %v2563 = vmul.f32 %v2499, 1.6732632
      %v2564 = vmul.f32 %v2500, 1.6732632
      %v2565 = vmul.f32 %v2501, 1.6732632
      %v2566 = vmul.f32 %v2502, 1.6732632
      %v2567 = vmul.f32 %v2503, 1.6732632
      %v2568 = vmul.f32 %v2504, 1.6732632
      %v2569 = vmul.f32 %v2505, 1.6732632
      %v2570 = vmul.f32 %v2506, 1.6732632
      %v2571 = vmul.f32 %v2507, 1.6732632
      %v2572 = vmul.f32 %v2508, 1.6732632
      %v2573 = vmul.f32 %v2509, 1.6732632
      %v2574 = vmul.f32 %v2510, 1.6732632
      %v2575 = vmul.f32 %v2511, 1.6732632
      %v2576 = vmul.f32 %v2512, 1.6732632
      %v2577 = vmul.f32 %v2513, 1.6732632
      %v2578 = vmul.f32 %v2514, 1.6732632
      %v2579 = vmul.f32 %v2515, 1.6732632
      %v2580 = vmul.f32 %v2516, 1.6732632
      %v2581 = vmul.f32 %v2517, 1.6732632
      %v2582 = vmul.f32 %v2518, 1.6732632
      %v2583 = vmul.f32 %v2519, 1.6732632
      %v2584 = vmul.f32 %v2520, 1.6732632
      %v2585 = vmul.f32 %v2521, 1.6732632
      %v2586 = vmul.f32 %v2522, 1.6732632
      %v2587 = vmul.f32 %v2523, 1.6732632
      %v2588 = vmul.f32 %v2524, 1.6732632
      %v2589 = vmul.f32 %v2525, 1.6732632
      %v2590 = vmul.f32 %v2526, 1.6732632
      %v2591 = vmul.f32 %v2527, 1.6732632
      %v2592 = vmul.f32 %v2528, 1.6732632
      %v2593 = vmul.f32 %v2529, 1.6732632
      %v2594 = vmul.f32 %v2530, 1.6732632
      %v2595 = vmul.f32 %v2531, 1.6732632
      %v2596 = vmul.f32 %v2532, 1.6732632
      %v2597 = vmul.f32 %v2533, 1.6732632
      %v2598 = vmul.f32 %v2534, 1.6732632
      %v2599 = vmul.f32 %v2535, 1.6732632
      %v2600 = vmul.f32 %v2536, 1.6732632
      %v2601 = vmul.f32 %v2537, 1.6732632
      %v2602 = vmul.f32 %v2538, 1.6732632
      %v2603 = vmul.f32 %v2539, 1.6732632
      %v2604 = vsel %vm2284, %v1966, %v2540
      %v2605 = vsel %vm2285, %v1971, %v2541
      %v2606 = vsel %vm2286, %v1976, %v2542
      %v2607 = vsel %vm2287, %v1981, %v2543
      %v2608 = vsel %vm2288, %v1986, %v2544
      %v2609 = vsel %vm2289, %v1991, %v2545
      %v2610 = vsel %vm2290, %v1996, %v2546
      %v2611 = vsel %vm2291, %v2001, %v2547
      %v2612 = vsel %vm2292, %v2006, %v2548
      %v2613 = vsel %vm2293, %v2011, %v2549
      %v2614 = vsel %vm2294, %v2016, %v2550
      %v2615 = vsel %vm2295, %v2021, %v2551
      %v2616 = vsel %vm2296, %v2026, %v2552
      %v2617 = vsel %vm2297, %v2031, %v2553
      %v2618 = vsel %vm2298, %v2036, %v2554
      %v2619 = vsel %vm2299, %v2041, %v2555
      %v2620 = vsel %vm2300, %v2046, %v2556
      %v2621 = vsel %vm2301, %v2051, %v2557
      %v2622 = vsel %vm2302, %v2056, %v2558
      %v2623 = vsel %vm2303, %v2061, %v2559
      %v2624 = vsel %vm2304, %v2066, %v2560
      %v2625 = vsel %vm2305, %v2071, %v2561
      %v2626 = vsel %vm2306, %v2076, %v2562
      %v2627 = vsel %vm2307, %v2081, %v2563
      %v2628 = vsel %vm2308, %v2086, %v2564
      %v2629 = vsel %vm2309, %v2091, %v2565
      %v2630 = vsel %vm2310, %v2096, %v2566
      %v2631 = vsel %vm2311, %v2101, %v2567
      %v2632 = vsel %vm2312, %v2106, %v2568
      %v2633 = vsel %vm2313, %v2111, %v2569
      %v2634 = vsel %vm2314, %v2116, %v2570
      %v2635 = vsel %vm2315, %v2121, %v2571
      %v2636 = vsel %vm2316, %v2126, %v2572
      %v2637 = vsel %vm2317, %v2131, %v2573
      %v2638 = vsel %vm2318, %v2136, %v2574
      %v2639 = vsel %vm2319, %v2141, %v2575
      %v2640 = vsel %vm2320, %v2146, %v2576
      %v2641 = vsel %vm2321, %v2151, %v2577
      %v2642 = vsel %vm2322, %v2156, %v2578
      %v2643 = vsel %vm2323, %v2161, %v2579
      %v2644 = vsel %vm2324, %v2166, %v2580
      %v2645 = vsel %vm2325, %v2171, %v2581
      %v2646 = vsel %vm2326, %v2176, %v2582
      %v2647 = vsel %vm2327, %v2181, %v2583
      %v2648 = vsel %vm2328, %v2186, %v2584
      %v2649 = vsel %vm2329, %v2191, %v2585
      %v2650 = vsel %vm2330, %v2196, %v2586
      %v2651 = vsel %vm2331, %v2201, %v2587
      %v2652 = vsel %vm2332, %v2206, %v2588
      %v2653 = vsel %vm2333, %v2211, %v2589
      %v2654 = vsel %vm2334, %v2216, %v2590
      %v2655 = vsel %vm2335, %v2221, %v2591
      %v2656 = vsel %vm2336, %v2226, %v2592
      %v2657 = vsel %vm2337, %v2231, %v2593
      %v2658 = vsel %vm2338, %v2236, %v2594
      %v2659 = vsel %vm2339, %v2241, %v2595
      %v2660 = vsel %vm2340, %v2246, %v2596
      %v2661 = vsel %vm2341, %v2251, %v2597
      %v2662 = vsel %vm2342, %v2256, %v2598
      %v2663 = vsel %vm2343, %v2261, %v2599
      %v2664 = vsel %vm2344, %v2266, %v2600
      %v2665 = vsel %vm2345, %v2271, %v2601
      %v2666 = vsel %vm2346, %v2276, %v2602
      %v2667 = vsel %vm2347, %v2281, %v2603
      %v2668 = vmul.f32 %v2604, 1.050701
      %v2669 = vmul.f32 %v2605, 1.050701
      %v2670 = vmul.f32 %v2606, 1.050701
      %v2671 = vmul.f32 %v2607, 1.050701
      %v2672 = vmul.f32 %v2608, 1.050701
      %v2673 = vmul.f32 %v2609, 1.050701
      %v2674 = vmul.f32 %v2610, 1.050701
      %v2675 = vmul.f32 %v2611, 1.050701
      %v2676 = vmul.f32 %v2612, 1.050701
      %v2677 = vmul.f32 %v2613, 1.050701
      %v2678 = vmul.f32 %v2614, 1.050701
      %v2679 = vmul.f32 %v2615, 1.050701
      %v2680 = vmul.f32 %v2616, 1.050701
      %v2681 = vmul.f32 %v2617, 1.050701
      %v2682 = vmul.f32 %v2618, 1.050701
      %v2683 = vmul.f32 %v2619, 1.050701
      %v2684 = vmul.f32 %v2620, 1.050701
      %v2685 = vmul.f32 %v2621, 1.050701
      %v2686 = vmul.f32 %v2622, 1.050701
      %v2687 = vmul.f32 %v2623, 1.050701
      %v2688 = vmul.f32 %v2624, 1.050701
      %v2689 = vmul.f32 %v2625, 1.050701
      %v2690 = vmul.f32 %v2626, 1.050701
      %v2691 = vmul.f32 %v2627, 1.050701
      %v2692 = vmul.f32 %v2628, 1.050701
      %v2693 = vmul.f32 %v2629, 1.050701
      %v2694 = vmul.f32 %v2630, 1.050701
      %v2695 = vmul.f32 %v2631, 1.050701
      %v2696 = vmul.f32 %v2632, 1.050701
      %v2697 = vmul.f32 %v2633, 1.050701
      %v2698 = vmul.f32 %v2634, 1.050701
      %v2699 = vmul.f32 %v2635, 1.050701
      %v2700 = vmul.f32 %v2636, 1.050701
      %v2701 = vmul.f32 %v2637, 1.050701
      %v2702 = vmul.f32 %v2638, 1.050701
      %v2703 = vmul.f32 %v2639, 1.050701
      %v2704 = vmul.f32 %v2640, 1.050701
      %v2705 = vmul.f32 %v2641, 1.050701
      %v2706 = vmul.f32 %v2642, 1.050701
      %v2707 = vmul.f32 %v2643, 1.050701
      %v2708 = vmul.f32 %v2644, 1.050701
      %v2709 = vmul.f32 %v2645, 1.050701
      %v2710 = vmul.f32 %v2646, 1.050701
      %v2711 = vmul.f32 %v2647, 1.050701
      %v2712 = vmul.f32 %v2648, 1.050701
      %v2713 = vmul.f32 %v2649, 1.050701
      %v2714 = vmul.f32 %v2650, 1.050701
      %v2715 = vmul.f32 %v2651, 1.050701
      %v2716 = vmul.f32 %v2652, 1.050701
      %v2717 = vmul.f32 %v2653, 1.050701
      %v2718 = vmul.f32 %v2654, 1.050701
      %v2719 = vmul.f32 %v2655, 1.050701
      %v2720 = vmul.f32 %v2656, 1.050701
      %v2721 = vmul.f32 %v2657, 1.050701
      %v2722 = vmul.f32 %v2658, 1.050701
      %v2723 = vmul.f32 %v2659, 1.050701
      %v2724 = vmul.f32 %v2660, 1.050701
      %v2725 = vmul.f32 %v2661, 1.050701
      %v2726 = vmul.f32 %v2662, 1.050701
      %v2727 = vmul.f32 %v2663, 1.050701
      %v2728 = vmul.f32 %v2664, 1.050701
      %v2729 = vmul.f32 %v2665, 1.050701
      %v2730 = vmul.f32 %v2666, 1.050701
      %v2731 = vmul.f32 %v2667, 1.050701
      %2732 = vst [vmem:[%s175] sm:$0xff] %v2668
      %2733 = vst [vmem:[%s175 + $0x8] sm:$0xff] %v2669
      %2734 = vst [vmem:[%s175 + $0x10] sm:$0xff] %v2670
      %2735 = vst [vmem:[%s175 + $0x18] sm:$0xff] %v2671
      %2736 = vst [vmem:[%s175 + $0x20] sm:$0xff] %v2672
      %2737 = vst [vmem:[%s175 + $0x28] sm:$0xff] %v2673
      %2738 = vst [vmem:[%s175 + $0x30] sm:$0xff] %v2674
      %2739 = vst [vmem:[%s175 + $0x38] sm:$0xff] %v2675
      %2740 = vst [vmem:[%s175 + $0x40] sm:$0xff] %v2676
      %2741 = vst [vmem:[%s175 + $0x48] sm:$0xff] %v2677
      %2742 = vst [vmem:[%s175 + $0x50] sm:$0xff] %v2678
      %2743 = vst [vmem:[%s175 + $0x58] sm:$0xff] %v2679
      %2744 = vst [vmem:[%s175 + $0x60] sm:$0xff] %v2680
      %2745 = vst [vmem:[%s175 + $0x68] sm:$0xff] %v2681
      %2746 = vst [vmem:[%s175 + $0x70] sm:$0xff] %v2682
      %2747 = vst [vmem:[%s175 + $0x78] sm:$0xff] %v2683
      %2748 = vst [vmem:[%s175 + $0x80] sm:$0xff] %v2684
      %2749 = vst [vmem:[%s175 + $0x88] sm:$0xff] %v2685
      %2750 = vst [vmem:[%s175 + $0x90] sm:$0xff] %v2686
      %2751 = vst [vmem:[%s175 + $0x98] sm:$0xff] %v2687
      %2752 = vst [vmem:[%s175 + $0xa0] sm:$0xff] %v2688
      %2753 = vst [vmem:[%s175 + $0xa8] sm:$0xff] %v2689
      %2754 = vst [vmem:[%s175 + $0xb0] sm:$0xff] %v2690
      %2755 = vst [vmem:[%s175 + $0xb8] sm:$0xff] %v2691
      %2756 = vst [vmem:[%s175 + $0xc0] sm:$0xff] %v2692
      %2757 = vst [vmem:[%s175 + $0xc8] sm:$0xff] %v2693
      %2758 = vst [vmem:[%s175 + $0xd0] sm:$0xff] %v2694
      %2759 = vst [vmem:[%s175 + $0xd8] sm:$0xff] %v2695
      %2760 = vst [vmem:[%s175 + $0xe0] sm:$0xff] %v2696
      %2761 = vst [vmem:[%s175 + $0xe8] sm:$0xff] %v2697
      %2762 = vst [vmem:[%s175 + $0xf0] sm:$0xff] %v2698
      %2763 = vst [vmem:[%s175 + $0xf8] sm:$0xff] %v2699
      %2764 = vst [vmem:[%s175 + $0x100] sm:$0xff] %v2700
      %2765 = vst [vmem:[%s175 + $0x108] sm:$0xff] %v2701
      %2766 = vst [vmem:[%s175 + $0x110] sm:$0xff] %v2702
      %2767 = vst [vmem:[%s175 + $0x118] sm:$0xff] %v2703
      %2768 = vst [vmem:[%s175 + $0x120] sm:$0xff] %v2704
      %2769 = vst [vmem:[%s175 + $0x128] sm:$0xff] %v2705
      %2770 = vst [vmem:[%s175 + $0x130] sm:$0xff] %v2706
      %2771 = vst [vmem:[%s175 + $0x138] sm:$0xff] %v2707
      %2772 = vst [vmem:[%s175 + $0x140] sm:$0xff] %v2708
      %2773 = vst [vmem:[%s175 + $0x148] sm:$0xff] %v2709
      %2774 = vst [vmem:[%s175 + $0x150] sm:$0xff] %v2710
      %2775 = vst [vmem:[%s175 + $0x158] sm:$0xff] %v2711
      %2776 = vst [vmem:[%s175 + $0x160] sm:$0xff] %v2712
      %2777 = vst [vmem:[%s175 + $0x168] sm:$0xff] %v2713
      %2778 = vst [vmem:[%s175 + $0x170] sm:$0xff] %v2714
      %2779 = vst [vmem:[%s175 + $0x178] sm:$0xff] %v2715
      %2780 = vst [vmem:[%s175 + $0x180] sm:$0xff] %v2716
      %2781 = vst [vmem:[%s175 + $0x188] sm:$0xff] %v2717
      %2782 = vst [vmem:[%s175 + $0x190] sm:$0xff] %v2718
      %2783 = vst [vmem:[%s175 + $0x198] sm:$0xff] %v2719
      %2784 = vst [vmem:[%s175 + $0x1a0] sm:$0xff] %v2720
      %2785 = vst [vmem:[%s175 + $0x1a8] sm:$0xff] %v2721
      %2786 = vst [vmem:[%s175 + $0x1b0] sm:$0xff] %v2722
      %2787 = vst [vmem:[%s175 + $0x1b8] sm:$0xff] %v2723
      %2788 = vst [vmem:[%s175 + $0x1c0] sm:$0xff] %v2724
      %2789 = vst [vmem:[%s175 + $0x1c8] sm:$0xff] %v2725
      %2790 = vst [vmem:[%s175 + $0x1d0] sm:$0xff] %v2726
      %2791 = vst [vmem:[%s175 + $0x1d8] sm:$0xff] %v2727
      %2792 = vst [vmem:[%s175 + $0x1e0] sm:$0xff] %v2728
      %2793 = vst [vmem:[%s175 + $0x1e8] sm:$0xff] %v2729
      %2794 = vst [vmem:[%s175 + $0x1f0] sm:$0xff] %v2730
      %2795 = vst [vmem:[%s175 + $0x1f8] sm:$0xff] %v2731
      %s2796 = smul.u32 64, %s14
      %p2797 = scmp.lt.s32.totalorder %s2796, 127
      %s2798 = scalar_select %p2797, %s2796, 127
      %s2799 = smul.addr %s2798, 8
      %s2800 = scalar_lea.vmem %s3, %s2799
      // Predicated region
      $region33: #{dueling_dqn_forward.7} parent=31 // pred_check
        %p2801 = pneg %p100
      $region34: #{dueling_dqn_forward.7} parent=31 // pred_check_branch
        %2803 = sbr.rel (%p2801) target = $region36
      $region35: #{dueling_dqn_forward.7} parent=31 // pred_region
        %s2804 = smul.u32 64, %s14
      $region36: #{dueling_dqn_forward.7} parent=31 // pred_fallthru
        _
    $region32: #{dueling_dqn_forward.7} parent=5 // pred_fallthru
      _
    %p2805 = scmp.le.s32.totalorder 2, %s9
    // Predicated region
    $region37: #{dueling_dqn_forward.7} parent=5 // pred_check
      %p2806 = pneg %p2805
    $region38: #{dueling_dqn_forward.7} parent=5 // pred_check_branch
      %2808 = sbr.rel (%p2806) target = $region40
    $region39: #{dueling_dqn_forward.7} parent=5 // pred_region
      %s2809 = ssub.s32 %s9, 2
      // Predicated region
      $region41: #{dueling_dqn_forward.7} parent=39 // pred_check
        %p2810 = pneg %p106
      $region42: #{dueling_dqn_forward.7} parent=39 // pred_check_branch
        %2812 = sbr.rel (%p2810) target = $region44
      $region43: #{dueling_dqn_forward.7} parent=39 // pred_region
        %s2813 = smul.u32 64, %s15
        %p2814 = scmp.lt.s32.totalorder %s2813, 127
        %s2815 = scalar_select %p2814, %s2813, 127
        %s2816 = smul.addr %s2815, 8
        %s2817 = scalar_lea.vmem %s3, %s2816
      $region44: #{dueling_dqn_forward.7} parent=39 // pred_fallthru
        _
    $region40: #{dueling_dqn_forward.7} parent=5 // pred_fallthru
      _
  $region6: #{dueling_dqn_forward.7} parent=0 // loop_footer
    %s13 = sadd.s32 1, %s9
  $region7: #{dueling_dqn_forward.7} parent=0 // loop_footer_branch
    %8 = sbr.rel target = $region3
  $region8: #{dueling_dqn_forward.7} parent=0 // loop_exit
    _

// kernel: dueling_dqn_forward.8
$region0: #{dueling_dqn_forward.8}
  #allocation0 [shape = 'u32[]', space=smem, size = 0x4, offset = 0x4, fixed_abs, tag = 'smem constant byte address 0x4 - core index']
  #allocation1 [shape = 'u32[144,128]{1,0:T(1,128)}', space=vmem, size = 0x12000, scoped, tag = 'internal scratch']
  %s0 = inlined_call_operand.vmem [shape: f32[248,1664], index: 0, kind: input, shape index: {}]
  %s1 = inlined_call_operand.vmem [shape: f32[1664,128], index: 1, kind: input, shape index: {}]
  %s2 = inlined_call_operand.vmem [shape: f32[1,128], index: 2, kind: input, shape index: {}]
  %s3 = inlined_call_operand.vmem [shape: f32[248,128], index: 3, kind: output, shape index: {}]
  %s4 = sld [smem:[#allocation0]]
  $region22: #{dueling_dqn_forward.8} parent=0
    _
  %s6 = ssub.s32 1, %s4
  %s7 = scalar_select 0, %s6, %s4
  // Predicated region
  $region2: #{dueling_dqn_forward.8} parent=0 // pred_check
    _
  $region3: #{dueling_dqn_forward.8} parent=0 // pred_check_branch
    %9 = sbr.rel (0) target = $region5
  $region4: #{dueling_dqn_forward.8} parent=0 // pred_region
    _
  $region5: #{dueling_dqn_forward.8} parent=0 // pred_fallthru
    _
  // Predicated region
  $region6: #{dueling_dqn_forward.8} parent=0 // pred_check
    _
  $region7: #{dueling_dqn_forward.8} parent=0 // pred_check_branch
    %11 = sbr.rel (0) target = $region9
  $region8: #{dueling_dqn_forward.8} parent=0 // pred_region
    _
  $region9: #{dueling_dqn_forward.8} parent=0 // pred_fallthru
    _
  // Predicated region
  $region10: #{dueling_dqn_forward.8} parent=0 // pred_check
    _
  $region11: #{dueling_dqn_forward.8} parent=0 // pred_check_branch
    %13 = sbr.rel (0) target = $region13
  $region12: #{dueling_dqn_forward.8} parent=0 // pred_region
    _
  $region13: #{dueling_dqn_forward.8} parent=0 // pred_fallthru
    _
  %v14 = vld [vmem:[%s0] sm:$0xff]
  %v15 = vld [vmem:[%s0 + $0x8] sm:$0xff]
  %v16 = vld [vmem:[%s0 + $0x10] sm:$0xff]
  %v17 = vld [vmem:[%s0 + $0x18] sm:$0xff]
  %v18 = vld [vmem:[%s0 + $0x20] sm:$0xff]
  %v19 = vld [vmem:[%s0 + $0x28] sm:$0xff]
  %v20 = vld [vmem:[%s0 + $0x30] sm:$0xff]
  %v21 = vld [vmem:[%s0 + $0x38] sm:$0xff]
  %v22 = vld [vmem:[%s0 + $0x40] sm:$0xff]
  %v23 = vld [vmem:[%s0 + $0x48] sm:$0xff]
  %v24 = vld [vmem:[%s0 + $0x50] sm:$0xff]
  %v25 = vld [vmem:[%s0 + $0x58] sm:$0xff]
  %v26 = vld [vmem:[%s0 + $0x60] sm:$0xff]
  %v27 = vld [vmem:[%s0 + $0x68] sm:$0xff]
  %v28 = vld [vmem:[%s0 + $0x70] sm:$0xff]
  %v29 = vld [vmem:[%s0 + $0x78] sm:$0xff]
  %v30 = vld [vmem:[%s0 + $0x80] sm:$0xff]
  %v31 = vld [vmem:[%s0 + $0x88] sm:$0xff]
  %v32 = vld [vmem:[%s0 + $0x90] sm:$0xff]
  %v33 = vld [vmem:[%s0 + $0x98] sm:$0xff]
  %v34 = vld [vmem:[%s0 + $0xa0] sm:$0xff]
  %v35 = vld [vmem:[%s0 + $0xa8] sm:$0xff]
  %v36 = vld [vmem:[%s0 + $0xb0] sm:$0xff]
  %v37 = vld [vmem:[%s0 + $0xb8] sm:$0xff]
  %v38 = vld [vmem:[%s0 + $0xc0] sm:$0xff]
  %v39 = vld [vmem:[%s0 + $0xc8] sm:$0xff]
  %v40 = vld [vmem:[%s0 + $0xd0] sm:$0xff]
  %v41 = vld [vmem:[%s0 + $0xd8] sm:$0xff]
  %v42 = vld [vmem:[%s0 + $0xe0] sm:$0xff]
  %v43 = vld [vmem:[%s0 + $0xe8] sm:$0xff]
  %v44 = vld [vmem:[%s0 + $0xf0] sm:$0xff]
  %v45 = vld [vmem:[%s0 + $0xf8] sm:$0xff]
  %v46 = vld [vmem:[%s0 + $0x100] sm:$0xff]
  %v47 = vld [vmem:[%s0 + $0x108] sm:$0xff]
  %v48 = vld [vmem:[%s0 + $0x110] sm:$0xff]
  %v49 = vld [vmem:[%s0 + $0x118] sm:$0xff]
  %v50 = vld [vmem:[%s0 + $0x120] sm:$0xff]
  %v51 = vld [vmem:[%s0 + $0x128] sm:$0xff]
  %v52 = vld [vmem:[%s0 + $0x130] sm:$0xff]
  %v53 = vld [vmem:[%s0 + $0x138] sm:$0xff]
  %v54 = vld [vmem:[%s0 + $0x140] sm:$0xff]
  %v55 = vld [vmem:[%s0 + $0x148] sm:$0xff]
  %v56 = vld [vmem:[%s0 + $0x150] sm:$0xff]
  %v57 = vld [vmem:[%s0 + $0x158] sm:$0xff]
  %v58 = vld [vmem:[%s0 + $0x160] sm:$0xff]
  %v59 = vld [vmem:[%s0 + $0x168] sm:$0xff]
  %v60 = vld [vmem:[%s0 + $0x170] sm:$0xff]
  %v61 = vld [vmem:[%s0 + $0x178] sm:$0xff]
  %v62 = vld [vmem:[%s0 + $0x180] sm:$0xff]
  %v63 = vld [vmem:[%s0 + $0x188] sm:$0xff]
  %v64 = vld [vmem:[%s0 + $0x190] sm:$0xff]
  %v65 = vld [vmem:[%s0 + $0x198] sm:$0xff]
  %v66 = vld [vmem:[%s0 + $0x1a0] sm:$0xff]
  %v67 = vld [vmem:[%s0 + $0x1a8] sm:$0xff]
  %v68 = vld [vmem:[%s0 + $0x1b0] sm:$0xff]
  %v69 = vld [vmem:[%s0 + $0x1b8] sm:$0xff]
  %v70 = vld [vmem:[%s0 + $0x1c0] sm:$0xff]
  %v71 = vld [vmem:[%s0 + $0x1c8] sm:$0xff]
  %v72 = vld [vmem:[%s0 + $0x1d0] sm:$0xff]
  %v73 = vld [vmem:[%s0 + $0x1d8] sm:$0xff]
  %v74 = vld [vmem:[%s0 + $0x1e0] sm:$0xff]
  %v75 = vld [vmem:[%s0 + $0x1e8] sm:$0xff]
  %v76 = vld [vmem:[%s0 + $0x1f0] sm:$0xff]
  %v77 = vld [vmem:[%s0 + $0x1f8] sm:$0xff]
  %v78 = vld [vmem:[%s0 + $0x200] sm:$0xff]
  %v79 = vld [vmem:[%s0 + $0x208] sm:$0xff]
  %v80 = vld [vmem:[%s0 + $0x210] sm:$0xff]
  %v81 = vld [vmem:[%s0 + $0x218] sm:$0xff]
  %v82 = vld [vmem:[%s0 + $0x220] sm:$0xff]
  %v83 = vld [vmem:[%s0 + $0x228] sm:$0xff]
  %v84 = vld [vmem:[%s0 + $0x230] sm:$0xff]
  %v85 = vld [vmem:[%s0 + $0x238] sm:$0xff]
  %v86 = vld [vmem:[%s0 + $0x240] sm:$0xff]
  %v87 = vld [vmem:[%s0 + $0x248] sm:$0xff]
  %v88 = vld [vmem:[%s0 + $0x250] sm:$0xff]
  %v89 = vld [vmem:[%s0 + $0x258] sm:$0xff]
  %v90 = vld [vmem:[%s0 + $0x260] sm:$0xff]
  %v91 = vld [vmem:[%s0 + $0x268] sm:$0xff]
  %v92 = vld [vmem:[%s0 + $0x270] sm:$0xff]
  %v93 = vld [vmem:[%s0 + $0x278] sm:$0xff]
  %v94 = vld [vmem:[%s0 + $0x280] sm:$0xff]
  %v95 = vld [vmem:[%s0 + $0x288] sm:$0xff]
  %v96 = vld [vmem:[%s0 + $0x290] sm:$0xff]
  %v97 = vld [vmem:[%s0 + $0x298] sm:$0xff]
  %v98 = vld [vmem:[%s0 + $0x2a0] sm:$0xff]
  %v99 = vld [vmem:[%s0 + $0x2a8] sm:$0xff]
  %v100 = vld [vmem:[%s0 + $0x2b0] sm:$0xff]
  %v101 = vld [vmem:[%s0 + $0x2b8] sm:$0xff]
  %v102 = vld [vmem:[%s0 + $0x2c0] sm:$0xff]
  %v103 = vld [vmem:[%s0 + $0x2c8] sm:$0xff]
  %v104 = vld [vmem:[%s0 + $0x2d0] sm:$0xff]
  %v105 = vld [vmem:[%s0 + $0x2d8] sm:$0xff]
  %v106 = vld [vmem:[%s0 + $0x2e0] sm:$0xff]
  %v107 = vld [vmem:[%s0 + $0x2e8] sm:$0xff]
  %v108 = vld [vmem:[%s0 + $0x2f0] sm:$0xff]
  %v109 = vld [vmem:[%s0 + $0x2f8] sm:$0xff]
  %v110 = vld [vmem:[%s0 + $0x300] sm:$0xff]
  %v111 = vld [vmem:[%s0 + $0x308] sm:$0xff]
  %v112 = vld [vmem:[%s0 + $0x310] sm:$0xff]
  %v113 = vld [vmem:[%s0 + $0x318] sm:$0xff]
  %v114 = vld [vmem:[%s0 + $0x320] sm:$0xff]
  %v115 = vld [vmem:[%s0 + $0x328] sm:$0xff]
  %v116 = vld [vmem:[%s0 + $0x330] sm:$0xff]
  %v117 = vld [vmem:[%s0 + $0x338] sm:$0xff]
  %v118 = vld [vmem:[%s0 + $0x340] sm:$0xff]
  %v119 = vld [vmem:[%s0 + $0x348] sm:$0xff]
  %v120 = vld [vmem:[%s0 + $0x350] sm:$0xff]
  %v121 = vld [vmem:[%s0 + $0x358] sm:$0xff]
  %v122 = vld [vmem:[%s0 + $0x360] sm:$0xff]
  %v123 = vld [vmem:[%s0 + $0x368] sm:$0xff]
  %v124 = vld [vmem:[%s0 + $0x370] sm:$0xff]
  %v125 = vld [vmem:[%s0 + $0x378] sm:$0xff]
  %v126 = vld [vmem:[%s0 + $0x380] sm:$0xff]
  %v127 = vld [vmem:[%s0 + $0x388] sm:$0xff]
  %v128 = vld [vmem:[%s0 + $0x390] sm:$0xff]
  %v129 = vld [vmem:[%s0 + $0x398] sm:$0xff]
  %v130 = vld [vmem:[%s0 + $0x3a0] sm:$0xff]
  %v131 = vld [vmem:[%s0 + $0x3a8] sm:$0xff]
  %v132 = vld [vmem:[%s0 + $0x3b0] sm:$0xff]
  %v133 = vld [vmem:[%s0 + $0x3b8] sm:$0xff]
  %v134 = vld [vmem:[%s0 + $0x3c0] sm:$0xff]
  %v135 = vld [vmem:[%s0 + $0x3c8] sm:$0xff]
  %v136 = vld [vmem:[%s0 + $0x3d0] sm:$0xff]
  %v137 = vld [vmem:[%s0 + $0x3d8] sm:$0xff]
  %v138 = vld [vmem:[%s0 + $0x3e0] sm:$0xff]
  %v139 = vld [vmem:[%s0 + $0x3e8] sm:$0xff]
  %v140 = vld [vmem:[%s0 + $0x3f0] sm:$0xff]
  %v141 = vld [vmem:[%s0 + $0x3f8] sm:$0xff]
  %v142 = vld [vmem:[%s0 + $0x400] sm:$0xff]
  %v143 = vld [vmem:[%s0 + $0x408] sm:$0xff]
  %v144 = vld [vmem:[%s0 + $0x410] sm:$0xff]
  %v145 = vld [vmem:[%s0 + $0x418] sm:$0xff]
  %v146 = vld [vmem:[%s0 + $0x420] sm:$0xff]
  %v147 = vld [vmem:[%s0 + $0x428] sm:$0xff]
  %v148 = vld [vmem:[%s0 + $0x430] sm:$0xff]
  %v149 = vld [vmem:[%s0 + $0x438] sm:$0xff]
  %v150 = vld [vmem:[%s0 + $0x440] sm:$0xff]
  %v151 = vld [vmem:[%s0 + $0x448] sm:$0xff]
  %v152 = vld [vmem:[%s0 + $0x450] sm:$0xff]
  %v153 = vld [vmem:[%s0 + $0x458] sm:$0xff]
  %v154 = vld [vmem:[%s0 + $0x460] sm:$0xff]
  %v155 = vld [vmem:[%s0 + $0x468] sm:$0xff]
  %v156 = vld [vmem:[%s0 + $0x470] sm:$0xff]
  %v157 = vld [vmem:[%s0 + $0x478] sm:$0xff]
  %v158 = vld [vmem:[%s0 + $0x480] sm:$0xff]
  %v159 = vld [vmem:[%s0 + $0x488] sm:$0xff]
  %v160 = vld [vmem:[%s0 + $0x490] sm:$0xff]
  %v161 = vld [vmem:[%s0 + $0x498] sm:$0xff]
  %v162 = vld [vmem:[%s0 + $0x4a0] sm:$0xff]
  %v163 = vld [vmem:[%s0 + $0x4a8] sm:$0xff]
  %v164 = vld [vmem:[%s0 + $0x4b0] sm:$0xff]
  %v165 = vld [vmem:[%s0 + $0x4b8] sm:$0xff]
  %v166 = vld [vmem:[%s0 + $0x4c0] sm:$0xff]
  %v167 = vld [vmem:[%s0 + $0x4c8] sm:$0xff]
  %v168 = vld [vmem:[%s0 + $0x4d0] sm:$0xff]
  %v169 = vld [vmem:[%s0 + $0x4d8] sm:$0xff]
  %v170 = vld [vmem:[%s0 + $0x4e0] sm:$0xff]
  %v171 = vld [vmem:[%s0 + $0x4e8] sm:$0xff]
  %v172 = vld [vmem:[%s0 + $0x4f0] sm:$0xff]
  %v173 = vld [vmem:[%s0 + $0x4f8] sm:$0xff]
  %v174 = vld [vmem:[%s0 + $0x500] sm:$0xff]
  %v175 = vld [vmem:[%s0 + $0x508] sm:$0xff]
  %v176 = vld [vmem:[%s0 + $0x510] sm:$0xff]
  %v177 = vld [vmem:[%s0 + $0x518] sm:$0xff]
  %v178 = vld [vmem:[%s0 + $0x520] sm:$0xff]
  %v179 = vld [vmem:[%s0 + $0x528] sm:$0xff]
  %v180 = vld [vmem:[%s0 + $0x530] sm:$0xff]
  %v181 = vld [vmem:[%s0 + $0x538] sm:$0xff]
  %v182 = vld [vmem:[%s0 + $0x540] sm:$0xff]
  %v183 = vld [vmem:[%s0 + $0x548] sm:$0xff]
  %v184 = vld [vmem:[%s0 + $0x550] sm:$0xff]
  %v185 = vld [vmem:[%s0 + $0x558] sm:$0xff]
  %v186 = vld [vmem:[%s0 + $0x560] sm:$0xff]
  %v187 = vld [vmem:[%s0 + $0x568] sm:$0xff]
  %v188 = vld [vmem:[%s0 + $0x570] sm:$0xff]
  %v189 = vld [vmem:[%s0 + $0x578] sm:$0xff]
  %v190 = vld [vmem:[%s0 + $0x580] sm:$0xff]
  %v191 = vld [vmem:[%s0 + $0x588] sm:$0xff]
  %v192 = vld [vmem:[%s0 + $0x590] sm:$0xff]
  %v193 = vld [vmem:[%s0 + $0x598] sm:$0xff]
  %v194 = vld [vmem:[%s0 + $0x5a0] sm:$0xff]
  %v195 = vld [vmem:[%s0 + $0x5a8] sm:$0xff]
  %v196 = vld [vmem:[%s0 + $0x5b0] sm:$0xff]
  %v197 = vld [vmem:[%s0 + $0x5b8] sm:$0xff]
  %v198 = vld [vmem:[%s0 + $0x5c0] sm:$0xff]
  %v199 = vld [vmem:[%s0 + $0x5c8] sm:$0xff]
  %v200 = vld [vmem:[%s0 + $0x5d0] sm:$0xff]
  %v201 = vld [vmem:[%s0 + $0x5d8] sm:$0xff]
  %v202 = vld [vmem:[%s0 + $0x5e0] sm:$0xff]
  %v203 = vld [vmem:[%s0 + $0x5e8] sm:$0xff]
  %v204 = vld [vmem:[%s0 + $0x5f0] sm:$0xff]
  %v205 = vld [vmem:[%s0 + $0x5f8] sm:$0xff]
  %v206 = vld [vmem:[%s0 + $0x600] sm:$0xff]
  %v207 = vld [vmem:[%s0 + $0x608] sm:$0xff]
  %v208 = vld [vmem:[%s0 + $0x610] sm:$0xff]
  %v209 = vld [vmem:[%s0 + $0x618] sm:$0xff]
  %v210 = vld [vmem:[%s0 + $0x620] sm:$0xff]
  %v211 = vld [vmem:[%s0 + $0x628] sm:$0xff]
  %v212 = vld [vmem:[%s0 + $0x630] sm:$0xff]
  %v213 = vld [vmem:[%s0 + $0x638] sm:$0xff]
  %v214 = vld [vmem:[%s0 + $0x640] sm:$0xff]
  %v215 = vld [vmem:[%s0 + $0x648] sm:$0xff]
  %v216 = vld [vmem:[%s0 + $0x650] sm:$0xff]
  %v217 = vld [vmem:[%s0 + $0x658] sm:$0xff]
  %v218 = vld [vmem:[%s0 + $0x660] sm:$0xff]
  %v219 = vld [vmem:[%s0 + $0x668] sm:$0xff]
  %v220 = vld [vmem:[%s0 + $0x670] sm:$0xff]
  %v221 = vld [vmem:[%s0 + $0x678] sm:$0xff]
  %v222 = vld [vmem:[%s0 + $0x680] sm:$0xff]
  %v223 = vld [vmem:[%s0 + $0x688] sm:$0xff]
  %v224 = vld [vmem:[%s0 + $0x690] sm:$0xff]
  %v225 = vld [vmem:[%s0 + $0x698] sm:$0xff]
  %v226 = vld [vmem:[%s0 + $0x6a0] sm:$0xff]
  %v227 = vld [vmem:[%s0 + $0x6a8] sm:$0xff]
  %v228 = vld [vmem:[%s0 + $0x6b0] sm:$0xff]
  %v229 = vld [vmem:[%s0 + $0x6b8] sm:$0xff]
  %v230 = vld [vmem:[%s0 + $0x6c0] sm:$0xff]
  %v231 = vld [vmem:[%s0 + $0x6c8] sm:$0xff]
  %v232 = vld [vmem:[%s0 + $0x6d0] sm:$0xff]
  %v233 = vld [vmem:[%s0 + $0x6d8] sm:$0xff]
  %v234 = vld [vmem:[%s0 + $0x6e0] sm:$0xff]
  %v235 = vld [vmem:[%s0 + $0x6e8] sm:$0xff]
  %v236 = vld [vmem:[%s0 + $0x6f0] sm:$0xff]
  %v237 = vld [vmem:[%s0 + $0x6f8] sm:$0xff]
  %v238 = vld [vmem:[%s0 + $0x700] sm:$0xff]
  %v239 = vld [vmem:[%s0 + $0x708] sm:$0xff]
  %v240 = vld [vmem:[%s0 + $0x710] sm:$0xff]
  %v241 = vld [vmem:[%s0 + $0x718] sm:$0xff]
  %v242 = vld [vmem:[%s0 + $0x720] sm:$0xff]
  %v243 = vld [vmem:[%s0 + $0x728] sm:$0xff]
  %v244 = vld [vmem:[%s0 + $0x730] sm:$0xff]
  %v245 = vld [vmem:[%s0 + $0x738] sm:$0xff]
  %v246 = vld [vmem:[%s0 + $0x740] sm:$0xff]
  %v247 = vld [vmem:[%s0 + $0x748] sm:$0xff]
  %v248 = vld [vmem:[%s0 + $0x750] sm:$0xff]
  %v249 = vld [vmem:[%s0 + $0x758] sm:$0xff]
  %v250 = vld [vmem:[%s0 + $0x760] sm:$0xff]
  %v251 = vld [vmem:[%s0 + $0x768] sm:$0xff]
  %v252 = vld [vmem:[%s0 + $0x770] sm:$0xff]
  %v253 = vld [vmem:[%s0 + $0x778] sm:$0xff]
  %v254 = vld [vmem:[%s0 + $0x780] sm:$0xff]
  %v255 = vld [vmem:[%s0 + $0x788] sm:$0xff]
  %v256 = vld [vmem:[%s0 + $0x790] sm:$0xff]
  %v257 = vld [vmem:[%s0 + $0x798] sm:$0xff]
  %v258 = vld [vmem:[%s0 + $0x7a0] sm:$0xff]
  %v259 = vld [vmem:[%s0 + $0x7a8] sm:$0xff]
  %v260 = vld [vmem:[%s0 + $0x7b0] sm:$0xff]
  %v261 = vld [vmem:[%s0 + $0x7b8] sm:$0xff]
  %v262 = vld [vmem:[%s0 + $0x7c0] sm:$0xff]
  %v263 = vld [vmem:[%s0 + $0x7c8] sm:$0xff]
  %v264 = vld [vmem:[%s0 + $0x7d0] sm:$0xff]
  %v265 = vld [vmem:[%s0 + $0x7d8] sm:$0xff]
  %v266 = vld [vmem:[%s0 + $0x7e0] sm:$0xff]
  %v267 = vld [vmem:[%s0 + $0x7e8] sm:$0xff]
  %v268 = vld [vmem:[%s0 + $0x7f0] sm:$0xff]
  %v269 = vld [vmem:[%s0 + $0x7f8] sm:$0xff]
  %v270 = vld [vmem:[%s0 + $0x800] sm:$0xff]
  %v271 = vld [vmem:[%s0 + $0x808] sm:$0xff]
  %v272 = vld [vmem:[%s0 + $0x810] sm:$0xff]
  %v273 = vld [vmem:[%s0 + $0x818] sm:$0xff]
  %v274 = vld [vmem:[%s0 + $0x820] sm:$0xff]
  %v275 = vld [vmem:[%s0 + $0x828] sm:$0xff]
  %v276 = vld [vmem:[%s0 + $0x830] sm:$0xff]
  %v277 = vld [vmem:[%s0 + $0x838] sm:$0xff]
  %v278 = vld [vmem:[%s0 + $0x840] sm:$0xff]
  %v279 = vld [vmem:[%s0 + $0x848] sm:$0xff]
  %v280 = vld [vmem:[%s0 + $0x850] sm:$0xff]
  %v281 = vld [vmem:[%s0 + $0x858] sm:$0xff]
  %v282 = vld [vmem:[%s0 + $0x860] sm:$0xff]
  %v283 = vld [vmem:[%s0 + $0x868] sm:$0xff]
  %v284 = vld [vmem:[%s0 + $0x870] sm:$0xff]
  %v285 = vld [vmem:[%s0 + $0x878] sm:$0xff]
  %v286 = vld [vmem:[%s0 + $0x880] sm:$0xff]
  %v287 = vld [vmem:[%s0 + $0x888] sm:$0xff]
  %v288 = vld [vmem:[%s0 + $0x890] sm:$0xff]
  %v289 = vld [vmem:[%s0 + $0x898] sm:$0xff]
  %v290 = vld [vmem:[%s0 + $0x8a0] sm:$0xff]
  %v291 = vld [vmem:[%s0 + $0x8a8] sm:$0xff]
  %v292 = vld [vmem:[%s0 + $0x8b0] sm:$0xff]
  %v293 = vld [vmem:[%s0 + $0x8b8] sm:$0xff]
  %v294 = vld [vmem:[%s0 + $0x8c0] sm:$0xff]
  %v295 = vld [vmem:[%s0 + $0x8c8] sm:$0xff]
  %v296 = vld [vmem:[%s0 + $0x8d0] sm:$0xff]
  %v297 = vld [vmem:[%s0 + $0x8d8] sm:$0xff]
  %v298 = vld [vmem:[%s0 + $0x8e0] sm:$0xff]
  %v299 = vld [vmem:[%s0 + $0x8e8] sm:$0xff]
  %v300 = vld [vmem:[%s0 + $0x8f0] sm:$0xff]
  %v301 = vld [vmem:[%s0 + $0x8f8] sm:$0xff]
  %v302 = vld [vmem:[%s0 + $0x900] sm:$0xff]
  %v303 = vld [vmem:[%s0 + $0x908] sm:$0xff]
  %v304 = vld [vmem:[%s0 + $0x910] sm:$0xff]
  %v305 = vld [vmem:[%s0 + $0x918] sm:$0xff]
  %v306 = vld [vmem:[%s0 + $0x920] sm:$0xff]
  %v307 = vld [vmem:[%s0 + $0x928] sm:$0xff]
  %v308 = vld [vmem:[%s0 + $0x930] sm:$0xff]
  %v309 = vld [vmem:[%s0 + $0x938] sm:$0xff]
  %v310 = vld [vmem:[%s0 + $0x940] sm:$0xff]
  %v311 = vld [vmem:[%s0 + $0x948] sm:$0xff]
  %v312 = vld [vmem:[%s0 + $0x950] sm:$0xff]
  %v313 = vld [vmem:[%s0 + $0x958] sm:$0xff]
  %v314 = vld [vmem:[%s0 + $0x960] sm:$0xff]
  %v315 = vld [vmem:[%s0 + $0x968] sm:$0xff]
  %v316 = vld [vmem:[%s0 + $0x970] sm:$0xff]
  %v317 = vld [vmem:[%s0 + $0x978] sm:$0xff]
  %v318 = vld [vmem:[%s0 + $0x980] sm:$0xff]
  %v319 = vld [vmem:[%s0 + $0x988] sm:$0xff]
  %v320 = vld [vmem:[%s0 + $0x990] sm:$0xff]
  %v321 = vld [vmem:[%s0 + $0x998] sm:$0xff]
  %v322 = vld [vmem:[%s0 + $0x9a0] sm:$0xff]
  %v323 = vld [vmem:[%s0 + $0x9a8] sm:$0xff]
  %v324 = vld [vmem:[%s0 + $0x9b0] sm:$0xff]
  %v325 = vld [vmem:[%s0 + $0x9b8] sm:$0xff]
  %v326 = vld [vmem:[%s0 + $0x9c0] sm:$0xff]
  %v327 = vld [vmem:[%s0 + $0x9c8] sm:$0xff]
  %v328 = vld [vmem:[%s0 + $0x9d0] sm:$0xff]
  %v329 = vld [vmem:[%s0 + $0x9d8] sm:$0xff]
  %v330 = vld [vmem:[%s0 + $0x9e0] sm:$0xff]
  %v331 = vld [vmem:[%s0 + $0x9e8] sm:$0xff]
  %v332 = vld [vmem:[%s0 + $0x9f0] sm:$0xff]
  %v333 = vld [vmem:[%s0 + $0x9f8] sm:$0xff]
  %v334 = vld [vmem:[%s0 + $0xa00] sm:$0xff]
  %v335 = vld [vmem:[%s0 + $0xa08] sm:$0xff]
  %v336 = vld [vmem:[%s0 + $0xa10] sm:$0xff]
  %v337 = vld [vmem:[%s0 + $0xa18] sm:$0xff]
  %v338 = vld [vmem:[%s0 + $0xa20] sm:$0xff]
  %v339 = vld [vmem:[%s0 + $0xa28] sm:$0xff]
  %v340 = vld [vmem:[%s0 + $0xa30] sm:$0xff]
  %v341 = vld [vmem:[%s0 + $0xa38] sm:$0xff]
  %v342 = vld [vmem:[%s0 + $0xa40] sm:$0xff]
  %v343 = vld [vmem:[%s0 + $0xa48] sm:$0xff]
  %v344 = vld [vmem:[%s0 + $0xa50] sm:$0xff]
  %v345 = vld [vmem:[%s0 + $0xa58] sm:$0xff]
  %v346 = vld [vmem:[%s0 + $0xa60] sm:$0xff]
  %v347 = vld [vmem:[%s0 + $0xa68] sm:$0xff]
  %v348 = vld [vmem:[%s0 + $0xa70] sm:$0xff]
  %v349 = vld [vmem:[%s0 + $0xa78] sm:$0xff]
  %v350 = vld [vmem:[%s0 + $0xa80] sm:$0xff]
  %v351 = vld [vmem:[%s0 + $0xa88] sm:$0xff]
  %v352 = vld [vmem:[%s0 + $0xa90] sm:$0xff]
  %v353 = vld [vmem:[%s0 + $0xa98] sm:$0xff]
  %v354 = vld [vmem:[%s0 + $0xaa0] sm:$0xff]
  %v355 = vld [vmem:[%s0 + $0xaa8] sm:$0xff]
  %v356 = vld [vmem:[%s0 + $0xab0] sm:$0xff]
  %v357 = vld [vmem:[%s0 + $0xab8] sm:$0xff]
  %v358 = vld [vmem:[%s0 + $0xac0] sm:$0xff]
  %v359 = vld [vmem:[%s0 + $0xac8] sm:$0xff]
  %v360 = vld [vmem:[%s0 + $0xad0] sm:$0xff]
  %v361 = vld [vmem:[%s0 + $0xad8] sm:$0xff]
  %v362 = vld [vmem:[%s0 + $0xae0] sm:$0xff]
  %v363 = vld [vmem:[%s0 + $0xae8] sm:$0xff]
  %v364 = vld [vmem:[%s0 + $0xaf0] sm:$0xff]
  %v365 = vld [vmem:[%s0 + $0xaf8] sm:$0xff]
  %v366 = vld [vmem:[%s0 + $0xb00] sm:$0xff]
  %v367 = vld [vmem:[%s0 + $0xb08] sm:$0xff]
  %v368 = vld [vmem:[%s0 + $0xb10] sm:$0xff]
  %v369 = vld [vmem:[%s0 + $0xb18] sm:$0xff]
  %v370 = vld [vmem:[%s0 + $0xb20] sm:$0xff]
  %v371 = vld [vmem:[%s0 + $0xb28] sm:$0xff]
  %v372 = vld [vmem:[%s0 + $0xb30] sm:$0xff]
  %v373 = vld [vmem:[%s0 + $0xb38] sm:$0xff]
  %v374 = vld [vmem:[%s0 + $0xb40] sm:$0xff]
  %v375 = vld [vmem:[%s0 + $0xb48] sm:$0xff]
  %v376 = vld [vmem:[%s0 + $0xb50] sm:$0xff]
  %v377 = vld [vmem:[%s0 + $0xb58] sm:$0xff]
  %v378 = vld [vmem:[%s0 + $0xb60] sm:$0xff]
  %v379 = vld [vmem:[%s0 + $0xb68] sm:$0xff]
  %v380 = vld [vmem:[%s0 + $0xb70] sm:$0xff]
  %v381 = vld [vmem:[%s0 + $0xb78] sm:$0xff]
  %v382 = vld [vmem:[%s0 + $0xb80] sm:$0xff]
  %v383 = vld [vmem:[%s0 + $0xb88] sm:$0xff]
  %v384 = vld [vmem:[%s0 + $0xb90] sm:$0xff]
  %v385 = vld [vmem:[%s0 + $0xb98] sm:$0xff]
  %v386 = vld [vmem:[%s0 + $0xba0] sm:$0xff]
  %v387 = vld [vmem:[%s0 + $0xba8] sm:$0xff]
  %v388 = vld [vmem:[%s0 + $0xbb0] sm:$0xff]
  %v389 = vld [vmem:[%s0 + $0xbb8] sm:$0xff]
  %v390 = vld [vmem:[%s0 + $0xbc0] sm:$0xff]
  %v391 = vld [vmem:[%s0 + $0xbc8] sm:$0xff]
  %v392 = vld [vmem:[%s0 + $0xbd0] sm:$0xff]
  %v393 = vld [vmem:[%s0 + $0xbd8] sm:$0xff]
  %v394 = vld [vmem:[%s0 + $0xbe0] sm:$0xff]
  %v395 = vld [vmem:[%s0 + $0xbe8] sm:$0xff]
  %v396 = vld [vmem:[%s0 + $0xbf0] sm:$0xff]
  %v397 = vld [vmem:[%s0 + $0xbf8] sm:$0xff]
  %v398 = vld [vmem:[%s0 + $0xc00] sm:$0xff]
  %v399 = vld [vmem:[%s0 + $0xc08] sm:$0xff]
  %v400 = vld [vmem:[%s0 + $0xc10] sm:$0xff]
  %v401 = vld [vmem:[%s0 + $0xc18] sm:$0xff]
  %v402 = vld [vmem:[%s0 + $0xc20] sm:$0xff]
  %v403 = vld [vmem:[%s0 + $0xc28] sm:$0xff]
  %v404 = vld [vmem:[%s0 + $0xc30] sm:$0xff]
  %v405 = vld [vmem:[%s0 + $0xc38] sm:$0xff]
  %v406 = vld [vmem:[%s0 + $0xc40] sm:$0xff]
  %v407 = vld [vmem:[%s0 + $0xc48] sm:$0xff]
  %v408 = vld [vmem:[%s0 + $0xc50] sm:$0xff]
  %v409 = vld [vmem:[%s0 + $0xc58] sm:$0xff]
  %v410 = vld [vmem:[%s0 + $0xc60] sm:$0xff]
  %v411 = vld [vmem:[%s0 + $0xc68] sm:$0xff]
  %v412 = vld [vmem:[%s0 + $0xc70] sm:$0xff]
  %v413 = vld [vmem:[%s0 + $0xc78] sm:$0xff]
  %v414 = vld [vmem:[%s0 + $0xc80] sm:$0xff]
  %v415 = vld [vmem:[%s0 + $0xc88] sm:$0xff]
  %v416 = vld [vmem:[%s0 + $0xc90] sm:$0xff]
  %v417 = vld [vmem:[%s1] sm:$0xff]
  %v418 = vld [vmem:[%s1 + $0x8] sm:$0xff]
  %v419 = vld [vmem:[%s1 + $0x10] sm:$0xff]
  %v420 = vld [vmem:[%s1 + $0x18] sm:$0xff]
  %v421 = vld [vmem:[%s1 + $0x20] sm:$0xff]
  %v422 = vld [vmem:[%s1 + $0x28] sm:$0xff]
  %v423 = vld [vmem:[%s1 + $0x30] sm:$0xff]
  %v424 = vld [vmem:[%s1 + $0x38] sm:$0xff]
  %v425 = vld [vmem:[%s1 + $0x40] sm:$0xff]
  %v426 = vld [vmem:[%s1 + $0x48] sm:$0xff]
  %v427 = vld [vmem:[%s1 + $0x50] sm:$0xff]
  %v428 = vld [vmem:[%s1 + $0x58] sm:$0xff]
  %v429 = vld [vmem:[%s1 + $0x60] sm:$0xff]
  %v430 = vld [vmem:[%s1 + $0x68] sm:$0xff]
  %v431 = vld [vmem:[%s1 + $0x70] sm:$0xff]
  %v432 = vld [vmem:[%s1 + $0x78] sm:$0xff]
  %v433 = vld [vmem:[%s1 + $0x80] sm:$0xff]
  %v434 = vld [vmem:[%s1 + $0x88] sm:$0xff]
  %v435 = vld [vmem:[%s1 + $0x90] sm:$0xff]
  %v436 = vld [vmem:[%s1 + $0x98] sm:$0xff]
  %v437 = vld [vmem:[%s1 + $0xa0] sm:$0xff]
  %v438 = vld [vmem:[%s1 + $0xa8] sm:$0xff]
  %v439 = vld [vmem:[%s1 + $0xb0] sm:$0xff]
  %v440 = vld [vmem:[%s1 + $0xb8] sm:$0xff]
  %v441 = vld [vmem:[%s1 + $0xc0] sm:$0xff]
  %v442 = vld [vmem:[%s1 + $0xc8] sm:$0xff]
  %v443 = vld [vmem:[%s1 + $0xd0] sm:$0xff]
  %v444 = vld [vmem:[%s1 + $0xd8] sm:$0xff]
  %v445 = vld [vmem:[%s1 + $0xe0] sm:$0xff]
  %v446 = vld [vmem:[%s1 + $0xe8] sm:$0xff]
  %v447 = vld [vmem:[%s1 + $0xf0] sm:$0xff]
  %v448 = vld [vmem:[%s1 + $0xf8] sm:$0xff]
  %v449 = vld [vmem:[%s1 + $0x100] sm:$0xff]
  %v450 = vld [vmem:[%s1 + $0x108] sm:$0xff]
  %v451 = vld [vmem:[%s1 + $0x110] sm:$0xff]
  %v452 = vld [vmem:[%s1 + $0x118] sm:$0xff]
  %v453 = vld [vmem:[%s1 + $0x120] sm:$0xff]
  %v454 = vld [vmem:[%s1 + $0x128] sm:$0xff]
  %v455 = vld [vmem:[%s1 + $0x130] sm:$0xff]
  %v456 = vld [vmem:[%s1 + $0x138] sm:$0xff]
  %v457 = vld [vmem:[%s1 + $0x140] sm:$0xff]
  %v458 = vld [vmem:[%s1 + $0x148] sm:$0xff]
  %v459 = vld [vmem:[%s1 + $0x150] sm:$0xff]
  %v460 = vld [vmem:[%s1 + $0x158] sm:$0xff]
  %v461 = vld [vmem:[%s1 + $0x160] sm:$0xff]
  %v462 = vld [vmem:[%s1 + $0x168] sm:$0xff]
  %v463 = vld [vmem:[%s1 + $0x170] sm:$0xff]
  %v464 = vld [vmem:[%s1 + $0x178] sm:$0xff]
  %v465 = vld [vmem:[%s1 + $0x180] sm:$0xff]
  %v466 = vld [vmem:[%s1 + $0x188] sm:$0xff]
  %v467 = vld [vmem:[%s1 + $0x190] sm:$0xff]
  %v468 = vld [vmem:[%s1 + $0x198] sm:$0xff]
  %v469 = vld [vmem:[%s1 + $0x1a0] sm:$0xff]
  %v470 = vld [vmem:[%s1 + $0x1a8] sm:$0xff]
  %v471 = vld [vmem:[%s1 + $0x1b0] sm:$0xff]
  %v472 = vld [vmem:[%s1 + $0x1b8] sm:$0xff]
  %v473 = vld [vmem:[%s1 + $0x1c0] sm:$0xff]
  %v474 = vld [vmem:[%s1 + $0x1c8] sm:$0xff]
  %v475 = vld [vmem:[%s1 + $0x1d0] sm:$0xff]
  %v476 = vld [vmem:[%s1 + $0x1d8] sm:$0xff]
  %v477 = vld [vmem:[%s1 + $0x1e0] sm:$0xff]
  %v478 = vld [vmem:[%s1 + $0x1e8] sm:$0xff]
  %v479 = vld [vmem:[%s1 + $0x1f0] sm:$0xff]
  %v480 = vld [vmem:[%s1 + $0x1f8] sm:$0xff]
  %v481 = vld [vmem:[%s1 + $0x200] sm:$0xff]
  %v482 = vld [vmem:[%s1 + $0x208] sm:$0xff]
  %v483 = vld [vmem:[%s1 + $0x210] sm:$0xff]
  %v484 = vld [vmem:[%s1 + $0x218] sm:$0xff]
  %v485 = vld [vmem:[%s1 + $0x220] sm:$0xff]
  %v486 = vld [vmem:[%s1 + $0x228] sm:$0xff]
  %v487 = vld [vmem:[%s1 + $0x230] sm:$0xff]
  %v488 = vld [vmem:[%s1 + $0x238] sm:$0xff]
  %v489 = vld [vmem:[%s1 + $0x240] sm:$0xff]
  %v490 = vld [vmem:[%s1 + $0x248] sm:$0xff]
  %v491 = vld [vmem:[%s1 + $0x250] sm:$0xff]
  %v492 = vld [vmem:[%s1 + $0x258] sm:$0xff]
  %v493 = vld [vmem:[%s1 + $0x260] sm:$0xff]
  %v494 = vld [vmem:[%s1 + $0x268] sm:$0xff]
  %v495 = vld [vmem:[%s1 + $0x270] sm:$0xff]
  %v496 = vld [vmem:[%s1 + $0x278] sm:$0xff]
  %v497 = vld [vmem:[%s1 + $0x280] sm:$0xff]
  %v498 = vld [vmem:[%s1 + $0x288] sm:$0xff]
  %v499 = vld [vmem:[%s1 + $0x290] sm:$0xff]
  %v500 = vld [vmem:[%s1 + $0x298] sm:$0xff]
  %v501 = vld [vmem:[%s1 + $0x2a0] sm:$0xff]
  %v502 = vld [vmem:[%s1 + $0x2a8] sm:$0xff]
  %v503 = vld [vmem:[%s1 + $0x2b0] sm:$0xff]
  %v504 = vld [vmem:[%s1 + $0x2b8] sm:$0xff]
  %v505 = vld [vmem:[%s1 + $0x2c0] sm:$0xff]
  %v506 = vld [vmem:[%s1 + $0x2c8] sm:$0xff]
  %v507 = vld [vmem:[%s1 + $0x2d0] sm:$0xff]
  %v508 = vld [vmem:[%s1 + $0x2d8] sm:$0xff]
  %v509 = vld [vmem:[%s1 + $0x2e0] sm:$0xff]
  %v510 = vld [vmem:[%s1 + $0x2e8] sm:$0xff]
  %v511 = vld [vmem:[%s1 + $0x2f0] sm:$0xff]
  %v512 = vld [vmem:[%s1 + $0x2f8] sm:$0xff]
  %v513 = vld [vmem:[%s1 + $0x300] sm:$0xff]
  %v514 = vld [vmem:[%s1 + $0x308] sm:$0xff]
  %v515 = vld [vmem:[%s1 + $0x310] sm:$0xff]
  %v516 = vld [vmem:[%s1 + $0x318] sm:$0xff]
  %v517 = vld [vmem:[%s1 + $0x320] sm:$0xff]
  %v518 = vld [vmem:[%s1 + $0x328] sm:$0xff]
  %v519 = vld [vmem:[%s1 + $0x330] sm:$0xff]
  %v520 = vld [vmem:[%s1 + $0x338] sm:$0xff]
  %v521 = vld [vmem:[%s1 + $0x340] sm:$0xff]
  %v522 = vld [vmem:[%s1 + $0x348] sm:$0xff]
  %v523 = vld [vmem:[%s1 + $0x350] sm:$0xff]
  %v524 = vld [vmem:[%s1 + $0x358] sm:$0xff]
  %v525 = vld [vmem:[%s1 + $0x360] sm:$0xff]
  %v526 = vld [vmem:[%s1 + $0x368] sm:$0xff]
  %v527 = vld [vmem:[%s1 + $0x370] sm:$0xff]
  %v528 = vld [vmem:[%s1 + $0x378] sm:$0xff]
  %v529 = vld [vmem:[%s1 + $0x380] sm:$0xff]
  %v530 = vld [vmem:[%s1 + $0x388] sm:$0xff]
  %v531 = vld [vmem:[%s1 + $0x390] sm:$0xff]
  %v532 = vld [vmem:[%s1 + $0x398] sm:$0xff]
  %v533 = vld [vmem:[%s1 + $0x3a0] sm:$0xff]
  %v534 = vld [vmem:[%s1 + $0x3a8] sm:$0xff]
  %v535 = vld [vmem:[%s1 + $0x3b0] sm:$0xff]
  %v536 = vld [vmem:[%s1 + $0x3b8] sm:$0xff]
  %v537 = vld [vmem:[%s1 + $0x3c0] sm:$0xff]
  %v538 = vld [vmem:[%s1 + $0x3c8] sm:$0xff]
  %v539 = vld [vmem:[%s1 + $0x3d0] sm:$0xff]
  %v540 = vld [vmem:[%s1 + $0x3d8] sm:$0xff]
  %v541 = vld [vmem:[%s1 + $0x3e0] sm:$0xff]
  %v542 = vld [vmem:[%s1 + $0x3e8] sm:$0xff]
  %v543 = vld [vmem:[%s1 + $0x3f0] sm:$0xff]
  %v544 = vld [vmem:[%s1 + $0x3f8] sm:$0xff]
  %v545 = vld [vmem:[%s1 + $0x400] sm:$0xff]
  %v546 = vld [vmem:[%s1 + $0x408] sm:$0xff]
  %v547 = vld [vmem:[%s1 + $0x410] sm:$0xff]
  %v548 = vld [vmem:[%s1 + $0x418] sm:$0xff]
  %v549 = vld [vmem:[%s1 + $0x420] sm:$0xff]
  %v550 = vld [vmem:[%s1 + $0x428] sm:$0xff]
  %v551 = vld [vmem:[%s1 + $0x430] sm:$0xff]
  %v552 = vld [vmem:[%s1 + $0x438] sm:$0xff]
  %v553 = vld [vmem:[%s1 + $0x440] sm:$0xff]
  %v554 = vld [vmem:[%s1 + $0x448] sm:$0xff]
  %v555 = vld [vmem:[%s1 + $0x450] sm:$0xff]
  %v556 = vld [vmem:[%s1 + $0x458] sm:$0xff]
  %v557 = vld [vmem:[%s1 + $0x460] sm:$0xff]
  %v558 = vld [vmem:[%s1 + $0x468] sm:$0xff]
  %v559 = vld [vmem:[%s1 + $0x470] sm:$0xff]
  %v560 = vld [vmem:[%s1 + $0x478] sm:$0xff]
  %v561 = vld [vmem:[%s1 + $0x480] sm:$0xff]
  %v562 = vld [vmem:[%s1 + $0x488] sm:$0xff]
  %v563 = vld [vmem:[%s1 + $0x490] sm:$0xff]
  %v564 = vld [vmem:[%s1 + $0x498] sm:$0xff]
  %v565 = vld [vmem:[%s1 + $0x4a0] sm:$0xff]
  %v566 = vld [vmem:[%s1 + $0x4a8] sm:$0xff]
  %v567 = vld [vmem:[%s1 + $0x4b0] sm:$0xff]
  %v568 = vld [vmem:[%s1 + $0x4b8] sm:$0xff]
  %v569 = vld [vmem:[%s1 + $0x4c0] sm:$0xff]
  %v570 = vld [vmem:[%s1 + $0x4c8] sm:$0xff]
  %v571 = vld [vmem:[%s1 + $0x4d0] sm:$0xff]
  %v572 = vld [vmem:[%s1 + $0x4d8] sm:$0xff]
  %v573 = vld [vmem:[%s1 + $0x4e0] sm:$0xff]
  %v574 = vld [vmem:[%s1 + $0x4e8] sm:$0xff]
  %v575 = vld [vmem:[%s1 + $0x4f0] sm:$0xff]
  %v576 = vld [vmem:[%s1 + $0x4f8] sm:$0xff]
  %v577 = vld [vmem:[%s1 + $0x500] sm:$0xff]
  %v578 = vld [vmem:[%s1 + $0x508] sm:$0xff]
  %v579 = vld [vmem:[%s1 + $0x510] sm:$0xff]
  %v580 = vld [vmem:[%s1 + $0x518] sm:$0xff]
  %v581 = vld [vmem:[%s1 + $0x520] sm:$0xff]
  %v582 = vld [vmem:[%s1 + $0x528] sm:$0xff]
  %v583 = vld [vmem:[%s1 + $0x530] sm:$0xff]
  %v584 = vld [vmem:[%s1 + $0x538] sm:$0xff]
  %v585 = vld [vmem:[%s1 + $0x540] sm:$0xff]
  %v586 = vld [vmem:[%s1 + $0x548] sm:$0xff]
  %v587 = vld [vmem:[%s1 + $0x550] sm:$0xff]
  %v588 = vld [vmem:[%s1 + $0x558] sm:$0xff]
  %v589 = vld [vmem:[%s1 + $0x560] sm:$0xff]
  %v590 = vld [vmem:[%s1 + $0x568] sm:$0xff]
  %v591 = vld [vmem:[%s1 + $0x570] sm:$0xff]
  %v592 = vld [vmem:[%s1 + $0x578] sm:$0xff]
  %v593 = vld [vmem:[%s1 + $0x580] sm:$0xff]
  %v594 = vld [vmem:[%s1 + $0x588] sm:$0xff]
  %v595 = vld [vmem:[%s1 + $0x590] sm:$0xff]
  %v596 = vld [vmem:[%s1 + $0x598] sm:$0xff]
  %v597 = vld [vmem:[%s1 + $0x5a0] sm:$0xff]
  %v598 = vld [vmem:[%s1 + $0x5a8] sm:$0xff]
  %v599 = vld [vmem:[%s1 + $0x5b0] sm:$0xff]
  %v600 = vld [vmem:[%s1 + $0x5b8] sm:$0xff]
  %v601 = vld [vmem:[%s1 + $0x5c0] sm:$0xff]
  %v602 = vld [vmem:[%s1 + $0x5c8] sm:$0xff]
  %v603 = vld [vmem:[%s1 + $0x5d0] sm:$0xff]
  %v604 = vld [vmem:[%s1 + $0x5d8] sm:$0xff]
  %v605 = vld [vmem:[%s1 + $0x5e0] sm:$0xff]
  %v606 = vld [vmem:[%s1 + $0x5e8] sm:$0xff]
  %v607 = vld [vmem:[%s1 + $0x5f0] sm:$0xff]
  %v608 = vld [vmem:[%s1 + $0x5f8] sm:$0xff]
  %v609 = vld [vmem:[%s1 + $0x600] sm:$0xff]
  %v610 = vld [vmem:[%s1 + $0x608] sm:$0xff]
  %v611 = vld [vmem:[%s1 + $0x610] sm:$0xff]
  %v612 = vld [vmem:[%s1 + $0x618] sm:$0xff]
  %v613 = vld [vmem:[%s1 + $0x620] sm:$0xff]
  %v614 = vld [vmem:[%s1 + $0x628] sm:$0xff]
  %v615 = vld [vmem:[%s1 + $0x630] sm:$0xff]
  %v616 = vld [vmem:[%s1 + $0x638] sm:$0xff]
  %v617 = vld [vmem:[%s1 + $0x640] sm:$0xff]
  %v618 = vld [vmem:[%s1 + $0x648] sm:$0xff]
  %v619 = vld [vmem:[%s1 + $0x650] sm:$0xff]
  %v620 = vld [vmem:[%s1 + $0x658] sm:$0xff]
  %v621 = vld [vmem:[%s1 + $0x660] sm:$0xff]
  %v622 = vld [vmem:[%s1 + $0x668] sm:$0xff]
  %v623 = vld [vmem:[%s1 + $0x670] sm:$0xff]
  %v624 = vld [vmem:[%s1 + $0x678] sm:$0xff]
  %v625 = vld [vmem:[%s2] sm:$0x1]
  %v627 = vlaneseq
  %v628 = vshrl.u32 %v627, 7
  %v629 = vsub.s32 0, %v628
  %v630 = vrot.slane %v625, %v629
  %632 = vmatprep.subr.mxu0 0.0
  %633 = vmatpush1.msra.mxu0 %v417
  %634 = vmatprep.subr.mxu0 0.0
  %635 = vmatpush1.msra.mxu0 %v418
  %636 = vmatprep.subr.mxu0 0.0
  %637 = vmatpush1.msra.mxu0 %v419
  %638 = vmatprep.subr.mxu0 0.0
  %639 = vmatpush1.msra.mxu0 %v420
  %640 = vmatprep.subr.mxu0 0.0
  %641 = vmatpush1.msra.mxu0 %v421
  %642 = vmatprep.subr.mxu0 0.0
  %643 = vmatpush1.msra.mxu0 %v422
  %644 = vmatprep.subr.mxu0 0.0
  %645 = vmatpush1.msra.mxu0 %v423
  %646 = vmatprep.subr.mxu0 0.0
  %647 = vmatpush1.msra.mxu0 %v424
  %648 = vmatprep.subr.mxu0 0.0
  %649 = vmatpush1.msra.mxu0 %v425
  %650 = vmatprep.subr.mxu0 0.0
  %651 = vmatpush1.msra.mxu0 %v426
  %652 = vmatprep.subr.mxu0 0.0
  %653 = vmatpush1.msra.mxu0 %v427
  %654 = vmatprep.subr.mxu0 0.0
  %655 = vmatpush1.msra.mxu0 %v428
  %656 = vmatprep.subr.mxu0 0.0
  %657 = vmatpush1.msra.mxu0 %v429
  %658 = vmatprep.subr.mxu0 0.0
  %659 = vmatpush1.msra.mxu0 %v430
  %660 = vmatprep.subr.mxu0 0.0
  %661 = vmatpush1.msra.mxu0 %v431
  %662 = vmatprep.subr.mxu0 0.0
  %663 = vmatpush1.msra.mxu0 %v432
  %664 = vmatprep.subr.mxu0 0.0
  %665 = vmatpush1.msra.mxu0 %v433
  %666 = vmatprep.subr.mxu0 0.0
  %667 = vmatpush1.msra.mxu0 %v434
  %668 = vmatprep.subr.mxu0 0.0
  %669 = vmatpush1.msra.mxu0 %v435
  %670 = vmatprep.subr.mxu0 0.0
  %671 = vmatpush1.msra.mxu0 %v436
  %672 = vmatprep.subr.mxu0 0.0
  %673 = vmatpush1.msra.mxu0 %v437
  %674 = vmatprep.subr.mxu0 0.0
  %675 = vmatpush1.msra.mxu0 %v438
  %676 = vmatprep.subr.mxu0 0.0
  %677 = vmatpush1.msra.mxu0 %v439
  %678 = vmatprep.subr.mxu0 0.0
  %679 = vmatpush1.msra.mxu0 %v440
  %680 = vmatprep.subr.mxu0 0.0
  %681 = vmatpush1.msra.mxu0 %v441
  %682 = vmatprep.subr.mxu0 0.0
  %683 = vmatpush1.msra.mxu0 %v442
  %684 = vmatprep.subr.mxu0 0.0
  %685 = vmatpush1.msra.mxu0 %v443
  %686 = vmatprep.subr.mxu0 0.0
  %687 = vmatpush1.msra.mxu0 %v444
  %688 = vmatprep.subr.mxu0 0.0
  %689 = vmatpush1.msra.mxu0 %v445
  %690 = vmatprep.subr.mxu0 0.0
  %691 = vmatpush1.msra.mxu0 %v446
  %692 = vmatprep.subr.mxu0 0.0
  %693 = vmatpush1.msra.mxu0 %v447
  %694 = vmatprep.subr.mxu0 0.0
  %695 = vmatpush1.msra.mxu0 %v448
  %696 = vmatprep.mubr.f32.mxu0 %v15
  %697 = vmatmul.mubr.f32.gmra.mrb[0].mxu0 %v14
  %v698 = vpop.f32.mrb[0].mxu0
  %v699 = vadd.f32 %v630, %v698
  %v700 = vpop.f32.mrb[0].mxu0
  %701 = vmatprep.mubr.f32.mxu0 %v28
  %702 = vmatmul.mubr.f32.gmra.mrb[0].mxu0 %v27
  %v703 = vpop.f32.mrb[0].mxu0
  %v704 = vadd.f32 %v630, %v703
  %v705 = vpop.f32.mrb[0].mxu0
  %706 = vmatprep.mubr.f32.mxu0 %v41
  %707 = vmatmul.mubr.f32.gmra.mrb[0].mxu0 %v40
  %v708 = vpop.f32.mrb[0].mxu0
  %v709 = vadd.f32 %v630, %v708
  %v710 = vpop.f32.mrb[0].mxu0
  %711 = vmatprep.mubr.f32.mxu0 %v54
  %712 = vmatmul.mubr.f32.gmra.mrb[0].mxu0 %v53
  %v713 = vpop.f32.mrb[0].mxu0
  %v714 = vadd.f32 %v630, %v713
  %v715 = vpop.f32.mrb[0].mxu0
  %716 = vmatprep.mubr.f32.mxu0 %v67
  %717 = vmatmul.mubr.f32.gmra.mrb[0].mxu0 %v66
  %v718 = vpop.f32.mrb[0].mxu0
  %v719 = vadd.f32 %v630, %v718
  %v720 = vpop.f32.mrb[0].mxu0
  %721 = vmatprep.mubr.f32.mxu0 %v80
  %722 = vmatmul.mubr.f32.gmra.mrb[0].mxu0 %v79
  %v723 = vpop.f32.mrb[0].mxu0
  %v724 = vadd.f32 %v630, %v723
  %v725 = vpop.f32.mrb[0].mxu0
  %726 = vmatprep.mubr.f32.mxu0 %v93
  %727 = vmatmul.mubr.f32.gmra.mrb[0].mxu0 %v92
  %v728 = vpop.f32.mrb[0].mxu0
  %v729 = vadd.f32 %v630, %v728
  %v730 = vpop.f32.mrb[0].mxu0
  %731 = vmatprep.mubr.f32.mxu0 %v106
  %732 = vmatmul.mubr.f32.gmra.mrb[0].mxu0 %v105
  %v733 = vpop.f32.mrb[0].mxu0
  %v734 = vadd.f32 %v630, %v733
  %v735 = vpop.f32.mrb[0].mxu0
  %736 = vmatprep.mubr.f32.mxu0 %v119
  %737 = vmatmul.mubr.f32.gmra.mrb[0].mxu0 %v118
  %v738 = vpop.f32.mrb[0].mxu0
  %v739 = vadd.f32 %v630, %v738
  %v740 = vpop.f32.mrb[0].mxu0
  %741 = vmatprep.mubr.f32.mxu0 %v132
  %742 = vmatmul.mubr.f32.gmra.mrb[0].mxu0 %v131
  %v743 = vpop.f32.mrb[0].mxu0
  %v744 = vadd.f32 %v630, %v743
  %v745 = vpop.f32.mrb[0].mxu0
  %746 = vmatprep.mubr.f32.mxu0 %v145
  %747 = vmatmul.mubr.f32.gmra.mrb[0].mxu0 %v144
  %v748 = vpop.f32.mrb[0].mxu0
  %v749 = vadd.f32 %v630, %v748
  %v750 = vpop.f32.mrb[0].mxu0
  %751 = vmatprep.mubr.f32.mxu0 %v158
  %752 = vmatmul.mubr.f32.gmra.mrb[0].mxu0 %v157
  %v753 = vpop.f32.mrb[0].mxu0
  %v754 = vadd.f32 %v630, %v753
  %v755 = vpop.f32.mrb[0].mxu0
  %756 = vmatprep.mubr.f32.mxu0 %v171
  %757 = vmatmul.mubr.f32.gmra.mrb[0].mxu0 %v170
  %v758 = vpop.f32.mrb[0].mxu0
  %v759 = vadd.f32 %v630, %v758
  %v760 = vpop.f32.mrb[0].mxu0
  %761 = vmatprep.mubr.f32.mxu0 %v184
  %762 = vmatmul.mubr.f32.gmra.mrb[0].mxu0 %v183
  %v763 = vpop.f32.mrb[0].mxu0
  %v764 = vadd.f32 %v630, %v763
  %v765 = vpop.f32.mrb[0].mxu0
  %766 = vmatprep.mubr.f32.mxu0 %v197
  %767 = vmatmul.mubr.f32.gmra.mrb[0].mxu0 %v196
  %v768 = vpop.f32.mrb[0].mxu0
  %v769 = vadd.f32 %v630, %v768
  %v770 = vpop.f32.mrb[0].mxu0
  %771 = vmatprep.mubr.f32.mxu0 %v210
  %772 = vmatmul.mubr.f32.gmra.mrb[0].mxu0 %v209
  %v773 = vpop.f32.mrb[0].mxu0
  %v774 = vadd.f32 %v630, %v773
  %v775 = vpop.f32.mrb[0].mxu0
  %776 = vmatprep.mubr.f32.mxu0 %v223
  %777 = vmatmul.mubr.f32.gmra.mrb[0].mxu0 %v222
  %v778 = vpop.f32.mrb[0].mxu0
  %v779 = vadd.f32 %v630, %v778
  %v780 = vpop.f32.mrb[0].mxu0
  %781 = vmatprep.mubr.f32.mxu0 %v236
  %782 = vmatmul.mubr.f32.gmra.mrb[0].mxu0 %v235
  %v783 = vpop.f32.mrb[0].mxu0
  %v784 = vadd.f32 %v630, %v783
  %v785 = vpop.f32.mrb[0].mxu0
  %786 = vmatprep.mubr.f32.mxu0 %v249
  %787 = vmatmul.mubr.f32.gmra.mrb[0].mxu0 %v248
  %v788 = vpop.f32.mrb[0].mxu0
  %v789 = vadd.f32 %v630, %v788
  %v790 = vpop.f32.mrb[0].mxu0
  %791 = vmatprep.mubr.f32.mxu0 %v262
  %792 = vmatmul.mubr.f32.gmra.mrb[0].mxu0 %v261
  %v793 = vpop.f32.mrb[0].mxu0
  %v794 = vadd.f32 %v630, %v793
  %v795 = vpop.f32.mrb[0].mxu0
  %796 = vmatprep.mubr.f32.mxu0 %v275
  %797 = vmatmul.mubr.f32.gmra.mrb[0].mxu0 %v274
  %v798 = vpop.f32.mrb[0].mxu0
  %v799 = vadd.f32 %v630, %v798
  %v800 = vpop.f32.mrb[0].mxu0
  %801 = vmatprep.mubr.f32.mxu0 %v288
  %802 = vmatmul.mubr.f32.gmra.mrb[0].mxu0 %v287
  %v803 = vpop.f32.mrb[0].mxu0
  %v804 = vadd.f32 %v630, %v803
  %v805 = vpop.f32.mrb[0].mxu0
  %806 = vmatprep.mubr.f32.mxu0 %v301
  %807 = vmatmul.mubr.f32.gmra.mrb[0].mxu0 %v300
  %v808 = vpop.f32.mrb[0].mxu0
  %v809 = vadd.f32 %v630, %v808
  %v810 = vpop.f32.mrb[0].mxu0
  %811 = vmatprep.mubr.f32.mxu0 %v314
  %812 = vmatmul.mubr.f32.gmra.mrb[0].mxu0 %v313
  %v813 = vpop.f32.mrb[0].mxu0
  %v814 = vadd.f32 %v630, %v813
  %v815 = vpop.f32.mrb[0].mxu0
  %816 = vmatprep.mubr.f32.mxu0 %v327
  %817 = vmatmul.mubr.f32.gmra.mrb[0].mxu0 %v326
  %v818 = vpop.f32.mrb[0].mxu0
  %v819 = vadd.f32 %v630, %v818
  %v820 = vpop.f32.mrb[0].mxu0
  %821 = vmatprep.mubr.f32.mxu0 %v340
  %822 = vmatmul.mubr.f32.gmra.mrb[0].mxu0 %v339
  %v823 = vpop.f32.mrb[0].mxu0
  %v824 = vadd.f32 %v630, %v823
  %v825 = vpop.f32.mrb[0].mxu0
  %826 = vmatprep.mubr.f32.mxu0 %v353
  %827 = vmatmul.mubr.f32.gmra.mrb[0].mxu0 %v352
  %v828 = vpop.f32.mrb[0].mxu0
  %v829 = vadd.f32 %v630, %v828
  %v830 = vpop.f32.mrb[0].mxu0
  %831 = vmatprep.mubr.f32.mxu0 %v366
  %832 = vmatmul.mubr.f32.gmra.mrb[0].mxu0 %v365
  %v833 = vpop.f32.mrb[0].mxu0
  %v834 = vadd.f32 %v630, %v833
  %v835 = vpop.f32.mrb[0].mxu0
  %836 = vmatprep.mubr.f32.mxu0 %v379
  %837 = vmatmul.mubr.f32.gmra.mrb[0].mxu0 %v378
  %v838 = vpop.f32.mrb[0].mxu0
  %v839 = vadd.f32 %v630, %v838
  %v840 = vpop.f32.mrb[0].mxu0
  %841 = vmatprep.mubr.f32.mxu0 %v392
  %842 = vmatmul.mubr.f32.gmra.mrb[0].mxu0 %v391
  %v843 = vpop.f32.mrb[0].mxu0
  %v844 = vadd.f32 %v630, %v843
  %v845 = vpop.f32.mrb[0].mxu0
  %846 = vmatprep.mubr.f32.mxu0 %v405
  %847 = vmatmul.mubr.f32.gmra.mrb[0].mxu0 %v404
  %v848 = vpop.f32.mrb[0].mxu0
  %v849 = vadd.f32 %v630, %v848
  %v850 = vpop.f32.mrb[0].mxu0
  %851 = vdwg.mxu0
  %852 = vmatprep.subr.mxu0 0.0
  %853 = vmatpush1.msra.mxu0 %v449
  %854 = vmatprep.subr.mxu0 0.0
  %855 = vmatpush1.msra.mxu0 %v450
  %856 = vmatprep.subr.mxu0 0.0
  %857 = vmatpush1.msra.mxu0 %v451
  %858 = vmatprep.subr.mxu0 0.0
  %859 = vmatpush1.msra.mxu0 %v452
  %860 = vmatprep.subr.mxu0 0.0
  %861 = vmatpush1.msra.mxu0 %v453
  %862 = vmatprep.subr.mxu0 0.0
  %863 = vmatpush1.msra.mxu0 %v454
  %864 = vmatprep.subr.mxu0 0.0
  %865 = vmatpush1.msra.mxu0 %v455
  %866 = vmatprep.subr.mxu0 0.0
  %867 = vmatpush1.msra.mxu0 %v456
  %868 = vmatprep.subr.mxu0 0.0
  %869 = vmatpush1.msra.mxu0 %v457
  %870 = vmatprep.subr.mxu0 0.0
  %871 = vmatpush1.msra.mxu0 %v458
  %872 = vmatprep.subr.mxu0 0.0
  %873 = vmatpush1.msra.mxu0 %v459
  %874 = vmatprep.subr.mxu0 0.0
  %875 = vmatpush1.msra.mxu0 %v460
  %876 = vmatprep.subr.mxu0 0.0
  %877 = vmatpush1.msra.mxu0 %v461
  %878 = vmatprep.subr.mxu0 0.0
  %879 = vmatpush1.msra.mxu0 %v462
  %880 = vmatprep.subr.mxu0 0.0
  %881 = vmatpush1.msra.mxu0 %v463
  %882 = vmatprep.subr.mxu0 0.0
  %883 = vmatpush1.msra.mxu0 %v464
  %884 = vmatprep.subr.mxu0 0.0
  %885 = vmatpush1.msra.mxu0 %v465
  %886 = vmatprep.subr.mxu0 0.0
  %887 = vmatpush1.msra.mxu0 %v466
  %888 = vmatprep.subr.mxu0 0.0
  %889 = vmatpush1.msra.mxu0 %v467
  %890 = vmatprep.subr.mxu0 0.0
  %891 = vmatpush1.msra.mxu0 %v468
  %892 = vmatprep.subr.mxu0 0.0
  %893 = vmatpush1.msra.mxu0 %v469
  %894 = vmatprep.subr.mxu0 0.0
  %895 = vmatpush1.msra.mxu0 %v470
  %896 = vmatprep.subr.mxu0 0.0
  %897 = vmatpush1.msra.mxu0 %v471
  %898 = vmatprep.subr.mxu0 0.0
  %899 = vmatpush1.msra.mxu0 %v472
  %900 = vmatprep.subr.mxu0 0.0
  %901 = vmatpush1.msra.mxu0 %v473
  %902 = vmatprep.subr.mxu0 0.0
  %903 = vmatpush1.msra.mxu0 %v474
  %904 = vmatprep.subr.mxu0 0.0
  %905 = vmatpush1.msra.mxu0 %v475
  %906 = vmatprep.subr.mxu0 0.0
  %907 = vmatpush1.msra.mxu0 %v476
  %908 = vmatprep.subr.mxu0 0.0
  %909 = vmatpush1.msra.mxu0 %v477
  %910 = vmatprep.subr.mxu0 0.0
  %911 = vmatpush1.msra.mxu0 %v478
  %912 = vmatprep.subr.mxu0 0.0
  %913 = vmatpush1.msra.mxu0 %v479
  %914 = vmatprep.subr.mxu0 0.0
  %915 = vmatpush1.msra.mxu0 %v480
  %916 = vmatprep.mubr.f32.mxu0 %v17
  %917 = vmatmul.mubr.f32.gmra.mrb[0].mxu0 %v16
  %v918 = vpop.f32.mrb[0].mxu0
  %v919 = vadd.f32 %v699, %v918
  %v920 = vpop.f32.mrb[0].mxu0
  %921 = vmatprep.mubr.f32.mxu0 %v30
  %922 = vmatmul.mubr.f32.gmra.mrb[0].mxu0 %v29
  %v923 = vpop.f32.mrb[0].mxu0
  %v924 = vadd.f32 %v704, %v923
  %v925 = vpop.f32.mrb[0].mxu0
  %926 = vmatprep.mubr.f32.mxu0 %v43
  %927 = vmatmul.mubr.f32.gmra.mrb[0].mxu0 %v42
  %v928 = vpop.f32.mrb[0].mxu0
  %v929 = vadd.f32 %v709, %v928
  %v930 = vpop.f32.mrb[0].mxu0
  %931 = vmatprep.mubr.f32.mxu0 %v56
  %932 = vmatmul.mubr.f32.gmra.mrb[0].mxu0 %v55
  %v933 = vpop.f32.mrb[0].mxu0
  %v934 = vadd.f32 %v714, %v933
  %v935 = vpop.f32.mrb[0].mxu0
  %936 = vmatprep.mubr.f32.mxu0 %v69
  %937 = vmatmul.mubr.f32.gmra.mrb[0].mxu0 %v68
  %v938 = vpop.f32.mrb[0].mxu0
  %v939 = vadd.f32 %v719, %v938
  %v940 = vpop.f32.mrb[0].mxu0
  %941 = vmatprep.mubr.f32.mxu0 %v82
  %942 = vmatmul.mubr.f32.gmra.mrb[0].mxu0 %v81
  %v943 = vpop.f32.mrb[0].mxu0
  %v944 = vadd.f32 %v724, %v943
  %v945 = vpop.f32.mrb[0].mxu0
  %946 = vmatprep.mubr.f32.mxu0 %v95
  %947 = vmatmul.mubr.f32.gmra.mrb[0].mxu0 %v94
  %v948 = vpop.f32.mrb[0].mxu0
  %v949 = vadd.f32 %v729, %v948
  %v950 = vpop.f32.mrb[0].mxu0
  %951 = vmatprep.mubr.f32.mxu0 %v108
  %952 = vmatmul.mubr.f32.gmra.mrb[0].mxu0 %v107
  %v953 = vpop.f32.mrb[0].mxu0
  %v954 = vadd.f32 %v734, %v953
  %v955 = vpop.f32.mrb[0].mxu0
  %956 = vmatprep.mubr.f32.mxu0 %v121
  %957 = vmatmul.mubr.f32.gmra.mrb[0].mxu0 %v120
  %v958 = vpop.f32.mrb[0].mxu0
  %v959 = vadd.f32 %v739, %v958
  %v960 = vpop.f32.mrb[0].mxu0
  %961 = vmatprep.mubr.f32.mxu0 %v134
  %962 = vmatmul.mubr.f32.gmra.mrb[0].mxu0 %v133
  %v963 = vpop.f32.mrb[0].mxu0
  %v964 = vadd.f32 %v744, %v963
  %v965 = vpop.f32.mrb[0].mxu0
  %966 = vmatprep.mubr.f32.mxu0 %v147
  %967 = vmatmul.mubr.f32.gmra.mrb[0].mxu0 %v146
  %v968 = vpop.f32.mrb[0].mxu0
  %v969 = vadd.f32 %v749, %v968
  %v970 = vpop.f32.mrb[0].mxu0
  %971 = vmatprep.mubr.f32.mxu0 %v160
  %972 = vmatmul.mubr.f32.gmra.mrb[0].mxu0 %v159
  %v973 = vpop.f32.mrb[0].mxu0
  %v974 = vadd.f32 %v754, %v973
  %v975 = vpop.f32.mrb[0].mxu0
  %976 = vmatprep.mubr.f32.mxu0 %v173
  %977 = vmatmul.mubr.f32.gmra.mrb[0].mxu0 %v172
  %v978 = vpop.f32.mrb[0].mxu0
  %v979 = vadd.f32 %v759, %v978
  %v980 = vpop.f32.mrb[0].mxu0
  %981 = vmatprep.mubr.f32.mxu0 %v186
  %982 = vmatmul.mubr.f32.gmra.mrb[0].mxu0 %v185
  %v983 = vpop.f32.mrb[0].mxu0
  %v984 = vadd.f32 %v764, %v983
  %v985 = vpop.f32.mrb[0].mxu0
  %986 = vmatprep.mubr.f32.mxu0 %v199
  %987 = vmatmul.mubr.f32.gmra.mrb[0].mxu0 %v198
  %v988 = vpop.f32.mrb[0].mxu0
  %v989 = vadd.f32 %v769, %v988
  %v990 = vpop.f32.mrb[0].mxu0
  %991 = vmatprep.mubr.f32.mxu0 %v212
  %992 = vmatmul.mubr.f32.gmra.mrb[0].mxu0 %v211
  %v993 = vpop.f32.mrb[0].mxu0
  %v994 = vadd.f32 %v774, %v993
  %v995 = vpop.f32.mrb[0].mxu0
  %996 = vmatprep.mubr.f32.mxu0 %v225
  %997 = vmatmul.mubr.f32.gmra.mrb[0].mxu0 %v224
  %v998 = vpop.f32.mrb[0].mxu0
  %v999 = vadd.f32 %v779, %v998
  %v1000 = vpop.f32.mrb[0].mxu0
  %1001 = vmatprep.mubr.f32.mxu0 %v238
  %1002 = vmatmul.mubr.f32.gmra.mrb[0].mxu0 %v237
  %v1003 = vpop.f32.mrb[0].mxu0
  %v1004 = vadd.f32 %v784, %v1003
  %v1005 = vpop.f32.mrb[0].mxu0
  %1006 = vmatprep.mubr.f32.mxu0 %v251
  %1007 = vmatmul.mubr.f32.gmra.mrb[0].mxu0 %v250
  %v1008 = vpop.f32.mrb[0].mxu0
  %v1009 = vadd.f32 %v789, %v1008
  %v1010 = vpop.f32.mrb[0].mxu0
  %1011 = vmatprep.mubr.f32.mxu0 %v264
  %1012 = vmatmul.mubr.f32.gmra.mrb[0].mxu0 %v263
  %v1013 = vpop.f32.mrb[0].mxu0
  %v1014 = vadd.f32 %v794, %v1013
  %v1015 = vpop.f32.mrb[0].mxu0
  %1016 = vmatprep.mubr.f32.mxu0 %v277
  %1017 = vmatmul.mubr.f32.gmra.mrb[0].mxu0 %v276
  %v1018 = vpop.f32.mrb[0].mxu0
  %v1019 = vadd.f32 %v799, %v1018
  %v1020 = vpop.f32.mrb[0].mxu0
  %1021 = vmatprep.mubr.f32.mxu0 %v290
  %1022 = vmatmul.mubr.f32.gmra.mrb[0].mxu0 %v289
  %v1023 = vpop.f32.mrb[0].mxu0
  %v1024 = vadd.f32 %v804, %v1023
  %v1025 = vpop.f32.mrb[0].mxu0
  %1026 = vmatprep.mubr.f32.mxu0 %v303
  %1027 = vmatmul.mubr.f32.gmra.mrb[0].mxu0 %v302
  %v1028 = vpop.f32.mrb[0].mxu0
  %v1029 = vadd.f32 %v809, %v1028
  %v1030 = vpop.f32.mrb[0].mxu0
  %1031 = vmatprep.mubr.f32.mxu0 %v316
  %1032 = vmatmul.mubr.f32.gmra.mrb[0].mxu0 %v315
  %v1033 = vpop.f32.mrb[0].mxu0
  %v1034 = vadd.f32 %v814, %v1033
  %v1035 = vpop.f32.mrb[0].mxu0
  %1036 = vmatprep.mubr.f32.mxu0 %v329
  %1037 = vmatmul.mubr.f32.gmra.mrb[0].mxu0 %v328
  %v1038 = vpop.f32.mrb[0].mxu0
  %v1039 = vadd.f32 %v819, %v1038
  %v1040 = vpop.f32.mrb[0].mxu0
  %1041 = vmatprep.mubr.f32.mxu0 %v342
  %1042 = vmatmul.mubr.f32.gmra.mrb[0].mxu0 %v341
  %v1043 = vpop.f32.mrb[0].mxu0
  %v1044 = vadd.f32 %v824, %v1043
  %v1045 = vpop.f32.mrb[0].mxu0
  %1046 = vmatprep.mubr.f32.mxu0 %v355
  %1047 = vmatmul.mubr.f32.gmra.mrb[0].mxu0 %v354
  %v1048 = vpop.f32.mrb[0].mxu0
  %v1049 = vadd.f32 %v829, %v1048
  %v1050 = vpop.f32.mrb[0].mxu0
  %1051 = vmatprep.mubr.f32.mxu0 %v368
  %1052 = vmatmul.mubr.f32.gmra.mrb[0].mxu0 %v367
  %v1053 = vpop.f32.mrb[0].mxu0
  %v1054 = vadd.f32 %v834, %v1053
  %v1055 = vpop.f32.mrb[0].mxu0
  %1056 = vmatprep.mubr.f32.mxu0 %v381
  %1057 = vmatmul.mubr.f32.gmra.mrb[0].mxu0 %v380
  %v1058 = vpop.f32.mrb[0].mxu0
  %v1059 = vadd.f32 %v839, %v1058
  %v1060 = vpop.f32.mrb[0].mxu0
  %1061 = vmatprep.mubr.f32.mxu0 %v394
  %1062 = vmatmul.mubr.f32.gmra.mrb[0].mxu0 %v393
  %v1063 = vpop.f32.mrb[0].mxu0
  %v1064 = vadd.f32 %v844, %v1063
  %v1065 = vpop.f32.mrb[0].mxu0
  %1066 = vmatprep.mubr.f32.mxu0 %v407
  %1067 = vmatmul.mubr.f32.gmra.mrb[0].mxu0 %v406
  %v1068 = vpop.f32.mrb[0].mxu0
  %v1069 = vadd.f32 %v849, %v1068
  %v1070 = vpop.f32.mrb[0].mxu0
  %1071 = vdwg.mxu0
  %1072 = vmatprep.subr.mxu0 0.0
  %1073 = vmatpush1.msra.mxu0 %v481
  %1074 = vmatprep.subr.mxu0 0.0
  %1075 = vmatpush1.msra.mxu0 %v482
  %1076 = vmatprep.subr.mxu0 0.0
  %1077 = vmatpush1.msra.mxu0 %v483
  %1078 = vmatprep.subr.mxu0 0.0
  %1079 = vmatpush1.msra.mxu0 %v484
  %1080 = vmatprep.subr.mxu0 0.0
  %1081 = vmatpush1.msra.mxu0 %v485
  %1082 = vmatprep.subr.mxu0 0.0
  %1083 = vmatpush1.msra.mxu0 %v486
  %1084 = vmatprep.subr.mxu0 0.0
  %1085 = vmatpush1.msra.mxu0 %v487
  %1086 = vmatprep.subr.mxu0 0.0
  %1087 = vmatpush1.msra.mxu0 %v488
  %1088 = vmatprep.subr.mxu0 0.0
  %1089 = vmatpush1.msra.mxu0 %v489
  %1090 = vmatprep.subr.mxu0 0.0
  %1091 = vmatpush1.msra.mxu0 %v490
  %1092 = vmatprep.subr.mxu0 0.0
  %1093 = vmatpush1.msra.mxu0 %v491
  %1094 = vmatprep.subr.mxu0 0.0
  %1095 = vmatpush1.msra.mxu0 %v492
  %1096 = vmatprep.subr.mxu0 0.0
  %1097 = vmatpush1.msra.mxu0 %v493
  %1098 = vmatprep.subr.mxu0 0.0
  %1099 = vmatpush1.msra.mxu0 %v494
  %1100 = vmatprep.subr.mxu0 0.0
  %1101 = vmatpush1.msra.mxu0 %v495
  %1102 = vmatprep.subr.mxu0 0.0
  %1103 = vmatpush1.msra.mxu0 %v496
  %1104 = vmatprep.subr.mxu0 0.0
  %1105 = vmatpush1.msra.mxu0 %v497
  %1106 = vmatprep.subr.mxu0 0.0
  %1107 = vmatpush1.msra.mxu0 %v498
  %1108 = vmatprep.subr.mxu0 0.0
  %1109 = vmatpush1.msra.mxu0 %v499
  %1110 = vmatprep.subr.mxu0 0.0
  %1111 = vmatpush1.msra.mxu0 %v500
  %1112 = vmatprep.subr.mxu0 0.0
  %1113 = vmatpush1.msra.mxu0 %v501
  %1114 = vmatprep.subr.mxu0 0.0
  %1115 = vmatpush1.msra.mxu0 %v502
  %1116 = vmatprep.subr.mxu0 0.0
  %1117 = vmatpush1.msra.mxu0 %v503
  %1118 = vmatprep.subr.mxu0 0.0
  %1119 = vmatpush1.msra.mxu0 %v504
  %1120 = vmatprep.subr.mxu0 0.0
  %1121 = vmatpush1.msra.mxu0 %v505
  %1122 = vmatprep.subr.mxu0 0.0
  %1123 = vmatpush1.msra.mxu0 %v506
  %1124 = vmatprep.subr.mxu0 0.0
  %1125 = vmatpush1.msra.mxu0 %v507
  %1126 = vmatprep.subr.mxu0 0.0
  %1127 = vmatpush1.msra.mxu0 %v508
  %1128 = vmatprep.subr.mxu0 0.0
  %1129 = vmatpush1.msra.mxu0 %v509
  %1130 = vmatprep.subr.mxu0 0.0
  %1131 = vmatpush1.msra.mxu0 %v510
  %1132 = vmatprep.subr.mxu0 0.0
  %1133 = vmatpush1.msra.mxu0 %v511
  %1134 = vmatprep.subr.mxu0 0.0
  %1135 = vmatpush1.msra.mxu0 %v512
  %1136 = vmatprep.mubr.f32.mxu0 %v19
  %1137 = vmatmul.mubr.f32.gmra.mrb[0].mxu0 %v18
  %v1138 = vpop.f32.mrb[0].mxu0
  %v1139 = vadd.f32 %v919, %v1138
  %v1140 = vpop.f32.mrb[0].mxu0
  %1141 = vmatprep.mubr.f32.mxu0 %v32
  %1142 = vmatmul.mubr.f32.gmra.mrb[0].mxu0 %v31
  %v1143 = vpop.f32.mrb[0].mxu0
  %v1144 = vadd.f32 %v924, %v1143
  %v1145 = vpop.f32.mrb[0].mxu0
  %1146 = vmatprep.mubr.f32.mxu0 %v45
  %1147 = vmatmul.mubr.f32.gmra.mrb[0].mxu0 %v44
  %v1148 = vpop.f32.mrb[0].mxu0
  %v1149 = vadd.f32 %v929, %v1148
  %v1150 = vpop.f32.mrb[0].mxu0
  %1151 = vmatprep.mubr.f32.mxu0 %v58
  %1152 = vmatmul.mubr.f32.gmra.mrb[0].mxu0 %v57
  %v1153 = vpop.f32.mrb[0].mxu0
  %v1154 = vadd.f32 %v934, %v1153
  %v1155 = vpop.f32.mrb[0].mxu0
  %1156 = vmatprep.mubr.f32.mxu0 %v71
  %1157 = vmatmul.mubr.f32.gmra.mrb[0].mxu0 %v70
  %v1158 = vpop.f32.mrb[0].mxu0
  %v1159 = vadd.f32 %v939, %v1158
  %v1160 = vpop.f32.mrb[0].mxu0
  %1161 = vmatprep.mubr.f32.mxu0 %v84
  %1162 = vmatmul.mubr.f32.gmra.mrb[0].mxu0 %v83
  %v1163 = vpop.f32.mrb[0].mxu0
  %v1164 = vadd.f32 %v944, %v1163
  %v1165 = vpop.f32.mrb[0].mxu0
  %1166 = vmatprep.mubr.f32.mxu0 %v97
  %1167 = vmatmul.mubr.f32.gmra.mrb[0].mxu0 %v96
  %v1168 = vpop.f32.mrb[0].mxu0
  %v1169 = vadd.f32 %v949, %v1168
  %v1170 = vpop.f32.mrb[0].mxu0
  %1171 = vmatprep.mubr.f32.mxu0 %v110
  %1172 = vmatmul.mubr.f32.gmra.mrb[0].mxu0 %v109
  %v1173 = vpop.f32.mrb[0].mxu0
  %v1174 = vadd.f32 %v954, %v1173
  %v1175 = vpop.f32.mrb[0].mxu0
  %1176 = vmatprep.mubr.f32.mxu0 %v123
  %1177 = vmatmul.mubr.f32.gmra.mrb[0].mxu0 %v122
  %v1178 = vpop.f32.mrb[0].mxu0
  %v1179 = vadd.f32 %v959, %v1178
  %v1180 = vpop.f32.mrb[0].mxu0
  %1181 = vmatprep.mubr.f32.mxu0 %v136
  %1182 = vmatmul.mubr.f32.gmra.mrb[0].mxu0 %v135
  %v1183 = vpop.f32.mrb[0].mxu0
  %v1184 = vadd.f32 %v964, %v1183
  %v1185 = vpop.f32.mrb[0].mxu0
  %1186 = vmatprep.mubr.f32.mxu0 %v149
  %1187 = vmatmul.mubr.f32.gmra.mrb[0].mxu0 %v148
  %v1188 = vpop.f32.mrb[0].mxu0
  %v1189 = vadd.f32 %v969, %v1188
  %v1190 = vpop.f32.mrb[0].mxu0
  %1191 = vmatprep.mubr.f32.mxu0 %v162
  %1192 = vmatmul.mubr.f32.gmra.mrb[0].mxu0 %v161
  %v1193 = vpop.f32.mrb[0].mxu0
  %v1194 = vadd.f32 %v974, %v1193
  %v1195 = vpop.f32.mrb[0].mxu0
  %1196 = vmatprep.mubr.f32.mxu0 %v175
  %1197 = vmatmul.mubr.f32.gmra.mrb[0].mxu0 %v174
  %v1198 = vpop.f32.mrb[0].mxu0
  %v1199 = vadd.f32 %v979, %v1198
  %v1200 = vpop.f32.mrb[0].mxu0
  %1201 = vmatprep.mubr.f32.mxu0 %v188
  %1202 = vmatmul.mubr.f32.gmra.mrb[0].mxu0 %v187
  %v1203 = vpop.f32.mrb[0].mxu0
  %v1204 = vadd.f32 %v984, %v1203
  %v1205 = vpop.f32.mrb[0].mxu0
  %1206 = vmatprep.mubr.f32.mxu0 %v201
  %1207 = vmatmul.mubr.f32.gmra.mrb[0].mxu0 %v200
  %v1208 = vpop.f32.mrb[0].mxu0
  %v1209 = vadd.f32 %v989, %v1208
  %v1210 = vpop.f32.mrb[0].mxu0
  %1211 = vmatprep.mubr.f32.mxu0 %v214
  %1212 = vmatmul.mubr.f32.gmra.mrb[0].mxu0 %v213
  %v1213 = vpop.f32.mrb[0].mxu0
  %v1214 = vadd.f32 %v994, %v1213
  %v1215 = vpop.f32.mrb[0].mxu0
  %1216 = vmatprep.mubr.f32.mxu0 %v227
  %1217 = vmatmul.mubr.f32.gmra.mrb[0].mxu0 %v226
  %v1218 = vpop.f32.mrb[0].mxu0
  %v1219 = vadd.f32 %v999, %v1218
  %v1220 = vpop.f32.mrb[0].mxu0
  %1221 = vmatprep.mubr.f32.mxu0 %v240
  %1222 = vmatmul.mubr.f32.gmra.mrb[0].mxu0 %v239
  %v1223 = vpop.f32.mrb[0].mxu0
  %v1224 = vadd.f32 %v1004, %v1223
  %v1225 = vpop.f32.mrb[0].mxu0
  %1226 = vmatprep.mubr.f32.mxu0 %v253
  %1227 = vmatmul.mubr.f32.gmra.mrb[0].mxu0 %v252
  %v1228 = vpop.f32.mrb[0].mxu0
  %v1229 = vadd.f32 %v1009, %v1228
  %v1230 = vpop.f32.mrb[0].mxu0
  %1231 = vmatprep.mubr.f32.mxu0 %v266
  %1232 = vmatmul.mubr.f32.gmra.mrb[0].mxu0 %v265
  %v1233 = vpop.f32.mrb[0].mxu0
  %v1234 = vadd.f32 %v1014, %v1233
  %v1235 = vpop.f32.mrb[0].mxu0
  %1236 = vmatprep.mubr.f32.mxu0 %v279
  %1237 = vmatmul.mubr.f32.gmra.mrb[0].mxu0 %v278
  %v1238 = vpop.f32.mrb[0].mxu0
  %v1239 = vadd.f32 %v1019, %v1238
  %v1240 = vpop.f32.mrb[0].mxu0
  %1241 = vmatprep.mubr.f32.mxu0 %v292
  %1242 = vmatmul.mubr.f32.gmra.mrb[0].mxu0 %v291
  %v1243 = vpop.f32.mrb[0].mxu0
  %v1244 = vadd.f32 %v1024, %v1243
  %v1245 = vpop.f32.mrb[0].mxu0
  %1246 = vmatprep.mubr.f32.mxu0 %v305
  %1247 = vmatmul.mubr.f32.gmra.mrb[0].mxu0 %v304
  %v1248 = vpop.f32.mrb[0].mxu0
  %v1249 = vadd.f32 %v1029, %v1248
  %v1250 = vpop.f32.mrb[0].mxu0
  %1251 = vmatprep.mubr.f32.mxu0 %v318
  %1252 = vmatmul.mubr.f32.gmra.mrb[0].mxu0 %v317
  %v1253 = vpop.f32.mrb[0].mxu0
  %v1254 = vadd.f32 %v1034, %v1253
  %v1255 = vpop.f32.mrb[0].mxu0
  %1256 = vmatprep.mubr.f32.mxu0 %v331
  %1257 = vmatmul.mubr.f32.gmra.mrb[0].mxu0 %v330
  %v1258 = vpop.f32.mrb[0].mxu0
  %v1259 = vadd.f32 %v1039, %v1258
  %v1260 = vpop.f32.mrb[0].mxu0
  %1261 = vmatprep.mubr.f32.mxu0 %v344
  %1262 = vmatmul.mubr.f32.gmra.mrb[0].mxu0 %v343
  %v1263 = vpop.f32.mrb[0].mxu0
  %v1264 = vadd.f32 %v1044, %v1263
  %v1265 = vpop.f32.mrb[0].mxu0
  %1266 = vmatprep.mubr.f32.mxu0 %v357
  %1267 = vmatmul.mubr.f32.gmra.mrb[0].mxu0 %v356
  %v1268 = vpop.f32.mrb[0].mxu0
  %v1269 = vadd.f32 %v1049, %v1268
  %v1270 = vpop.f32.mrb[0].mxu0
  %1271 = vmatprep.mubr.f32.mxu0 %v370
  %1272 = vmatmul.mubr.f32.gmra.mrb[0].mxu0 %v369
  %v1273 = vpop.f32.mrb[0].mxu0
  %v1274 = vadd.f32 %v1054, %v1273
  %v1275 = vpop.f32.mrb[0].mxu0
  %1276 = vmatprep.mubr.f32.mxu0 %v383
  %1277 = vmatmul.mubr.f32.gmra.mrb[0].mxu0 %v382
  %v1278 = vpop.f32.mrb[0].mxu0
  %v1279 = vadd.f32 %v1059, %v1278
  %v1280 = vpop.f32.mrb[0].mxu0
  %1281 = vmatprep.mubr.f32.mxu0 %v396
  %1282 = vmatmul.mubr.f32.gmra.mrb[0].mxu0 %v395
  %v1283 = vpop.f32.mrb[0].mxu0
  %v1284 = vadd.f32 %v1064, %v1283
  %v1285 = vpop.f32.mrb[0].mxu0
  %1286 = vmatprep.mubr.f32.mxu0 %v409
  %1287 = vmatmul.mubr.f32.gmra.mrb[0].mxu0 %v408
  %v1288 = vpop.f32.mrb[0].mxu0
  %v1289 = vadd.f32 %v1069, %v1288
  %v1290 = vpop.f32.mrb[0].mxu0
  %1291 = vdwg.mxu0
  %1292 = vmatprep.subr.mxu0 0.0
  %1293 = vmatpush1.msra.mxu0 %v513
  %1294 = vmatprep.subr.mxu0 0.0
  %1295 = vmatpush1.msra.mxu0 %v514
  %1296 = vmatprep.subr.mxu0 0.0
  %1297 = vmatpush1.msra.mxu0 %v515
  %1298 = vmatprep.subr.mxu0 0.0
  %1299 = vmatpush1.msra.mxu0 %v516
  %1300 = vmatprep.subr.mxu0 0.0
  %1301 = vmatpush1.msra.mxu0 %v517
  %1302 = vmatprep.subr.mxu0 0.0
  %1303 = vmatpush1.msra.mxu0 %v518
  %1304 = vmatprep.subr.mxu0 0.0
  %1305 = vmatpush1.msra.mxu0 %v519
  %1306 = vmatprep.subr.mxu0 0.0
  %1307 = vmatpush1.msra.mxu0 %v520
  %1308 = vmatprep.subr.mxu0 0.0
  %1309 = vmatpush1.msra.mxu0 %v521
  %1310 = vmatprep.subr.mxu0 0.0
  %1311 = vmatpush1.msra.mxu0 %v522
  %1312 = vmatprep.subr.mxu0 0.0
  %1313 = vmatpush1.msra.mxu0 %v523
  %1314 = vmatprep.subr.mxu0 0.0
  %1315 = vmatpush1.msra.mxu0 %v524
  %1316 = vmatprep.subr.mxu0 0.0
  %1317 = vmatpush1.msra.mxu0 %v525
  %1318 = vmatprep.subr.mxu0 0.0
  %1319 = vmatpush1.msra.mxu0 %v526
  %1320 = vmatprep.subr.mxu0 0.0
  %1321 = vmatpush1.msra.mxu0 %v527
  %1322 = vmatprep.subr.mxu0 0.0
  %1323 = vmatpush1.msra.mxu0 %v528
  %1324 = vmatprep.subr.mxu0 0.0
  %1325 = vmatpush1.msra.mxu0 %v529
  %1326 = vmatprep.subr.mxu0 0.0
  %1327 = vmatpush1.msra.mxu0 %v530
  %1328 = vmatprep.subr.mxu0 0.0
  %1329 = vmatpush1.msra.mxu0 %v531
  %1330 = vmatprep.subr.mxu0 0.0
  %1331 = vmatpush1.msra.mxu0 %v532
  %1332 = vmatprep.subr.mxu0 0.0
  %1333 = vmatpush1.msra.mxu0 %v533
  %1334 = vmatprep.subr.mxu0 0.0
  %1335 = vmatpush1.msra.mxu0 %v534
  %1336 = vmatprep.subr.mxu0 0.0
  %1337 = vmatpush1.msra.mxu0 %v535
  %1338 = vmatprep.subr.mxu0 0.0
  %1339 = vmatpush1.msra.mxu0 %v536
  %1340 = vmatprep.subr.mxu0 0.0
  %1341 = vmatpush1.msra.mxu0 %v537
  %1342 = vmatprep.subr.mxu0 0.0
  %1343 = vmatpush1.msra.mxu0 %v538
  %1344 = vmatprep.subr.mxu0 0.0
  %1345 = vmatpush1.msra.mxu0 %v539
  %1346 = vmatprep.subr.mxu0 0.0
  %1347 = vmatpush1.msra.mxu0 %v540
  %1348 = vmatprep.subr.mxu0 0.0
  %1349 = vmatpush1.msra.mxu0 %v541
  %1350 = vmatprep.subr.mxu0 0.0
  %1351 = vmatpush1.msra.mxu0 %v542
  %1352 = vmatprep.subr.mxu0 0.0
  %1353 = vmatpush1.msra.mxu0 %v543
  %1354 = vmatprep.subr.mxu0 0.0
  %1355 = vmatpush1.msra.mxu0 %v544
  %1356 = vmatprep.mubr.f32.mxu0 %v21
  %1357 = vmatmul.mubr.f32.gmra.mrb[0].mxu0 %v20
  %v1358 = vpop.f32.mrb[0].mxu0
  %v1359 = vadd.f32 %v1139, %v1358
  %v1360 = vpop.f32.mrb[0].mxu0
  %1361 = vmatprep.mubr.f32.mxu0 %v34
  %1362 = vmatmul.mubr.f32.gmra.mrb[0].mxu0 %v33
  %v1363 = vpop.f32.mrb[0].mxu0
  %v1364 = vadd.f32 %v1144, %v1363
  %v1365 = vpop.f32.mrb[0].mxu0
  %1366 = vmatprep.mubr.f32.mxu0 %v47
  %1367 = vmatmul.mubr.f32.gmra.mrb[0].mxu0 %v46
  %v1368 = vpop.f32.mrb[0].mxu0
  %v1369 = vadd.f32 %v1149, %v1368
  %v1370 = vpop.f32.mrb[0].mxu0
  %1371 = vmatprep.mubr.f32.mxu0 %v60
  %1372 = vmatmul.mubr.f32.gmra.mrb[0].mxu0 %v59
  %v1373 = vpop.f32.mrb[0].mxu0
  %v1374 = vadd.f32 %v1154, %v1373
  %v1375 = vpop.f32.mrb[0].mxu0
  %1376 = vmatprep.mubr.f32.mxu0 %v73
  %1377 = vmatmul.mubr.f32.gmra.mrb[0].mxu0 %v72
  %v1378 = vpop.f32.mrb[0].mxu0
  %v1379 = vadd.f32 %v1159, %v1378
  %v1380 = vpop.f32.mrb[0].mxu0
  %1381 = vmatprep.mubr.f32.mxu0 %v86
  %1382 = vmatmul.mubr.f32.gmra.mrb[0].mxu0 %v85
  %v1383 = vpop.f32.mrb[0].mxu0
  %v1384 = vadd.f32 %v1164, %v1383
  %v1385 = vpop.f32.mrb[0].mxu0
  %1386 = vmatprep.mubr.f32.mxu0 %v99
  %1387 = vmatmul.mubr.f32.gmra.mrb[0].mxu0 %v98
  %v1388 = vpop.f32.mrb[0].mxu0
  %v1389 = vadd.f32 %v1169, %v1388
  %v1390 = vpop.f32.mrb[0].mxu0
  %1391 = vmatprep.mubr.f32.mxu0 %v112
  %1392 = vmatmul.mubr.f32.gmra.mrb[0].mxu0 %v111
  %v1393 = vpop.f32.mrb[0].mxu0
  %v1394 = vadd.f32 %v1174, %v1393
  %v1395 = vpop.f32.mrb[0].mxu0
  %1396 = vmatprep.mubr.f32.mxu0 %v125
  %1397 = vmatmul.mubr.f32.gmra.mrb[0].mxu0 %v124
  %v1398 = vpop.f32.mrb[0].mxu0
  %v1399 = vadd.f32 %v1179, %v1398
  %v1400 = vpop.f32.mrb[0].mxu0
  %1401 = vmatprep.mubr.f32.mxu0 %v138
  %1402 = vmatmul.mubr.f32.gmra.mrb[0].mxu0 %v137
  %v1403 = vpop.f32.mrb[0].mxu0
  %v1404 = vadd.f32 %v1184, %v1403
  %v1405 = vpop.f32.mrb[0].mxu0
  %1406 = vmatprep.mubr.f32.mxu0 %v151
  %1407 = vmatmul.mubr.f32.gmra.mrb[0].mxu0 %v150
  %v1408 = vpop.f32.mrb[0].mxu0
  %v1409 = vadd.f32 %v1189, %v1408
  %v1410 = vpop.f32.mrb[0].mxu0
  %1411 = vmatprep.mubr.f32.mxu0 %v164
  %1412 = vmatmul.mubr.f32.gmra.mrb[0].mxu0 %v163
  %v1413 = vpop.f32.mrb[0].mxu0
  %v1414 = vadd.f32 %v1194, %v1413
  %v1415 = vpop.f32.mrb[0].mxu0
  %1416 = vmatprep.mubr.f32.mxu0 %v177
  %1417 = vmatmul.mubr.f32.gmra.mrb[0].mxu0 %v176
  %v1418 = vpop.f32.mrb[0].mxu0
  %v1419 = vadd.f32 %v1199, %v1418
  %v1420 = vpop.f32.mrb[0].mxu0
  %1421 = vmatprep.mubr.f32.mxu0 %v190
  %1422 = vmatmul.mubr.f32.gmra.mrb[0].mxu0 %v189
  %v1423 = vpop.f32.mrb[0].mxu0
  %v1424 = vadd.f32 %v1204, %v1423
  %v1425 = vpop.f32.mrb[0].mxu0
  %1426 = vmatprep.mubr.f32.mxu0 %v203
  %1427 = vmatmul.mubr.f32.gmra.mrb[0].mxu0 %v202
  %v1428 = vpop.f32.mrb[0].mxu0
  %v1429 = vadd.f32 %v1209, %v1428
  %v1430 = vpop.f32.mrb[0].mxu0
  %1431 = vmatprep.mubr.f32.mxu0 %v216
  %1432 = vmatmul.mubr.f32.gmra.mrb[0].mxu0 %v215
  %v1433 = vpop.f32.mrb[0].mxu0
  %v1434 = vadd.f32 %v1214, %v1433
  %v1435 = vpop.f32.mrb[0].mxu0
  %1436 = vmatprep.mubr.f32.mxu0 %v229
  %1437 = vmatmul.mubr.f32.gmra.mrb[0].mxu0 %v228
  %v1438 = vpop.f32.mrb[0].mxu0
  %v1439 = vadd.f32 %v1219, %v1438
  %v1440 = vpop.f32.mrb[0].mxu0
  %1441 = vmatprep.mubr.f32.mxu0 %v242
  %1442 = vmatmul.mubr.f32.gmra.mrb[0].mxu0 %v241
  %v1443 = vpop.f32.mrb[0].mxu0
  %v1444 = vadd.f32 %v1224, %v1443
  %v1445 = vpop.f32.mrb[0].mxu0
  %1446 = vmatprep.mubr.f32.mxu0 %v255
  %1447 = vmatmul.mubr.f32.gmra.mrb[0].mxu0 %v254
  %v1448 = vpop.f32.mrb[0].mxu0
  %v1449 = vadd.f32 %v1229, %v1448
  %v1450 = vpop.f32.mrb[0].mxu0
  %1451 = vmatprep.mubr.f32.mxu0 %v268
  %1452 = vmatmul.mubr.f32.gmra.mrb[0].mxu0 %v267
  %v1453 = vpop.f32.mrb[0].mxu0
  %v1454 = vadd.f32 %v1234, %v1453
  %v1455 = vpop.f32.mrb[0].mxu0
  %1456 = vmatprep.mubr.f32.mxu0 %v281
  %1457 = vmatmul.mubr.f32.gmra.mrb[0].mxu0 %v280
  %v1458 = vpop.f32.mrb[0].mxu0
  %v1459 = vadd.f32 %v1239, %v1458
  %v1460 = vpop.f32.mrb[0].mxu0
  %1461 = vmatprep.mubr.f32.mxu0 %v294
  %1462 = vmatmul.mubr.f32.gmra.mrb[0].mxu0 %v293
  %v1463 = vpop.f32.mrb[0].mxu0
  %v1464 = vadd.f32 %v1244, %v1463
  %v1465 = vpop.f32.mrb[0].mxu0
  %1466 = vmatprep.mubr.f32.mxu0 %v307
  %1467 = vmatmul.mubr.f32.gmra.mrb[0].mxu0 %v306
  %v1468 = vpop.f32.mrb[0].mxu0
  %v1469 = vadd.f32 %v1249, %v1468
  %v1470 = vpop.f32.mrb[0].mxu0
  %1471 = vmatprep.mubr.f32.mxu0 %v320
  %1472 = vmatmul.mubr.f32.gmra.mrb[0].mxu0 %v319
  %v1473 = vpop.f32.mrb[0].mxu0
  %v1474 = vadd.f32 %v1254, %v1473
  %v1475 = vpop.f32.mrb[0].mxu0
  %1476 = vmatprep.mubr.f32.mxu0 %v333
  %1477 = vmatmul.mubr.f32.gmra.mrb[0].mxu0 %v332
  %v1478 = vpop.f32.mrb[0].mxu0
  %v1479 = vadd.f32 %v1259, %v1478
  %v1480 = vpop.f32.mrb[0].mxu0
  %1481 = vmatprep.mubr.f32.mxu0 %v346
  %1482 = vmatmul.mubr.f32.gmra.mrb[0].mxu0 %v345
  %v1483 = vpop.f32.mrb[0].mxu0
  %v1484 = vadd.f32 %v1264, %v1483
  %v1485 = vpop.f32.mrb[0].mxu0
  %1486 = vmatprep.mubr.f32.mxu0 %v359
  %1487 = vmatmul.mubr.f32.gmra.mrb[0].mxu0 %v358
  %v1488 = vpop.f32.mrb[0].mxu0
  %v1489 = vadd.f32 %v1269, %v1488
  %v1490 = vpop.f32.mrb[0].mxu0
  %1491 = vmatprep.mubr.f32.mxu0 %v372
  %1492 = vmatmul.mubr.f32.gmra.mrb[0].mxu0 %v371
  %v1493 = vpop.f32.mrb[0].mxu0
  %v1494 = vadd.f32 %v1274, %v1493
  %v1495 = vpop.f32.mrb[0].mxu0
  %1496 = vmatprep.mubr.f32.mxu0 %v385
  %1497 = vmatmul.mubr.f32.gmra.mrb[0].mxu0 %v384
  %v1498 = vpop.f32.mrb[0].mxu0
  %v1499 = vadd.f32 %v1279, %v1498
  %v1500 = vpop.f32.mrb[0].mxu0
  %1501 = vmatprep.mubr.f32.mxu0 %v398
  %1502 = vmatmul.mubr.f32.gmra.mrb[0].mxu0 %v397
  %v1503 = vpop.f32.mrb[0].mxu0
  %v1504 = vadd.f32 %v1284, %v1503
  %v1505 = vpop.f32.mrb[0].mxu0
  %1506 = vmatprep.mubr.f32.mxu0 %v411
  %1507 = vmatmul.mubr.f32.gmra.mrb[0].mxu0 %v410
  %v1508 = vpop.f32.mrb[0].mxu0
  %v1509 = vadd.f32 %v1289, %v1508
  %v1510 = vpop.f32.mrb[0].mxu0
  %1511 = vdwg.mxu0
  %1512 = vmatprep.subr.mxu0 0.0
  %1513 = vmatpush1.msra.mxu0 %v545
  %1514 = vmatprep.subr.mxu0 0.0
  %1515 = vmatpush1.msra.mxu0 %v546
  %1516 = vmatprep.subr.mxu0 0.0
  %1517 = vmatpush1.msra.mxu0 %v547
  %1518 = vmatprep.subr.mxu0 0.0
  %1519 = vmatpush1.msra.mxu0 %v548
  %1520 = vmatprep.subr.mxu0 0.0
  %1521 = vmatpush1.msra.mxu0 %v549
  %1522 = vmatprep.subr.mxu0 0.0
  %1523 = vmatpush1.msra.mxu0 %v550
  %1524 = vmatprep.subr.mxu0 0.0
  %1525 = vmatpush1.msra.mxu0 %v551
  %1526 = vmatprep.subr.mxu0 0.0
  %1527 = vmatpush1.msra.mxu0 %v552
  %1528 = vmatprep.subr.mxu0 0.0
  %1529 = vmatpush1.msra.mxu0 %v553
  %1530 = vmatprep.subr.mxu0 0.0
  %1531 = vmatpush1.msra.mxu0 %v554
  %1532 = vmatprep.subr.mxu0 0.0
  %1533 = vmatpush1.msra.mxu0 %v555
  %1534 = vmatprep.subr.mxu0 0.0
  %1535 = vmatpush1.msra.mxu0 %v556
  %1536 = vmatprep.subr.mxu0 0.0
  %1537 = vmatpush1.msra.mxu0 %v557
  %1538 = vmatprep.subr.mxu0 0.0
  %1539 = vmatpush1.msra.mxu0 %v558
  %1540 = vmatprep.subr.mxu0 0.0
  %1541 = vmatpush1.msra.mxu0 %v559
  %1542 = vmatprep.subr.mxu0 0.0
  %1543 = vmatpush1.msra.mxu0 %v560
  %1544 = vmatprep.subr.mxu0 0.0
  %1545 = vmatpush1.msra.mxu0 %v561
  %1546 = vmatprep.subr.mxu0 0.0
  %1547 = vmatpush1.msra.mxu0 %v562
  %1548 = vmatprep.subr.mxu0 0.0
  %1549 = vmatpush1.msra.mxu0 %v563
  %1550 = vmatprep.subr.mxu0 0.0
  %1551 = vmatpush1.msra.mxu0 %v564
  %1552 = vmatprep.subr.mxu0 0.0
  %1553 = vmatpush1.msra.mxu0 %v565
  %1554 = vmatprep.subr.mxu0 0.0
  %1555 = vmatpush1.msra.mxu0 %v566
  %1556 = vmatprep.subr.mxu0 0.0
  %1557 = vmatpush1.msra.mxu0 %v567
  %1558 = vmatprep.subr.mxu0 0.0
  %1559 = vmatpush1.msra.mxu0 %v568
  %1560 = vmatprep.subr.mxu0 0.0
  %1561 = vmatpush1.msra.mxu0 %v569
  %1562 = vmatprep.subr.mxu0 0.0
  %1563 = vmatpush1.msra.mxu0 %v570
  %1564 = vmatprep.subr.mxu0 0.0
  %1565 = vmatpush1.msra.mxu0 %v571
  %1566 = vmatprep.subr.mxu0 0.0
  %1567 = vmatpush1.msra.mxu0 %v572
  %1568 = vmatprep.subr.mxu0 0.0
  %1569 = vmatpush1.msra.mxu0 %v573
  %1570 = vmatprep.subr.mxu0 0.0
  %1571 = vmatpush1.msra.mxu0 %v574
  %1572 = vmatprep.subr.mxu0 0.0
  %1573 = vmatpush1.msra.mxu0 %v575
  %1574 = vmatprep.subr.mxu0 0.0
  %1575 = vmatpush1.msra.mxu0 %v576
  %1576 = vmatprep.mubr.f32.mxu0 %v23
  %1577 = vmatmul.mubr.f32.gmra.mrb[0].mxu0 %v22
  %v1578 = vpop.f32.mrb[0].mxu0
  %v1579 = vadd.f32 %v1359, %v1578
  %v1580 = vpop.f32.mrb[0].mxu0
  %1581 = vmatprep.mubr.f32.mxu0 %v36
  %1582 = vmatmul.mubr.f32.gmra.mrb[0].mxu0 %v35
  %v1583 = vpop.f32.mrb[0].mxu0
  %v1584 = vadd.f32 %v1364, %v1583
  %v1585 = vpop.f32.mrb[0].mxu0
  %1586 = vmatprep.mubr.f32.mxu0 %v49
  %1587 = vmatmul.mubr.f32.gmra.mrb[0].mxu0 %v48
  %v1588 = vpop.f32.mrb[0].mxu0
  %v1589 = vadd.f32 %v1369, %v1588
  %v1590 = vpop.f32.mrb[0].mxu0
  %1591 = vmatprep.mubr.f32.mxu0 %v62
  %1592 = vmatmul.mubr.f32.gmra.mrb[0].mxu0 %v61
  %v1593 = vpop.f32.mrb[0].mxu0
  %v1594 = vadd.f32 %v1374, %v1593
  %v1595 = vpop.f32.mrb[0].mxu0
  %1596 = vmatprep.mubr.f32.mxu0 %v75
  %1597 = vmatmul.mubr.f32.gmra.mrb[0].mxu0 %v74
  %v1598 = vpop.f32.mrb[0].mxu0
  %v1599 = vadd.f32 %v1379, %v1598
  %v1600 = vpop.f32.mrb[0].mxu0
  %1601 = vmatprep.mubr.f32.mxu0 %v88
  %1602 = vmatmul.mubr.f32.gmra.mrb[0].mxu0 %v87
  %v1603 = vpop.f32.mrb[0].mxu0
  %v1604 = vadd.f32 %v1384, %v1603
  %v1605 = vpop.f32.mrb[0].mxu0
  %1606 = vmatprep.mubr.f32.mxu0 %v101
  %1607 = vmatmul.mubr.f32.gmra.mrb[0].mxu0 %v100
  %v1608 = vpop.f32.mrb[0].mxu0
  %v1609 = vadd.f32 %v1389, %v1608
  %v1610 = vpop.f32.mrb[0].mxu0
  %1611 = vmatprep.mubr.f32.mxu0 %v114
  %1612 = vmatmul.mubr.f32.gmra.mrb[0].mxu0 %v113
  %v1613 = vpop.f32.mrb[0].mxu0
  %v1614 = vadd.f32 %v1394, %v1613
  %v1615 = vpop.f32.mrb[0].mxu0
  %1616 = vmatprep.mubr.f32.mxu0 %v127
  %1617 = vmatmul.mubr.f32.gmra.mrb[0].mxu0 %v126
  %v1618 = vpop.f32.mrb[0].mxu0
  %v1619 = vadd.f32 %v1399, %v1618
  %v1620 = vpop.f32.mrb[0].mxu0
  %1621 = vmatprep.mubr.f32.mxu0 %v140
  %1622 = vmatmul.mubr.f32.gmra.mrb[0].mxu0 %v139
  %v1623 = vpop.f32.mrb[0].mxu0
  %v1624 = vadd.f32 %v1404, %v1623
  %v1625 = vpop.f32.mrb[0].mxu0
  %1626 = vmatprep.mubr.f32.mxu0 %v153
  %1627 = vmatmul.mubr.f32.gmra.mrb[0].mxu0 %v152
  %v1628 = vpop.f32.mrb[0].mxu0
  %v1629 = vadd.f32 %v1409, %v1628
  %v1630 = vpop.f32.mrb[0].mxu0
  %1631 = vmatprep.mubr.f32.mxu0 %v166
  %1632 = vmatmul.mubr.f32.gmra.mrb[0].mxu0 %v165
  %v1633 = vpop.f32.mrb[0].mxu0
  %v1634 = vadd.f32 %v1414, %v1633
  %v1635 = vpop.f32.mrb[0].mxu0
  %1636 = vmatprep.mubr.f32.mxu0 %v179
  %1637 = vmatmul.mubr.f32.gmra.mrb[0].mxu0 %v178
  %v1638 = vpop.f32.mrb[0].mxu0
  %v1639 = vadd.f32 %v1419, %v1638
  %v1640 = vpop.f32.mrb[0].mxu0
  %1641 = vmatprep.mubr.f32.mxu0 %v192
  %1642 = vmatmul.mubr.f32.gmra.mrb[0].mxu0 %v191
  %v1643 = vpop.f32.mrb[0].mxu0
  %v1644 = vadd.f32 %v1424, %v1643
  %v1645 = vpop.f32.mrb[0].mxu0
  %1646 = vmatprep.mubr.f32.mxu0 %v205
  %1647 = vmatmul.mubr.f32.gmra.mrb[0].mxu0 %v204
  %v1648 = vpop.f32.mrb[0].mxu0
  %v1649 = vadd.f32 %v1429, %v1648
  %v1650 = vpop.f32.mrb[0].mxu0
  %1651 = vmatprep.mubr.f32.mxu0 %v218
  %1652 = vmatmul.mubr.f32.gmra.mrb[0].mxu0 %v217
  %v1653 = vpop.f32.mrb[0].mxu0
  %v1654 = vadd.f32 %v1434, %v1653
  %v1655 = vpop.f32.mrb[0].mxu0
  %1656 = vmatprep.mubr.f32.mxu0 %v231
  %1657 = vmatmul.mubr.f32.gmra.mrb[0].mxu0 %v230
  %v1658 = vpop.f32.mrb[0].mxu0
  %v1659 = vadd.f32 %v1439, %v1658
  %v1660 = vpop.f32.mrb[0].mxu0
  %1661 = vmatprep.mubr.f32.mxu0 %v244
  %1662 = vmatmul.mubr.f32.gmra.mrb[0].mxu0 %v243
  %v1663 = vpop.f32.mrb[0].mxu0
  %v1664 = vadd.f32 %v1444, %v1663
  %v1665 = vpop.f32.mrb[0].mxu0
  %1666 = vmatprep.mubr.f32.mxu0 %v257
  %1667 = vmatmul.mubr.f32.gmra.mrb[0].mxu0 %v256
  %v1668 = vpop.f32.mrb[0].mxu0
  %v1669 = vadd.f32 %v1449, %v1668
  %v1670 = vpop.f32.mrb[0].mxu0
  %1671 = vmatprep.mubr.f32.mxu0 %v270
  %1672 = vmatmul.mubr.f32.gmra.mrb[0].mxu0 %v269
  %v1673 = vpop.f32.mrb[0].mxu0
  %v1674 = vadd.f32 %v1454, %v1673
  %v1675 = vpop.f32.mrb[0].mxu0
  %1676 = vmatprep.mubr.f32.mxu0 %v283
  %1677 = vmatmul.mubr.f32.gmra.mrb[0].mxu0 %v282
  %v1678 = vpop.f32.mrb[0].mxu0
  %v1679 = vadd.f32 %v1459, %v1678
  %v1680 = vpop.f32.mrb[0].mxu0
  %1681 = vmatprep.mubr.f32.mxu0 %v296
  %1682 = vmatmul.mubr.f32.gmra.mrb[0].mxu0 %v295
  %v1683 = vpop.f32.mrb[0].mxu0
  %v1684 = vadd.f32 %v1464, %v1683
  %v1685 = vpop.f32.mrb[0].mxu0
  %1686 = vmatprep.mubr.f32.mxu0 %v309
  %1687 = vmatmul.mubr.f32.gmra.mrb[0].mxu0 %v308
  %v1688 = vpop.f32.mrb[0].mxu0
  %v1689 = vadd.f32 %v1469, %v1688
  %v1690 = vpop.f32.mrb[0].mxu0
  %1691 = vmatprep.mubr.f32.mxu0 %v322
  %1692 = vmatmul.mubr.f32.gmra.mrb[0].mxu0 %v321
  %v1693 = vpop.f32.mrb[0].mxu0
  %v1694 = vadd.f32 %v1474, %v1693
  %v1695 = vpop.f32.mrb[0].mxu0
  %1696 = vmatprep.mubr.f32.mxu0 %v335
  %1697 = vmatmul.mubr.f32.gmra.mrb[0].mxu0 %v334
  %v1698 = vpop.f32.mrb[0].mxu0
  %v1699 = vadd.f32 %v1479, %v1698
  %v1700 = vpop.f32.mrb[0].mxu0
  %1701 = vmatprep.mubr.f32.mxu0 %v348
  %1702 = vmatmul.mubr.f32.gmra.mrb[0].mxu0 %v347
  %v1703 = vpop.f32.mrb[0].mxu0
  %v1704 = vadd.f32 %v1484, %v1703
  %v1705 = vpop.f32.mrb[0].mxu0
  %1706 = vmatprep.mubr.f32.mxu0 %v361
  %1707 = vmatmul.mubr.f32.gmra.mrb[0].mxu0 %v360
  %v1708 = vpop.f32.mrb[0].mxu0
  %v1709 = vadd.f32 %v1489, %v1708
  %v1710 = vpop.f32.mrb[0].mxu0
  %1711 = vmatprep.mubr.f32.mxu0 %v374
  %1712 = vmatmul.mubr.f32.gmra.mrb[0].mxu0 %v373
  %v1713 = vpop.f32.mrb[0].mxu0
  %v1714 = vadd.f32 %v1494, %v1713
  %v1715 = vpop.f32.mrb[0].mxu0
  %1716 = vmatprep.mubr.f32.mxu0 %v387
  %1717 = vmatmul.mubr.f32.gmra.mrb[0].mxu0 %v386
  %v1718 = vpop.f32.mrb[0].mxu0
  %v1719 = vadd.f32 %v1499, %v1718
  %v1720 = vpop.f32.mrb[0].mxu0
  %1721 = vmatprep.mubr.f32.mxu0 %v400
  %1722 = vmatmul.mubr.f32.gmra.mrb[0].mxu0 %v399
  %v1723 = vpop.f32.mrb[0].mxu0
  %v1724 = vadd.f32 %v1504, %v1723
  %v1725 = vpop.f32.mrb[0].mxu0
  %1726 = vmatprep.mubr.f32.mxu0 %v413
  %1727 = vmatmul.mubr.f32.gmra.mrb[0].mxu0 %v412
  %v1728 = vpop.f32.mrb[0].mxu0
  %v1729 = vadd.f32 %v1509, %v1728
  %v1730 = vpop.f32.mrb[0].mxu0
  %1731 = vdwg.mxu0
  %1732 = vmatprep.subr.mxu0 0.0
  %1733 = vmatpush1.msra.mxu0 %v577
  %1734 = vmatprep.subr.mxu0 0.0
  %1735 = vmatpush1.msra.mxu0 %v578
  %1736 = vmatprep.subr.mxu0 0.0
  %1737 = vmatpush1.msra.mxu0 %v579
  %1738 = vmatprep.subr.mxu0 0.0
  %1739 = vmatpush1.msra.mxu0 %v580
  %1740 = vmatprep.subr.mxu0 0.0
  %1741 = vmatpush1.msra.mxu0 %v581
  %1742 = vmatprep.subr.mxu0 0.0
  %1743 = vmatpush1.msra.mxu0 %v582
  %1744 = vmatprep.subr.mxu0 0.0
  %1745 = vmatpush1.msra.mxu0 %v583
  %1746 = vmatprep.subr.mxu0 0.0
  %1747 = vmatpush1.msra.mxu0 %v584
  %1748 = vmatprep.subr.mxu0 0.0
  %1749 = vmatpush1.msra.mxu0 %v585
  %1750 = vmatprep.subr.mxu0 0.0
  %1751 = vmatpush1.msra.mxu0 %v586
  %1752 = vmatprep.subr.mxu0 0.0
  %1753 = vmatpush1.msra.mxu0 %v587
  %1754 = vmatprep.subr.mxu0 0.0
  %1755 = vmatpush1.msra.mxu0 %v588
  %1756 = vmatprep.subr.mxu0 0.0
  %1757 = vmatpush1.msra.mxu0 %v589
  %1758 = vmatprep.subr.mxu0 0.0
  %1759 = vmatpush1.msra.mxu0 %v590
  %1760 = vmatprep.subr.mxu0 0.0
  %1761 = vmatpush1.msra.mxu0 %v591
  %1762 = vmatprep.subr.mxu0 0.0
  %1763 = vmatpush1.msra.mxu0 %v592
  %1764 = vmatprep.subr.mxu0 0.0
  %1765 = vmatpush1.msra.mxu0 %v593
  %1766 = vmatprep.subr.mxu0 0.0
  %1767 = vmatpush1.msra.mxu0 %v594
  %1768 = vmatprep.subr.mxu0 0.0
  %1769 = vmatpush1.msra.mxu0 %v595
  %1770 = vmatprep.subr.mxu0 0.0
  %1771 = vmatpush1.msra.mxu0 %v596
  %1772 = vmatprep.subr.mxu0 0.0
  %1773 = vmatpush1.msra.mxu0 %v597
  %1774 = vmatprep.subr.mxu0 0.0
  %1775 = vmatpush1.msra.mxu0 %v598
  %1776 = vmatprep.subr.mxu0 0.0
  %1777 = vmatpush1.msra.mxu0 %v599
  %1778 = vmatprep.subr.mxu0 0.0
  %1779 = vmatpush1.msra.mxu0 %v600
  %1780 = vmatprep.subr.mxu0 0.0
  %1781 = vmatpush1.msra.mxu0 %v601
  %1782 = vmatprep.subr.mxu0 0.0
  %1783 = vmatpush1.msra.mxu0 %v602
  %1784 = vmatprep.subr.mxu0 0.0
  %1785 = vmatpush1.msra.mxu0 %v603
  %1786 = vmatprep.subr.mxu0 0.0
  %1787 = vmatpush1.msra.mxu0 %v604
  %1788 = vmatprep.subr.mxu0 0.0
  %1789 = vmatpush1.msra.mxu0 %v605
  %1790 = vmatprep.subr.mxu0 0.0
  %1791 = vmatpush1.msra.mxu0 %v606
  %1792 = vmatprep.subr.mxu0 0.0
  %1793 = vmatpush1.msra.mxu0 %v607
  %1794 = vmatprep.subr.mxu0 0.0
  %1795 = vmatpush1.msra.mxu0 %v608
  %1796 = vmatprep.mubr.f32.mxu0 %v25
  %1797 = vmatmul.mubr.f32.gmra.mrb[0].mxu0 %v24
  %v1798 = vpop.f32.mrb[0].mxu0
  %v1799 = vadd.f32 %v1579, %v1798
  %v1800 = vpop.f32.mrb[0].mxu0
  %1801 = vmatprep.mubr.f32.mxu0 %v38
  %1802 = vmatmul.mubr.f32.gmra.mrb[0].mxu0 %v37
  %v1803 = vpop.f32.mrb[0].mxu0
  %v1804 = vadd.f32 %v1584, %v1803
  %v1805 = vpop.f32.mrb[0].mxu0
  %1806 = vmatprep.mubr.f32.mxu0 %v51
  %1807 = vmatmul.mubr.f32.gmra.mrb[0].mxu0 %v50
  %v1808 = vpop.f32.mrb[0].mxu0
  %v1809 = vadd.f32 %v1589, %v1808
  %v1810 = vpop.f32.mrb[0].mxu0
  %1811 = vmatprep.mubr.f32.mxu0 %v64
  %1812 = vmatmul.mubr.f32.gmra.mrb[0].mxu0 %v63
  %v1813 = vpop.f32.mrb[0].mxu0
  %v1814 = vadd.f32 %v1594, %v1813
  %v1815 = vpop.f32.mrb[0].mxu0
  %1816 = vmatprep.mubr.f32.mxu0 %v77
  %1817 = vmatmul.mubr.f32.gmra.mrb[0].mxu0 %v76
  %v1818 = vpop.f32.mrb[0].mxu0
  %v1819 = vadd.f32 %v1599, %v1818
  %v1820 = vpop.f32.mrb[0].mxu0
  %1821 = vmatprep.mubr.f32.mxu0 %v90
  %1822 = vmatmul.mubr.f32.gmra.mrb[0].mxu0 %v89
  %v1823 = vpop.f32.mrb[0].mxu0
  %v1824 = vadd.f32 %v1604, %v1823
  %v1825 = vpop.f32.mrb[0].mxu0
  %1826 = vmatprep.mubr.f32.mxu0 %v103
  %1827 = vmatmul.mubr.f32.gmra.mrb[0].mxu0 %v102
  %v1828 = vpop.f32.mrb[0].mxu0
  %v1829 = vadd.f32 %v1609, %v1828
  %v1830 = vpop.f32.mrb[0].mxu0
  %1831 = vmatprep.mubr.f32.mxu0 %v116
  %1832 = vmatmul.mubr.f32.gmra.mrb[0].mxu0 %v115
  %v1833 = vpop.f32.mrb[0].mxu0
  %v1834 = vadd.f32 %v1614, %v1833
  %v1835 = vpop.f32.mrb[0].mxu0
  %1836 = vmatprep.mubr.f32.mxu0 %v129
  %1837 = vmatmul.mubr.f32.gmra.mrb[0].mxu0 %v128
  %v1838 = vpop.f32.mrb[0].mxu0
  %v1839 = vadd.f32 %v1619, %v1838
  %v1840 = vpop.f32.mrb[0].mxu0
  %1841 = vmatprep.mubr.f32.mxu0 %v142
  %1842 = vmatmul.mubr.f32.gmra.mrb[0].mxu0 %v141
  %v1843 = vpop.f32.mrb[0].mxu0
  %v1844 = vadd.f32 %v1624, %v1843
  %v1845 = vpop.f32.mrb[0].mxu0
  %1846 = vmatprep.mubr.f32.mxu0 %v155
  %1847 = vmatmul.mubr.f32.gmra.mrb[0].mxu0 %v154
  %v1848 = vpop.f32.mrb[0].mxu0
  %v1849 = vadd.f32 %v1629, %v1848
  %v1850 = vpop.f32.mrb[0].mxu0
  %1851 = vmatprep.mubr.f32.mxu0 %v168
  %1852 = vmatmul.mubr.f32.gmra.mrb[0].mxu0 %v167
  %v1853 = vpop.f32.mrb[0].mxu0
  %v1854 = vadd.f32 %v1634, %v1853
  %v1855 = vpop.f32.mrb[0].mxu0
  %1856 = vmatprep.mubr.f32.mxu0 %v181
  %1857 = vmatmul.mubr.f32.gmra.mrb[0].mxu0 %v180
  %v1858 = vpop.f32.mrb[0].mxu0
  %v1859 = vadd.f32 %v1639, %v1858
  %v1860 = vpop.f32.mrb[0].mxu0
  %1861 = vmatprep.mubr.f32.mxu0 %v194
  %1862 = vmatmul.mubr.f32.gmra.mrb[0].mxu0 %v193
  %v1863 = vpop.f32.mrb[0].mxu0
  %v1864 = vadd.f32 %v1644, %v1863
  %v1865 = vpop.f32.mrb[0].mxu0
  %1866 = vmatprep.mubr.f32.mxu0 %v207
  %1867 = vmatmul.mubr.f32.gmra.mrb[0].mxu0 %v206
  %v1868 = vpop.f32.mrb[0].mxu0
  %v1869 = vadd.f32 %v1649, %v1868
  %v1870 = vpop.f32.mrb[0].mxu0
  %1871 = vmatprep.mubr.f32.mxu0 %v220
  %1872 = vmatmul.mubr.f32.gmra.mrb[0].mxu0 %v219
  %v1873 = vpop.f32.mrb[0].mxu0
  %v1874 = vadd.f32 %v1654, %v1873
  %v1875 = vpop.f32.mrb[0].mxu0
  %1876 = vmatprep.mubr.f32.mxu0 %v233
  %1877 = vmatmul.mubr.f32.gmra.mrb[0].mxu0 %v232
  %v1878 = vpop.f32.mrb[0].mxu0
  %v1879 = vadd.f32 %v1659, %v1878
  %v1880 = vpop.f32.mrb[0].mxu0
  %1881 = vmatprep.mubr.f32.mxu0 %v246
  %1882 = vmatmul.mubr.f32.gmra.mrb[0].mxu0 %v245
  %v1883 = vpop.f32.mrb[0].mxu0
  %v1884 = vadd.f32 %v1664, %v1883
  %v1885 = vpop.f32.mrb[0].mxu0
  %1886 = vmatprep.mubr.f32.mxu0 %v259
  %1887 = vmatmul.mubr.f32.gmra.mrb[0].mxu0 %v258
  %v1888 = vpop.f32.mrb[0].mxu0
  %v1889 = vadd.f32 %v1669, %v1888
  %v1890 = vpop.f32.mrb[0].mxu0
  %1891 = vmatprep.mubr.f32.mxu0 %v272
  %1892 = vmatmul.mubr.f32.gmra.mrb[0].mxu0 %v271
  %v1893 = vpop.f32.mrb[0].mxu0
  %v1894 = vadd.f32 %v1674, %v1893
  %v1895 = vpop.f32.mrb[0].mxu0
  %1896 = vmatprep.mubr.f32.mxu0 %v285
  %1897 = vmatmul.mubr.f32.gmra.mrb[0].mxu0 %v284
  %v1898 = vpop.f32.mrb[0].mxu0
  %v1899 = vadd.f32 %v1679, %v1898
  %v1900 = vpop.f32.mrb[0].mxu0
  %1901 = vmatprep.mubr.f32.mxu0 %v298
  %1902 = vmatmul.mubr.f32.gmra.mrb[0].mxu0 %v297
  %v1903 = vpop.f32.mrb[0].mxu0
  %v1904 = vadd.f32 %v1684, %v1903
  %v1905 = vpop.f32.mrb[0].mxu0
  %1906 = vmatprep.mubr.f32.mxu0 %v311
  %1907 = vmatmul.mubr.f32.gmra.mrb[0].mxu0 %v310
  %v1908 = vpop.f32.mrb[0].mxu0
  %v1909 = vadd.f32 %v1689, %v1908
  %v1910 = vpop.f32.mrb[0].mxu0
  %1911 = vmatprep.mubr.f32.mxu0 %v324
  %1912 = vmatmul.mubr.f32.gmra.mrb[0].mxu0 %v323
  %v1913 = vpop.f32.mrb[0].mxu0
  %v1914 = vadd.f32 %v1694, %v1913
  %v1915 = vpop.f32.mrb[0].mxu0
  %1916 = vmatprep.mubr.f32.mxu0 %v337
  %1917 = vmatmul.mubr.f32.gmra.mrb[0].mxu0 %v336
  %v1918 = vpop.f32.mrb[0].mxu0
  %v1919 = vadd.f32 %v1699, %v1918
  %v1920 = vpop.f32.mrb[0].mxu0
  %1921 = vmatprep.mubr.f32.mxu0 %v350
  %1922 = vmatmul.mubr.f32.gmra.mrb[0].mxu0 %v349
  %v1923 = vpop.f32.mrb[0].mxu0
  %v1924 = vadd.f32 %v1704, %v1923
  %v1925 = vpop.f32.mrb[0].mxu0
  %1926 = vmatprep.mubr.f32.mxu0 %v363
  %1927 = vmatmul.mubr.f32.gmra.mrb[0].mxu0 %v362
  %v1928 = vpop.f32.mrb[0].mxu0
  %v1929 = vadd.f32 %v1709, %v1928
  %v1930 = vpop.f32.mrb[0].mxu0
  %1931 = vmatprep.mubr.f32.mxu0 %v376
  %1932 = vmatmul.mubr.f32.gmra.mrb[0].mxu0 %v375
  %v1933 = vpop.f32.mrb[0].mxu0
  %v1934 = vadd.f32 %v1714, %v1933
  %v1935 = vpop.f32.mrb[0].mxu0
  %1936 = vmatprep.mubr.f32.mxu0 %v389
  %1937 = vmatmul.mubr.f32.gmra.mrb[0].mxu0 %v388
  %v1938 = vpop.f32.mrb[0].mxu0
  %v1939 = vadd.f32 %v1719, %v1938
  %v1940 = vpop.f32.mrb[0].mxu0
  %1941 = vmatprep.mubr.f32.mxu0 %v402
  %1942 = vmatmul.mubr.f32.gmra.mrb[0].mxu0 %v401
  %v1943 = vpop.f32.mrb[0].mxu0
  %v1944 = vadd.f32 %v1724, %v1943
  %v1945 = vpop.f32.mrb[0].mxu0
  %1946 = vmatprep.mubr.f32.mxu0 %v415
  %1947 = vmatmul.mubr.f32.gmra.mrb[0].mxu0 %v414
  %v1948 = vpop.f32.mrb[0].mxu0
  %v1949 = vadd.f32 %v1729, %v1948
  %v1950 = vpop.f32.mrb[0].mxu0
  %1951 = vdwg.mxu0
  %1952 = vmatprep.subr.mxu0 0.0
  %1953 = vmatpush1.msra.mxu0 %v609
  %1954 = vmatprep.subr.mxu0 0.0
  %1955 = vmatpush1.msra.mxu0 %v610
  %1956 = vmatprep.subr.mxu0 0.0
  %1957 = vmatpush1.msra.mxu0 %v611
  %1958 = vmatprep.subr.mxu0 0.0
  %1959 = vmatpush1.msra.mxu0 %v612
  %1960 = vmatprep.subr.mxu0 0.0
  %1961 = vmatpush1.msra.mxu0 %v613
  %1962 = vmatprep.subr.mxu0 0.0
  %1963 = vmatpush1.msra.mxu0 %v614
  %1964 = vmatprep.subr.mxu0 0.0
  %1965 = vmatpush1.msra.mxu0 %v615
  %1966 = vmatprep.subr.mxu0 0.0
  %1967 = vmatpush1.msra.mxu0 %v616
  %1968 = vmatprep.subr.mxu0 0.0
  %1969 = vmatpush1.msra.mxu0 %v617
  %1970 = vmatprep.subr.mxu0 0.0
  %1971 = vmatpush1.msra.mxu0 %v618
  %1972 = vmatprep.subr.mxu0 0.0
  %1973 = vmatpush1.msra.mxu0 %v619
  %1974 = vmatprep.subr.mxu0 0.0
  %1975 = vmatpush1.msra.mxu0 %v620
  %1976 = vmatprep.subr.mxu0 0.0
  %1977 = vmatpush1.msra.mxu0 %v621
  %1978 = vmatprep.subr.mxu0 0.0
  %1979 = vmatpush1.msra.mxu0 %v622
  %1980 = vmatprep.subr.mxu0 0.0
  %1981 = vmatpush1.msra.mxu0 %v623
  %1982 = vmatprep.subr.mxu0 0.0
  %1983 = vmatpush1.msra.mxu0 %v624
  %1984 = vmatprep.subr.mxu0 0.0
  %1985 = vmatpush1.msra.mxu0 0.0
  %1986 = vmatprep.subr.mxu0 0.0
  %1987 = vmatpush1.msra.mxu0 0.0
  %1988 = vmatprep.subr.mxu0 0.0
  %1989 = vmatpush1.msra.mxu0 0.0
  %1990 = vmatprep.subr.mxu0 0.0
  %1991 = vmatpush1.msra.mxu0 0.0
  %1992 = vmatprep.subr.mxu0 0.0
  %1993 = vmatpush1.msra.mxu0 0.0
  %1994 = vmatprep.subr.mxu0 0.0
  %1995 = vmatpush1.msra.mxu0 0.0
  %1996 = vmatprep.subr.mxu0 0.0
  %1997 = vmatpush1.msra.mxu0 0.0
  %1998 = vmatprep.subr.mxu0 0.0
  %1999 = vmatpush1.msra.mxu0 0.0
  %2000 = vmatprep.subr.mxu0 0.0
  %2001 = vmatpush1.msra.mxu0 0.0
  %2002 = vmatprep.subr.mxu0 0.0
  %2003 = vmatpush1.msra.mxu0 0.0
  %2004 = vmatprep.subr.mxu0 0.0
  %2005 = vmatpush1.msra.mxu0 0.0
  %2006 = vmatprep.subr.mxu0 0.0
  %2007 = vmatpush1.msra.mxu0 0.0
  %2008 = vmatprep.subr.mxu0 0.0
  %2009 = vmatpush1.msra.mxu0 0.0
  %2010 = vmatprep.subr.mxu0 0.0
  %2011 = vmatpush1.msra.mxu0 0.0
  %2012 = vmatprep.subr.mxu0 0.0
  %2013 = vmatpush1.msra.mxu0 0.0
  %2014 = vmatprep.subr.mxu0 0.0
  %2015 = vmatpush1.msra.mxu0 0.0
  %2016 = vmatprep.mubr.f32.mxu0 0.0
  %2017 = vmatmul.mubr.f32.gmra.mrb[0].mxu0 %v26
  %v2018 = vpop.f32.mrb[0].mxu0
  %v2019 = vadd.f32 %v1799, %v2018
  %v2020 = vpop.f32.mrb[0].mxu0
  %2021 = vmatprep.mubr.f32.mxu0 0.0
  %2022 = vmatmul.mubr.f32.gmra.mrb[0].mxu0 %v39
  %v2023 = vpop.f32.mrb[0].mxu0
  %v2024 = vadd.f32 %v1804, %v2023
  %v2025 = vpop.f32.mrb[0].mxu0
  %2026 = vmatprep.mubr.f32.mxu0 0.0
  %2027 = vmatmul.mubr.f32.gmra.mrb[0].mxu0 %v52
  %v2028 = vpop.f32.mrb[0].mxu0
  %v2029 = vadd.f32 %v1809, %v2028
  %v2030 = vpop.f32.mrb[0].mxu0
  %2031 = vmatprep.mubr.f32.mxu0 0.0
  %2032 = vmatmul.mubr.f32.gmra.mrb[0].mxu0 %v65
  %v2033 = vpop.f32.mrb[0].mxu0
  %v2034 = vadd.f32 %v1814, %v2033
  %v2035 = vpop.f32.mrb[0].mxu0
  %2036 = vmatprep.mubr.f32.mxu0 0.0
  %2037 = vmatmul.mubr.f32.gmra.mrb[0].mxu0 %v78
  %v2038 = vpop.f32.mrb[0].mxu0
  %v2039 = vadd.f32 %v1819, %v2038
  %v2040 = vpop.f32.mrb[0].mxu0
  %2041 = vmatprep.mubr.f32.mxu0 0.0
  %2042 = vmatmul.mubr.f32.gmra.mrb[0].mxu0 %v91
  %v2043 = vpop.f32.mrb[0].mxu0
  %v2044 = vadd.f32 %v1824, %v2043
  %v2045 = vpop.f32.mrb[0].mxu0
  %2046 = vmatprep.mubr.f32.mxu0 0.0
  %2047 = vmatmul.mubr.f32.gmra.mrb[0].mxu0 %v104
  %v2048 = vpop.f32.mrb[0].mxu0
  %v2049 = vadd.f32 %v1829, %v2048
  %v2050 = vpop.f32.mrb[0].mxu0
  %2051 = vmatprep.mubr.f32.mxu0 0.0
  %2052 = vmatmul.mubr.f32.gmra.mrb[0].mxu0 %v117
  %v2053 = vpop.f32.mrb[0].mxu0
  %v2054 = vadd.f32 %v1834, %v2053
  %v2055 = vpop.f32.mrb[0].mxu0
  %2056 = vmatprep.mubr.f32.mxu0 0.0
  %2057 = vmatmul.mubr.f32.gmra.mrb[0].mxu0 %v130
  %v2058 = vpop.f32.mrb[0].mxu0
  %v2059 = vadd.f32 %v1839, %v2058
  %v2060 = vpop.f32.mrb[0].mxu0
  %2061 = vmatprep.mubr.f32.mxu0 0.0
  %2062 = vmatmul.mubr.f32.gmra.mrb[0].mxu0 %v143
  %v2063 = vpop.f32.mrb[0].mxu0
  %v2064 = vadd.f32 %v1844, %v2063
  %v2065 = vpop.f32.mrb[0].mxu0
  %2066 = vmatprep.mubr.f32.mxu0 0.0
  %2067 = vmatmul.mubr.f32.gmra.mrb[0].mxu0 %v156
  %v2068 = vpop.f32.mrb[0].mxu0
  %v2069 = vadd.f32 %v1849, %v2068
  %v2070 = vpop.f32.mrb[0].mxu0
  %2071 = vmatprep.mubr.f32.mxu0 0.0
  %2072 = vmatmul.mubr.f32.gmra.mrb[0].mxu0 %v169
  %v2073 = vpop.f32.mrb[0].mxu0
  %v2074 = vadd.f32 %v1854, %v2073
  %v2075 = vpop.f32.mrb[0].mxu0
  %2076 = vmatprep.mubr.f32.mxu0 0.0
  %2077 = vmatmul.mubr.f32.gmra.mrb[0].mxu0 %v182
  %v2078 = vpop.f32.mrb[0].mxu0
  %v2079 = vadd.f32 %v1859, %v2078
  %v2080 = vpop.f32.mrb[0].mxu0
  %2081 = vmatprep.mubr.f32.mxu0 0.0
  %2082 = vmatmul.mubr.f32.gmra.mrb[0].mxu0 %v195
  %v2083 = vpop.f32.mrb[0].mxu0
  %v2084 = vadd.f32 %v1864, %v2083
  %v2085 = vpop.f32.mrb[0].mxu0
  %2086 = vmatprep.mubr.f32.mxu0 0.0
  %2087 = vmatmul.mubr.f32.gmra.mrb[0].mxu0 %v208
  %v2088 = vpop.f32.mrb[0].mxu0
  %v2089 = vadd.f32 %v1869, %v2088
  %v2090 = vpop.f32.mrb[0].mxu0
  %2091 = vmatprep.mubr.f32.mxu0 0.0
  %2092 = vmatmul.mubr.f32.gmra.mrb[0].mxu0 %v221
  %v2093 = vpop.f32.mrb[0].mxu0
  %v2094 = vadd.f32 %v1874, %v2093
  %v2095 = vpop.f32.mrb[0].mxu0
  %2096 = vmatprep.mubr.f32.mxu0 0.0
  %2097 = vmatmul.mubr.f32.gmra.mrb[0].mxu0 %v234
  %v2098 = vpop.f32.mrb[0].mxu0
  %v2099 = vadd.f32 %v1879, %v2098
  %v2100 = vpop.f32.mrb[0].mxu0
  %2101 = vmatprep.mubr.f32.mxu0 0.0
  %2102 = vmatmul.mubr.f32.gmra.mrb[0].mxu0 %v247
  %v2103 = vpop.f32.mrb[0].mxu0
  %v2104 = vadd.f32 %v1884, %v2103
  %v2105 = vpop.f32.mrb[0].mxu0
  %2106 = vmatprep.mubr.f32.mxu0 0.0
  %2107 = vmatmul.mubr.f32.gmra.mrb[0].mxu0 %v260
  %v2108 = vpop.f32.mrb[0].mxu0
  %v2109 = vadd.f32 %v1889, %v2108
  %v2110 = vpop.f32.mrb[0].mxu0
  %2111 = vmatprep.mubr.f32.mxu0 0.0
  %2112 = vmatmul.mubr.f32.gmra.mrb[0].mxu0 %v273
  %v2113 = vpop.f32.mrb[0].mxu0
  %v2114 = vadd.f32 %v1894, %v2113
  %v2115 = vpop.f32.mrb[0].mxu0
  %2116 = vmatprep.mubr.f32.mxu0 0.0
  %2117 = vmatmul.mubr.f32.gmra.mrb[0].mxu0 %v286
  %v2118 = vpop.f32.mrb[0].mxu0
  %v2119 = vadd.f32 %v1899, %v2118
  %v2120 = vpop.f32.mrb[0].mxu0
  %2121 = vmatprep.mubr.f32.mxu0 0.0
  %2122 = vmatmul.mubr.f32.gmra.mrb[0].mxu0 %v299
  %v2123 = vpop.f32.mrb[0].mxu0
  %v2124 = vadd.f32 %v1904, %v2123
  %v2125 = vpop.f32.mrb[0].mxu0
  %2126 = vmatprep.mubr.f32.mxu0 0.0
  %2127 = vmatmul.mubr.f32.gmra.mrb[0].mxu0 %v312
  %v2128 = vpop.f32.mrb[0].mxu0
  %v2129 = vadd.f32 %v1909, %v2128
  %v2130 = vpop.f32.mrb[0].mxu0
  %2131 = vmatprep.mubr.f32.mxu0 0.0
  %2132 = vmatmul.mubr.f32.gmra.mrb[0].mxu0 %v325
  %v2133 = vpop.f32.mrb[0].mxu0
  %v2134 = vadd.f32 %v1914, %v2133
  %v2135 = vpop.f32.mrb[0].mxu0
  %2136 = vmatprep.mubr.f32.mxu0 0.0
  %2137 = vmatmul.mubr.f32.gmra.mrb[0].mxu0 %v338
  %v2138 = vpop.f32.mrb[0].mxu0
  %v2139 = vadd.f32 %v1919, %v2138
  %v2140 = vpop.f32.mrb[0].mxu0
  %2141 = vmatprep.mubr.f32.mxu0 0.0
  %2142 = vmatmul.mubr.f32.gmra.mrb[0].mxu0 %v351
  %v2143 = vpop.f32.mrb[0].mxu0
  %v2144 = vadd.f32 %v1924, %v2143
  %v2145 = vpop.f32.mrb[0].mxu0
  %2146 = vmatprep.mubr.f32.mxu0 0.0
  %2147 = vmatmul.mubr.f32.gmra.mrb[0].mxu0 %v364
  %v2148 = vpop.f32.mrb[0].mxu0
  %v2149 = vadd.f32 %v1929, %v2148
  %v2150 = vpop.f32.mrb[0].mxu0
  %2151 = vmatprep.mubr.f32.mxu0 0.0
  %2152 = vmatmul.mubr.f32.gmra.mrb[0].mxu0 %v377
  %v2153 = vpop.f32.mrb[0].mxu0
  %v2154 = vadd.f32 %v1934, %v2153
  %v2155 = vpop.f32.mrb[0].mxu0
  %2156 = vmatprep.mubr.f32.mxu0 0.0
  %2157 = vmatmul.mubr.f32.gmra.mrb[0].mxu0 %v390
  %v2158 = vpop.f32.mrb[0].mxu0
  %v2159 = vadd.f32 %v1939, %v2158
  %v2160 = vpop.f32.mrb[0].mxu0
  %2161 = vmatprep.mubr.f32.mxu0 0.0
  %2162 = vmatmul.mubr.f32.gmra.mrb[0].mxu0 %v403
  %v2163 = vpop.f32.mrb[0].mxu0
  %v2164 = vadd.f32 %v1944, %v2163
  %v2165 = vpop.f32.mrb[0].mxu0
  %2166 = vmatprep.mubr.f32.mxu0 0.0
  %2167 = vmatmul.mubr.f32.gmra.mrb[0].mxu0 %v416
  %v2168 = vpop.f32.mrb[0].mxu0
  %v2169 = vadd.f32 %v1949, %v2168
  %v2170 = vpop.f32.mrb[0].mxu0
  %2171 = vdwg.mxu0
  %vm2172 = vcmp.gt.f32.partialorder %v2019, 0.0
  %vm2173 = vcmp.gt.f32.partialorder %v2024, 0.0
  %vm2174 = vcmp.gt.f32.partialorder %v2029, 0.0
  %vm2175 = vcmp.gt.f32.partialorder %v2034, 0.0
  %vm2176 = vcmp.gt.f32.partialorder %v2039, 0.0
  %vm2177 = vcmp.gt.f32.partialorder %v2044, 0.0
  %vm2178 = vcmp.gt.f32.partialorder %v2049, 0.0
  %vm2179 = vcmp.gt.f32.partialorder %v2054, 0.0
  %vm2180 = vcmp.gt.f32.partialorder %v2059, 0.0
  %vm2181 = vcmp.gt.f32.partialorder %v2064, 0.0
  %vm2182 = vcmp.gt.f32.partialorder %v2069, 0.0
  %vm2183 = vcmp.gt.f32.partialorder %v2074, 0.0
  %vm2184 = vcmp.gt.f32.partialorder %v2079, 0.0
  %vm2185 = vcmp.gt.f32.partialorder %v2084, 0.0
  %vm2186 = vcmp.gt.f32.partialorder %v2089, 0.0
  %vm2187 = vcmp.gt.f32.partialorder %v2094, 0.0
  %vm2188 = vcmp.gt.f32.partialorder %v2099, 0.0
  %vm2189 = vcmp.gt.f32.partialorder %v2104, 0.0
  %vm2190 = vcmp.gt.f32.partialorder %v2109, 0.0
  %vm2191 = vcmp.gt.f32.partialorder %v2114, 0.0
  %vm2192 = vcmp.gt.f32.partialorder %v2119, 0.0
  %vm2193 = vcmp.gt.f32.partialorder %v2124, 0.0
  %vm2194 = vcmp.gt.f32.partialorder %v2129, 0.0
  %vm2195 = vcmp.gt.f32.partialorder %v2134, 0.0
  %vm2196 = vcmp.gt.f32.partialorder %v2139, 0.0
  %vm2197 = vcmp.gt.f32.partialorder %v2144, 0.0
  %vm2198 = vcmp.gt.f32.partialorder %v2149, 0.0
  %vm2199 = vcmp.gt.f32.partialorder %v2154, 0.0
  %vm2200 = vcmp.gt.f32.partialorder %v2159, 0.0
  %vm2201 = vcmp.gt.f32.partialorder %v2164, 0.0
  %vm2202 = vcmp.gt.f32.partialorder %v2169, 0.0
  %v2203 = vmul.f32 %v2019, 1.442695
  %v2204 = vpow.pop %v2203
  %v2205 = vmul.f32 %v2024, 1.442695
  %v2206 = vpow.pop %v2205
  %v2207 = vmul.f32 %v2029, 1.442695
  %v2208 = vpow.pop %v2207
  %v2209 = vmul.f32 %v2034, 1.442695
  %v2210 = vpow.pop %v2209
  %v2211 = vmul.f32 %v2039, 1.442695
  %v2212 = vpow.pop %v2211
  %v2213 = vmul.f32 %v2044, 1.442695
  %v2214 = vpow.pop %v2213
  %v2215 = vmul.f32 %v2049, 1.442695
  %v2216 = vpow.pop %v2215
  %v2217 = vmul.f32 %v2054, 1.442695
  %v2218 = vpow.pop %v2217
  %v2219 = vmul.f32 %v2059, 1.442695
  %v2220 = vpow.pop %v2219
  %v2221 = vmul.f32 %v2064, 1.442695
  %v2222 = vpow.pop %v2221
  %v2223 = vmul.f32 %v2069, 1.442695
  %v2224 = vpow.pop %v2223
  %v2225 = vmul.f32 %v2074, 1.442695
  %v2226 = vpow.pop %v2225
  %v2227 = vmul.f32 %v2079, 1.442695
  %v2228 = vpow.pop %v2227
  %v2229 = vmul.f32 %v2084, 1.442695
  %v2230 = vpow.pop %v2229
  %v2231 = vmul.f32 %v2089, 1.442695
  %v2232 = vpow.pop %v2231
  %v2233 = vmul.f32 %v2094, 1.442695
  %v2234 = vpow.pop %v2233
  %v2235 = vmul.f32 %v2099, 1.442695
  %v2236 = vpow.pop %v2235
  %v2237 = vmul.f32 %v2104, 1.442695
  %v2238 = vpow.pop %v2237
  %v2239 = vmul.f32 %v2109, 1.442695
  %v2240 = vpow.pop %v2239
  %v2241 = vmul.f32 %v2114, 1.442695
  %v2242 = vpow.pop %v2241
  %v2243 = vmul.f32 %v2119, 1.442695
  %v2244 = vpow.pop %v2243
  %v2245 = vmul.f32 %v2124, 1.442695
  %v2246 = vpow.pop %v2245
  %v2247 = vmul.f32 %v2129, 1.442695
  %v2248 = vpow.pop %v2247
  %v2249 = vmul.f32 %v2134, 1.442695
  %v2250 = vpow.pop %v2249
  %v2251 = vmul.f32 %v2139, 1.442695
  %v2252 = vpow.pop %v2251
  %v2253 = vmul.f32 %v2144, 1.442695
  %v2254 = vpow.pop %v2253
  %v2255 = vmul.f32 %v2149, 1.442695
  %v2256 = vpow.pop %v2255
  %v2257 = vmul.f32 %v2154, 1.442695
  %v2258 = vpow.pop %v2257
  %v2259 = vmul.f32 %v2159, 1.442695
  %v2260 = vpow.pop %v2259
  %v2261 = vmul.f32 %v2164, 1.442695
  %v2262 = vpow.pop %v2261
  %v2263 = vmul.f32 %v2169, 1.442695
  %v2264 = vpow.pop %v2263
  %v2265 = vsub.f32 %v2204, 1.0
  %v2266 = vsub.f32 %v2206, 1.0
  %v2267 = vsub.f32 %v2208, 1.0
  %v2268 = vsub.f32 %v2210, 1.0
  %v2269 = vsub.f32 %v2212, 1.0
  %v2270 = vsub.f32 %v2214, 1.0
  %v2271 = vsub.f32 %v2216, 1.0
  %v2272 = vsub.f32 %v2218, 1.0
  %v2273 = vsub.f32 %v2220, 1.0
  %v2274 = vsub.f32 %v2222, 1.0
  %v2275 = vsub.f32 %v2224, 1.0
  %v2276 = vsub.f32 %v2226, 1.0
  %v2277 = vsub.f32 %v2228, 1.0
  %v2278 = vsub.f32 %v2230, 1.0
  %v2279 = vsub.f32 %v2232, 1.0
  %v2280 = vsub.f32 %v2234, 1.0
  %v2281 = vsub.f32 %v2236, 1.0
  %v2282 = vsub.f32 %v2238, 1.0
  %v2283 = vsub.f32 %v2240, 1.0
  %v2284 = vsub.f32 %v2242, 1.0
  %v2285 = vsub.f32 %v2244, 1.0
  %v2286 = vsub.f32 %v2246, 1.0
  %v2287 = vsub.f32 %v2248, 1.0
  %v2288 = vsub.f32 %v2250, 1.0
  %v2289 = vsub.f32 %v2252, 1.0
  %v2290 = vsub.f32 %v2254, 1.0
  %v2291 = vsub.f32 %v2256, 1.0
  %v2292 = vsub.f32 %v2258, 1.0
  %v2293 = vsub.f32 %v2260, 1.0
  %v2294 = vsub.f32 %v2262, 1.0
  %v2295 = vsub.f32 %v2264, 1.0
  %v2296 = vmul.f32 %v2265, 1.6732632
  %v2297 = vmul.f32 %v2266, 1.6732632
  %v2298 = vmul.f32 %v2267, 1.6732632
  %v2299 = vmul.f32 %v2268, 1.6732632
  %v2300 = vmul.f32 %v2269, 1.6732632
  %v2301 = vmul.f32 %v2270, 1.6732632
  %v2302 = vmul.f32 %v2271, 1.6732632
  %v2303 = vmul.f32 %v2272, 1.6732632
  %v2304 = vmul.f32 %v2273, 1.6732632
  %v2305 = vmul.f32 %v2274, 1.6732632
  %v2306 = vmul.f32 %v2275, 1.6732632
  %v2307 = vmul.f32 %v2276, 1.6732632
  %v2308 = vmul.f32 %v2277, 1.6732632
  %v2309 = vmul.f32 %v2278, 1.6732632
  %v2310 = vmul.f32 %v2279, 1.6732632
  %v2311 = vmul.f32 %v2280, 1.6732632
  %v2312 = vmul.f32 %v2281, 1.6732632
  %v2313 = vmul.f32 %v2282, 1.6732632
  %v2314 = vmul.f32 %v2283, 1.6732632
  %v2315 = vmul.f32 %v2284, 1.6732632
  %v2316 = vmul.f32 %v2285, 1.6732632
  %v2317 = vmul.f32 %v2286, 1.6732632
  %v2318 = vmul.f32 %v2287, 1.6732632
  %v2319 = vmul.f32 %v2288, 1.6732632
  %v2320 = vmul.f32 %v2289, 1.6732632
  %v2321 = vmul.f32 %v2290, 1.6732632
  %v2322 = vmul.f32 %v2291, 1.6732632
  %v2323 = vmul.f32 %v2292, 1.6732632
  %v2324 = vmul.f32 %v2293, 1.6732632
  %v2325 = vmul.f32 %v2294, 1.6732632
  %v2326 = vmul.f32 %v2295, 1.6732632
  %v2327 = vsel %vm2172, %v2019, %v2296
  %v2328 = vsel %vm2173, %v2024, %v2297
  %v2329 = vsel %vm2174, %v2029, %v2298
  %v2330 = vsel %vm2175, %v2034, %v2299
  %v2331 = vsel %vm2176, %v2039, %v2300
  %v2332 = vsel %vm2177, %v2044, %v2301
  %v2333 = vsel %vm2178, %v2049, %v2302
  %v2334 = vsel %vm2179, %v2054, %v2303
  %v2335 = vsel %vm2180, %v2059, %v2304
  %v2336 = vsel %vm2181, %v2064, %v2305
  %v2337 = vsel %vm2182, %v2069, %v2306
  %v2338 = vsel %vm2183, %v2074, %v2307
  %v2339 = vsel %vm2184, %v2079, %v2308
  %v2340 = vsel %vm2185, %v2084, %v2309
  %v2341 = vsel %vm2186, %v2089, %v2310
  %v2342 = vsel %vm2187, %v2094, %v2311
  %v2343 = vsel %vm2188, %v2099, %v2312
  %v2344 = vsel %vm2189, %v2104, %v2313
  %v2345 = vsel %vm2190, %v2109, %v2314
  %v2346 = vsel %vm2191, %v2114, %v2315
  %v2347 = vsel %vm2192, %v2119, %v2316
  %v2348 = vsel %vm2193, %v2124, %v2317
  %v2349 = vsel %vm2194, %v2129, %v2318
  %v2350 = vsel %vm2195, %v2134, %v2319
  %v2351 = vsel %vm2196, %v2139, %v2320
  %v2352 = vsel %vm2197, %v2144, %v2321
  %v2353 = vsel %vm2198, %v2149, %v2322
  %v2354 = vsel %vm2199, %v2154, %v2323
  %v2355 = vsel %vm2200, %v2159, %v2324
  %v2356 = vsel %vm2201, %v2164, %v2325
  %v2357 = vsel %vm2202, %v2169, %v2326
  %v2358 = vmul.f32 %v2327, 1.050701
  %v2359 = vmul.f32 %v2328, 1.050701
  %v2360 = vmul.f32 %v2329, 1.050701
  %v2361 = vmul.f32 %v2330, 1.050701
  %v2362 = vmul.f32 %v2331, 1.050701
  %v2363 = vmul.f32 %v2332, 1.050701
  %v2364 = vmul.f32 %v2333, 1.050701
  %v2365 = vmul.f32 %v2334, 1.050701
  %v2366 = vmul.f32 %v2335, 1.050701
  %v2367 = vmul.f32 %v2336, 1.050701
  %v2368 = vmul.f32 %v2337, 1.050701
  %v2369 = vmul.f32 %v2338, 1.050701
  %v2370 = vmul.f32 %v2339, 1.050701
  %v2371 = vmul.f32 %v2340, 1.050701
  %v2372 = vmul.f32 %v2341, 1.050701
  %v2373 = vmul.f32 %v2342, 1.050701
  %v2374 = vmul.f32 %v2343, 1.050701
  %v2375 = vmul.f32 %v2344, 1.050701
  %v2376 = vmul.f32 %v2345, 1.050701
  %v2377 = vmul.f32 %v2346, 1.050701
  %v2378 = vmul.f32 %v2347, 1.050701
  %v2379 = vmul.f32 %v2348, 1.050701
  %v2380 = vmul.f32 %v2349, 1.050701
  %v2381 = vmul.f32 %v2350, 1.050701
  %v2382 = vmul.f32 %v2351, 1.050701
  %v2383 = vmul.f32 %v2352, 1.050701
  %v2384 = vmul.f32 %v2353, 1.050701
  %v2385 = vmul.f32 %v2354, 1.050701
  %v2386 = vmul.f32 %v2355, 1.050701
  %v2387 = vmul.f32 %v2356, 1.050701
  %v2388 = vmul.f32 %v2357, 1.050701
  %2389 = vst [vmem:[%s3] sm:$0xff] %v2358
  %2390 = vst [vmem:[%s3 + $0x8] sm:$0xff] %v2359
  %2391 = vst [vmem:[%s3 + $0x10] sm:$0xff] %v2360
  %2392 = vst [vmem:[%s3 + $0x18] sm:$0xff] %v2361
  %2393 = vst [vmem:[%s3 + $0x20] sm:$0xff] %v2362
  %2394 = vst [vmem:[%s3 + $0x28] sm:$0xff] %v2363
  %2395 = vst [vmem:[%s3 + $0x30] sm:$0xff] %v2364
  %2396 = vst [vmem:[%s3 + $0x38] sm:$0xff] %v2365
  %2397 = vst [vmem:[%s3 + $0x40] sm:$0xff] %v2366
  %2398 = vst [vmem:[%s3 + $0x48] sm:$0xff] %v2367
  %2399 = vst [vmem:[%s3 + $0x50] sm:$0xff] %v2368
  %2400 = vst [vmem:[%s3 + $0x58] sm:$0xff] %v2369
  %2401 = vst [vmem:[%s3 + $0x60] sm:$0xff] %v2370
  %2402 = vst [vmem:[%s3 + $0x68] sm:$0xff] %v2371
  %2403 = vst [vmem:[%s3 + $0x70] sm:$0xff] %v2372
  %2404 = vst [vmem:[%s3 + $0x78] sm:$0xff] %v2373
  %2405 = vst [vmem:[%s3 + $0x80] sm:$0xff] %v2374
  %2406 = vst [vmem:[%s3 + $0x88] sm:$0xff] %v2375
  %2407 = vst [vmem:[%s3 + $0x90] sm:$0xff] %v2376
  %2408 = vst [vmem:[%s3 + $0x98] sm:$0xff] %v2377
  %2409 = vst [vmem:[%s3 + $0xa0] sm:$0xff] %v2378
  %2410 = vst [vmem:[%s3 + $0xa8] sm:$0xff] %v2379
  %2411 = vst [vmem:[%s3 + $0xb0] sm:$0xff] %v2380
  %2412 = vst [vmem:[%s3 + $0xb8] sm:$0xff] %v2381
  %2413 = vst [vmem:[%s3 + $0xc0] sm:$0xff] %v2382
  %2414 = vst [vmem:[%s3 + $0xc8] sm:$0xff] %v2383
  %2415 = vst [vmem:[%s3 + $0xd0] sm:$0xff] %v2384
  %2416 = vst [vmem:[%s3 + $0xd8] sm:$0xff] %v2385
  %2417 = vst [vmem:[%s3 + $0xe0] sm:$0xff] %v2386
  %2418 = vst [vmem:[%s3 + $0xe8] sm:$0xff] %v2387
  %2419 = vst [vmem:[%s3 + $0xf0] sm:$0xff] %v2388
  // Predicated region
  $region14: #{dueling_dqn_forward.8} parent=0 // pred_check
    _
  $region15: #{dueling_dqn_forward.8} parent=0 // pred_check_branch
    %2421 = sbr.rel (0) target = $region17
  $region16: #{dueling_dqn_forward.8} parent=0 // pred_region
    _
  $region17: #{dueling_dqn_forward.8} parent=0 // pred_fallthru
    _
  // Predicated region
  $region18: #{dueling_dqn_forward.8} parent=0 // pred_check
    _
  $region19: #{dueling_dqn_forward.8} parent=0 // pred_check_branch
    %2423 = sbr.rel (0) target = $region21
  $region20: #{dueling_dqn_forward.8} parent=0 // pred_region
    _
  $region21: #{dueling_dqn_forward.8} parent=0 // pred_fallthru
    _

// kernel: dueling_dqn_forward.9
$region0: #{dueling_dqn_forward.9}
  #allocation0 [shape = 'u32[]', space=smem, size = 0x4, offset = 0x4, fixed_abs, tag = 'smem constant byte address 0x4 - core index']
  #allocation1 [shape = 'u32[144,128]{1,0:T(1,128)}', space=vmem, size = 0x12000, scoped, tag = 'internal scratch']
  %s0 = inlined_call_operand.vmem [shape: f32[8,3968], index: 0, kind: input, shape index: {}]
  %s1 = inlined_call_operand.vmem [shape: f32[3968,128], index: 1, kind: input, shape index: {}]
  %s2 = inlined_call_operand.vmem [shape: f32[1,128], index: 2, kind: input, shape index: {}]
  %s3 = inlined_call_operand.vmem [shape: f32[8,128], index: 3, kind: output, shape index: {}]
  %s4 = sld [smem:[#allocation0]]
  $region22: #{dueling_dqn_forward.9} parent=0
    _
  %s6 = ssub.s32 1, %s4
  %s7 = scalar_select 0, %s6, %s4
  // Predicated region
  $region2: #{dueling_dqn_forward.9} parent=0 // pred_check
    _
  $region3: #{dueling_dqn_forward.9} parent=0 // pred_check_branch
    %9 = sbr.rel (0) target = $region5
  $region4: #{dueling_dqn_forward.9} parent=0 // pred_region
    _
  $region5: #{dueling_dqn_forward.9} parent=0 // pred_fallthru
    _
  // Predicated region
  $region6: #{dueling_dqn_forward.9} parent=0 // pred_check
    _
  $region7: #{dueling_dqn_forward.9} parent=0 // pred_check_branch
    %11 = sbr.rel (0) target = $region9
  $region8: #{dueling_dqn_forward.9} parent=0 // pred_region
    _
  $region9: #{dueling_dqn_forward.9} parent=0 // pred_fallthru
    _
  // Predicated region
  $region10: #{dueling_dqn_forward.9} parent=0 // pred_check
    _
  $region11: #{dueling_dqn_forward.9} parent=0 // pred_check_branch
    %13 = sbr.rel (0) target = $region13
  $region12: #{dueling_dqn_forward.9} parent=0 // pred_region
    _
  $region13: #{dueling_dqn_forward.9} parent=0 // pred_fallthru
    _
  %v14 = vld [vmem:[%s0] sm:$0xff]
  %v15 = vld [vmem:[%s0 + $0x8] sm:$0xff]
  %v16 = vld [vmem:[%s0 + $0x10] sm:$0xff]
  %v17 = vld [vmem:[%s0 + $0x18] sm:$0xff]
  %v18 = vld [vmem:[%s0 + $0x20] sm:$0xff]
  %v19 = vld [vmem:[%s0 + $0x28] sm:$0xff]
  %v20 = vld [vmem:[%s0 + $0x30] sm:$0xff]
  %v21 = vld [vmem:[%s0 + $0x38] sm:$0xff]
  %v22 = vld [vmem:[%s0 + $0x40] sm:$0xff]
  %v23 = vld [vmem:[%s0 + $0x48] sm:$0xff]
  %v24 = vld [vmem:[%s0 + $0x50] sm:$0xff]
  %v25 = vld [vmem:[%s0 + $0x58] sm:$0xff]
  %v26 = vld [vmem:[%s0 + $0x60] sm:$0xff]
  %v27 = vld [vmem:[%s0 + $0x68] sm:$0xff]
  %v28 = vld [vmem:[%s0 + $0x70] sm:$0xff]
  %v29 = vld [vmem:[%s0 + $0x78] sm:$0xff]
  %v30 = vld [vmem:[%s0 + $0x80] sm:$0xff]
  %v31 = vld [vmem:[%s0 + $0x88] sm:$0xff]
  %v32 = vld [vmem:[%s0 + $0x90] sm:$0xff]
  %v33 = vld [vmem:[%s0 + $0x98] sm:$0xff]
  %v34 = vld [vmem:[%s0 + $0xa0] sm:$0xff]
  %v35 = vld [vmem:[%s0 + $0xa8] sm:$0xff]
  %v36 = vld [vmem:[%s0 + $0xb0] sm:$0xff]
  %v37 = vld [vmem:[%s0 + $0xb8] sm:$0xff]
  %v38 = vld [vmem:[%s0 + $0xc0] sm:$0xff]
  %v39 = vld [vmem:[%s0 + $0xc8] sm:$0xff]
  %v40 = vld [vmem:[%s0 + $0xd0] sm:$0xff]
  %v41 = vld [vmem:[%s0 + $0xd8] sm:$0xff]
  %v42 = vld [vmem:[%s0 + $0xe0] sm:$0xff]
  %v43 = vld [vmem:[%s0 + $0xe8] sm:$0xff]
  %v44 = vld [vmem:[%s0 + $0xf0] sm:$0xff]
  %v45 = vld [vmem:[%s1] sm:$0xff]
  %v46 = vld [vmem:[%s1 + $0x8] sm:$0xff]
  %v47 = vld [vmem:[%s1 + $0x10] sm:$0xff]
  %v48 = vld [vmem:[%s1 + $0x18] sm:$0xff]
  %v49 = vld [vmem:[%s1 + $0x20] sm:$0xff]
  %v50 = vld [vmem:[%s1 + $0x28] sm:$0xff]
  %v51 = vld [vmem:[%s1 + $0x30] sm:$0xff]
  %v52 = vld [vmem:[%s1 + $0x38] sm:$0xff]
  %v53 = vld [vmem:[%s1 + $0x40] sm:$0xff]
  %v54 = vld [vmem:[%s1 + $0x48] sm:$0xff]
  %v55 = vld [vmem:[%s1 + $0x50] sm:$0xff]
  %v56 = vld [vmem:[%s1 + $0x58] sm:$0xff]
  %v57 = vld [vmem:[%s1 + $0x60] sm:$0xff]
  %v58 = vld [vmem:[%s1 + $0x68] sm:$0xff]
  %v59 = vld [vmem:[%s1 + $0x70] sm:$0xff]
  %v60 = vld [vmem:[%s1 + $0x78] sm:$0xff]
  %v61 = vld [vmem:[%s1 + $0x80] sm:$0xff]
  %v62 = vld [vmem:[%s1 + $0x88] sm:$0xff]
  %v63 = vld [vmem:[%s1 + $0x90] sm:$0xff]
  %v64 = vld [vmem:[%s1 + $0x98] sm:$0xff]
  %v65 = vld [vmem:[%s1 + $0xa0] sm:$0xff]
  %v66 = vld [vmem:[%s1 + $0xa8] sm:$0xff]
  %v67 = vld [vmem:[%s1 + $0xb0] sm:$0xff]
  %v68 = vld [vmem:[%s1 + $0xb8] sm:$0xff]
  %v69 = vld [vmem:[%s1 + $0xc0] sm:$0xff]
  %v70 = vld [vmem:[%s1 + $0xc8] sm:$0xff]
  %v71 = vld [vmem:[%s1 + $0xd0] sm:$0xff]
  %v72 = vld [vmem:[%s1 + $0xd8] sm:$0xff]
  %v73 = vld [vmem:[%s1 + $0xe0] sm:$0xff]
  %v74 = vld [vmem:[%s1 + $0xe8] sm:$0xff]
  %v75 = vld [vmem:[%s1 + $0xf0] sm:$0xff]
  %v76 = vld [vmem:[%s1 + $0xf8] sm:$0xff]
  %v77 = vld [vmem:[%s1 + $0x100] sm:$0xff]
  %v78 = vld [vmem:[%s1 + $0x108] sm:$0xff]
  %v79 = vld [vmem:[%s1 + $0x110] sm:$0xff]
  %v80 = vld [vmem:[%s1 + $0x118] sm:$0xff]
  %v81 = vld [vmem:[%s1 + $0x120] sm:$0xff]
  %v82 = vld [vmem:[%s1 + $0x128] sm:$0xff]
  %v83 = vld [vmem:[%s1 + $0x130] sm:$0xff]
  %v84 = vld [vmem:[%s1 + $0x138] sm:$0xff]
  %v85 = vld [vmem:[%s1 + $0x140] sm:$0xff]
  %v86 = vld [vmem:[%s1 + $0x148] sm:$0xff]
  %v87 = vld [vmem:[%s1 + $0x150] sm:$0xff]
  %v88 = vld [vmem:[%s1 + $0x158] sm:$0xff]
  %v89 = vld [vmem:[%s1 + $0x160] sm:$0xff]
  %v90 = vld [vmem:[%s1 + $0x168] sm:$0xff]
  %v91 = vld [vmem:[%s1 + $0x170] sm:$0xff]
  %v92 = vld [vmem:[%s1 + $0x178] sm:$0xff]
  %v93 = vld [vmem:[%s1 + $0x180] sm:$0xff]
  %v94 = vld [vmem:[%s1 + $0x188] sm:$0xff]
  %v95 = vld [vmem:[%s1 + $0x190] sm:$0xff]
  %v96 = vld [vmem:[%s1 + $0x198] sm:$0xff]
  %v97 = vld [vmem:[%s1 + $0x1a0] sm:$0xff]
  %v98 = vld [vmem:[%s1 + $0x1a8] sm:$0xff]
  %v99 = vld [vmem:[%s1 + $0x1b0] sm:$0xff]
  %v100 = vld [vmem:[%s1 + $0x1b8] sm:$0xff]
  %v101 = vld [vmem:[%s1 + $0x1c0] sm:$0xff]
  %v102 = vld [vmem:[%s1 + $0x1c8] sm:$0xff]
  %v103 = vld [vmem:[%s1 + $0x1d0] sm:$0xff]
  %v104 = vld [vmem:[%s1 + $0x1d8] sm:$0xff]
  %v105 = vld [vmem:[%s1 + $0x1e0] sm:$0xff]
  %v106 = vld [vmem:[%s1 + $0x1e8] sm:$0xff]
  %v107 = vld [vmem:[%s1 + $0x1f0] sm:$0xff]
  %v108 = vld [vmem:[%s1 + $0x1f8] sm:$0xff]
  %v109 = vld [vmem:[%s1 + $0x200] sm:$0xff]
  %v110 = vld [vmem:[%s1 + $0x208] sm:$0xff]
  %v111 = vld [vmem:[%s1 + $0x210] sm:$0xff]
  %v112 = vld [vmem:[%s1 + $0x218] sm:$0xff]
  %v113 = vld [vmem:[%s1 + $0x220] sm:$0xff]
  %v114 = vld [vmem:[%s1 + $0x228] sm:$0xff]
  %v115 = vld [vmem:[%s1 + $0x230] sm:$0xff]
  %v116 = vld [vmem:[%s1 + $0x238] sm:$0xff]
  %v117 = vld [vmem:[%s1 + $0x240] sm:$0xff]
  %v118 = vld [vmem:[%s1 + $0x248] sm:$0xff]
  %v119 = vld [vmem:[%s1 + $0x250] sm:$0xff]
  %v120 = vld [vmem:[%s1 + $0x258] sm:$0xff]
  %v121 = vld [vmem:[%s1 + $0x260] sm:$0xff]
  %v122 = vld [vmem:[%s1 + $0x268] sm:$0xff]
  %v123 = vld [vmem:[%s1 + $0x270] sm:$0xff]
  %v124 = vld [vmem:[%s1 + $0x278] sm:$0xff]
  %v125 = vld [vmem:[%s1 + $0x280] sm:$0xff]
  %v126 = vld [vmem:[%s1 + $0x288] sm:$0xff]
  %v127 = vld [vmem:[%s1 + $0x290] sm:$0xff]
  %v128 = vld [vmem:[%s1 + $0x298] sm:$0xff]
  %v129 = vld [vmem:[%s1 + $0x2a0] sm:$0xff]
  %v130 = vld [vmem:[%s1 + $0x2a8] sm:$0xff]
  %v131 = vld [vmem:[%s1 + $0x2b0] sm:$0xff]
  %v132 = vld [vmem:[%s1 + $0x2b8] sm:$0xff]
  %v133 = vld [vmem:[%s1 + $0x2c0] sm:$0xff]
  %v134 = vld [vmem:[%s1 + $0x2c8] sm:$0xff]
  %v135 = vld [vmem:[%s1 + $0x2d0] sm:$0xff]
  %v136 = vld [vmem:[%s1 + $0x2d8] sm:$0xff]
  %v137 = vld [vmem:[%s1 + $0x2e0] sm:$0xff]
  %v138 = vld [vmem:[%s1 + $0x2e8] sm:$0xff]
  %v139 = vld [vmem:[%s1 + $0x2f0] sm:$0xff]
  %v140 = vld [vmem:[%s1 + $0x2f8] sm:$0xff]
  %v141 = vld [vmem:[%s1 + $0x300] sm:$0xff]
  %v142 = vld [vmem:[%s1 + $0x308] sm:$0xff]
  %v143 = vld [vmem:[%s1 + $0x310] sm:$0xff]
  %v144 = vld [vmem:[%s1 + $0x318] sm:$0xff]
  %v145 = vld [vmem:[%s1 + $0x320] sm:$0xff]
  %v146 = vld [vmem:[%s1 + $0x328] sm:$0xff]
  %v147 = vld [vmem:[%s1 + $0x330] sm:$0xff]
  %v148 = vld [vmem:[%s1 + $0x338] sm:$0xff]
  %v149 = vld [vmem:[%s1 + $0x340] sm:$0xff]
  %v150 = vld [vmem:[%s1 + $0x348] sm:$0xff]
  %v151 = vld [vmem:[%s1 + $0x350] sm:$0xff]
  %v152 = vld [vmem:[%s1 + $0x358] sm:$0xff]
  %v153 = vld [vmem:[%s1 + $0x360] sm:$0xff]
  %v154 = vld [vmem:[%s1 + $0x368] sm:$0xff]
  %v155 = vld [vmem:[%s1 + $0x370] sm:$0xff]
  %v156 = vld [vmem:[%s1 + $0x378] sm:$0xff]
  %v157 = vld [vmem:[%s1 + $0x380] sm:$0xff]
  %v158 = vld [vmem:[%s1 + $0x388] sm:$0xff]
  %v159 = vld [vmem:[%s1 + $0x390] sm:$0xff]
  %v160 = vld [vmem:[%s1 + $0x398] sm:$0xff]
  %v161 = vld [vmem:[%s1 + $0x3a0] sm:$0xff]
  %v162 = vld [vmem:[%s1 + $0x3a8] sm:$0xff]
  %v163 = vld [vmem:[%s1 + $0x3b0] sm:$0xff]
  %v164 = vld [vmem:[%s1 + $0x3b8] sm:$0xff]
  %v165 = vld [vmem:[%s1 + $0x3c0] sm:$0xff]
  %v166 = vld [vmem:[%s1 + $0x3c8] sm:$0xff]
  %v167 = vld [vmem:[%s1 + $0x3d0] sm:$0xff]
  %v168 = vld [vmem:[%s1 + $0x3d8] sm:$0xff]
  %v169 = vld [vmem:[%s1 + $0x3e0] sm:$0xff]
  %v170 = vld [vmem:[%s1 + $0x3e8] sm:$0xff]
  %v171 = vld [vmem:[%s1 + $0x3f0] sm:$0xff]
  %v172 = vld [vmem:[%s1 + $0x3f8] sm:$0xff]
  %v173 = vld [vmem:[%s1 + $0x400] sm:$0xff]
  %v174 = vld [vmem:[%s1 + $0x408] sm:$0xff]
  %v175 = vld [vmem:[%s1 + $0x410] sm:$0xff]
  %v176 = vld [vmem:[%s1 + $0x418] sm:$0xff]
  %v177 = vld [vmem:[%s1 + $0x420] sm:$0xff]
  %v178 = vld [vmem:[%s1 + $0x428] sm:$0xff]
  %v179 = vld [vmem:[%s1 + $0x430] sm:$0xff]
  %v180 = vld [vmem:[%s1 + $0x438] sm:$0xff]
  %v181 = vld [vmem:[%s1 + $0x440] sm:$0xff]
  %v182 = vld [vmem:[%s1 + $0x448] sm:$0xff]
  %v183 = vld [vmem:[%s1 + $0x450] sm:$0xff]
  %v184 = vld [vmem:[%s1 + $0x458] sm:$0xff]
  %v185 = vld [vmem:[%s1 + $0x460] sm:$0xff]
  %v186 = vld [vmem:[%s1 + $0x468] sm:$0xff]
  %v187 = vld [vmem:[%s1 + $0x470] sm:$0xff]
  %v188 = vld [vmem:[%s1 + $0x478] sm:$0xff]
  %v189 = vld [vmem:[%s1 + $0x480] sm:$0xff]
  %v190 = vld [vmem:[%s1 + $0x488] sm:$0xff]
  %v191 = vld [vmem:[%s1 + $0x490] sm:$0xff]
  %v192 = vld [vmem:[%s1 + $0x498] sm:$0xff]
  %v193 = vld [vmem:[%s1 + $0x4a0] sm:$0xff]
  %v194 = vld [vmem:[%s1 + $0x4a8] sm:$0xff]
  %v195 = vld [vmem:[%s1 + $0x4b0] sm:$0xff]
  %v196 = vld [vmem:[%s1 + $0x4b8] sm:$0xff]
  %v197 = vld [vmem:[%s1 + $0x4c0] sm:$0xff]
  %v198 = vld [vmem:[%s1 + $0x4c8] sm:$0xff]
  %v199 = vld [vmem:[%s1 + $0x4d0] sm:$0xff]
  %v200 = vld [vmem:[%s1 + $0x4d8] sm:$0xff]
  %v201 = vld [vmem:[%s1 + $0x4e0] sm:$0xff]
  %v202 = vld [vmem:[%s1 + $0x4e8] sm:$0xff]
  %v203 = vld [vmem:[%s1 + $0x4f0] sm:$0xff]
  %v204 = vld [vmem:[%s1 + $0x4f8] sm:$0xff]
  %v205 = vld [vmem:[%s1 + $0x500] sm:$0xff]
  %v206 = vld [vmem:[%s1 + $0x508] sm:$0xff]
  %v207 = vld [vmem:[%s1 + $0x510] sm:$0xff]
  %v208 = vld [vmem:[%s1 + $0x518] sm:$0xff]
  %v209 = vld [vmem:[%s1 + $0x520] sm:$0xff]
  %v210 = vld [vmem:[%s1 + $0x528] sm:$0xff]
  %v211 = vld [vmem:[%s1 + $0x530] sm:$0xff]
  %v212 = vld [vmem:[%s1 + $0x538] sm:$0xff]
  %v213 = vld [vmem:[%s1 + $0x540] sm:$0xff]
  %v214 = vld [vmem:[%s1 + $0x548] sm:$0xff]
  %v215 = vld [vmem:[%s1 + $0x550] sm:$0xff]
  %v216 = vld [vmem:[%s1 + $0x558] sm:$0xff]
  %v217 = vld [vmem:[%s1 + $0x560] sm:$0xff]
  %v218 = vld [vmem:[%s1 + $0x568] sm:$0xff]
  %v219 = vld [vmem:[%s1 + $0x570] sm:$0xff]
  %v220 = vld [vmem:[%s1 + $0x578] sm:$0xff]
  %v221 = vld [vmem:[%s1 + $0x580] sm:$0xff]
  %v222 = vld [vmem:[%s1 + $0x588] sm:$0xff]
  %v223 = vld [vmem:[%s1 + $0x590] sm:$0xff]
  %v224 = vld [vmem:[%s1 + $0x598] sm:$0xff]
  %v225 = vld [vmem:[%s1 + $0x5a0] sm:$0xff]
  %v226 = vld [vmem:[%s1 + $0x5a8] sm:$0xff]
  %v227 = vld [vmem:[%s1 + $0x5b0] sm:$0xff]
  %v228 = vld [vmem:[%s1 + $0x5b8] sm:$0xff]
  %v229 = vld [vmem:[%s1 + $0x5c0] sm:$0xff]
  %v230 = vld [vmem:[%s1 + $0x5c8] sm:$0xff]
  %v231 = vld [vmem:[%s1 + $0x5d0] sm:$0xff]
  %v232 = vld [vmem:[%s1 + $0x5d8] sm:$0xff]
  %v233 = vld [vmem:[%s1 + $0x5e0] sm:$0xff]
  %v234 = vld [vmem:[%s1 + $0x5e8] sm:$0xff]
  %v235 = vld [vmem:[%s1 + $0x5f0] sm:$0xff]
  %v236 = vld [vmem:[%s1 + $0x5f8] sm:$0xff]
  %v237 = vld [vmem:[%s1 + $0x600] sm:$0xff]
  %v238 = vld [vmem:[%s1 + $0x608] sm:$0xff]
  %v239 = vld [vmem:[%s1 + $0x610] sm:$0xff]
  %v240 = vld [vmem:[%s1 + $0x618] sm:$0xff]
  %v241 = vld [vmem:[%s1 + $0x620] sm:$0xff]
  %v242 = vld [vmem:[%s1 + $0x628] sm:$0xff]
  %v243 = vld [vmem:[%s1 + $0x630] sm:$0xff]
  %v244 = vld [vmem:[%s1 + $0x638] sm:$0xff]
  %v245 = vld [vmem:[%s1 + $0x640] sm:$0xff]
  %v246 = vld [vmem:[%s1 + $0x648] sm:$0xff]
  %v247 = vld [vmem:[%s1 + $0x650] sm:$0xff]
  %v248 = vld [vmem:[%s1 + $0x658] sm:$0xff]
  %v249 = vld [vmem:[%s1 + $0x660] sm:$0xff]
  %v250 = vld [vmem:[%s1 + $0x668] sm:$0xff]
  %v251 = vld [vmem:[%s1 + $0x670] sm:$0xff]
  %v252 = vld [vmem:[%s1 + $0x678] sm:$0xff]
  %v253 = vld [vmem:[%s1 + $0x680] sm:$0xff]
  %v254 = vld [vmem:[%s1 + $0x688] sm:$0xff]
  %v255 = vld [vmem:[%s1 + $0x690] sm:$0xff]
  %v256 = vld [vmem:[%s1 + $0x698] sm:$0xff]
  %v257 = vld [vmem:[%s1 + $0x6a0] sm:$0xff]
  %v258 = vld [vmem:[%s1 + $0x6a8] sm:$0xff]
  %v259 = vld [vmem:[%s1 + $0x6b0] sm:$0xff]
  %v260 = vld [vmem:[%s1 + $0x6b8] sm:$0xff]
  %v261 = vld [vmem:[%s1 + $0x6c0] sm:$0xff]
  %v262 = vld [vmem:[%s1 + $0x6c8] sm:$0xff]
  %v263 = vld [vmem:[%s1 + $0x6d0] sm:$0xff]
  %v264 = vld [vmem:[%s1 + $0x6d8] sm:$0xff]
  %v265 = vld [vmem:[%s1 + $0x6e0] sm:$0xff]
  %v266 = vld [vmem:[%s1 + $0x6e8] sm:$0xff]
  %v267 = vld [vmem:[%s1 + $0x6f0] sm:$0xff]
  %v268 = vld [vmem:[%s1 + $0x6f8] sm:$0xff]
  %v269 = vld [vmem:[%s1 + $0x700] sm:$0xff]
  %v270 = vld [vmem:[%s1 + $0x708] sm:$0xff]
  %v271 = vld [vmem:[%s1 + $0x710] sm:$0xff]
  %v272 = vld [vmem:[%s1 + $0x718] sm:$0xff]
  %v273 = vld [vmem:[%s1 + $0x720] sm:$0xff]
  %v274 = vld [vmem:[%s1 + $0x728] sm:$0xff]
  %v275 = vld [vmem:[%s1 + $0x730] sm:$0xff]
  %v276 = vld [vmem:[%s1 + $0x738] sm:$0xff]
  %v277 = vld [vmem:[%s1 + $0x740] sm:$0xff]
  %v278 = vld [vmem:[%s1 + $0x748] sm:$0xff]
  %v279 = vld [vmem:[%s1 + $0x750] sm:$0xff]
  %v280 = vld [vmem:[%s1 + $0x758] sm:$0xff]
  %v281 = vld [vmem:[%s1 + $0x760] sm:$0xff]
  %v282 = vld [vmem:[%s1 + $0x768] sm:$0xff]
  %v283 = vld [vmem:[%s1 + $0x770] sm:$0xff]
  %v284 = vld [vmem:[%s1 + $0x778] sm:$0xff]
  %v285 = vld [vmem:[%s1 + $0x780] sm:$0xff]
  %v286 = vld [vmem:[%s1 + $0x788] sm:$0xff]
  %v287 = vld [vmem:[%s1 + $0x790] sm:$0xff]
  %v288 = vld [vmem:[%s1 + $0x798] sm:$0xff]
  %v289 = vld [vmem:[%s1 + $0x7a0] sm:$0xff]
  %v290 = vld [vmem:[%s1 + $0x7a8] sm:$0xff]
  %v291 = vld [vmem:[%s1 + $0x7b0] sm:$0xff]
  %v292 = vld [vmem:[%s1 + $0x7b8] sm:$0xff]
  %v293 = vld [vmem:[%s1 + $0x7c0] sm:$0xff]
  %v294 = vld [vmem:[%s1 + $0x7c8] sm:$0xff]
  %v295 = vld [vmem:[%s1 + $0x7d0] sm:$0xff]
  %v296 = vld [vmem:[%s1 + $0x7d8] sm:$0xff]
  %v297 = vld [vmem:[%s1 + $0x7e0] sm:$0xff]
  %v298 = vld [vmem:[%s1 + $0x7e8] sm:$0xff]
  %v299 = vld [vmem:[%s1 + $0x7f0] sm:$0xff]
  %v300 = vld [vmem:[%s1 + $0x7f8] sm:$0xff]
  %v301 = vld [vmem:[%s1 + $0x800] sm:$0xff]
  %v302 = vld [vmem:[%s1 + $0x808] sm:$0xff]
  %v303 = vld [vmem:[%s1 + $0x810] sm:$0xff]
  %v304 = vld [vmem:[%s1 + $0x818] sm:$0xff]
  %v305 = vld [vmem:[%s1 + $0x820] sm:$0xff]
  %v306 = vld [vmem:[%s1 + $0x828] sm:$0xff]
  %v307 = vld [vmem:[%s1 + $0x830] sm:$0xff]
  %v308 = vld [vmem:[%s1 + $0x838] sm:$0xff]
  %v309 = vld [vmem:[%s1 + $0x840] sm:$0xff]
  %v310 = vld [vmem:[%s1 + $0x848] sm:$0xff]
  %v311 = vld [vmem:[%s1 + $0x850] sm:$0xff]
  %v312 = vld [vmem:[%s1 + $0x858] sm:$0xff]
  %v313 = vld [vmem:[%s1 + $0x860] sm:$0xff]
  %v314 = vld [vmem:[%s1 + $0x868] sm:$0xff]
  %v315 = vld [vmem:[%s1 + $0x870] sm:$0xff]
  %v316 = vld [vmem:[%s1 + $0x878] sm:$0xff]
  %v317 = vld [vmem:[%s1 + $0x880] sm:$0xff]
  %v318 = vld [vmem:[%s1 + $0x888] sm:$0xff]
  %v319 = vld [vmem:[%s1 + $0x890] sm:$0xff]
  %v320 = vld [vmem:[%s1 + $0x898] sm:$0xff]
  %v321 = vld [vmem:[%s1 + $0x8a0] sm:$0xff]
  %v322 = vld [vmem:[%s1 + $0x8a8] sm:$0xff]
  %v323 = vld [vmem:[%s1 + $0x8b0] sm:$0xff]
  %v324 = vld [vmem:[%s1 + $0x8b8] sm:$0xff]
  %v325 = vld [vmem:[%s1 + $0x8c0] sm:$0xff]
  %v326 = vld [vmem:[%s1 + $0x8c8] sm:$0xff]
  %v327 = vld [vmem:[%s1 + $0x8d0] sm:$0xff]
  %v328 = vld [vmem:[%s1 + $0x8d8] sm:$0xff]
  %v329 = vld [vmem:[%s1 + $0x8e0] sm:$0xff]
  %v330 = vld [vmem:[%s1 + $0x8e8] sm:$0xff]
  %v331 = vld [vmem:[%s1 + $0x8f0] sm:$0xff]
  %v332 = vld [vmem:[%s1 + $0x8f8] sm:$0xff]
  %v333 = vld [vmem:[%s1 + $0x900] sm:$0xff]
  %v334 = vld [vmem:[%s1 + $0x908] sm:$0xff]
  %v335 = vld [vmem:[%s1 + $0x910] sm:$0xff]
  %v336 = vld [vmem:[%s1 + $0x918] sm:$0xff]
  %v337 = vld [vmem:[%s1 + $0x920] sm:$0xff]
  %v338 = vld [vmem:[%s1 + $0x928] sm:$0xff]
  %v339 = vld [vmem:[%s1 + $0x930] sm:$0xff]
  %v340 = vld [vmem:[%s1 + $0x938] sm:$0xff]
  %v341 = vld [vmem:[%s1 + $0x940] sm:$0xff]
  %v342 = vld [vmem:[%s1 + $0x948] sm:$0xff]
  %v343 = vld [vmem:[%s1 + $0x950] sm:$0xff]
  %v344 = vld [vmem:[%s1 + $0x958] sm:$0xff]
  %v345 = vld [vmem:[%s1 + $0x960] sm:$0xff]
  %v346 = vld [vmem:[%s1 + $0x968] sm:$0xff]
  %v347 = vld [vmem:[%s1 + $0x970] sm:$0xff]
  %v348 = vld [vmem:[%s1 + $0x978] sm:$0xff]
  %v349 = vld [vmem:[%s1 + $0x980] sm:$0xff]
  %v350 = vld [vmem:[%s1 + $0x988] sm:$0xff]
  %v351 = vld [vmem:[%s1 + $0x990] sm:$0xff]
  %v352 = vld [vmem:[%s1 + $0x998] sm:$0xff]
  %v353 = vld [vmem:[%s1 + $0x9a0] sm:$0xff]
  %v354 = vld [vmem:[%s1 + $0x9a8] sm:$0xff]
  %v355 = vld [vmem:[%s1 + $0x9b0] sm:$0xff]
  %v356 = vld [vmem:[%s1 + $0x9b8] sm:$0xff]
  %v357 = vld [vmem:[%s1 + $0x9c0] sm:$0xff]
  %v358 = vld [vmem:[%s1 + $0x9c8] sm:$0xff]
  %v359 = vld [vmem:[%s1 + $0x9d0] sm:$0xff]
  %v360 = vld [vmem:[%s1 + $0x9d8] sm:$0xff]
  %v361 = vld [vmem:[%s1 + $0x9e0] sm:$0xff]
  %v362 = vld [vmem:[%s1 + $0x9e8] sm:$0xff]
  %v363 = vld [vmem:[%s1 + $0x9f0] sm:$0xff]
  %v364 = vld [vmem:[%s1 + $0x9f8] sm:$0xff]
  %v365 = vld [vmem:[%s1 + $0xa00] sm:$0xff]
  %v366 = vld [vmem:[%s1 + $0xa08] sm:$0xff]
  %v367 = vld [vmem:[%s1 + $0xa10] sm:$0xff]
  %v368 = vld [vmem:[%s1 + $0xa18] sm:$0xff]
  %v369 = vld [vmem:[%s1 + $0xa20] sm:$0xff]
  %v370 = vld [vmem:[%s1 + $0xa28] sm:$0xff]
  %v371 = vld [vmem:[%s1 + $0xa30] sm:$0xff]
  %v372 = vld [vmem:[%s1 + $0xa38] sm:$0xff]
  %v373 = vld [vmem:[%s1 + $0xa40] sm:$0xff]
  %v374 = vld [vmem:[%s1 + $0xa48] sm:$0xff]
  %v375 = vld [vmem:[%s1 + $0xa50] sm:$0xff]
  %v376 = vld [vmem:[%s1 + $0xa58] sm:$0xff]
  %v377 = vld [vmem:[%s1 + $0xa60] sm:$0xff]
  %v378 = vld [vmem:[%s1 + $0xa68] sm:$0xff]
  %v379 = vld [vmem:[%s1 + $0xa70] sm:$0xff]
  %v380 = vld [vmem:[%s1 + $0xa78] sm:$0xff]
  %v381 = vld [vmem:[%s1 + $0xa80] sm:$0xff]
  %v382 = vld [vmem:[%s1 + $0xa88] sm:$0xff]
  %v383 = vld [vmem:[%s1 + $0xa90] sm:$0xff]
  %v384 = vld [vmem:[%s1 + $0xa98] sm:$0xff]
  %v385 = vld [vmem:[%s1 + $0xaa0] sm:$0xff]
  %v386 = vld [vmem:[%s1 + $0xaa8] sm:$0xff]
  %v387 = vld [vmem:[%s1 + $0xab0] sm:$0xff]
  %v388 = vld [vmem:[%s1 + $0xab8] sm:$0xff]
  %v389 = vld [vmem:[%s1 + $0xac0] sm:$0xff]
  %v390 = vld [vmem:[%s1 + $0xac8] sm:$0xff]
  %v391 = vld [vmem:[%s1 + $0xad0] sm:$0xff]
  %v392 = vld [vmem:[%s1 + $0xad8] sm:$0xff]
  %v393 = vld [vmem:[%s1 + $0xae0] sm:$0xff]
  %v394 = vld [vmem:[%s1 + $0xae8] sm:$0xff]
  %v395 = vld [vmem:[%s1 + $0xaf0] sm:$0xff]
  %v396 = vld [vmem:[%s1 + $0xaf8] sm:$0xff]
  %v397 = vld [vmem:[%s1 + $0xb00] sm:$0xff]
  %v398 = vld [vmem:[%s1 + $0xb08] sm:$0xff]
  %v399 = vld [vmem:[%s1 + $0xb10] sm:$0xff]
  %v400 = vld [vmem:[%s1 + $0xb18] sm:$0xff]
  %v401 = vld [vmem:[%s1 + $0xb20] sm:$0xff]
  %v402 = vld [vmem:[%s1 + $0xb28] sm:$0xff]
  %v403 = vld [vmem:[%s1 + $0xb30] sm:$0xff]
  %v404 = vld [vmem:[%s1 + $0xb38] sm:$0xff]
  %v405 = vld [vmem:[%s1 + $0xb40] sm:$0xff]
  %v406 = vld [vmem:[%s1 + $0xb48] sm:$0xff]
  %v407 = vld [vmem:[%s1 + $0xb50] sm:$0xff]
  %v408 = vld [vmem:[%s1 + $0xb58] sm:$0xff]
  %v409 = vld [vmem:[%s1 + $0xb60] sm:$0xff]
  %v410 = vld [vmem:[%s1 + $0xb68] sm:$0xff]
  %v411 = vld [vmem:[%s1 + $0xb70] sm:$0xff]
  %v412 = vld [vmem:[%s1 + $0xb78] sm:$0xff]
  %v413 = vld [vmem:[%s1 + $0xb80] sm:$0xff]
  %v414 = vld [vmem:[%s1 + $0xb88] sm:$0xff]
  %v415 = vld [vmem:[%s1 + $0xb90] sm:$0xff]
  %v416 = vld [vmem:[%s1 + $0xb98] sm:$0xff]
  %v417 = vld [vmem:[%s1 + $0xba0] sm:$0xff]
  %v418 = vld [vmem:[%s1 + $0xba8] sm:$0xff]
  %v419 = vld [vmem:[%s1 + $0xbb0] sm:$0xff]
  %v420 = vld [vmem:[%s1 + $0xbb8] sm:$0xff]
  %v421 = vld [vmem:[%s1 + $0xbc0] sm:$0xff]
  %v422 = vld [vmem:[%s1 + $0xbc8] sm:$0xff]
  %v423 = vld [vmem:[%s1 + $0xbd0] sm:$0xff]
  %v424 = vld [vmem:[%s1 + $0xbd8] sm:$0xff]
  %v425 = vld [vmem:[%s1 + $0xbe0] sm:$0xff]
  %v426 = vld [vmem:[%s1 + $0xbe8] sm:$0xff]
  %v427 = vld [vmem:[%s1 + $0xbf0] sm:$0xff]
  %v428 = vld [vmem:[%s1 + $0xbf8] sm:$0xff]
  %v429 = vld [vmem:[%s1 + $0xc00] sm:$0xff]
  %v430 = vld [vmem:[%s1 + $0xc08] sm:$0xff]
  %v431 = vld [vmem:[%s1 + $0xc10] sm:$0xff]
  %v432 = vld [vmem:[%s1 + $0xc18] sm:$0xff]
  %v433 = vld [vmem:[%s1 + $0xc20] sm:$0xff]
  %v434 = vld [vmem:[%s1 + $0xc28] sm:$0xff]
  %v435 = vld [vmem:[%s1 + $0xc30] sm:$0xff]
  %v436 = vld [vmem:[%s1 + $0xc38] sm:$0xff]
  %v437 = vld [vmem:[%s1 + $0xc40] sm:$0xff]
  %v438 = vld [vmem:[%s1 + $0xc48] sm:$0xff]
  %v439 = vld [vmem:[%s1 + $0xc50] sm:$0xff]
  %v440 = vld [vmem:[%s1 + $0xc58] sm:$0xff]
  %v441 = vld [vmem:[%s1 + $0xc60] sm:$0xff]
  %v442 = vld [vmem:[%s1 + $0xc68] sm:$0xff]
  %v443 = vld [vmem:[%s1 + $0xc70] sm:$0xff]
  %v444 = vld [vmem:[%s1 + $0xc78] sm:$0xff]
  %v445 = vld [vmem:[%s1 + $0xc80] sm:$0xff]
  %v446 = vld [vmem:[%s1 + $0xc88] sm:$0xff]
  %v447 = vld [vmem:[%s1 + $0xc90] sm:$0xff]
  %v448 = vld [vmem:[%s1 + $0xc98] sm:$0xff]
  %v449 = vld [vmem:[%s1 + $0xca0] sm:$0xff]
  %v450 = vld [vmem:[%s1 + $0xca8] sm:$0xff]
  %v451 = vld [vmem:[%s1 + $0xcb0] sm:$0xff]
  %v452 = vld [vmem:[%s1 + $0xcb8] sm:$0xff]
  %v453 = vld [vmem:[%s1 + $0xcc0] sm:$0xff]
  %v454 = vld [vmem:[%s1 + $0xcc8] sm:$0xff]
  %v455 = vld [vmem:[%s1 + $0xcd0] sm:$0xff]
  %v456 = vld [vmem:[%s1 + $0xcd8] sm:$0xff]
  %v457 = vld [vmem:[%s1 + $0xce0] sm:$0xff]
  %v458 = vld [vmem:[%s1 + $0xce8] sm:$0xff]
  %v459 = vld [vmem:[%s1 + $0xcf0] sm:$0xff]
  %v460 = vld [vmem:[%s1 + $0xcf8] sm:$0xff]
  %v461 = vld [vmem:[%s1 + $0xd00] sm:$0xff]
  %v462 = vld [vmem:[%s1 + $0xd08] sm:$0xff]
  %v463 = vld [vmem:[%s1 + $0xd10] sm:$0xff]
  %v464 = vld [vmem:[%s1 + $0xd18] sm:$0xff]
  %v465 = vld [vmem:[%s1 + $0xd20] sm:$0xff]
  %v466 = vld [vmem:[%s1 + $0xd28] sm:$0xff]
  %v467 = vld [vmem:[%s1 + $0xd30] sm:$0xff]
  %v468 = vld [vmem:[%s1 + $0xd38] sm:$0xff]
  %v469 = vld [vmem:[%s1 + $0xd40] sm:$0xff]
  %v470 = vld [vmem:[%s1 + $0xd48] sm:$0xff]
  %v471 = vld [vmem:[%s1 + $0xd50] sm:$0xff]
  %v472 = vld [vmem:[%s1 + $0xd58] sm:$0xff]
  %v473 = vld [vmem:[%s1 + $0xd60] sm:$0xff]
  %v474 = vld [vmem:[%s1 + $0xd68] sm:$0xff]
  %v475 = vld [vmem:[%s1 + $0xd70] sm:$0xff]
  %v476 = vld [vmem:[%s1 + $0xd78] sm:$0xff]
  %v477 = vld [vmem:[%s1 + $0xd80] sm:$0xff]
  %v478 = vld [vmem:[%s1 + $0xd88] sm:$0xff]
  %v479 = vld [vmem:[%s1 + $0xd90] sm:$0xff]
  %v480 = vld [vmem:[%s1 + $0xd98] sm:$0xff]
  %v481 = vld [vmem:[%s1 + $0xda0] sm:$0xff]
  %v482 = vld [vmem:[%s1 + $0xda8] sm:$0xff]
  %v483 = vld [vmem:[%s1 + $0xdb0] sm:$0xff]
  %v484 = vld [vmem:[%s1 + $0xdb8] sm:$0xff]
  %v485 = vld [vmem:[%s1 + $0xdc0] sm:$0xff]
  %v486 = vld [vmem:[%s1 + $0xdc8] sm:$0xff]
  %v487 = vld [vmem:[%s1 + $0xdd0] sm:$0xff]
  %v488 = vld [vmem:[%s1 + $0xdd8] sm:$0xff]
  %v489 = vld [vmem:[%s1 + $0xde0] sm:$0xff]
  %v490 = vld [vmem:[%s1 + $0xde8] sm:$0xff]
  %v491 = vld [vmem:[%s1 + $0xdf0] sm:$0xff]
  %v492 = vld [vmem:[%s1 + $0xdf8] sm:$0xff]
  %v493 = vld [vmem:[%s1 + $0xe00] sm:$0xff]
  %v494 = vld [vmem:[%s1 + $0xe08] sm:$0xff]
  %v495 = vld [vmem:[%s1 + $0xe10] sm:$0xff]
  %v496 = vld [vmem:[%s1 + $0xe18] sm:$0xff]
  %v497 = vld [vmem:[%s1 + $0xe20] sm:$0xff]
  %v498 = vld [vmem:[%s1 + $0xe28] sm:$0xff]
  %v499 = vld [vmem:[%s1 + $0xe30] sm:$0xff]
  %v500 = vld [vmem:[%s1 + $0xe38] sm:$0xff]
  %v501 = vld [vmem:[%s1 + $0xe40] sm:$0xff]
  %v502 = vld [vmem:[%s1 + $0xe48] sm:$0xff]
  %v503 = vld [vmem:[%s1 + $0xe50] sm:$0xff]
  %v504 = vld [vmem:[%s1 + $0xe58] sm:$0xff]
  %v505 = vld [vmem:[%s1 + $0xe60] sm:$0xff]
  %v506 = vld [vmem:[%s1 + $0xe68] sm:$0xff]
  %v507 = vld [vmem:[%s1 + $0xe70] sm:$0xff]
  %v508 = vld [vmem:[%s1 + $0xe78] sm:$0xff]
  %v509 = vld [vmem:[%s1 + $0xe80] sm:$0xff]
  %v510 = vld [vmem:[%s1 + $0xe88] sm:$0xff]
  %v511 = vld [vmem:[%s1 + $0xe90] sm:$0xff]
  %v512 = vld [vmem:[%s1 + $0xe98] sm:$0xff]
  %v513 = vld [vmem:[%s1 + $0xea0] sm:$0xff]
  %v514 = vld [vmem:[%s1 + $0xea8] sm:$0xff]
  %v515 = vld [vmem:[%s1 + $0xeb0] sm:$0xff]
  %v516 = vld [vmem:[%s1 + $0xeb8] sm:$0xff]
  %v517 = vld [vmem:[%s1 + $0xec0] sm:$0xff]
  %v518 = vld [vmem:[%s1 + $0xec8] sm:$0xff]
  %v519 = vld [vmem:[%s1 + $0xed0] sm:$0xff]
  %v520 = vld [vmem:[%s1 + $0xed8] sm:$0xff]
  %v521 = vld [vmem:[%s1 + $0xee0] sm:$0xff]
  %v522 = vld [vmem:[%s1 + $0xee8] sm:$0xff]
  %v523 = vld [vmem:[%s1 + $0xef0] sm:$0xff]
  %v524 = vld [vmem:[%s1 + $0xef8] sm:$0xff]
  %v525 = vld [vmem:[%s1 + $0xf00] sm:$0xff]
  %v526 = vld [vmem:[%s1 + $0xf08] sm:$0xff]
  %v527 = vld [vmem:[%s1 + $0xf10] sm:$0xff]
  %v528 = vld [vmem:[%s1 + $0xf18] sm:$0xff]
  %v529 = vld [vmem:[%s1 + $0xf20] sm:$0xff]
  %v530 = vld [vmem:[%s1 + $0xf28] sm:$0xff]
  %v531 = vld [vmem:[%s1 + $0xf30] sm:$0xff]
  %v532 = vld [vmem:[%s1 + $0xf38] sm:$0xff]
  %v533 = vld [vmem:[%s1 + $0xf40] sm:$0xff]
  %v534 = vld [vmem:[%s1 + $0xf48] sm:$0xff]
  %v535 = vld [vmem:[%s1 + $0xf50] sm:$0xff]
  %v536 = vld [vmem:[%s1 + $0xf58] sm:$0xff]
  %v537 = vld [vmem:[%s1 + $0xf60] sm:$0xff]
  %v538 = vld [vmem:[%s1 + $0xf68] sm:$0xff]
  %v539 = vld [vmem:[%s1 + $0xf70] sm:$0xff]
  %v540 = vld [vmem:[%s1 + $0xf78] sm:$0xff]
  %v541 = vld [vmem:[%s2] sm:$0x1]
  %v543 = vlaneseq
  %v544 = vshrl.u32 %v543, 7
  %v545 = vsub.s32 0, %v544
  %v546 = vrot.slane %v541, %v545
  %548 = vmatprep.subr.mxu0 0.0
  %549 = vmatpush1.msra.mxu0 %v45
  %550 = vmatprep.subr.mxu0 0.0
  %551 = vmatpush1.msra.mxu0 %v46
  %552 = vmatprep.subr.mxu0 0.0
  %553 = vmatpush1.msra.mxu0 %v47
  %554 = vmatprep.subr.mxu0 0.0
  %555 = vmatpush1.msra.mxu0 %v48
  %556 = vmatprep.subr.mxu0 0.0
  %557 = vmatpush1.msra.mxu0 %v49
  %558 = vmatprep.subr.mxu0 0.0
  %559 = vmatpush1.msra.mxu0 %v50
  %560 = vmatprep.subr.mxu0 0.0
  %561 = vmatpush1.msra.mxu0 %v51
  %562 = vmatprep.subr.mxu0 0.0
  %563 = vmatpush1.msra.mxu0 %v52
  %564 = vmatprep.subr.mxu0 0.0
  %565 = vmatpush1.msra.mxu0 %v53
  %566 = vmatprep.subr.mxu0 0.0
  %567 = vmatpush1.msra.mxu0 %v54
  %568 = vmatprep.subr.mxu0 0.0
  %569 = vmatpush1.msra.mxu0 %v55
  %570 = vmatprep.subr.mxu0 0.0
  %571 = vmatpush1.msra.mxu0 %v56
  %572 = vmatprep.subr.mxu0 0.0
  %573 = vmatpush1.msra.mxu0 %v57
  %574 = vmatprep.subr.mxu0 0.0
  %575 = vmatpush1.msra.mxu0 %v58
  %576 = vmatprep.subr.mxu0 0.0
  %577 = vmatpush1.msra.mxu0 %v59
  %578 = vmatprep.subr.mxu0 0.0
  %579 = vmatpush1.msra.mxu0 %v60
  %580 = vmatprep.subr.mxu0 0.0
  %581 = vmatpush1.msra.mxu0 %v61
  %582 = vmatprep.subr.mxu0 0.0
  %583 = vmatpush1.msra.mxu0 %v62
  %584 = vmatprep.subr.mxu0 0.0
  %585 = vmatpush1.msra.mxu0 %v63
  %586 = vmatprep.subr.mxu0 0.0
  %587 = vmatpush1.msra.mxu0 %v64
  %588 = vmatprep.subr.mxu0 0.0
  %589 = vmatpush1.msra.mxu0 %v65
  %590 = vmatprep.subr.mxu0 0.0
  %591 = vmatpush1.msra.mxu0 %v66
  %592 = vmatprep.subr.mxu0 0.0
  %593 = vmatpush1.msra.mxu0 %v67
  %594 = vmatprep.subr.mxu0 0.0
  %595 = vmatpush1.msra.mxu0 %v68
  %596 = vmatprep.subr.mxu0 0.0
  %597 = vmatpush1.msra.mxu0 %v69
  %598 = vmatprep.subr.mxu0 0.0
  %599 = vmatpush1.msra.mxu0 %v70
  %600 = vmatprep.subr.mxu0 0.0
  %601 = vmatpush1.msra.mxu0 %v71
  %602 = vmatprep.subr.mxu0 0.0
  %603 = vmatpush1.msra.mxu0 %v72
  %604 = vmatprep.subr.mxu0 0.0
  %605 = vmatpush1.msra.mxu0 %v73
  %606 = vmatprep.subr.mxu0 0.0
  %607 = vmatpush1.msra.mxu0 %v74
  %608 = vmatprep.subr.mxu0 0.0
  %609 = vmatpush1.msra.mxu0 %v75
  %610 = vmatprep.subr.mxu0 0.0
  %611 = vmatpush1.msra.mxu0 %v76
  %612 = vmatprep.mubr.f32.mxu0 %v15
  %613 = vmatmul.mubr.f32.gmra.mrb[0].mxu0 %v14
  %v614 = vpop.f32.mrb[0].mxu0
  %v615 = vadd.f32 %v546, %v614
  %v616 = vpop.f32.mrb[0].mxu0
  %617 = vdwg.mxu0
  %618 = vmatprep.subr.mxu0 0.0
  %619 = vmatpush1.msra.mxu0 %v77
  %620 = vmatprep.subr.mxu0 0.0
  %621 = vmatpush1.msra.mxu0 %v78
  %622 = vmatprep.subr.mxu0 0.0
  %623 = vmatpush1.msra.mxu0 %v79
  %624 = vmatprep.subr.mxu0 0.0
  %625 = vmatpush1.msra.mxu0 %v80
  %626 = vmatprep.subr.mxu0 0.0
  %627 = vmatpush1.msra.mxu0 %v81
  %628 = vmatprep.subr.mxu0 0.0
  %629 = vmatpush1.msra.mxu0 %v82
  %630 = vmatprep.subr.mxu0 0.0
  %631 = vmatpush1.msra.mxu0 %v83
  %632 = vmatprep.subr.mxu0 0.0
  %633 = vmatpush1.msra.mxu0 %v84
  %634 = vmatprep.subr.mxu0 0.0
  %635 = vmatpush1.msra.mxu0 %v85
  %636 = vmatprep.subr.mxu0 0.0
  %637 = vmatpush1.msra.mxu0 %v86
  %638 = vmatprep.subr.mxu0 0.0
  %639 = vmatpush1.msra.mxu0 %v87
  %640 = vmatprep.subr.mxu0 0.0
  %641 = vmatpush1.msra.mxu0 %v88
  %642 = vmatprep.subr.mxu0 0.0
  %643 = vmatpush1.msra.mxu0 %v89
  %644 = vmatprep.subr.mxu0 0.0
  %645 = vmatpush1.msra.mxu0 %v90
  %646 = vmatprep.subr.mxu0 0.0
  %647 = vmatpush1.msra.mxu0 %v91
  %648 = vmatprep.subr.mxu0 0.0
  %649 = vmatpush1.msra.mxu0 %v92
  %650 = vmatprep.subr.mxu0 0.0
  %651 = vmatpush1.msra.mxu0 %v93
  %652 = vmatprep.subr.mxu0 0.0
  %653 = vmatpush1.msra.mxu0 %v94
  %654 = vmatprep.subr.mxu0 0.0
  %655 = vmatpush1.msra.mxu0 %v95
  %656 = vmatprep.subr.mxu0 0.0
  %657 = vmatpush1.msra.mxu0 %v96
  %658 = vmatprep.subr.mxu0 0.0
  %659 = vmatpush1.msra.mxu0 %v97
  %660 = vmatprep.subr.mxu0 0.0
  %661 = vmatpush1.msra.mxu0 %v98
  %662 = vmatprep.subr.mxu0 0.0
  %663 = vmatpush1.msra.mxu0 %v99
  %664 = vmatprep.subr.mxu0 0.0
  %665 = vmatpush1.msra.mxu0 %v100
  %666 = vmatprep.subr.mxu0 0.0
  %667 = vmatpush1.msra.mxu0 %v101
  %668 = vmatprep.subr.mxu0 0.0
  %669 = vmatpush1.msra.mxu0 %v102
  %670 = vmatprep.subr.mxu0 0.0
  %671 = vmatpush1.msra.mxu0 %v103
  %672 = vmatprep.subr.mxu0 0.0
  %673 = vmatpush1.msra.mxu0 %v104
  %674 = vmatprep.subr.mxu0 0.0
  %675 = vmatpush1.msra.mxu0 %v105
  %676 = vmatprep.subr.mxu0 0.0
  %677 = vmatpush1.msra.mxu0 %v106
  %678 = vmatprep.subr.mxu0 0.0
  %679 = vmatpush1.msra.mxu0 %v107
  %680 = vmatprep.subr.mxu0 0.0
  %681 = vmatpush1.msra.mxu0 %v108
  %682 = vmatprep.mubr.f32.mxu0 %v17
  %683 = vmatmul.mubr.f32.gmra.mrb[0].mxu0 %v16
  %v684 = vpop.f32.mrb[0].mxu0
  %v685 = vadd.f32 %v615, %v684
  %v686 = vpop.f32.mrb[0].mxu0
  %687 = vdwg.mxu0
  %688 = vmatprep.subr.mxu0 0.0
  %689 = vmatpush1.msra.mxu0 %v109
  %690 = vmatprep.subr.mxu0 0.0
  %691 = vmatpush1.msra.mxu0 %v110
  %692 = vmatprep.subr.mxu0 0.0
  %693 = vmatpush1.msra.mxu0 %v111
  %694 = vmatprep.subr.mxu0 0.0
  %695 = vmatpush1.msra.mxu0 %v112
  %696 = vmatprep.subr.mxu0 0.0
  %697 = vmatpush1.msra.mxu0 %v113
  %698 = vmatprep.subr.mxu0 0.0
  %699 = vmatpush1.msra.mxu0 %v114
  %700 = vmatprep.subr.mxu0 0.0
  %701 = vmatpush1.msra.mxu0 %v115
  %702 = vmatprep.subr.mxu0 0.0
  %703 = vmatpush1.msra.mxu0 %v116
  %704 = vmatprep.subr.mxu0 0.0
  %705 = vmatpush1.msra.mxu0 %v117
  %706 = vmatprep.subr.mxu0 0.0
  %707 = vmatpush1.msra.mxu0 %v118
  %708 = vmatprep.subr.mxu0 0.0
  %709 = vmatpush1.msra.mxu0 %v119
  %710 = vmatprep.subr.mxu0 0.0
  %711 = vmatpush1.msra.mxu0 %v120
  %712 = vmatprep.subr.mxu0 0.0
  %713 = vmatpush1.msra.mxu0 %v121
  %714 = vmatprep.subr.mxu0 0.0
  %715 = vmatpush1.msra.mxu0 %v122
  %716 = vmatprep.subr.mxu0 0.0
  %717 = vmatpush1.msra.mxu0 %v123
  %718 = vmatprep.subr.mxu0 0.0
  %719 = vmatpush1.msra.mxu0 %v124
  %720 = vmatprep.subr.mxu0 0.0
  %721 = vmatpush1.msra.mxu0 %v125
  %722 = vmatprep.subr.mxu0 0.0
  %723 = vmatpush1.msra.mxu0 %v126
  %724 = vmatprep.subr.mxu0 0.0
  %725 = vmatpush1.msra.mxu0 %v127
  %726 = vmatprep.subr.mxu0 0.0
  %727 = vmatpush1.msra.mxu0 %v128
  %728 = vmatprep.subr.mxu0 0.0
  %729 = vmatpush1.msra.mxu0 %v129
  %730 = vmatprep.subr.mxu0 0.0
  %731 = vmatpush1.msra.mxu0 %v130
  %732 = vmatprep.subr.mxu0 0.0
  %733 = vmatpush1.msra.mxu0 %v131
  %734 = vmatprep.subr.mxu0 0.0
  %735 = vmatpush1.msra.mxu0 %v132
  %736 = vmatprep.subr.mxu0 0.0
  %737 = vmatpush1.msra.mxu0 %v133
  %738 = vmatprep.subr.mxu0 0.0
  %739 = vmatpush1.msra.mxu0 %v134
  %740 = vmatprep.subr.mxu0 0.0
  %741 = vmatpush1.msra.mxu0 %v135
  %742 = vmatprep.subr.mxu0 0.0
  %743 = vmatpush1.msra.mxu0 %v136
  %744 = vmatprep.subr.mxu0 0.0
  %745 = vmatpush1.msra.mxu0 %v137
  %746 = vmatprep.subr.mxu0 0.0
  %747 = vmatpush1.msra.mxu0 %v138
  %748 = vmatprep.subr.mxu0 0.0
  %749 = vmatpush1.msra.mxu0 %v139
  %750 = vmatprep.subr.mxu0 0.0
  %751 = vmatpush1.msra.mxu0 %v140
  %752 = vmatprep.mubr.f32.mxu0 %v19
  %753 = vmatmul.mubr.f32.gmra.mrb[0].mxu0 %v18
  %v754 = vpop.f32.mrb[0].mxu0
  %v755 = vadd.f32 %v685, %v754
  %v756 = vpop.f32.mrb[0].mxu0
  %757 = vdwg.mxu0
  %758 = vmatprep.subr.mxu0 0.0
  %759 = vmatpush1.msra.mxu0 %v141
  %760 = vmatprep.subr.mxu0 0.0
  %761 = vmatpush1.msra.mxu0 %v142
  %762 = vmatprep.subr.mxu0 0.0
  %763 = vmatpush1.msra.mxu0 %v143
  %764 = vmatprep.subr.mxu0 0.0
  %765 = vmatpush1.msra.mxu0 %v144
  %766 = vmatprep.subr.mxu0 0.0
  %767 = vmatpush1.msra.mxu0 %v145
  %768 = vmatprep.subr.mxu0 0.0
  %769 = vmatpush1.msra.mxu0 %v146
  %770 = vmatprep.subr.mxu0 0.0
  %771 = vmatpush1.msra.mxu0 %v147
  %772 = vmatprep.subr.mxu0 0.0
  %773 = vmatpush1.msra.mxu0 %v148
  %774 = vmatprep.subr.mxu0 0.0
  %775 = vmatpush1.msra.mxu0 %v149
  %776 = vmatprep.subr.mxu0 0.0
  %777 = vmatpush1.msra.mxu0 %v150
  %778 = vmatprep.subr.mxu0 0.0
  %779 = vmatpush1.msra.mxu0 %v151
  %780 = vmatprep.subr.mxu0 0.0
  %781 = vmatpush1.msra.mxu0 %v152
  %782 = vmatprep.subr.mxu0 0.0
  %783 = vmatpush1.msra.mxu0 %v153
  %784 = vmatprep.subr.mxu0 0.0
  %785 = vmatpush1.msra.mxu0 %v154
  %786 = vmatprep.subr.mxu0 0.0
  %787 = vmatpush1.msra.mxu0 %v155
  %788 = vmatprep.subr.mxu0 0.0
  %789 = vmatpush1.msra.mxu0 %v156
  %790 = vmatprep.subr.mxu0 0.0
  %791 = vmatpush1.msra.mxu0 %v157
  %792 = vmatprep.subr.mxu0 0.0
  %793 = vmatpush1.msra.mxu0 %v158
  %794 = vmatprep.subr.mxu0 0.0
  %795 = vmatpush1.msra.mxu0 %v159
  %796 = vmatprep.subr.mxu0 0.0
  %797 = vmatpush1.msra.mxu0 %v160
  %798 = vmatprep.subr.mxu0 0.0
  %799 = vmatpush1.msra.mxu0 %v161
  %800 = vmatprep.subr.mxu0 0.0
  %801 = vmatpush1.msra.mxu0 %v162
  %802 = vmatprep.subr.mxu0 0.0
  %803 = vmatpush1.msra.mxu0 %v163
  %804 = vmatprep.subr.mxu0 0.0
  %805 = vmatpush1.msra.mxu0 %v164
  %806 = vmatprep.subr.mxu0 0.0
  %807 = vmatpush1.msra.mxu0 %v165
  %808 = vmatprep.subr.mxu0 0.0
  %809 = vmatpush1.msra.mxu0 %v166
  %810 = vmatprep.subr.mxu0 0.0
  %811 = vmatpush1.msra.mxu0 %v167
  %812 = vmatprep.subr.mxu0 0.0
  %813 = vmatpush1.msra.mxu0 %v168
  %814 = vmatprep.subr.mxu0 0.0
  %815 = vmatpush1.msra.mxu0 %v169
  %816 = vmatprep.subr.mxu0 0.0
  %817 = vmatpush1.msra.mxu0 %v170
  %818 = vmatprep.subr.mxu0 0.0
  %819 = vmatpush1.msra.mxu0 %v171
  %820 = vmatprep.subr.mxu0 0.0
  %821 = vmatpush1.msra.mxu0 %v172
  %822 = vmatprep.mubr.f32.mxu0 %v21
  %823 = vmatmul.mubr.f32.gmra.mrb[0].mxu0 %v20
  %v824 = vpop.f32.mrb[0].mxu0
  %v825 = vadd.f32 %v755, %v824
  %v826 = vpop.f32.mrb[0].mxu0
  %827 = vdwg.mxu0
  %828 = vmatprep.subr.mxu0 0.0
  %829 = vmatpush1.msra.mxu0 %v173
  %830 = vmatprep.subr.mxu0 0.0
  %831 = vmatpush1.msra.mxu0 %v174
  %832 = vmatprep.subr.mxu0 0.0
  %833 = vmatpush1.msra.mxu0 %v175
  %834 = vmatprep.subr.mxu0 0.0
  %835 = vmatpush1.msra.mxu0 %v176
  %836 = vmatprep.subr.mxu0 0.0
  %837 = vmatpush1.msra.mxu0 %v177
  %838 = vmatprep.subr.mxu0 0.0
  %839 = vmatpush1.msra.mxu0 %v178
  %840 = vmatprep.subr.mxu0 0.0
  %841 = vmatpush1.msra.mxu0 %v179
  %842 = vmatprep.subr.mxu0 0.0
  %843 = vmatpush1.msra.mxu0 %v180
  %844 = vmatprep.subr.mxu0 0.0
  %845 = vmatpush1.msra.mxu0 %v181
  %846 = vmatprep.subr.mxu0 0.0
  %847 = vmatpush1.msra.mxu0 %v182
  %848 = vmatprep.subr.mxu0 0.0
  %849 = vmatpush1.msra.mxu0 %v183
  %850 = vmatprep.subr.mxu0 0.0
  %851 = vmatpush1.msra.mxu0 %v184
  %852 = vmatprep.subr.mxu0 0.0
  %853 = vmatpush1.msra.mxu0 %v185
  %854 = vmatprep.subr.mxu0 0.0
  %855 = vmatpush1.msra.mxu0 %v186
  %856 = vmatprep.subr.mxu0 0.0
  %857 = vmatpush1.msra.mxu0 %v187
  %858 = vmatprep.subr.mxu0 0.0
  %859 = vmatpush1.msra.mxu0 %v188
  %860 = vmatprep.subr.mxu0 0.0
  %861 = vmatpush1.msra.mxu0 %v189
  %862 = vmatprep.subr.mxu0 0.0
  %863 = vmatpush1.msra.mxu0 %v190
  %864 = vmatprep.subr.mxu0 0.0
  %865 = vmatpush1.msra.mxu0 %v191
  %866 = vmatprep.subr.mxu0 0.0
  %867 = vmatpush1.msra.mxu0 %v192
  %868 = vmatprep.subr.mxu0 0.0
  %869 = vmatpush1.msra.mxu0 %v193
  %870 = vmatprep.subr.mxu0 0.0
  %871 = vmatpush1.msra.mxu0 %v194
  %872 = vmatprep.subr.mxu0 0.0
  %873 = vmatpush1.msra.mxu0 %v195
  %874 = vmatprep.subr.mxu0 0.0
  %875 = vmatpush1.msra.mxu0 %v196
  %876 = vmatprep.subr.mxu0 0.0
  %877 = vmatpush1.msra.mxu0 %v197
  %878 = vmatprep.subr.mxu0 0.0
  %879 = vmatpush1.msra.mxu0 %v198
  %880 = vmatprep.subr.mxu0 0.0
  %881 = vmatpush1.msra.mxu0 %v199
  %882 = vmatprep.subr.mxu0 0.0
  %883 = vmatpush1.msra.mxu0 %v200
  %884 = vmatprep.subr.mxu0 0.0
  %885 = vmatpush1.msra.mxu0 %v201
  %886 = vmatprep.subr.mxu0 0.0
  %887 = vmatpush1.msra.mxu0 %v202
  %888 = vmatprep.subr.mxu0 0.0
  %889 = vmatpush1.msra.mxu0 %v203
  %890 = vmatprep.subr.mxu0 0.0
  %891 = vmatpush1.msra.mxu0 %v204
  %892 = vmatprep.mubr.f32.mxu0 %v23
  %893 = vmatmul.mubr.f32.gmra.mrb[0].mxu0 %v22
  %v894 = vpop.f32.mrb[0].mxu0
  %v895 = vadd.f32 %v825, %v894
  %v896 = vpop.f32.mrb[0].mxu0
  %897 = vdwg.mxu0
  %898 = vmatprep.subr.mxu0 0.0
  %899 = vmatpush1.msra.mxu0 %v205
  %900 = vmatprep.subr.mxu0 0.0
  %901 = vmatpush1.msra.mxu0 %v206
  %902 = vmatprep.subr.mxu0 0.0
  %903 = vmatpush1.msra.mxu0 %v207
  %904 = vmatprep.subr.mxu0 0.0
  %905 = vmatpush1.msra.mxu0 %v208
  %906 = vmatprep.subr.mxu0 0.0
  %907 = vmatpush1.msra.mxu0 %v209
  %908 = vmatprep.subr.mxu0 0.0
  %909 = vmatpush1.msra.mxu0 %v210
  %910 = vmatprep.subr.mxu0 0.0
  %911 = vmatpush1.msra.mxu0 %v211
  %912 = vmatprep.subr.mxu0 0.0
  %913 = vmatpush1.msra.mxu0 %v212
  %914 = vmatprep.subr.mxu0 0.0
  %915 = vmatpush1.msra.mxu0 %v213
  %916 = vmatprep.subr.mxu0 0.0
  %917 = vmatpush1.msra.mxu0 %v214
  %918 = vmatprep.subr.mxu0 0.0
  %919 = vmatpush1.msra.mxu0 %v215
  %920 = vmatprep.subr.mxu0 0.0
  %921 = vmatpush1.msra.mxu0 %v216
  %922 = vmatprep.subr.mxu0 0.0
  %923 = vmatpush1.msra.mxu0 %v217
  %924 = vmatprep.subr.mxu0 0.0
  %925 = vmatpush1.msra.mxu0 %v218
  %926 = vmatprep.subr.mxu0 0.0
  %927 = vmatpush1.msra.mxu0 %v219
  %928 = vmatprep.subr.mxu0 0.0
  %929 = vmatpush1.msra.mxu0 %v220
  %930 = vmatprep.subr.mxu0 0.0
  %931 = vmatpush1.msra.mxu0 %v221
  %932 = vmatprep.subr.mxu0 0.0
  %933 = vmatpush1.msra.mxu0 %v222
  %934 = vmatprep.subr.mxu0 0.0
  %935 = vmatpush1.msra.mxu0 %v223
  %936 = vmatprep.subr.mxu0 0.0
  %937 = vmatpush1.msra.mxu0 %v224
  %938 = vmatprep.subr.mxu0 0.0
  %939 = vmatpush1.msra.mxu0 %v225
  %940 = vmatprep.subr.mxu0 0.0
  %941 = vmatpush1.msra.mxu0 %v226
  %942 = vmatprep.subr.mxu0 0.0
  %943 = vmatpush1.msra.mxu0 %v227
  %944 = vmatprep.subr.mxu0 0.0
  %945 = vmatpush1.msra.mxu0 %v228
  %946 = vmatprep.subr.mxu0 0.0
  %947 = vmatpush1.msra.mxu0 %v229
  %948 = vmatprep.subr.mxu0 0.0
  %949 = vmatpush1.msra.mxu0 %v230
  %950 = vmatprep.subr.mxu0 0.0
  %951 = vmatpush1.msra.mxu0 %v231
  %952 = vmatprep.subr.mxu0 0.0
  %953 = vmatpush1.msra.mxu0 %v232
  %954 = vmatprep.subr.mxu0 0.0
  %955 = vmatpush1.msra.mxu0 %v233
  %956 = vmatprep.subr.mxu0 0.0
  %957 = vmatpush1.msra.mxu0 %v234
  %958 = vmatprep.subr.mxu0 0.0
  %959 = vmatpush1.msra.mxu0 %v235
  %960 = vmatprep.subr.mxu0 0.0
  %961 = vmatpush1.msra.mxu0 %v236
  %962 = vmatprep.mubr.f32.mxu0 %v25
  %963 = vmatmul.mubr.f32.gmra.mrb[0].mxu0 %v24
  %v964 = vpop.f32.mrb[0].mxu0
  %v965 = vadd.f32 %v895, %v964
  %v966 = vpop.f32.mrb[0].mxu0
  %967 = vdwg.mxu0
  %968 = vmatprep.subr.mxu0 0.0
  %969 = vmatpush1.msra.mxu0 %v237
  %970 = vmatprep.subr.mxu0 0.0
  %971 = vmatpush1.msra.mxu0 %v238
  %972 = vmatprep.subr.mxu0 0.0
  %973 = vmatpush1.msra.mxu0 %v239
  %974 = vmatprep.subr.mxu0 0.0
  %975 = vmatpush1.msra.mxu0 %v240
  %976 = vmatprep.subr.mxu0 0.0
  %977 = vmatpush1.msra.mxu0 %v241
  %978 = vmatprep.subr.mxu0 0.0
  %979 = vmatpush1.msra.mxu0 %v242
  %980 = vmatprep.subr.mxu0 0.0
  %981 = vmatpush1.msra.mxu0 %v243
  %982 = vmatprep.subr.mxu0 0.0
  %983 = vmatpush1.msra.mxu0 %v244
  %984 = vmatprep.subr.mxu0 0.0
  %985 = vmatpush1.msra.mxu0 %v245
  %986 = vmatprep.subr.mxu0 0.0
  %987 = vmatpush1.msra.mxu0 %v246
  %988 = vmatprep.subr.mxu0 0.0
  %989 = vmatpush1.msra.mxu0 %v247
  %990 = vmatprep.subr.mxu0 0.0
  %991 = vmatpush1.msra.mxu0 %v248
  %992 = vmatprep.subr.mxu0 0.0
  %993 = vmatpush1.msra.mxu0 %v249
  %994 = vmatprep.subr.mxu0 0.0
  %995 = vmatpush1.msra.mxu0 %v250
  %996 = vmatprep.subr.mxu0 0.0
  %997 = vmatpush1.msra.mxu0 %v251
  %998 = vmatprep.subr.mxu0 0.0
  %999 = vmatpush1.msra.mxu0 %v252
  %1000 = vmatprep.subr.mxu0 0.0
  %1001 = vmatpush1.msra.mxu0 %v253
  %1002 = vmatprep.subr.mxu0 0.0
  %1003 = vmatpush1.msra.mxu0 %v254
  %1004 = vmatprep.subr.mxu0 0.0
  %1005 = vmatpush1.msra.mxu0 %v255
  %1006 = vmatprep.subr.mxu0 0.0
  %1007 = vmatpush1.msra.mxu0 %v256
  %1008 = vmatprep.subr.mxu0 0.0
  %1009 = vmatpush1.msra.mxu0 %v257
  %1010 = vmatprep.subr.mxu0 0.0
  %1011 = vmatpush1.msra.mxu0 %v258
  %1012 = vmatprep.subr.mxu0 0.0
  %1013 = vmatpush1.msra.mxu0 %v259
  %1014 = vmatprep.subr.mxu0 0.0
  %1015 = vmatpush1.msra.mxu0 %v260
  %1016 = vmatprep.subr.mxu0 0.0
  %1017 = vmatpush1.msra.mxu0 %v261
  %1018 = vmatprep.subr.mxu0 0.0
  %1019 = vmatpush1.msra.mxu0 %v262
  %1020 = vmatprep.subr.mxu0 0.0
  %1021 = vmatpush1.msra.mxu0 %v263
  %1022 = vmatprep.subr.mxu0 0.0
  %1023 = vmatpush1.msra.mxu0 %v264
  %1024 = vmatprep.subr.mxu0 0.0
  %1025 = vmatpush1.msra.mxu0 %v265
  %1026 = vmatprep.subr.mxu0 0.0
  %1027 = vmatpush1.msra.mxu0 %v266
  %1028 = vmatprep.subr.mxu0 0.0
  %1029 = vmatpush1.msra.mxu0 %v267
  %1030 = vmatprep.subr.mxu0 0.0
  %1031 = vmatpush1.msra.mxu0 %v268
  %1032 = vmatprep.mubr.f32.mxu0 %v27
  %1033 = vmatmul.mubr.f32.gmra.mrb[0].mxu0 %v26
  %v1034 = vpop.f32.mrb[0].mxu0
  %v1035 = vadd.f32 %v965, %v1034
  %v1036 = vpop.f32.mrb[0].mxu0
  %1037 = vdwg.mxu0
  %1038 = vmatprep.subr.mxu0 0.0
  %1039 = vmatpush1.msra.mxu0 %v269
  %1040 = vmatprep.subr.mxu0 0.0
  %1041 = vmatpush1.msra.mxu0 %v270
  %1042 = vmatprep.subr.mxu0 0.0
  %1043 = vmatpush1.msra.mxu0 %v271
  %1044 = vmatprep.subr.mxu0 0.0
  %1045 = vmatpush1.msra.mxu0 %v272
  %1046 = vmatprep.subr.mxu0 0.0
  %1047 = vmatpush1.msra.mxu0 %v273
  %1048 = vmatprep.subr.mxu0 0.0
  %1049 = vmatpush1.msra.mxu0 %v274
  %1050 = vmatprep.subr.mxu0 0.0
  %1051 = vmatpush1.msra.mxu0 %v275
  %1052 = vmatprep.subr.mxu0 0.0
  %1053 = vmatpush1.msra.mxu0 %v276
  %1054 = vmatprep.subr.mxu0 0.0
  %1055 = vmatpush1.msra.mxu0 %v277
  %1056 = vmatprep.subr.mxu0 0.0
  %1057 = vmatpush1.msra.mxu0 %v278
  %1058 = vmatprep.subr.mxu0 0.0
  %1059 = vmatpush1.msra.mxu0 %v279
  %1060 = vmatprep.subr.mxu0 0.0
  %1061 = vmatpush1.msra.mxu0 %v280
  %1062 = vmatprep.subr.mxu0 0.0
  %1063 = vmatpush1.msra.mxu0 %v281
  %1064 = vmatprep.subr.mxu0 0.0
  %1065 = vmatpush1.msra.mxu0 %v282
  %1066 = vmatprep.subr.mxu0 0.0
  %1067 = vmatpush1.msra.mxu0 %v283
  %1068 = vmatprep.subr.mxu0 0.0
  %1069 = vmatpush1.msra.mxu0 %v284
  %1070 = vmatprep.subr.mxu0 0.0
  %1071 = vmatpush1.msra.mxu0 %v285
  %1072 = vmatprep.subr.mxu0 0.0
  %1073 = vmatpush1.msra.mxu0 %v286
  %1074 = vmatprep.subr.mxu0 0.0
  %1075 = vmatpush1.msra.mxu0 %v287
  %1076 = vmatprep.subr.mxu0 0.0
  %1077 = vmatpush1.msra.mxu0 %v288
  %1078 = vmatprep.subr.mxu0 0.0
  %1079 = vmatpush1.msra.mxu0 %v289
  %1080 = vmatprep.subr.mxu0 0.0
  %1081 = vmatpush1.msra.mxu0 %v290
  %1082 = vmatprep.subr.mxu0 0.0
  %1083 = vmatpush1.msra.mxu0 %v291
  %1084 = vmatprep.subr.mxu0 0.0
  %1085 = vmatpush1.msra.mxu0 %v292
  %1086 = vmatprep.subr.mxu0 0.0
  %1087 = vmatpush1.msra.mxu0 %v293
  %1088 = vmatprep.subr.mxu0 0.0
  %1089 = vmatpush1.msra.mxu0 %v294
  %1090 = vmatprep.subr.mxu0 0.0
  %1091 = vmatpush1.msra.mxu0 %v295
  %1092 = vmatprep.subr.mxu0 0.0
  %1093 = vmatpush1.msra.mxu0 %v296
  %1094 = vmatprep.subr.mxu0 0.0
  %1095 = vmatpush1.msra.mxu0 %v297
  %1096 = vmatprep.subr.mxu0 0.0
  %1097 = vmatpush1.msra.mxu0 %v298
  %1098 = vmatprep.subr.mxu0 0.0
  %1099 = vmatpush1.msra.mxu0 %v299
  %1100 = vmatprep.subr.mxu0 0.0
  %1101 = vmatpush1.msra.mxu0 %v300
  %1102 = vmatprep.mubr.f32.mxu0 %v29
  %1103 = vmatmul.mubr.f32.gmra.mrb[0].mxu0 %v28
  %v1104 = vpop.f32.mrb[0].mxu0
  %v1105 = vadd.f32 %v1035, %v1104
  %v1106 = vpop.f32.mrb[0].mxu0
  %1107 = vdwg.mxu0
  %1108 = vmatprep.subr.mxu0 0.0
  %1109 = vmatpush1.msra.mxu0 %v301
  %1110 = vmatprep.subr.mxu0 0.0
  %1111 = vmatpush1.msra.mxu0 %v302
  %1112 = vmatprep.subr.mxu0 0.0
  %1113 = vmatpush1.msra.mxu0 %v303
  %1114 = vmatprep.subr.mxu0 0.0
  %1115 = vmatpush1.msra.mxu0 %v304
  %1116 = vmatprep.subr.mxu0 0.0
  %1117 = vmatpush1.msra.mxu0 %v305
  %1118 = vmatprep.subr.mxu0 0.0
  %1119 = vmatpush1.msra.mxu0 %v306
  %1120 = vmatprep.subr.mxu0 0.0
  %1121 = vmatpush1.msra.mxu0 %v307
  %1122 = vmatprep.subr.mxu0 0.0
  %1123 = vmatpush1.msra.mxu0 %v308
  %1124 = vmatprep.subr.mxu0 0.0
  %1125 = vmatpush1.msra.mxu0 %v309
  %1126 = vmatprep.subr.mxu0 0.0
  %1127 = vmatpush1.msra.mxu0 %v310
  %1128 = vmatprep.subr.mxu0 0.0
  %1129 = vmatpush1.msra.mxu0 %v311
  %1130 = vmatprep.subr.mxu0 0.0
  %1131 = vmatpush1.msra.mxu0 %v312
  %1132 = vmatprep.subr.mxu0 0.0
  %1133 = vmatpush1.msra.mxu0 %v313
  %1134 = vmatprep.subr.mxu0 0.0
  %1135 = vmatpush1.msra.mxu0 %v314
  %1136 = vmatprep.subr.mxu0 0.0
  %1137 = vmatpush1.msra.mxu0 %v315
  %1138 = vmatprep.subr.mxu0 0.0
  %1139 = vmatpush1.msra.mxu0 %v316
  %1140 = vmatprep.subr.mxu0 0.0
  %1141 = vmatpush1.msra.mxu0 %v317
  %1142 = vmatprep.subr.mxu0 0.0
  %1143 = vmatpush1.msra.mxu0 %v318
  %1144 = vmatprep.subr.mxu0 0.0
  %1145 = vmatpush1.msra.mxu0 %v319
  %1146 = vmatprep.subr.mxu0 0.0
  %1147 = vmatpush1.msra.mxu0 %v320
  %1148 = vmatprep.subr.mxu0 0.0
  %1149 = vmatpush1.msra.mxu0 %v321
  %1150 = vmatprep.subr.mxu0 0.0
  %1151 = vmatpush1.msra.mxu0 %v322
  %1152 = vmatprep.subr.mxu0 0.0
  %1153 = vmatpush1.msra.mxu0 %v323
  %1154 = vmatprep.subr.mxu0 0.0
  %1155 = vmatpush1.msra.mxu0 %v324
  %1156 = vmatprep.subr.mxu0 0.0
  %1157 = vmatpush1.msra.mxu0 %v325
  %1158 = vmatprep.subr.mxu0 0.0
  %1159 = vmatpush1.msra.mxu0 %v326
  %1160 = vmatprep.subr.mxu0 0.0
  %1161 = vmatpush1.msra.mxu0 %v327
  %1162 = vmatprep.subr.mxu0 0.0
  %1163 = vmatpush1.msra.mxu0 %v328
  %1164 = vmatprep.subr.mxu0 0.0
  %1165 = vmatpush1.msra.mxu0 %v329
  %1166 = vmatprep.subr.mxu0 0.0
  %1167 = vmatpush1.msra.mxu0 %v330
  %1168 = vmatprep.subr.mxu0 0.0
  %1169 = vmatpush1.msra.mxu0 %v331
  %1170 = vmatprep.subr.mxu0 0.0
  %1171 = vmatpush1.msra.mxu0 %v332
  %1172 = vmatprep.mubr.f32.mxu0 %v31
  %1173 = vmatmul.mubr.f32.gmra.mrb[0].mxu0 %v30
  %v1174 = vpop.f32.mrb[0].mxu0
  %v1175 = vadd.f32 %v1105, %v1174
  %v1176 = vpop.f32.mrb[0].mxu0
  %1177 = vdwg.mxu0
  %1178 = vmatprep.subr.mxu0 0.0
  %1179 = vmatpush1.msra.mxu0 %v333
  %1180 = vmatprep.subr.mxu0 0.0
  %1181 = vmatpush1.msra.mxu0 %v334
  %1182 = vmatprep.subr.mxu0 0.0
  %1183 = vmatpush1.msra.mxu0 %v335
  %1184 = vmatprep.subr.mxu0 0.0
  %1185 = vmatpush1.msra.mxu0 %v336
  %1186 = vmatprep.subr.mxu0 0.0
  %1187 = vmatpush1.msra.mxu0 %v337
  %1188 = vmatprep.subr.mxu0 0.0
  %1189 = vmatpush1.msra.mxu0 %v338
  %1190 = vmatprep.subr.mxu0 0.0
  %1191 = vmatpush1.msra.mxu0 %v339
  %1192 = vmatprep.subr.mxu0 0.0
  %1193 = vmatpush1.msra.mxu0 %v340
  %1194 = vmatprep.subr.mxu0 0.0
  %1195 = vmatpush1.msra.mxu0 %v341
  %1196 = vmatprep.subr.mxu0 0.0
  %1197 = vmatpush1.msra.mxu0 %v342
  %1198 = vmatprep.subr.mxu0 0.0
  %1199 = vmatpush1.msra.mxu0 %v343
  %1200 = vmatprep.subr.mxu0 0.0
  %1201 = vmatpush1.msra.mxu0 %v344
  %1202 = vmatprep.subr.mxu0 0.0
  %1203 = vmatpush1.msra.mxu0 %v345
  %1204 = vmatprep.subr.mxu0 0.0
  %1205 = vmatpush1.msra.mxu0 %v346
  %1206 = vmatprep.subr.mxu0 0.0
  %1207 = vmatpush1.msra.mxu0 %v347
  %1208 = vmatprep.subr.mxu0 0.0
  %1209 = vmatpush1.msra.mxu0 %v348
  %1210 = vmatprep.subr.mxu0 0.0
  %1211 = vmatpush1.msra.mxu0 %v349
  %1212 = vmatprep.subr.mxu0 0.0
  %1213 = vmatpush1.msra.mxu0 %v350
  %1214 = vmatprep.subr.mxu0 0.0
  %1215 = vmatpush1.msra.mxu0 %v351
  %1216 = vmatprep.subr.mxu0 0.0
  %1217 = vmatpush1.msra.mxu0 %v352
  %1218 = vmatprep.subr.mxu0 0.0
  %1219 = vmatpush1.msra.mxu0 %v353
  %1220 = vmatprep.subr.mxu0 0.0
  %1221 = vmatpush1.msra.mxu0 %v354
  %1222 = vmatprep.subr.mxu0 0.0
  %1223 = vmatpush1.msra.mxu0 %v355
  %1224 = vmatprep.subr.mxu0 0.0
  %1225 = vmatpush1.msra.mxu0 %v356
  %1226 = vmatprep.subr.mxu0 0.0
  %1227 = vmatpush1.msra.mxu0 %v357
  %1228 = vmatprep.subr.mxu0 0.0
  %1229 = vmatpush1.msra.mxu0 %v358
  %1230 = vmatprep.subr.mxu0 0.0
  %1231 = vmatpush1.msra.mxu0 %v359
  %1232 = vmatprep.subr.mxu0 0.0
  %1233 = vmatpush1.msra.mxu0 %v360
  %1234 = vmatprep.subr.mxu0 0.0
  %1235 = vmatpush1.msra.mxu0 %v361
  %1236 = vmatprep.subr.mxu0 0.0
  %1237 = vmatpush1.msra.mxu0 %v362
  %1238 = vmatprep.subr.mxu0 0.0
  %1239 = vmatpush1.msra.mxu0 %v363
  %1240 = vmatprep.subr.mxu0 0.0
  %1241 = vmatpush1.msra.mxu0 %v364
  %1242 = vmatprep.mubr.f32.mxu0 %v33
  %1243 = vmatmul.mubr.f32.gmra.mrb[0].mxu0 %v32
  %v1244 = vpop.f32.mrb[0].mxu0
  %v1245 = vadd.f32 %v1175, %v1244
  %v1246 = vpop.f32.mrb[0].mxu0
  %1247 = vdwg.mxu0
  %1248 = vmatprep.subr.mxu0 0.0
  %1249 = vmatpush1.msra.mxu0 %v365
  %1250 = vmatprep.subr.mxu0 0.0
  %1251 = vmatpush1.msra.mxu0 %v366
  %1252 = vmatprep.subr.mxu0 0.0
  %1253 = vmatpush1.msra.mxu0 %v367
  %1254 = vmatprep.subr.mxu0 0.0
  %1255 = vmatpush1.msra.mxu0 %v368
  %1256 = vmatprep.subr.mxu0 0.0
  %1257 = vmatpush1.msra.mxu0 %v369
  %1258 = vmatprep.subr.mxu0 0.0
  %1259 = vmatpush1.msra.mxu0 %v370
  %1260 = vmatprep.subr.mxu0 0.0
  %1261 = vmatpush1.msra.mxu0 %v371
  %1262 = vmatprep.subr.mxu0 0.0
  %1263 = vmatpush1.msra.mxu0 %v372
  %1264 = vmatprep.subr.mxu0 0.0
  %1265 = vmatpush1.msra.mxu0 %v373
  %1266 = vmatprep.subr.mxu0 0.0
  %1267 = vmatpush1.msra.mxu0 %v374
  %1268 = vmatprep.subr.mxu0 0.0
  %1269 = vmatpush1.msra.mxu0 %v375
  %1270 = vmatprep.subr.mxu0 0.0
  %1271 = vmatpush1.msra.mxu0 %v376
  %1272 = vmatprep.subr.mxu0 0.0
  %1273 = vmatpush1.msra.mxu0 %v377
  %1274 = vmatprep.subr.mxu0 0.0
  %1275 = vmatpush1.msra.mxu0 %v378
  %1276 = vmatprep.subr.mxu0 0.0
  %1277 = vmatpush1.msra.mxu0 %v379
  %1278 = vmatprep.subr.mxu0 0.0
  %1279 = vmatpush1.msra.mxu0 %v380
  %1280 = vmatprep.subr.mxu0 0.0
  %1281 = vmatpush1.msra.mxu0 %v381
  %1282 = vmatprep.subr.mxu0 0.0
  %1283 = vmatpush1.msra.mxu0 %v382
  %1284 = vmatprep.subr.mxu0 0.0
  %1285 = vmatpush1.msra.mxu0 %v383
  %1286 = vmatprep.subr.mxu0 0.0
  %1287 = vmatpush1.msra.mxu0 %v384
  %1288 = vmatprep.subr.mxu0 0.0
  %1289 = vmatpush1.msra.mxu0 %v385
  %1290 = vmatprep.subr.mxu0 0.0
  %1291 = vmatpush1.msra.mxu0 %v386
  %1292 = vmatprep.subr.mxu0 0.0
  %1293 = vmatpush1.msra.mxu0 %v387
  %1294 = vmatprep.subr.mxu0 0.0
  %1295 = vmatpush1.msra.mxu0 %v388
  %1296 = vmatprep.subr.mxu0 0.0
  %1297 = vmatpush1.msra.mxu0 %v389
  %1298 = vmatprep.subr.mxu0 0.0
  %1299 = vmatpush1.msra.mxu0 %v390
  %1300 = vmatprep.subr.mxu0 0.0
  %1301 = vmatpush1.msra.mxu0 %v391
  %1302 = vmatprep.subr.mxu0 0.0
  %1303 = vmatpush1.msra.mxu0 %v392
  %1304 = vmatprep.subr.mxu0 0.0
  %1305 = vmatpush1.msra.mxu0 %v393
  %1306 = vmatprep.subr.mxu0 0.0
  %1307 = vmatpush1.msra.mxu0 %v394
  %1308 = vmatprep.subr.mxu0 0.0
  %1309 = vmatpush1.msra.mxu0 %v395
  %1310 = vmatprep.subr.mxu0 0.0
  %1311 = vmatpush1.msra.mxu0 %v396
  %1312 = vmatprep.mubr.f32.mxu0 %v35
  %1313 = vmatmul.mubr.f32.gmra.mrb[0].mxu0 %v34
  %v1314 = vpop.f32.mrb[0].mxu0
  %v1315 = vadd.f32 %v1245, %v1314
  %v1316 = vpop.f32.mrb[0].mxu0
  %1317 = vdwg.mxu0
  %1318 = vmatprep.subr.mxu0 0.0
  %1319 = vmatpush1.msra.mxu0 %v397
  %1320 = vmatprep.subr.mxu0 0.0
  %1321 = vmatpush1.msra.mxu0 %v398
  %1322 = vmatprep.subr.mxu0 0.0
  %1323 = vmatpush1.msra.mxu0 %v399
  %1324 = vmatprep.subr.mxu0 0.0
  %1325 = vmatpush1.msra.mxu0 %v400
  %1326 = vmatprep.subr.mxu0 0.0
  %1327 = vmatpush1.msra.mxu0 %v401
  %1328 = vmatprep.subr.mxu0 0.0
  %1329 = vmatpush1.msra.mxu0 %v402
  %1330 = vmatprep.subr.mxu0 0.0
  %1331 = vmatpush1.msra.mxu0 %v403
  %1332 = vmatprep.subr.mxu0 0.0
  %1333 = vmatpush1.msra.mxu0 %v404
  %1334 = vmatprep.subr.mxu0 0.0
  %1335 = vmatpush1.msra.mxu0 %v405
  %1336 = vmatprep.subr.mxu0 0.0
  %1337 = vmatpush1.msra.mxu0 %v406
  %1338 = vmatprep.subr.mxu0 0.0
  %1339 = vmatpush1.msra.mxu0 %v407
  %1340 = vmatprep.subr.mxu0 0.0
  %1341 = vmatpush1.msra.mxu0 %v408
  %1342 = vmatprep.subr.mxu0 0.0
  %1343 = vmatpush1.msra.mxu0 %v409
  %1344 = vmatprep.subr.mxu0 0.0
  %1345 = vmatpush1.msra.mxu0 %v410
  %1346 = vmatprep.subr.mxu0 0.0
  %1347 = vmatpush1.msra.mxu0 %v411
  %1348 = vmatprep.subr.mxu0 0.0
  %1349 = vmatpush1.msra.mxu0 %v412
  %1350 = vmatprep.subr.mxu0 0.0
  %1351 = vmatpush1.msra.mxu0 %v413
  %1352 = vmatprep.subr.mxu0 0.0
  %1353 = vmatpush1.msra.mxu0 %v414
  %1354 = vmatprep.subr.mxu0 0.0
  %1355 = vmatpush1.msra.mxu0 %v415
  %1356 = vmatprep.subr.mxu0 0.0
  %1357 = vmatpush1.msra.mxu0 %v416
  %1358 = vmatprep.subr.mxu0 0.0
  %1359 = vmatpush1.msra.mxu0 %v417
  %1360 = vmatprep.subr.mxu0 0.0
  %1361 = vmatpush1.msra.mxu0 %v418
  %1362 = vmatprep.subr.mxu0 0.0
  %1363 = vmatpush1.msra.mxu0 %v419
  %1364 = vmatprep.subr.mxu0 0.0
  %1365 = vmatpush1.msra.mxu0 %v420
  %1366 = vmatprep.subr.mxu0 0.0
  %1367 = vmatpush1.msra.mxu0 %v421
  %1368 = vmatprep.subr.mxu0 0.0
  %1369 = vmatpush1.msra.mxu0 %v422
  %1370 = vmatprep.subr.mxu0 0.0
  %1371 = vmatpush1.msra.mxu0 %v423
  %1372 = vmatprep.subr.mxu0 0.0
  %1373 = vmatpush1.msra.mxu0 %v424
  %1374 = vmatprep.subr.mxu0 0.0
  %1375 = vmatpush1.msra.mxu0 %v425
  %1376 = vmatprep.subr.mxu0 0.0
  %1377 = vmatpush1.msra.mxu0 %v426
  %1378 = vmatprep.subr.mxu0 0.0
  %1379 = vmatpush1.msra.mxu0 %v427
  %1380 = vmatprep.subr.mxu0 0.0
  %1381 = vmatpush1.msra.mxu0 %v428
  %1382 = vmatprep.mubr.f32.mxu0 %v37
  %1383 = vmatmul.mubr.f32.gmra.mrb[0].mxu0 %v36
  %v1384 = vpop.f32.mrb[0].mxu0
  %v1385 = vadd.f32 %v1315, %v1384
  %v1386 = vpop.f32.mrb[0].mxu0
  %1387 = vdwg.mxu0
  %1388 = vmatprep.subr.mxu0 0.0
  %1389 = vmatpush1.msra.mxu0 %v429
  %1390 = vmatprep.subr.mxu0 0.0
  %1391 = vmatpush1.msra.mxu0 %v430
  %1392 = vmatprep.subr.mxu0 0.0
  %1393 = vmatpush1.msra.mxu0 %v431
  %1394 = vmatprep.subr.mxu0 0.0
  %1395 = vmatpush1.msra.mxu0 %v432
  %1396 = vmatprep.subr.mxu0 0.0
  %1397 = vmatpush1.msra.mxu0 %v433
  %1398 = vmatprep.subr.mxu0 0.0
  %1399 = vmatpush1.msra.mxu0 %v434
  %1400 = vmatprep.subr.mxu0 0.0
  %1401 = vmatpush1.msra.mxu0 %v435
  %1402 = vmatprep.subr.mxu0 0.0
  %1403 = vmatpush1.msra.mxu0 %v436
  %1404 = vmatprep.subr.mxu0 0.0
  %1405 = vmatpush1.msra.mxu0 %v437
  %1406 = vmatprep.subr.mxu0 0.0
  %1407 = vmatpush1.msra.mxu0 %v438
  %1408 = vmatprep.subr.mxu0 0.0
  %1409 = vmatpush1.msra.mxu0 %v439
  %1410 = vmatprep.subr.mxu0 0.0
  %1411 = vmatpush1.msra.mxu0 %v440
  %1412 = vmatprep.subr.mxu0 0.0
  %1413 = vmatpush1.msra.mxu0 %v441
  %1414 = vmatprep.subr.mxu0 0.0
  %1415 = vmatpush1.msra.mxu0 %v442
  %1416 = vmatprep.subr.mxu0 0.0
  %1417 = vmatpush1.msra.mxu0 %v443
  %1418 = vmatprep.subr.mxu0 0.0
  %1419 = vmatpush1.msra.mxu0 %v444
  %1420 = vmatprep.subr.mxu0 0.0
  %1421 = vmatpush1.msra.mxu0 %v445
  %1422 = vmatprep.subr.mxu0 0.0
  %1423 = vmatpush1.msra.mxu0 %v446
  %1424 = vmatprep.subr.mxu0 0.0
  %1425 = vmatpush1.msra.mxu0 %v447
  %1426 = vmatprep.subr.mxu0 0.0
  %1427 = vmatpush1.msra.mxu0 %v448
  %1428 = vmatprep.subr.mxu0 0.0
  %1429 = vmatpush1.msra.mxu0 %v449
  %1430 = vmatprep.subr.mxu0 0.0
  %1431 = vmatpush1.msra.mxu0 %v450
  %1432 = vmatprep.subr.mxu0 0.0
  %1433 = vmatpush1.msra.mxu0 %v451
  %1434 = vmatprep.subr.mxu0 0.0
  %1435 = vmatpush1.msra.mxu0 %v452
  %1436 = vmatprep.subr.mxu0 0.0
  %1437 = vmatpush1.msra.mxu0 %v453
  %1438 = vmatprep.subr.mxu0 0.0
  %1439 = vmatpush1.msra.mxu0 %v454
  %1440 = vmatprep.subr.mxu0 0.0
  %1441 = vmatpush1.msra.mxu0 %v455
  %1442 = vmatprep.subr.mxu0 0.0
  %1443 = vmatpush1.msra.mxu0 %v456
  %1444 = vmatprep.subr.mxu0 0.0
  %1445 = vmatpush1.msra.mxu0 %v457
  %1446 = vmatprep.subr.mxu0 0.0
  %1447 = vmatpush1.msra.mxu0 %v458
  %1448 = vmatprep.subr.mxu0 0.0
  %1449 = vmatpush1.msra.mxu0 %v459
  %1450 = vmatprep.subr.mxu0 0.0
  %1451 = vmatpush1.msra.mxu0 %v460
  %1452 = vmatprep.mubr.f32.mxu0 %v39
  %1453 = vmatmul.mubr.f32.gmra.mrb[0].mxu0 %v38
  %v1454 = vpop.f32.mrb[0].mxu0
  %v1455 = vadd.f32 %v1385, %v1454
  %v1456 = vpop.f32.mrb[0].mxu0
  %1457 = vdwg.mxu0
  %1458 = vmatprep.subr.mxu0 0.0
  %1459 = vmatpush1.msra.mxu0 %v461
  %1460 = vmatprep.subr.mxu0 0.0
  %1461 = vmatpush1.msra.mxu0 %v462
  %1462 = vmatprep.subr.mxu0 0.0
  %1463 = vmatpush1.msra.mxu0 %v463
  %1464 = vmatprep.subr.mxu0 0.0
  %1465 = vmatpush1.msra.mxu0 %v464
  %1466 = vmatprep.subr.mxu0 0.0
  %1467 = vmatpush1.msra.mxu0 %v465
  %1468 = vmatprep.subr.mxu0 0.0
  %1469 = vmatpush1.msra.mxu0 %v466
  %1470 = vmatprep.subr.mxu0 0.0
  %1471 = vmatpush1.msra.mxu0 %v467
  %1472 = vmatprep.subr.mxu0 0.0
  %1473 = vmatpush1.msra.mxu0 %v468
  %1474 = vmatprep.subr.mxu0 0.0
  %1475 = vmatpush1.msra.mxu0 %v469
  %1476 = vmatprep.subr.mxu0 0.0
  %1477 = vmatpush1.msra.mxu0 %v470
  %1478 = vmatprep.subr.mxu0 0.0
  %1479 = vmatpush1.msra.mxu0 %v471
  %1480 = vmatprep.subr.mxu0 0.0
  %1481 = vmatpush1.msra.mxu0 %v472
  %1482 = vmatprep.subr.mxu0 0.0
  %1483 = vmatpush1.msra.mxu0 %v473
  %1484 = vmatprep.subr.mxu0 0.0
  %1485 = vmatpush1.msra.mxu0 %v474
  %1486 = vmatprep.subr.mxu0 0.0
  %1487 = vmatpush1.msra.mxu0 %v475
  %1488 = vmatprep.subr.mxu0 0.0
  %1489 = vmatpush1.msra.mxu0 %v476
  %1490 = vmatprep.subr.mxu0 0.0
  %1491 = vmatpush1.msra.mxu0 %v477
  %1492 = vmatprep.subr.mxu0 0.0
  %1493 = vmatpush1.msra.mxu0 %v478
  %1494 = vmatprep.subr.mxu0 0.0
  %1495 = vmatpush1.msra.mxu0 %v479
  %1496 = vmatprep.subr.mxu0 0.0
  %1497 = vmatpush1.msra.mxu0 %v480
  %1498 = vmatprep.subr.mxu0 0.0
  %1499 = vmatpush1.msra.mxu0 %v481
  %1500 = vmatprep.subr.mxu0 0.0
  %1501 = vmatpush1.msra.mxu0 %v482
  %1502 = vmatprep.subr.mxu0 0.0
  %1503 = vmatpush1.msra.mxu0 %v483
  %1504 = vmatprep.subr.mxu0 0.0
  %1505 = vmatpush1.msra.mxu0 %v484
  %1506 = vmatprep.subr.mxu0 0.0
  %1507 = vmatpush1.msra.mxu0 %v485
  %1508 = vmatprep.subr.mxu0 0.0
  %1509 = vmatpush1.msra.mxu0 %v486
  %1510 = vmatprep.subr.mxu0 0.0
  %1511 = vmatpush1.msra.mxu0 %v487
  %1512 = vmatprep.subr.mxu0 0.0
  %1513 = vmatpush1.msra.mxu0 %v488
  %1514 = vmatprep.subr.mxu0 0.0
  %1515 = vmatpush1.msra.mxu0 %v489
  %1516 = vmatprep.subr.mxu0 0.0
  %1517 = vmatpush1.msra.mxu0 %v490
  %1518 = vmatprep.subr.mxu0 0.0
  %1519 = vmatpush1.msra.mxu0 %v491
  %1520 = vmatprep.subr.mxu0 0.0
  %1521 = vmatpush1.msra.mxu0 %v492
  %1522 = vmatprep.mubr.f32.mxu0 %v41
  %1523 = vmatmul.mubr.f32.gmra.mrb[0].mxu0 %v40
  %v1524 = vpop.f32.mrb[0].mxu0
  %v1525 = vadd.f32 %v1455, %v1524
  %v1526 = vpop.f32.mrb[0].mxu0
  %1527 = vdwg.mxu0
  %1528 = vmatprep.subr.mxu0 0.0
  %1529 = vmatpush1.msra.mxu0 %v493
  %1530 = vmatprep.subr.mxu0 0.0
  %1531 = vmatpush1.msra.mxu0 %v494
  %1532 = vmatprep.subr.mxu0 0.0
  %1533 = vmatpush1.msra.mxu0 %v495
  %1534 = vmatprep.subr.mxu0 0.0
  %1535 = vmatpush1.msra.mxu0 %v496
  %1536 = vmatprep.subr.mxu0 0.0
  %1537 = vmatpush1.msra.mxu0 %v497
  %1538 = vmatprep.subr.mxu0 0.0
  %1539 = vmatpush1.msra.mxu0 %v498
  %1540 = vmatprep.subr.mxu0 0.0
  %1541 = vmatpush1.msra.mxu0 %v499
  %1542 = vmatprep.subr.mxu0 0.0
  %1543 = vmatpush1.msra.mxu0 %v500
  %1544 = vmatprep.subr.mxu0 0.0
  %1545 = vmatpush1.msra.mxu0 %v501
  %1546 = vmatprep.subr.mxu0 0.0
  %1547 = vmatpush1.msra.mxu0 %v502
  %1548 = vmatprep.subr.mxu0 0.0
  %1549 = vmatpush1.msra.mxu0 %v503
  %1550 = vmatprep.subr.mxu0 0.0
  %1551 = vmatpush1.msra.mxu0 %v504
  %1552 = vmatprep.subr.mxu0 0.0
  %1553 = vmatpush1.msra.mxu0 %v505
  %1554 = vmatprep.subr.mxu0 0.0
  %1555 = vmatpush1.msra.mxu0 %v506
  %1556 = vmatprep.subr.mxu0 0.0
  %1557 = vmatpush1.msra.mxu0 %v507
  %1558 = vmatprep.subr.mxu0 0.0
  %1559 = vmatpush1.msra.mxu0 %v508
  %1560 = vmatprep.subr.mxu0 0.0
  %1561 = vmatpush1.msra.mxu0 %v509
  %1562 = vmatprep.subr.mxu0 0.0
  %1563 = vmatpush1.msra.mxu0 %v510
  %1564 = vmatprep.subr.mxu0 0.0
  %1565 = vmatpush1.msra.mxu0 %v511
  %1566 = vmatprep.subr.mxu0 0.0
  %1567 = vmatpush1.msra.mxu0 %v512
  %1568 = vmatprep.subr.mxu0 0.0
  %1569 = vmatpush1.msra.mxu0 %v513
  %1570 = vmatprep.subr.mxu0 0.0
  %1571 = vmatpush1.msra.mxu0 %v514
  %1572 = vmatprep.subr.mxu0 0.0
  %1573 = vmatpush1.msra.mxu0 %v515
  %1574 = vmatprep.subr.mxu0 0.0
  %1575 = vmatpush1.msra.mxu0 %v516
  %1576 = vmatprep.subr.mxu0 0.0
  %1577 = vmatpush1.msra.mxu0 %v517
  %1578 = vmatprep.subr.mxu0 0.0
  %1579 = vmatpush1.msra.mxu0 %v518
  %1580 = vmatprep.subr.mxu0 0.0
  %1581 = vmatpush1.msra.mxu0 %v519
  %1582 = vmatprep.subr.mxu0 0.0
  %1583 = vmatpush1.msra.mxu0 %v520
  %1584 = vmatprep.subr.mxu0 0.0
  %1585 = vmatpush1.msra.mxu0 %v521
  %1586 = vmatprep.subr.mxu0 0.0
  %1587 = vmatpush1.msra.mxu0 %v522
  %1588 = vmatprep.subr.mxu0 0.0
  %1589 = vmatpush1.msra.mxu0 %v523
  %1590 = vmatprep.subr.mxu0 0.0
  %1591 = vmatpush1.msra.mxu0 %v524
  %1592 = vmatprep.mubr.f32.mxu0 %v43
  %1593 = vmatmul.mubr.f32.gmra.mrb[0].mxu0 %v42
  %v1594 = vpop.f32.mrb[0].mxu0
  %v1595 = vadd.f32 %v1525, %v1594
  %v1596 = vpop.f32.mrb[0].mxu0
  %1597 = vdwg.mxu0
  %1598 = vmatprep.subr.mxu0 0.0
  %1599 = vmatpush1.msra.mxu0 %v525
  %1600 = vmatprep.subr.mxu0 0.0
  %1601 = vmatpush1.msra.mxu0 %v526
  %1602 = vmatprep.subr.mxu0 0.0
  %1603 = vmatpush1.msra.mxu0 %v527
  %1604 = vmatprep.subr.mxu0 0.0
  %1605 = vmatpush1.msra.mxu0 %v528
  %1606 = vmatprep.subr.mxu0 0.0
  %1607 = vmatpush1.msra.mxu0 %v529
  %1608 = vmatprep.subr.mxu0 0.0
  %1609 = vmatpush1.msra.mxu0 %v530
  %1610 = vmatprep.subr.mxu0 0.0
  %1611 = vmatpush1.msra.mxu0 %v531
  %1612 = vmatprep.subr.mxu0 0.0
  %1613 = vmatpush1.msra.mxu0 %v532
  %1614 = vmatprep.subr.mxu0 0.0
  %1615 = vmatpush1.msra.mxu0 %v533
  %1616 = vmatprep.subr.mxu0 0.0
  %1617 = vmatpush1.msra.mxu0 %v534
  %1618 = vmatprep.subr.mxu0 0.0
  %1619 = vmatpush1.msra.mxu0 %v535
  %1620 = vmatprep.subr.mxu0 0.0
  %1621 = vmatpush1.msra.mxu0 %v536
  %1622 = vmatprep.subr.mxu0 0.0
  %1623 = vmatpush1.msra.mxu0 %v537
  %1624 = vmatprep.subr.mxu0 0.0
  %1625 = vmatpush1.msra.mxu0 %v538
  %1626 = vmatprep.subr.mxu0 0.0
  %1627 = vmatpush1.msra.mxu0 %v539
  %1628 = vmatprep.subr.mxu0 0.0
  %1629 = vmatpush1.msra.mxu0 %v540
  %1630 = vmatprep.subr.mxu0 0.0
  %1631 = vmatpush1.msra.mxu0 0.0
  %1632 = vmatprep.subr.mxu0 0.0
  %1633 = vmatpush1.msra.mxu0 0.0
  %1634 = vmatprep.subr.mxu0 0.0
  %1635 = vmatpush1.msra.mxu0 0.0
  %1636 = vmatprep.subr.mxu0 0.0
  %1637 = vmatpush1.msra.mxu0 0.0
  %1638 = vmatprep.subr.mxu0 0.0
  %1639 = vmatpush1.msra.mxu0 0.0
  %1640 = vmatprep.subr.mxu0 0.0
  %1641 = vmatpush1.msra.mxu0 0.0
  %1642 = vmatprep.subr.mxu0 0.0
  %1643 = vmatpush1.msra.mxu0 0.0
  %1644 = vmatprep.subr.mxu0 0.0
  %1645 = vmatpush1.msra.mxu0 0.0
  %1646 = vmatprep.subr.mxu0 0.0
  %1647 = vmatpush1.msra.mxu0 0.0
  %1648 = vmatprep.subr.mxu0 0.0
  %1649 = vmatpush1.msra.mxu0 0.0
  %1650 = vmatprep.subr.mxu0 0.0
  %1651 = vmatpush1.msra.mxu0 0.0
  %1652 = vmatprep.subr.mxu0 0.0
  %1653 = vmatpush1.msra.mxu0 0.0
  %1654 = vmatprep.subr.mxu0 0.0
  %1655 = vmatpush1.msra.mxu0 0.0
  %1656 = vmatprep.subr.mxu0 0.0
  %1657 = vmatpush1.msra.mxu0 0.0
  %1658 = vmatprep.subr.mxu0 0.0
  %1659 = vmatpush1.msra.mxu0 0.0
  %1660 = vmatprep.subr.mxu0 0.0
  %1661 = vmatpush1.msra.mxu0 0.0
  %1662 = vmatprep.mubr.f32.mxu0 0.0
  %1663 = vmatmul.mubr.f32.gmra.mrb[0].mxu0 %v44
  %v1664 = vpop.f32.mrb[0].mxu0
  %v1665 = vadd.f32 %v1595, %v1664
  %v1666 = vpop.f32.mrb[0].mxu0
  %1667 = vdwg.mxu0
  %1668 = vst [vmem:[%s3] sm:$0xff] %v1665
  // Predicated region
  $region14: #{dueling_dqn_forward.9} parent=0 // pred_check
    _
  $region15: #{dueling_dqn_forward.9} parent=0 // pred_check_branch
    %1670 = sbr.rel (0) target = $region17
  $region16: #{dueling_dqn_forward.9} parent=0 // pred_region
    _
  $region17: #{dueling_dqn_forward.9} parent=0 // pred_fallthru
    _
  // Predicated region
  $region18: #{dueling_dqn_forward.9} parent=0 // pred_check
    _
  $region19: #{dueling_dqn_forward.9} parent=0 // pred_check_branch
    %1672 = sbr.rel (0) target = $region21
  $region20: #{dueling_dqn_forward.9} parent=0 // pred_region
    _
  $region21: #{dueling_dqn_forward.9} parent=0 // pred_fallthru
    _

</llo_original>
